<compile_context>
chip_gen: v7x
topology: tpu7x:2x2x1
jax: 0.10.0
libtpu: 0.0.40
codegen_flags: <defaults>
</compile_context>

<pallas_src>
import math
from functools import partial

import jax
import jax.numpy as jnp
from jax.experimental import pallas as pl
from jax.experimental.pallas import tpu as pltpu


def _round_up(x, m):
    return ((x + m - 1) // m) * m


# ----------------------------------------------------------------------------
# Kernel 1: fused conv (im2col matmul) + 2x2 maxpool + bias + ReLU.
# The four inputs are the im2col patch matrices of the four pool phases;
# max-pooling the conv output == elementwise max of the four matmul results
# (ReLU and max commute, bias is shared, so relu(max(acc)+b) is exact).
# ----------------------------------------------------------------------------
def _conv_pool_kernel(p00_ref, p01_ref, p10_ref, p11_ref, w_ref, b_ref, o_ref):
    w = w_ref[...]
    acc00 = jnp.dot(p00_ref[...], w, preferred_element_type=jnp.float32)
    acc01 = jnp.dot(p01_ref[...], w, preferred_element_type=jnp.float32)
    acc10 = jnp.dot(p10_ref[...], w, preferred_element_type=jnp.float32)
    acc11 = jnp.dot(p11_ref[...], w, preferred_element_type=jnp.float32)
    acc = jnp.maximum(jnp.maximum(acc00, acc01), jnp.maximum(acc10, acc11))
    acc = jnp.maximum(acc + b_ref[...], 0.0)
    o_ref[...] = acc.astype(o_ref.dtype)


def conv_relu_pool(x_nhwc, w_mat, b_row, *, kh, kw):
    """Valid conv (stride 1) + ReLU + 2x2 maxpool, fused.

    x_nhwc: (N, H, W, Cin) bf16;  w_mat: (kh*kw*Cin, Cout) bf16;
    b_row: (1, Cout) f32.  Returns (N, Ho//2, Wo//2, Cout) bf16.
    """
    n, h, w, cin = x_nhwc.shape
    k, cout = w_mat.shape
    assert k == kh * kw * cin
    ho, wo = h - kh + 1, w - kw + 1
    hp, wp = ho // 2, wo // 2
    m = n * hp * wp

    # TODO(synk): build the patch windows inside the kernel from a VMEM-resident
    # input block (in-kernel im2col) to avoid the kh*kw x HBM inflation of the
    # patch matrices at large batch; here patches are built in bf16 (half the
    # bytes of the previous f32 version) and streamed tile-by-tile.
    def phase_patches(a, b):
        cols = []
        for i in range(kh):
            for j in range(kw):
                cols.append(x_nhwc[:, a + i:a + i + 2 * hp:2,
                                   b + j:b + j + 2 * wp:2, :])
        p = jnp.stack(cols, axis=3)                    # (N, hp, wp, kh*kw, cin)
        return p.reshape(m, k)

    patches = [phase_patches(0, 0), phase_patches(0, 1),
               phase_patches(1, 0), phase_patches(1, 1)]

    tm = min(512, _round_up(m, 8))
    grid = (pl.cdiv(m, tm),)
    row_tile = pl.BlockSpec((tm, k), lambda i: (i, 0))

    out = pl.pallas_call(
        _conv_pool_kernel,
        out_shape=jax.ShapeDtypeStruct((m, cout), jnp.bfloat16),
        grid=grid,
        in_specs=[row_tile, row_tile, row_tile, row_tile,
                  pl.BlockSpec((k, cout), lambda i: (0, 0)),
                  pl.BlockSpec((1, cout), lambda i: (0, 0))],
        out_specs=pl.BlockSpec((tm, cout), lambda i: (i, 0)),
        compiler_params=pltpu.CompilerParams(
            dimension_semantics=("parallel",)),
    )(*patches, w_mat, b_row)
    return out.reshape(n, hp, wp, cout)


# ----------------------------------------------------------------------------
# Kernel 2: fused FC tail: l1+ReLU -> l2+ReLU -> l3 -> log_softmax.
# All weights stay resident in VMEM; intermediates never leave the chip.
# ----------------------------------------------------------------------------
def _mlp_head_kernel(x_ref, w1_ref, b1_ref, w2_ref, b2_ref, w3_ref, b3_ref,
                     o_ref):
    h = jnp.dot(x_ref[...], w1_ref[...], preferred_element_type=jnp.float32)
    h = jnp.maximum(h + b1_ref[...], 0.0)
    h = jnp.dot(h.astype(jnp.bfloat16), w2_ref[...],
                preferred_element_type=jnp.float32)
    h = jnp.maximum(h + b2_ref[...], 0.0)
    h = jnp.dot(h.astype(jnp.bfloat16), w3_ref[...],
                preferred_element_type=jnp.float32)
    h = h + b3_ref[...]
    mx = jnp.max(h, axis=-1, keepdims=True)
    s = h - mx
    lse = jnp.log(jnp.sum(jnp.exp(s), axis=-1, keepdims=True))
    o_ref[...] = (s - lse).astype(o_ref.dtype)


def mlp_head(x, w1, b1, w2, b2, w3, b3):
    m, k = x.shape
    n_out = w3.shape[1]
    tm = min(256, _round_up(m, 8))
    grid = (pl.cdiv(m, tm),)

    def full(shape):
        return pl.BlockSpec(shape, lambda i: (0, 0))

    return pl.pallas_call(
        _mlp_head_kernel,
        out_shape=jax.ShapeDtypeStruct((m, n_out), jnp.float32),
        grid=grid,
        in_specs=[pl.BlockSpec((tm, k), lambda i: (i, 0)),
                  full(w1.shape), full(b1.shape),
                  full(w2.shape), full(b2.shape),
                  full(w3.shape), full(b3.shape)],
        out_specs=pl.BlockSpec((tm, n_out), lambda i: (i, 0)),
        compiler_params=pltpu.CompilerParams(
            dimension_semantics=("parallel",)),
    )(x, w1, b1, w2, b2, w3, b3)


# ----------------------------------------------------------------------------
# Parameters: PyTorch-style init, then a one-time pack into kernel layout.
# ----------------------------------------------------------------------------
def init_params(key):
    def conv_init(k, cout, cin, kh, kw):
        bound = 1.0 / math.sqrt(cin * kh * kw)
        k1, k2 = jax.random.split(k)
        w = jax.random.uniform(k1, (cout, cin, kh, kw), jnp.float32, -bound, bound)
        b = jax.random.uniform(k2, (cout,), jnp.float32, -bound, bound)
        return w, b

    def linear_init(k, out_f, in_f):
        bound = 1.0 / math.sqrt(in_f)
        k1, k2 = jax.random.split(k)
        w = jax.random.uniform(k1, (out_f, in_f), jnp.float32, -bound, bound)
        b = jax.random.uniform(k2, (out_f,), jnp.float32, -bound, bound)
        return w, b

    ks = jax.random.split(key, 6)
    return {
        "c1": conv_init(ks[0], 12, 1, 5, 5),
        "c2": conv_init(ks[1], 24, 12, 3, 3),
        "c3": conv_init(ks[2], 48, 24, 3, 3),
        "l1": linear_init(ks[3], 400, 48 * 5 * 5),
        "l2": linear_init(ks[4], 100, 400),
        "l3": linear_init(ks[5], 43, 100),
    }


def pack_params(params):
    """One-time conversion to kernel layout: conv weight -> (kh*kw*cin, cout)
    bf16 (matching (ki, kj, cin) patch flattening order), linear weight ->
    (in, out) bf16, biases -> (1, out) f32 rows."""
    def conv_pack(w, b):
        cout, cin, kh, kw = w.shape
        w_mat = jnp.transpose(w, (2, 3, 1, 0)).reshape(kh * kw * cin, cout)
        return w_mat.astype(jnp.bfloat16), b.reshape(1, cout).astype(jnp.float32)

    def lin_pack(w, b):
        return w.T.astype(jnp.bfloat16), b.reshape(1, -1).astype(jnp.float32)

    return {
        "c1": conv_pack(*params["c1"]),
        "c2": conv_pack(*params["c2"]),
        "c3": conv_pack(*params["c3"]),
        "l1": lin_pack(*params["l1"]),
        "l2": lin_pack(*params["l2"]),
        "l3": lin_pack(*params["l3"]),
    }


# ----------------------------------------------------------------------------
# Forward pass (mirrors Net.forward)
# ----------------------------------------------------------------------------
def net_forward(packed, x_nchw):
    x = jnp.transpose(x_nchw, (0, 2, 3, 1)).astype(jnp.bfloat16)  # NCHW -> NHWC
    x = conv_relu_pool(x, *packed["c1"], kh=5, kw=5)   # (N, 26, 26, 12)
    x = conv_relu_pool(x, *packed["c2"], kh=3, kw=3)   # (N, 12, 12, 24)
    x = conv_relu_pool(x, *packed["c3"], kh=3, kw=3)   # (N,  5,  5, 48)
    n = x.shape[0]
    # PyTorch flattens NCHW -> (N, C*H*W); reproduce that ordering exactly.
    x = jnp.transpose(x, (0, 3, 1, 2)).reshape(n, 48 * 5 * 5)
    return mlp_head(x, *packed["l1"], *packed["l2"], *packed["l3"])  # (N, 43)


if __name__ == "__main__":
    key = jax.random.PRNGKey(0)
    pkey, xkey = jax.random.split(key)
    packed = pack_params(init_params(pkey))
    # Input spatial size 56x56 is implied by x.view(-1, 48*5*5) after 3x conv+pool.
    x = jax.random.normal(xkey, (2, 1, 56, 56), jnp.float32)
    out = jax.jit(net_forward)(packed, x)
    out = jax.block_until_ready(out)
    assert out.shape == (2, 43)
    print("KERNEL_OK")
</pallas_src>

<mosaic_0001>
module attributes {stable_mosaic.version = 11 : i64} {
  func.func @_conv_pool_kernel(%arg0: i32, %arg1: memref<512x25xbf16, #tpu.memory_space<vmem>>, %arg2: memref<512x25xbf16, #tpu.memory_space<vmem>>, %arg3: memref<512x25xbf16, #tpu.memory_space<vmem>>, %arg4: memref<512x25xbf16, #tpu.memory_space<vmem>>, %arg5: memref<25x12xbf16, #tpu.memory_space<vmem>>, %arg6: memref<1x12xf32, #tpu.memory_space<vmem>>, %arg7: memref<512x12xbf16, #tpu.memory_space<vmem>>) attributes {dimension_semantics = [#tpu.dimension_semantics<parallel>], iteration_bounds = array<i64: 3>, scalar_prefetch = 0 : i64, scratch_operands = 0 : i64, tpu.core_type = #tpu.core_type<tc>, window_params = [{transform_indices = @transform_0, window_bounds = array<i64: 512, 25>}, {transform_indices = @transform_1, window_bounds = array<i64: 512, 25>}, {transform_indices = @transform_2, window_bounds = array<i64: 512, 25>}, {transform_indices = @transform_3, window_bounds = array<i64: 512, 25>}, {pipeline_mode = #tpu.pipeline_mode<synchronous>, transform_indices = @transform_4, window_bounds = array<i64: 25, 12>}, {pipeline_mode = #tpu.pipeline_mode<synchronous>, transform_indices = @transform_5, window_bounds = array<i64: 1, 12>}, {transform_indices = @transform_6, window_bounds = array<i64: 512, 12>}]} {
    %c0 = arith.constant 0 : index
    %c0_0 = arith.constant 0 : index
    %0 = vector.load %arg5[%c0, %c0_0] : memref<25x12xbf16, #tpu.memory_space<vmem>>, vector<25x12xbf16>
    %c0_1 = arith.constant 0 : index
    %c0_2 = arith.constant 0 : index
    %1 = vector.load %arg1[%c0_1, %c0_2] : memref<512x25xbf16, #tpu.memory_space<vmem>>, vector<512x25xbf16>
    %cst = arith.constant dense<0.000000e+00> : vector<512x12xf32>
    %2 = tpu.matmul %1, %0, %cst {dimension_numbers = #tpu.dot_dimension_numbers<[1], [0], [0], [1], [0, 0, 1, 1], [], []>} : vector<512x25xbf16>, vector<25x12xbf16>, vector<512x12xf32> -> vector<512x12xf32>
    %c0_3 = arith.constant 0 : index
    %c0_4 = arith.constant 0 : index
    %3 = vector.load %arg2[%c0_3, %c0_4] : memref<512x25xbf16, #tpu.memory_space<vmem>>, vector<512x25xbf16>
    %cst_5 = arith.constant dense<0.000000e+00> : vector<512x12xf32>
    %4 = tpu.matmul %3, %0, %cst_5 {dimension_numbers = #tpu.dot_dimension_numbers<[1], [0], [0], [1], [0, 0, 1, 1], [], []>} : vector<512x25xbf16>, vector<25x12xbf16>, vector<512x12xf32> -> vector<512x12xf32>
    %c0_6 = arith.constant 0 : index
    %c0_7 = arith.constant 0 : index
    %5 = vector.load %arg3[%c0_6, %c0_7] : memref<512x25xbf16, #tpu.memory_space<vmem>>, vector<512x25xbf16>
    %cst_8 = arith.constant dense<0.000000e+00> : vector<512x12xf32>
    %6 = tpu.matmul %5, %0, %cst_8 {dimension_numbers = #tpu.dot_dimension_numbers<[1], [0], [0], [1], [0, 0, 1, 1], [], []>} : vector<512x25xbf16>, vector<25x12xbf16>, vector<512x12xf32> -> vector<512x12xf32>
    %c0_9 = arith.constant 0 : index
    %c0_10 = arith.constant 0 : index
    %7 = vector.load %arg4[%c0_9, %c0_10] : memref<512x25xbf16, #tpu.memory_space<vmem>>, vector<512x25xbf16>
    %cst_11 = arith.constant dense<0.000000e+00> : vector<512x12xf32>
    %8 = tpu.matmul %7, %0, %cst_11 {dimension_numbers = #tpu.dot_dimension_numbers<[1], [0], [0], [1], [0, 0, 1, 1], [], []>} : vector<512x25xbf16>, vector<25x12xbf16>, vector<512x12xf32> -> vector<512x12xf32>
    %9 = arith.maximumf %2, %4 : vector<512x12xf32>
    %10 = arith.maximumf %6, %8 : vector<512x12xf32>
    %11 = arith.maximumf %9, %10 : vector<512x12xf32>
    %c0_12 = arith.constant 0 : index
    %c0_13 = arith.constant 0 : index
    %12 = vector.load %arg6[%c0_12, %c0_13] : memref<1x12xf32, #tpu.memory_space<vmem>>, vector<1x12xf32>
    %13 = vector.broadcast %12 : vector<1x12xf32> to vector<512x12xf32>
    %14 = arith.addf %11, %13 : vector<512x12xf32>
    %cst_14 = arith.constant 0.000000e+00 : f32
    %15 = vector.broadcast %cst_14 : f32 to vector<512x12xf32>
    %16 = arith.maximumf %14, %15 : vector<512x12xf32>
    %17 = arith.truncf %16 : vector<512x12xf32> to vector<512x12xbf16>
    %c0_15 = arith.constant 0 : index
    %c0_16 = arith.constant 0 : index
    %18 = vector.load %arg7[%c0_15, %c0_16] : memref<512x12xbf16, #tpu.memory_space<vmem>>, vector<512x12xbf16>
    tpu.vector_store %arg7[%c0_15, %c0_16], %17 {strides = array<i32>} : memref<512x12xbf16, #tpu.memory_space<vmem>>, vector<512x12xbf16>,
    return
  }
  func.func @transform_0(%arg0: i32) -> (i32, i32) {
    %c0_i32 = arith.constant 0 : i32
    %c0_i32_0 = arith.constant 0 : i32
    return %arg0, %c0_i32 : i32, i32
  }
  func.func @transform_1(%arg0: i32) -> (i32, i32) {
    %c0_i32 = arith.constant 0 : i32
    %c0_i32_0 = arith.constant 0 : i32
    return %arg0, %c0_i32 : i32, i32
  }
  func.func @transform_2(%arg0: i32) -> (i32, i32) {
    %c0_i32 = arith.constant 0 : i32
    %c0_i32_0 = arith.constant 0 : i32
    return %arg0, %c0_i32 : i32, i32
  }
  func.func @transform_3(%arg0: i32) -> (i32, i32) {
    %c0_i32 = arith.constant 0 : i32
    %c0_i32_0 = arith.constant 0 : i32
    return %arg0, %c0_i32 : i32, i32
  }
  func.func @transform_4(%arg0: i32) -> (i32, i32) {
    %c0_i32 = arith.constant 0 : i32
    %c0_i32_0 = arith.constant 0 : i32
    %c0_i32_1 = arith.constant 0 : i32
    return %c0_i32, %c0_i32_0 : i32, i32
  }
  func.func @transform_5(%arg0: i32) -> (i32, i32) {
    %c0_i32 = arith.constant 0 : i32
    %c0_i32_0 = arith.constant 0 : i32
    %c0_i32_1 = arith.constant 0 : i32
    return %c0_i32, %c0_i32_0 : i32, i32
  }
  func.func @transform_6(%arg0: i32) -> (i32, i32) {
    %c0_i32 = arith.constant 0 : i32
    %c0_i32_0 = arith.constant 0 : i32
    return %arg0, %c0_i32 : i32, i32
  }
}

module attributes {stable_mosaic.version = 11 : i64} {
  func.func @_conv_pool_kernel(%arg0: i32, %arg1: memref<288x108xbf16, #tpu.memory_space<vmem>>, %arg2: memref<288x108xbf16, #tpu.memory_space<vmem>>, %arg3: memref<288x108xbf16, #tpu.memory_space<vmem>>, %arg4: memref<288x108xbf16, #tpu.memory_space<vmem>>, %arg5: memref<108x24xbf16, #tpu.memory_space<vmem>>, %arg6: memref<1x24xf32, #tpu.memory_space<vmem>>, %arg7: memref<288x24xbf16, #tpu.memory_space<vmem>>) attributes {dimension_semantics = [#tpu.dimension_semantics<parallel>], iteration_bounds = array<i64: 1>, scalar_prefetch = 0 : i64, scratch_operands = 0 : i64, tpu.core_type = #tpu.core_type<tc>, window_params = [{transform_indices = @transform_0, window_bounds = array<i64: 288, 108>}, {transform_indices = @transform_1, window_bounds = array<i64: 288, 108>}, {transform_indices = @transform_2, window_bounds = array<i64: 288, 108>}, {transform_indices = @transform_3, window_bounds = array<i64: 288, 108>}, {pipeline_mode = #tpu.pipeline_mode<synchronous>, transform_indices = @transform_4, window_bounds = array<i64: 108, 24>}, {pipeline_mode = #tpu.pipeline_mode<synchronous>, transform_indices = @transform_5, window_bounds = array<i64: 1, 24>}, {transform_indices = @transform_6, window_bounds = array<i64: 288, 24>}]} {
    %c0 = arith.constant 0 : index
    %c0_0 = arith.constant 0 : index
    %0 = vector.load %arg5[%c0, %c0_0] : memref<108x24xbf16, #tpu.memory_space<vmem>>, vector<108x24xbf16>
    %c0_1 = arith.constant 0 : index
    %c0_2 = arith.constant 0 : index
    %1 = vector.load %arg1[%c0_1, %c0_2] : memref<288x108xbf16, #tpu.memory_space<vmem>>, vector<288x108xbf16>
    %cst = arith.constant dense<0.000000e+00> : vector<288x24xf32>
    %2 = tpu.matmul %1, %0, %cst {dimension_numbers = #tpu.dot_dimension_numbers<[1], [0], [0], [1], [0, 0, 1, 1], [], []>} : vector<288x108xbf16>, vector<108x24xbf16>, vector<288x24xf32> -> vector<288x24xf32>
    %c0_3 = arith.constant 0 : index
    %c0_4 = arith.constant 0 : index
    %3 = vector.load %arg2[%c0_3, %c0_4] : memref<288x108xbf16, #tpu.memory_space<vmem>>, vector<288x108xbf16>
    %cst_5 = arith.constant dense<0.000000e+00> : vector<288x24xf32>
    %4 = tpu.matmul %3, %0, %cst_5 {dimension_numbers = #tpu.dot_dimension_numbers<[1], [0], [0], [1], [0, 0, 1, 1], [], []>} : vector<288x108xbf16>, vector<108x24xbf16>, vector<288x24xf32> -> vector<288x24xf32>
    %c0_6 = arith.constant 0 : index
    %c0_7 = arith.constant 0 : index
    %5 = vector.load %arg3[%c0_6, %c0_7] : memref<288x108xbf16, #tpu.memory_space<vmem>>, vector<288x108xbf16>
    %cst_8 = arith.constant dense<0.000000e+00> : vector<288x24xf32>
    %6 = tpu.matmul %5, %0, %cst_8 {dimension_numbers = #tpu.dot_dimension_numbers<[1], [0], [0], [1], [0, 0, 1, 1], [], []>} : vector<288x108xbf16>, vector<108x24xbf16>, vector<288x24xf32> -> vector<288x24xf32>
    %c0_9 = arith.constant 0 : index
    %c0_10 = arith.constant 0 : index
    %7 = vector.load %arg4[%c0_9, %c0_10] : memref<288x108xbf16, #tpu.memory_space<vmem>>, vector<288x108xbf16>
    %cst_11 = arith.constant dense<0.000000e+00> : vector<288x24xf32>
    %8 = tpu.matmul %7, %0, %cst_11 {dimension_numbers = #tpu.dot_dimension_numbers<[1], [0], [0], [1], [0, 0, 1, 1], [], []>} : vector<288x108xbf16>, vector<108x24xbf16>, vector<288x24xf32> -> vector<288x24xf32>
    %9 = arith.maximumf %2, %4 : vector<288x24xf32>
    %10 = arith.maximumf %6, %8 : vector<288x24xf32>
    %11 = arith.maximumf %9, %10 : vector<288x24xf32>
    %c0_12 = arith.constant 0 : index
    %c0_13 = arith.constant 0 : index
    %12 = vector.load %arg6[%c0_12, %c0_13] : memref<1x24xf32, #tpu.memory_space<vmem>>, vector<1x24xf32>
    %13 = vector.broadcast %12 : vector<1x24xf32> to vector<288x24xf32>
    %14 = arith.addf %11, %13 : vector<288x24xf32>
    %cst_14 = arith.constant 0.000000e+00 : f32
    %15 = vector.broadcast %cst_14 : f32 to vector<288x24xf32>
    %16 = arith.maximumf %14, %15 : vector<288x24xf32>
    %17 = arith.truncf %16 : vector<288x24xf32> to vector<288x24xbf16>
    %c0_15 = arith.constant 0 : index
    %c0_16 = arith.constant 0 : index
    %18 = vector.load %arg7[%c0_15, %c0_16] : memref<288x24xbf16, #tpu.memory_space<vmem>>, vector<288x24xbf16>
    tpu.vector_store %arg7[%c0_15, %c0_16], %17 {strides = array<i32>} : memref<288x24xbf16, #tpu.memory_space<vmem>>, vector<288x24xbf16>,
    return
  }
  func.func @transform_0(%arg0: i32) -> (i32, i32) {
    %c0_i32 = arith.constant 0 : i32
    %c0_i32_0 = arith.constant 0 : i32
    return %arg0, %c0_i32 : i32, i32
  }
  func.func @transform_1(%arg0: i32) -> (i32, i32) {
    %c0_i32 = arith.constant 0 : i32
    %c0_i32_0 = arith.constant 0 : i32
    return %arg0, %c0_i32 : i32, i32
  }
  func.func @transform_2(%arg0: i32) -> (i32, i32) {
    %c0_i32 = arith.constant 0 : i32
    %c0_i32_0 = arith.constant 0 : i32
    return %arg0, %c0_i32 : i32, i32
  }
  func.func @transform_3(%arg0: i32) -> (i32, i32) {
    %c0_i32 = arith.constant 0 : i32
    %c0_i32_0 = arith.constant 0 : i32
    return %arg0, %c0_i32 : i32, i32
  }
  func.func @transform_4(%arg0: i32) -> (i32, i32) {
    %c0_i32 = arith.constant 0 : i32
    %c0_i32_0 = arith.constant 0 : i32
    %c0_i32_1 = arith.constant 0 : i32
    return %c0_i32, %c0_i32_0 : i32, i32
  }
  func.func @transform_5(%arg0: i32) -> (i32, i32) {
    %c0_i32 = arith.constant 0 : i32
    %c0_i32_0 = arith.constant 0 : i32
    %c0_i32_1 = arith.constant 0 : i32
    return %c0_i32, %c0_i32_0 : i32, i32
  }
  func.func @transform_6(%arg0: i32) -> (i32, i32) {
    %c0_i32 = arith.constant 0 : i32
    %c0_i32_0 = arith.constant 0 : i32
    return %arg0, %c0_i32 : i32, i32
  }
}

module attributes {stable_mosaic.version = 11 : i64} {
  func.func @_conv_pool_kernel(%arg0: i32, %arg1: memref<56x216xbf16, #tpu.memory_space<vmem>>, %arg2: memref<56x216xbf16, #tpu.memory_space<vmem>>, %arg3: memref<56x216xbf16, #tpu.memory_space<vmem>>, %arg4: memref<56x216xbf16, #tpu.memory_space<vmem>>, %arg5: memref<216x48xbf16, #tpu.memory_space<vmem>>, %arg6: memref<1x48xf32, #tpu.memory_space<vmem>>, %arg7: memref<56x48xbf16, #tpu.memory_space<vmem>>) attributes {dimension_semantics = [#tpu.dimension_semantics<parallel>], iteration_bounds = array<i64: 1>, scalar_prefetch = 0 : i64, scratch_operands = 0 : i64, tpu.core_type = #tpu.core_type<tc>, window_params = [{transform_indices = @transform_0, window_bounds = array<i64: 56, 216>}, {transform_indices = @transform_1, window_bounds = array<i64: 56, 216>}, {transform_indices = @transform_2, window_bounds = array<i64: 56, 216>}, {transform_indices = @transform_3, window_bounds = array<i64: 56, 216>}, {pipeline_mode = #tpu.pipeline_mode<synchronous>, transform_indices = @transform_4, window_bounds = array<i64: 216, 48>}, {pipeline_mode = #tpu.pipeline_mode<synchronous>, transform_indices = @transform_5, window_bounds = array<i64: 1, 48>}, {transform_indices = @transform_6, window_bounds = array<i64: 56, 48>}]} {
    %c0 = arith.constant 0 : index
    %c0_0 = arith.constant 0 : index
    %0 = vector.load %arg5[%c0, %c0_0] : memref<216x48xbf16, #tpu.memory_space<vmem>>, vector<216x48xbf16>
    %c0_1 = arith.constant 0 : index
    %c0_2 = arith.constant 0 : index
    %1 = vector.load %arg1[%c0_1, %c0_2] : memref<56x216xbf16, #tpu.memory_space<vmem>>, vector<56x216xbf16>
    %cst = arith.constant dense<0.000000e+00> : vector<56x48xf32>
    %2 = tpu.matmul %1, %0, %cst {dimension_numbers = #tpu.dot_dimension_numbers<[1], [0], [0], [1], [0, 0, 1, 1], [], []>} : vector<56x216xbf16>, vector<216x48xbf16>, vector<56x48xf32> -> vector<56x48xf32>
    %c0_3 = arith.constant 0 : index
    %c0_4 = arith.constant 0 : index
    %3 = vector.load %arg2[%c0_3, %c0_4] : memref<56x216xbf16, #tpu.memory_space<vmem>>, vector<56x216xbf16>
    %cst_5 = arith.constant dense<0.000000e+00> : vector<56x48xf32>
    %4 = tpu.matmul %3, %0, %cst_5 {dimension_numbers = #tpu.dot_dimension_numbers<[1], [0], [0], [1], [0, 0, 1, 1], [], []>} : vector<56x216xbf16>, vector<216x48xbf16>, vector<56x48xf32> -> vector<56x48xf32>
    %c0_6 = arith.constant 0 : index
    %c0_7 = arith.constant 0 : index
    %5 = vector.load %arg3[%c0_6, %c0_7] : memref<56x216xbf16, #tpu.memory_space<vmem>>, vector<56x216xbf16>
    %cst_8 = arith.constant dense<0.000000e+00> : vector<56x48xf32>
    %6 = tpu.matmul %5, %0, %cst_8 {dimension_numbers = #tpu.dot_dimension_numbers<[1], [0], [0], [1], [0, 0, 1, 1], [], []>} : vector<56x216xbf16>, vector<216x48xbf16>, vector<56x48xf32> -> vector<56x48xf32>
    %c0_9 = arith.constant 0 : index
    %c0_10 = arith.constant 0 : index
    %7 = vector.load %arg4[%c0_9, %c0_10] : memref<56x216xbf16, #tpu.memory_space<vmem>>, vector<56x216xbf16>
    %cst_11 = arith.constant dense<0.000000e+00> : vector<56x48xf32>
    %8 = tpu.matmul %7, %0, %cst_11 {dimension_numbers = #tpu.dot_dimension_numbers<[1], [0], [0], [1], [0, 0, 1, 1], [], []>} : vector<56x216xbf16>, vector<216x48xbf16>, vector<56x48xf32> -> vector<56x48xf32>
    %9 = arith.maximumf %2, %4 : vector<56x48xf32>
    %10 = arith.maximumf %6, %8 : vector<56x48xf32>
    %11 = arith.maximumf %9, %10 : vector<56x48xf32>
    %c0_12 = arith.constant 0 : index
    %c0_13 = arith.constant 0 : index
    %12 = vector.load %arg6[%c0_12, %c0_13] : memref<1x48xf32, #tpu.memory_space<vmem>>, vector<1x48xf32>
    %13 = vector.broadcast %12 : vector<1x48xf32> to vector<56x48xf32>
    %14 = arith.addf %11, %13 : vector<56x48xf32>
    %cst_14 = arith.constant 0.000000e+00 : f32
    %15 = vector.broadcast %cst_14 : f32 to vector<56x48xf32>
    %16 = arith.maximumf %14, %15 : vector<56x48xf32>
    %17 = arith.truncf %16 : vector<56x48xf32> to vector<56x48xbf16>
    %c0_15 = arith.constant 0 : index
    %c0_16 = arith.constant 0 : index
    %18 = vector.load %arg7[%c0_15, %c0_16] : memref<56x48xbf16, #tpu.memory_space<vmem>>, vector<56x48xbf16>
    tpu.vector_store %arg7[%c0_15, %c0_16], %17 {strides = array<i32>} : memref<56x48xbf16, #tpu.memory_space<vmem>>, vector<56x48xbf16>,
    return
  }
  func.func @transform_0(%arg0: i32) -> (i32, i32) {
    %c0_i32 = arith.constant 0 : i32
    %c0_i32_0 = arith.constant 0 : i32
    return %arg0, %c0_i32 : i32, i32
  }
  func.func @transform_1(%arg0: i32) -> (i32, i32) {
    %c0_i32 = arith.constant 0 : i32
    %c0_i32_0 = arith.constant 0 : i32
    return %arg0, %c0_i32 : i32, i32
  }
  func.func @transform_2(%arg0: i32) -> (i32, i32) {
    %c0_i32 = arith.constant 0 : i32
    %c0_i32_0 = arith.constant 0 : i32
    return %arg0, %c0_i32 : i32, i32
  }
  func.func @transform_3(%arg0: i32) -> (i32, i32) {
    %c0_i32 = arith.constant 0 : i32
    %c0_i32_0 = arith.constant 0 : i32
    return %arg0, %c0_i32 : i32, i32
  }
  func.func @transform_4(%arg0: i32) -> (i32, i32) {
    %c0_i32 = arith.constant 0 : i32
    %c0_i32_0 = arith.constant 0 : i32
    %c0_i32_1 = arith.constant 0 : i32
    return %c0_i32, %c0_i32_0 : i32, i32
  }
  func.func @transform_5(%arg0: i32) -> (i32, i32) {
    %c0_i32 = arith.constant 0 : i32
    %c0_i32_0 = arith.constant 0 : i32
    %c0_i32_1 = arith.constant 0 : i32
    return %c0_i32, %c0_i32_0 : i32, i32
  }
  func.func @transform_6(%arg0: i32) -> (i32, i32) {
    %c0_i32 = arith.constant 0 : i32
    %c0_i32_0 = arith.constant 0 : i32
    return %arg0, %c0_i32 : i32, i32
  }
}

module attributes {stable_mosaic.version = 11 : i64} {
  func.func @_mlp_head_kernel(%arg0: i32, %arg1: memref<8x1200xbf16, #tpu.memory_space<vmem>>, %arg2: memref<1200x400xbf16, #tpu.memory_space<vmem>>, %arg3: memref<1x400xf32, #tpu.memory_space<vmem>>, %arg4: memref<400x100xbf16, #tpu.memory_space<vmem>>, %arg5: memref<1x100xf32, #tpu.memory_space<vmem>>, %arg6: memref<100x43xbf16, #tpu.memory_space<vmem>>, %arg7: memref<1x43xf32, #tpu.memory_space<vmem>>, %arg8: memref<8x43xf32, #tpu.memory_space<vmem>>) attributes {dimension_semantics = [#tpu.dimension_semantics<parallel>], iteration_bounds = array<i64: 1>, scalar_prefetch = 0 : i64, scratch_operands = 0 : i64, tpu.core_type = #tpu.core_type<tc>, window_params = [{transform_indices = @transform_0, window_bounds = array<i64: 8, 1200>}, {pipeline_mode = #tpu.pipeline_mode<synchronous>, transform_indices = @transform_1, window_bounds = array<i64: 1200, 400>}, {pipeline_mode = #tpu.pipeline_mode<synchronous>, transform_indices = @transform_2, window_bounds = array<i64: 1, 400>}, {pipeline_mode = #tpu.pipeline_mode<synchronous>, transform_indices = @transform_3, window_bounds = array<i64: 400, 100>}, {pipeline_mode = #tpu.pipeline_mode<synchronous>, transform_indices = @transform_4, window_bounds = array<i64: 1, 100>}, {pipeline_mode = #tpu.pipeline_mode<synchronous>, transform_indices = @transform_5, window_bounds = array<i64: 100, 43>}, {pipeline_mode = #tpu.pipeline_mode<synchronous>, transform_indices = @transform_6, window_bounds = array<i64: 1, 43>}, {transform_indices = @transform_7, window_bounds = array<i64: 8, 43>}]} {
    %c0 = arith.constant 0 : index
    %c0_0 = arith.constant 0 : index
    %0 = vector.load %arg1[%c0, %c0_0] : memref<8x1200xbf16, #tpu.memory_space<vmem>>, vector<8x1200xbf16>
    %c0_1 = arith.constant 0 : index
    %c0_2 = arith.constant 0 : index
    %1 = vector.load %arg2[%c0_1, %c0_2] : memref<1200x400xbf16, #tpu.memory_space<vmem>>, vector<1200x400xbf16>
    %cst = arith.constant dense<0.000000e+00> : vector<8x400xf32>
    %2 = tpu.matmul %0, %1, %cst {dimension_numbers = #tpu.dot_dimension_numbers<[1], [0], [0], [1], [0, 0, 1, 1], [], []>} : vector<8x1200xbf16>, vector<1200x400xbf16>, vector<8x400xf32> -> vector<8x400xf32>
    %c0_3 = arith.constant 0 : index
    %c0_4 = arith.constant 0 : index
    %3 = vector.load %arg3[%c0_3, %c0_4] : memref<1x400xf32, #tpu.memory_space<vmem>>, vector<1x400xf32>
    %4 = vector.broadcast %3 : vector<1x400xf32> to vector<8x400xf32>
    %5 = arith.addf %2, %4 : vector<8x400xf32>
    %cst_5 = arith.constant 0.000000e+00 : f32
    %6 = vector.broadcast %cst_5 : f32 to vector<8x400xf32>
    %7 = arith.maximumf %5, %6 : vector<8x400xf32>
    %8 = arith.truncf %7 : vector<8x400xf32> to vector<8x400xbf16>
    %c0_6 = arith.constant 0 : index
    %c0_7 = arith.constant 0 : index
    %9 = vector.load %arg4[%c0_6, %c0_7] : memref<400x100xbf16, #tpu.memory_space<vmem>>, vector<400x100xbf16>
    %cst_8 = arith.constant dense<0.000000e+00> : vector<8x100xf32>
    %10 = tpu.matmul %8, %9, %cst_8 {dimension_numbers = #tpu.dot_dimension_numbers<[1], [0], [0], [1], [0, 0, 1, 1], [], []>} : vector<8x400xbf16>, vector<400x100xbf16>, vector<8x100xf32> -> vector<8x100xf32>
    %c0_9 = arith.constant 0 : index
    %c0_10 = arith.constant 0 : index
    %11 = vector.load %arg5[%c0_9, %c0_10] : memref<1x100xf32, #tpu.memory_space<vmem>>, vector<1x100xf32>
    %12 = vector.broadcast %11 : vector<1x100xf32> to vector<8x100xf32>
    %13 = arith.addf %10, %12 : vector<8x100xf32>
    %cst_11 = arith.constant 0.000000e+00 : f32
    %14 = vector.broadcast %cst_11 : f32 to vector<8x100xf32>
    %15 = arith.maximumf %13, %14 : vector<8x100xf32>
    %16 = arith.truncf %15 : vector<8x100xf32> to vector<8x100xbf16>
    %c0_12 = arith.constant 0 : index
    %c0_13 = arith.constant 0 : index
    %17 = vector.load %arg6[%c0_12, %c0_13] : memref<100x43xbf16, #tpu.memory_space<vmem>>, vector<100x43xbf16>
    %cst_14 = arith.constant dense<0.000000e+00> : vector<8x43xf32>
    %18 = tpu.matmul %16, %17, %cst_14 {dimension_numbers = #tpu.dot_dimension_numbers<[1], [0], [0], [1], [0, 0, 1, 1], [], []>} : vector<8x100xbf16>, vector<100x43xbf16>, vector<8x43xf32> -> vector<8x43xf32>
    %c0_15 = arith.constant 0 : index
    %c0_16 = arith.constant 0 : index
    %19 = vector.load %arg7[%c0_15, %c0_16] : memref<1x43xf32, #tpu.memory_space<vmem>>, vector<1x43xf32>
    %20 = vector.broadcast %19 : vector<1x43xf32> to vector<8x43xf32>
    %21 = arith.addf %18, %20 : vector<8x43xf32>
    %cst_17 = arith.constant dense<0xFF800000> : vector<8xf32>
    %22 = vector.multi_reduction <maximumf>, %21, %cst_17 [1] : vector<8x43xf32> to vector<8xf32>
    %23 = vector.shape_cast %22 : vector<8xf32> to vector<8x1xf32>
    %24 = vector.broadcast %23 : vector<8x1xf32> to vector<8x43xf32>
    %25 = arith.subf %21, %24 : vector<8x43xf32>
    %26 = math.exp %25 : vector<8x43xf32>
    %cst_18 = arith.constant dense<0.000000e+00> : vector<8xf32>
    %27 = vector.multi_reduction <add>, %26, %cst_18 [1] : vector<8x43xf32> to vector<8xf32>
    %28 = vector.shape_cast %27 : vector<8xf32> to vector<8x1xf32>
    %29 = math.log %28 : vector<8x1xf32>
    %30 = vector.broadcast %29 : vector<8x1xf32> to vector<8x43xf32>
    %31 = arith.subf %25, %30 : vector<8x43xf32>
    %c0_19 = arith.constant 0 : index
    %c0_20 = arith.constant 0 : index
    %32 = vector.load %arg8[%c0_19, %c0_20] : memref<8x43xf32, #tpu.memory_space<vmem>>, vector<8x43xf32>
    tpu.vector_store %arg8[%c0_19, %c0_20], %31 {strides = array<i32>} : memref<8x43xf32, #tpu.memory_space<vmem>>, vector<8x43xf32>,
    return
  }
  func.func @transform_0(%arg0: i32) -> (i32, i32) {
    %c0_i32 = arith.constant 0 : i32
    %c0_i32_0 = arith.constant 0 : i32
    return %arg0, %c0_i32 : i32, i32
  }
  func.func @transform_1(%arg0: i32) -> (i32, i32) {
    %c0_i32 = arith.constant 0 : i32
    %c0_i32_0 = arith.constant 0 : i32
    %c0_i32_1 = arith.constant 0 : i32
    return %c0_i32, %c0_i32_0 : i32, i32
  }
  func.func @transform_2(%arg0: i32) -> (i32, i32) {
    %c0_i32 = arith.constant 0 : i32
    %c0_i32_0 = arith.constant 0 : i32
    %c0_i32_1 = arith.constant 0 : i32
    return %c0_i32, %c0_i32_0 : i32, i32
  }
  func.func @transform_3(%arg0: i32) -> (i32, i32) {
    %c0_i32 = arith.constant 0 : i32
    %c0_i32_0 = arith.constant 0 : i32
    %c0_i32_1 = arith.constant 0 : i32
    return %c0_i32, %c0_i32_0 : i32, i32
  }
  func.func @transform_4(%arg0: i32) -> (i32, i32) {
    %c0_i32 = arith.constant 0 : i32
    %c0_i32_0 = arith.constant 0 : i32
    %c0_i32_1 = arith.constant 0 : i32
    return %c0_i32, %c0_i32_0 : i32, i32
  }
  func.func @transform_5(%arg0: i32) -> (i32, i32) {
    %c0_i32 = arith.constant 0 : i32
    %c0_i32_0 = arith.constant 0 : i32
    %c0_i32_1 = arith.constant 0 : i32
    return %c0_i32, %c0_i32_0 : i32, i32
  }
  func.func @transform_6(%arg0: i32) -> (i32, i32) {
    %c0_i32 = arith.constant 0 : i32
    %c0_i32_0 = arith.constant 0 : i32
    %c0_i32_1 = arith.constant 0 : i32
    return %c0_i32, %c0_i32_0 : i32, i32
  }
  func.func @transform_7(%arg0: i32) -> (i32, i32) {
    %c0_i32 = arith.constant 0 : i32
    %c0_i32_0 = arith.constant 0 : i32
    return %arg0, %c0_i32 : i32, i32
  }
}

</mosaic_0001>

<llo_original>
// kernel: net_forward.4
$region0: #{net_forward.4}
  #allocation0 [shape = 'u32[]', space=smem, size = 0x4, offset = 0x4, fixed_abs, tag = 'smem constant byte address 0x4 - core index']
  #allocation1 [shape = 'u32[144,128]{1,0:T(1,128)}', space=vmem, size = 0x12000, scoped, tag = 'internal scratch']
  %s0 = inlined_call_operand.vmem [shape: bf16[1352,25], index: 0, kind: input, shape index: {}]
  %s1 = inlined_call_operand.vmem [shape: bf16[1352,25], index: 1, kind: input, shape index: {}]
  %s2 = inlined_call_operand.vmem [shape: bf16[1352,25], index: 2, kind: input, shape index: {}]
  %s3 = inlined_call_operand.vmem [shape: bf16[1352,25], index: 3, kind: input, shape index: {}]
  %s4 = inlined_call_operand.vmem [shape: bf16[25,12], index: 4, kind: input, shape index: {}]
  %s5 = inlined_call_operand.vmem [shape: f32[1,12], index: 5, kind: input, shape index: {}]
  %s6 = inlined_call_operand.vmem [shape: bf16[1352,12], index: 6, kind: output, shape index: {}]
  %s7 = sld [smem:[#allocation0]]
  $region101: #{net_forward.4} parent=0
    _
  %s9 = ssub.s32 1, %s7
  %s10 = scalar_select 0, %s9, %s7
  $region1: #{net_forward.4} parent=0
    #allocation2 [shape = 'u8[262144]{0}', space=vmem, size = 0x40000, scoped, tag = 'output window, operand 0']
    loop: start=0, step=1, limit=5
    $region2: #{net_forward.4} parent=1 // loop_pre_header
      _
    $region3: #{net_forward.4} parent=1 // loop_header
      %s12 = sphi 0, %s16
      %p13 = scmp.ge.s32.totalorder %s12, 5
      %s22 = sphi 0, %s24
      %s25 = sphi 0, %s22
      %s26 = sphi 0, %s25
      %s42 = sphi 0, %s26
      %s48 = sphi 0, %s50
      %s51 = sphi 0, %s48
      %s52 = sphi 0, %s51
      %s68 = sphi 0, %s52
      %s74 = sphi 0, %s76
      %s77 = sphi 0, %s74
      %s78 = sphi 0, %s77
      %s94 = sphi 0, %s78
      %s100 = sphi 0, %s102
      %s103 = sphi 0, %s100
      %s104 = sphi 0, %s103
      %s120 = sphi 0, %s104
      %s124 = sphi 0, %s124
      %s126 = sphi 0, %s124
      %s127 = sphi 0, %s126
      %s141 = sphi 0, %s127
      %s145 = sphi 0, %s145
      %s147 = sphi 0, %s145
      %s148 = sphi 0, %s147
      %s162 = sphi 0, %s148
      %s168 = sphi 0, %s170
      %s171 = sphi 0, %s168
      %s172 = sphi 0, %s171
      %s188 = sphi 0, %s172
    $region4: #{net_forward.4} parent=1 // loop_header_branch
      %15 = sbr.rel (%p13) target = $region8
    $region5: #{net_forward.4} parent=1 // loop_body
      %s17 = ssub.s32 %s12, 1
      %s18 = ssub.s32 %s12, 2
      %s19 = sadd.s32 %s12, 1
      %s20 = ssub.s32 %s12, %s19
      %p21 = scmp.eq.s32.totalorder %s20, 0
      %s23 = sadd.s32 %s22, 1
      %s24 = scalar_select %p21, %s22, %s23
      %p27 = pneg %p21
      %p28 = scmp.eq.s32.totalorder %s12, 2
      %p29 = por %p27, %p28
      %p30 = scmp.ne.s32.totalorder %s22, %s25
      %p31 = scmp.eq.s32.totalorder %s12, 0
      %p32 = por %p30, %p31
      %p33 = scmp.ne.s32.totalorder %s22, %s25
      %p34 = scmp.eq.s32.totalorder %s17, 2
      %p35 = por %p33, %p34
      %p36 = scmp.ne.s32.totalorder %s25, %s26
      %p37 = scmp.eq.s32.totalorder %s17, 0
      %p38 = por %p36, %p37
      %p39 = scmp.ne.s32.totalorder %s25, %s26
      %p40 = scmp.eq.s32.totalorder %s18, 2
      %p41 = por %p39, %p40
      %p43 = scmp.ne.s32.totalorder %s26, %s42
      %p44 = scmp.eq.s32.totalorder %s18, 0
      %p45 = por %p43, %p44
      %s46 = ssub.s32 %s12, %s19
      %p47 = scmp.eq.s32.totalorder %s46, 0
      %s49 = sadd.s32 %s48, 1
      %s50 = scalar_select %p47, %s48, %s49
      %p53 = pneg %p47
      %p54 = scmp.eq.s32.totalorder %s12, 2
      %p55 = por %p53, %p54
      %p56 = scmp.ne.s32.totalorder %s48, %s51
      %p57 = scmp.eq.s32.totalorder %s12, 0
      %p58 = por %p56, %p57
      %p59 = scmp.ne.s32.totalorder %s48, %s51
      %p60 = scmp.eq.s32.totalorder %s17, 2
      %p61 = por %p59, %p60
      %p62 = scmp.ne.s32.totalorder %s51, %s52
      %p63 = scmp.eq.s32.totalorder %s17, 0
      %p64 = por %p62, %p63
      %p65 = scmp.ne.s32.totalorder %s51, %s52
      %p66 = scmp.eq.s32.totalorder %s18, 2
      %p67 = por %p65, %p66
      %p69 = scmp.ne.s32.totalorder %s52, %s68
      %p70 = scmp.eq.s32.totalorder %s18, 0
      %p71 = por %p69, %p70
      %s72 = ssub.s32 %s12, %s19
      %p73 = scmp.eq.s32.totalorder %s72, 0
      %s75 = sadd.s32 %s74, 1
      %s76 = scalar_select %p73, %s74, %s75
      %p79 = pneg %p73
      %p80 = scmp.eq.s32.totalorder %s12, 2
      %p81 = por %p79, %p80
      %p82 = scmp.ne.s32.totalorder %s74, %s77
      %p83 = scmp.eq.s32.totalorder %s12, 0
      %p84 = por %p82, %p83
      %p85 = scmp.ne.s32.totalorder %s74, %s77
      %p86 = scmp.eq.s32.totalorder %s17, 2
      %p87 = por %p85, %p86
      %p88 = scmp.ne.s32.totalorder %s77, %s78
      %p89 = scmp.eq.s32.totalorder %s17, 0
      %p90 = por %p88, %p89
      %p91 = scmp.ne.s32.totalorder %s77, %s78
      %p92 = scmp.eq.s32.totalorder %s18, 2
      %p93 = por %p91, %p92
      %p95 = scmp.ne.s32.totalorder %s78, %s94
      %p96 = scmp.eq.s32.totalorder %s18, 0
      %p97 = por %p95, %p96
      %s98 = ssub.s32 %s12, %s19
      %p99 = scmp.eq.s32.totalorder %s98, 0
      %s101 = sadd.s32 %s100, 1
      %s102 = scalar_select %p99, %s100, %s101
      %p105 = pneg %p99
      %p106 = scmp.eq.s32.totalorder %s12, 2
      %p107 = por %p105, %p106
      %p108 = scmp.ne.s32.totalorder %s100, %s103
      %p109 = scmp.eq.s32.totalorder %s12, 0
      %p110 = por %p108, %p109
      %p111 = scmp.ne.s32.totalorder %s100, %s103
      %p112 = scmp.eq.s32.totalorder %s17, 2
      %p113 = por %p111, %p112
      %p114 = scmp.ne.s32.totalorder %s103, %s104
      %p115 = scmp.eq.s32.totalorder %s17, 0
      %p116 = por %p114, %p115
      %p117 = scmp.ne.s32.totalorder %s103, %s104
      %p118 = scmp.eq.s32.totalorder %s18, 2
      %p119 = por %p117, %p118
      %p121 = scmp.ne.s32.totalorder %s104, %s120
      %p122 = scmp.eq.s32.totalorder %s18, 0
      %p123 = por %p121, %p122
      %s125 = sadd.s32 %s124, 1
      %p128 = scmp.eq.s32.totalorder %s12, 2
      %p129 = scmp.ne.s32.totalorder %s124, %s126
      %p130 = scmp.eq.s32.totalorder %s12, 0
      %p131 = por %p129, %p130
      %p132 = scmp.ne.s32.totalorder %s124, %s126
      %p133 = scmp.eq.s32.totalorder %s17, 2
      %p134 = por %p132, %p133
      %p135 = scmp.ne.s32.totalorder %s126, %s127
      %p136 = scmp.eq.s32.totalorder %s17, 0
      %p137 = por %p135, %p136
      %p138 = scmp.ne.s32.totalorder %s126, %s127
      %p139 = scmp.eq.s32.totalorder %s18, 2
      %p140 = por %p138, %p139
      %p142 = scmp.ne.s32.totalorder %s127, %s141
      %p143 = scmp.eq.s32.totalorder %s18, 0
      %p144 = por %p142, %p143
      %s146 = sadd.s32 %s145, 1
      %p149 = scmp.eq.s32.totalorder %s12, 2
      %p150 = scmp.ne.s32.totalorder %s145, %s147
      %p151 = scmp.eq.s32.totalorder %s12, 0
      %p152 = por %p150, %p151
      %p153 = scmp.ne.s32.totalorder %s145, %s147
      %p154 = scmp.eq.s32.totalorder %s17, 2
      %p155 = por %p153, %p154
      %p156 = scmp.ne.s32.totalorder %s147, %s148
      %p157 = scmp.eq.s32.totalorder %s17, 0
      %p158 = por %p156, %p157
      %p159 = scmp.ne.s32.totalorder %s147, %s148
      %p160 = scmp.eq.s32.totalorder %s18, 2
      %p161 = por %p159, %p160
      %p163 = scmp.ne.s32.totalorder %s148, %s162
      %p164 = scmp.eq.s32.totalorder %s18, 0
      %p165 = por %p163, %p164
      %s166 = ssub.s32 %s12, %s19
      %p167 = scmp.eq.s32.totalorder %s166, 0
      %s169 = sadd.s32 %s168, 1
      %s170 = scalar_select %p167, %s168, %s169
      %p173 = pneg %p167
      %p174 = scmp.eq.s32.totalorder %s12, 2
      %p175 = por %p173, %p174
      %p176 = scmp.ne.s32.totalorder %s168, %s171
      %p177 = scmp.eq.s32.totalorder %s12, 0
      %p178 = por %p176, %p177
      %p179 = scmp.ne.s32.totalorder %s168, %s171
      %p180 = scmp.eq.s32.totalorder %s17, 2
      %p181 = por %p179, %p180
      %p182 = scmp.ne.s32.totalorder %s171, %s172
      %p183 = scmp.eq.s32.totalorder %s17, 0
      %p184 = por %p182, %p183
      %p185 = scmp.ne.s32.totalorder %s171, %s172
      %p186 = scmp.eq.s32.totalorder %s18, 2
      %p187 = por %p185, %p186
      %p189 = scmp.ne.s32.totalorder %s172, %s188
      %p190 = scmp.eq.s32.totalorder %s18, 0
      %p191 = por %p189, %p190
      %p192 = scmp.le.s32.totalorder 1, %s12
      %p193 = scmp.lt.s32.totalorder %s12, 4
      %p194 = pnand %p192, %p193
      %p195 = pneg %p194
      // Predicated region
      $region9: #{net_forward.4} parent=5 // pred_check
        _
      $region10: #{net_forward.4} parent=5 // pred_check_branch
        %197 = sbr.rel (%p194) target = $region12
      $region11: #{net_forward.4} parent=5 // pred_region
        %s198 = ssub.s32 %s12, 1
        // Predicated region
        $region13: #{net_forward.4} parent=11 // pred_check
          %p199 = pneg %p137
        $region14: #{net_forward.4} parent=11 // pred_check_branch
          %201 = sbr.rel (%p199) target = $region16
        $region15: #{net_forward.4} parent=11 // pred_region
          _
        $region16: #{net_forward.4} parent=11 // pred_fallthru
          _
        // Predicated region
        $region17: #{net_forward.4} parent=11 // pred_check
          %p202 = pneg %p158
        $region18: #{net_forward.4} parent=11 // pred_check_branch
          %204 = sbr.rel (%p202) target = $region20
        $region19: #{net_forward.4} parent=11 // pred_region
          _
        $region20: #{net_forward.4} parent=11 // pred_fallthru
          _
      $region12: #{net_forward.4} parent=5 // pred_fallthru
        _
      %p205 = scmp.lt.s32.totalorder %s12, 3
      // Predicated region
      $region21: #{net_forward.4} parent=5 // pred_check
        %p206 = pneg %p205
      $region22: #{net_forward.4} parent=5 // pred_check_branch
        %208 = sbr.rel (%p206) target = $region24
      $region23: #{net_forward.4} parent=5 // pred_region
        // Predicated region
        $region25: #{net_forward.4} parent=23 // pred_check
          %p209 = pneg %p32
        $region26: #{net_forward.4} parent=23 // pred_check_branch
          %211 = sbr.rel (%p209) target = $region28
        $region27: #{net_forward.4} parent=23 // pred_region
          %s212 = smul.u32 64, %s12
          %s213 = ssub.s32 169, %s212
          %p214 = scmp.lt.s32.totalorder %s213, 64
          %s215 = scalar_select %p214, %s213, 64
          %s216 = smul.u32 64, %s215
          %p217 = scmp.lt.s32.totalorder %s212, 168
          %s218 = scalar_select %p217, %s212, 168
          %s219 = smul.addr %s218, 4
          %s220 = scalar_lea.vmem %s0, %s219
          %s221 = smul.u32 64, %s12
          %s222 = ssub.s32 169, %s221
          %p223 = scmp.lt.s32.totalorder %s222, 64
          %s224 = scalar_select %p223, %s222, 64
          %s225 = smul.u32 64, %s224
        $region28: #{net_forward.4} parent=23 // pred_fallthru
          _
        // Predicated region
        $region29: #{net_forward.4} parent=23 // pred_check
          %p226 = pneg %p58
        $region30: #{net_forward.4} parent=23 // pred_check_branch
          %228 = sbr.rel (%p226) target = $region32
        $region31: #{net_forward.4} parent=23 // pred_region
          %s229 = smul.u32 64, %s12
          %s230 = ssub.s32 169, %s229
          %p231 = scmp.lt.s32.totalorder %s230, 64
          %s232 = scalar_select %p231, %s230, 64
          %s233 = smul.u32 64, %s232
          %p234 = scmp.lt.s32.totalorder %s229, 168
          %s235 = scalar_select %p234, %s229, 168
          %s236 = smul.addr %s235, 4
          %s237 = scalar_lea.vmem %s1, %s236
          %s238 = smul.u32 64, %s12
          %s239 = ssub.s32 169, %s238
          %p240 = scmp.lt.s32.totalorder %s239, 64
          %s241 = scalar_select %p240, %s239, 64
          %s242 = smul.u32 64, %s241
        $region32: #{net_forward.4} parent=23 // pred_fallthru
          _
        // Predicated region
        $region33: #{net_forward.4} parent=23 // pred_check
          %p243 = pneg %p84
        $region34: #{net_forward.4} parent=23 // pred_check_branch
          %245 = sbr.rel (%p243) target = $region36
        $region35: #{net_forward.4} parent=23 // pred_region
          %s246 = smul.u32 64, %s12
          %s247 = ssub.s32 169, %s246
          %p248 = scmp.lt.s32.totalorder %s247, 64
          %s249 = scalar_select %p248, %s247, 64
          %s250 = smul.u32 64, %s249
          %p251 = scmp.lt.s32.totalorder %s246, 168
          %s252 = scalar_select %p251, %s246, 168
          %s253 = smul.addr %s252, 4
          %s254 = scalar_lea.vmem %s2, %s253
          %s255 = smul.u32 64, %s12
          %s256 = ssub.s32 169, %s255
          %p257 = scmp.lt.s32.totalorder %s256, 64
          %s258 = scalar_select %p257, %s256, 64
          %s259 = smul.u32 64, %s258
        $region36: #{net_forward.4} parent=23 // pred_fallthru
          _
        // Predicated region
        $region37: #{net_forward.4} parent=23 // pred_check
          %p260 = pneg %p110
        $region38: #{net_forward.4} parent=23 // pred_check_branch
          %262 = sbr.rel (%p260) target = $region40
        $region39: #{net_forward.4} parent=23 // pred_region
          %s263 = smul.u32 64, %s12
          %s264 = ssub.s32 169, %s263
          %p265 = scmp.lt.s32.totalorder %s264, 64
          %s266 = scalar_select %p265, %s264, 64
          %s267 = smul.u32 64, %s266
          %p268 = scmp.lt.s32.totalorder %s263, 168
          %s269 = scalar_select %p268, %s263, 168
          %s270 = smul.addr %s269, 4
          %s271 = scalar_lea.vmem %s3, %s270
          %s272 = smul.u32 64, %s12
          %s273 = ssub.s32 169, %s272
          %p274 = scmp.lt.s32.totalorder %s273, 64
          %s275 = scalar_select %p274, %s273, 64
          %s276 = smul.u32 64, %s275
        $region40: #{net_forward.4} parent=23 // pred_fallthru
          _
      $region24: #{net_forward.4} parent=5 // pred_fallthru
        _
      %p277 = scmp.le.s32.totalorder 1, %s12
      %p278 = scmp.lt.s32.totalorder %s12, 4
      %p279 = pnand %p277, %p278
      %p280 = pneg %p279
      // Predicated region
      $region41: #{net_forward.4} parent=5 // pred_check
        _
      $region42: #{net_forward.4} parent=5 // pred_check_branch
        %282 = sbr.rel (%p279) target = $region44
      $region43: #{net_forward.4} parent=5 // pred_region
        %s283 = ssub.s32 %s12, 1
        %s284 = smul.u32 64, %s17
        %s285 = ssub.s32 169, %s284
        %p286 = scmp.lt.s32.totalorder %s285, 64
        %s287 = scalar_select %p286, %s285, 64
        %s288 = smul.u32 64, %s287
        %p289 = scmp.lt.s32.totalorder %s284, 168
        %s290 = scalar_select %p289, %s284, 168
        %s291 = smul.addr %s290, 4
        %s292 = scalar_lea.vmem %s0, %s291
        %p293 = pneg %p38
        %p294 = pneg %p35
        %s295 = smul.u32 64, %s17
        %s296 = ssub.s32 169, %s295
        %p297 = scmp.lt.s32.totalorder %s296, 64
        %s298 = scalar_select %p297, %s296, 64
        %s299 = smul.u32 64, %s298
        %p300 = scmp.lt.s32.totalorder %s295, 168
        %s301 = scalar_select %p300, %s295, 168
        %s302 = smul.addr %s301, 4
        %s303 = scalar_lea.vmem %s1, %s302
        %p304 = pneg %p64
        %p305 = pneg %p61
        %s306 = smul.u32 64, %s17
        %s307 = ssub.s32 169, %s306
        %p308 = scmp.lt.s32.totalorder %s307, 64
        %s309 = scalar_select %p308, %s307, 64
        %s310 = smul.u32 64, %s309
        %p311 = scmp.lt.s32.totalorder %s306, 168
        %s312 = scalar_select %p311, %s306, 168
        %s313 = smul.addr %s312, 4
        %s314 = scalar_lea.vmem %s2, %s313
        %p315 = pneg %p90
        %p316 = pneg %p87
        %s317 = smul.u32 64, %s17
        %s318 = ssub.s32 169, %s317
        %p319 = scmp.lt.s32.totalorder %s318, 64
        %s320 = scalar_select %p319, %s318, 64
        %s321 = smul.u32 64, %s320
        %p322 = scmp.lt.s32.totalorder %s317, 168
        %s323 = scalar_select %p322, %s317, 168
        %s324 = smul.addr %s323, 4
        %s325 = scalar_lea.vmem %s3, %s324
        %p326 = pneg %p116
        %p327 = pneg %p113
        %p328 = pneg %p137
        %p329 = pneg %p134
        %p330 = pneg %p158
        %p331 = pneg %p155
        %p332 = pneg %p184
        %p333 = pneg %p181
        %s334 = sand.u32 %s171, 1
        %s335 = sand.u32 %s171, 1
        %s336 = smul.addr %s335, 256
        %s337 = scalar_lea.vmem [#allocation2], %s336
        %s338 = smul.u32 64, %s17
        %s339 = ssub.s32 169, %s338
        %p340 = scmp.lt.s32.totalorder %s339, 64
        %s341 = scalar_select %p340, %s339, 64
        %s342 = smul.u32 64, %s341
        %p343 = scmp.lt.s32.totalorder %s338, 168
        %s344 = scalar_select %p343, %s338, 168
        %s345 = smul.addr %s344, 4
        %s346 = scalar_lea.vmem %s0, %s345
        %s347 = smul.u32 64, %s17
        %s348 = ssub.s32 169, %s347
        %p349 = scmp.lt.s32.totalorder %s348, 64
        %s350 = scalar_select %p349, %s348, 64
        %s351 = smul.u32 64, %s350
        %s352 = smul.u32 64, %s17
        %s353 = ssub.s32 169, %s352
        %p354 = scmp.lt.s32.totalorder %s353, 64
        %s355 = scalar_select %p354, %s353, 64
        %s356 = smul.u32 64, %s355
        %p357 = scmp.lt.s32.totalorder %s352, 168
        %s358 = scalar_select %p357, %s352, 168
        %s359 = smul.addr %s358, 4
        %s360 = scalar_lea.vmem %s1, %s359
        %s361 = smul.u32 64, %s17
        %s362 = ssub.s32 169, %s361
        %p363 = scmp.lt.s32.totalorder %s362, 64
        %s364 = scalar_select %p363, %s362, 64
        %s365 = smul.u32 64, %s364
        %s366 = smul.u32 64, %s17
        %s367 = ssub.s32 169, %s366
        %p368 = scmp.lt.s32.totalorder %s367, 64
        %s369 = scalar_select %p368, %s367, 64
        %s370 = smul.u32 64, %s369
        %p371 = scmp.lt.s32.totalorder %s366, 168
        %s372 = scalar_select %p371, %s366, 168
        %s373 = smul.addr %s372, 4
        %s374 = scalar_lea.vmem %s2, %s373
        %s375 = smul.u32 64, %s17
        %s376 = ssub.s32 169, %s375
        %p377 = scmp.lt.s32.totalorder %s376, 64
        %s378 = scalar_select %p377, %s376, 64
        %s379 = smul.u32 64, %s378
        %s380 = smul.u32 64, %s17
        %s381 = ssub.s32 169, %s380
        %p382 = scmp.lt.s32.totalorder %s381, 64
        %s383 = scalar_select %p382, %s381, 64
        %s384 = smul.u32 64, %s383
        %p385 = scmp.lt.s32.totalorder %s380, 168
        %s386 = scalar_select %p385, %s380, 168
        %s387 = smul.addr %s386, 4
        %s388 = scalar_lea.vmem %s3, %s387
        %s389 = smul.u32 64, %s17
        %s390 = ssub.s32 169, %s389
        %p391 = scmp.lt.s32.totalorder %s390, 64
        %s392 = scalar_select %p391, %s390, 64
        %s393 = smul.u32 64, %s392
        %s394 = smul.u32 64, %s17
        %s395 = ssub.s32 169, %s394
        %p396 = scmp.lt.s32.totalorder %s395, 64
        %s397 = scalar_select %p396, %s395, 64
        %s398 = smul.u32 64, %s397
        %v400 = vld [vmem:[%s4] sm:$0xf]
        %v401 = vld [vmem:[%s4 + $0x4] sm:$0xf]
        %v402 = vld [vmem:[%s4 + $0x8] sm:$0xf]
        %v403 = vld [vmem:[%s4 + $0xc] sm:$0x1]
        %v404 = vld [vmem:[%s346] sm:$0xf]
        %v405 = vld [vmem:[%s346 + $0x4] sm:$0xf]
        %v406 = vld [vmem:[%s346 + $0x8] sm:$0xf]
        %v407 = vld [vmem:[%s346 + $0xc] sm:$0xf]
        %v408 = vld [vmem:[%s346 + $0x10] sm:$0xf]
        %v409 = vld [vmem:[%s346 + $0x14] sm:$0xf]
        %v410 = vld [vmem:[%s346 + $0x18] sm:$0xf]
        %v411 = vld [vmem:[%s346 + $0x1c] sm:$0xf]
        %v412 = vld [vmem:[%s346 + $0x20] sm:$0xf]
        %v413 = vld [vmem:[%s346 + $0x24] sm:$0xf]
        %v414 = vld [vmem:[%s346 + $0x28] sm:$0xf]
        %v415 = vld [vmem:[%s346 + $0x2c] sm:$0xf]
        %v416 = vld [vmem:[%s346 + $0x30] sm:$0xf]
        %v417 = vld [vmem:[%s346 + $0x34] sm:$0xf]
        %v418 = vld [vmem:[%s346 + $0x38] sm:$0xf]
        %v419 = vld [vmem:[%s346 + $0x3c] sm:$0xf]
        %v420 = vld [vmem:[%s346 + $0x40] sm:$0xf]
        %v421 = vld [vmem:[%s346 + $0x44] sm:$0xf]
        %v422 = vld [vmem:[%s346 + $0x48] sm:$0xf]
        %v423 = vld [vmem:[%s346 + $0x4c] sm:$0xf]
        %v424 = vld [vmem:[%s346 + $0x50] sm:$0xf]
        %v425 = vld [vmem:[%s346 + $0x54] sm:$0xf]
        %v426 = vld [vmem:[%s346 + $0x58] sm:$0xf]
        %v427 = vld [vmem:[%s346 + $0x5c] sm:$0xf]
        %v428 = vld [vmem:[%s346 + $0x60] sm:$0xf]
        %v429 = vld [vmem:[%s346 + $0x64] sm:$0xf]
        %v430 = vld [vmem:[%s346 + $0x68] sm:$0xf]
        %v431 = vld [vmem:[%s346 + $0x6c] sm:$0xf]
        %v432 = vld [vmem:[%s346 + $0x70] sm:$0xf]
        %v433 = vld [vmem:[%s346 + $0x74] sm:$0xf]
        %v434 = vld [vmem:[%s346 + $0x78] sm:$0xf]
        %v435 = vld [vmem:[%s346 + $0x7c] sm:$0xf]
        %v436 = vld [vmem:[%s346 + $0x80] sm:$0xf]
        %v437 = vld [vmem:[%s346 + $0x84] sm:$0xf]
        %v438 = vld [vmem:[%s346 + $0x88] sm:$0xf]
        %v439 = vld [vmem:[%s346 + $0x8c] sm:$0xf]
        %v440 = vld [vmem:[%s346 + $0x90] sm:$0xf]
        %v441 = vld [vmem:[%s346 + $0x94] sm:$0xf]
        %v442 = vld [vmem:[%s346 + $0x98] sm:$0xf]
        %v443 = vld [vmem:[%s346 + $0x9c] sm:$0xf]
        %v444 = vld [vmem:[%s346 + $0xa0] sm:$0xf]
        %v445 = vld [vmem:[%s346 + $0xa4] sm:$0xf]
        %v446 = vld [vmem:[%s346 + $0xa8] sm:$0xf]
        %v447 = vld [vmem:[%s346 + $0xac] sm:$0xf]
        %v448 = vld [vmem:[%s346 + $0xb0] sm:$0xf]
        %v449 = vld [vmem:[%s346 + $0xb4] sm:$0xf]
        %v450 = vld [vmem:[%s346 + $0xb8] sm:$0xf]
        %v451 = vld [vmem:[%s346 + $0xbc] sm:$0xf]
        %v452 = vld [vmem:[%s346 + $0xc0] sm:$0xf]
        %v453 = vld [vmem:[%s346 + $0xc4] sm:$0xf]
        %v454 = vld [vmem:[%s346 + $0xc8] sm:$0xf]
        %v455 = vld [vmem:[%s346 + $0xcc] sm:$0xf]
        %v456 = vld [vmem:[%s346 + $0xd0] sm:$0xf]
        %v457 = vld [vmem:[%s346 + $0xd4] sm:$0xf]
        %v458 = vld [vmem:[%s346 + $0xd8] sm:$0xf]
        %v459 = vld [vmem:[%s346 + $0xdc] sm:$0xf]
        %v460 = vld [vmem:[%s346 + $0xe0] sm:$0xf]
        %v461 = vld [vmem:[%s346 + $0xe4] sm:$0xf]
        %v462 = vld [vmem:[%s346 + $0xe8] sm:$0xf]
        %v463 = vld [vmem:[%s346 + $0xec] sm:$0xf]
        %v464 = vld [vmem:[%s346 + $0xf0] sm:$0xf]
        %v465 = vld [vmem:[%s346 + $0xf4] sm:$0xf]
        %v466 = vld [vmem:[%s346 + $0xf8] sm:$0xf]
        %v467 = vld [vmem:[%s346 + $0xfc] sm:$0xf]
        %v532 = vunpack.c.l.b16 %v404
        %v533 = vunpack.c.l.b16 %v405
        %v534 = vunpack.c.l.b16 %v406
        %v535 = vunpack.c.l.b16 %v407
        %v536 = vunpack.c.l.b16 %v408
        %v537 = vunpack.c.l.b16 %v409
        %v538 = vunpack.c.l.b16 %v410
        %v539 = vunpack.c.l.b16 %v411
        %v540 = vunpack.c.l.b16 %v412
        %v541 = vunpack.c.l.b16 %v413
        %v542 = vunpack.c.l.b16 %v414
        %v543 = vunpack.c.l.b16 %v415
        %v544 = vunpack.c.l.b16 %v416
        %v545 = vunpack.c.l.b16 %v417
        %v546 = vunpack.c.l.b16 %v418
        %v547 = vunpack.c.l.b16 %v419
        %v548 = vunpack.c.l.b16 %v420
        %v549 = vunpack.c.l.b16 %v421
        %v550 = vunpack.c.l.b16 %v422
        %v551 = vunpack.c.l.b16 %v423
        %v552 = vunpack.c.l.b16 %v424
        %v553 = vunpack.c.l.b16 %v425
        %v554 = vunpack.c.l.b16 %v426
        %v555 = vunpack.c.l.b16 %v427
        %v556 = vunpack.c.l.b16 %v428
        %v557 = vunpack.c.l.b16 %v429
        %v558 = vunpack.c.l.b16 %v430
        %v559 = vunpack.c.l.b16 %v431
        %v560 = vunpack.c.l.b16 %v432
        %v561 = vunpack.c.l.b16 %v433
        %v562 = vunpack.c.l.b16 %v434
        %v563 = vunpack.c.l.b16 %v435
        %v564 = vunpack.c.l.b16 %v436
        %v565 = vunpack.c.l.b16 %v437
        %v566 = vunpack.c.l.b16 %v438
        %v567 = vunpack.c.l.b16 %v439
        %v568 = vunpack.c.l.b16 %v440
        %v569 = vunpack.c.l.b16 %v441
        %v570 = vunpack.c.l.b16 %v442
        %v571 = vunpack.c.l.b16 %v443
        %v572 = vunpack.c.l.b16 %v444
        %v573 = vunpack.c.l.b16 %v445
        %v574 = vunpack.c.l.b16 %v446
        %v575 = vunpack.c.l.b16 %v447
        %v576 = vunpack.c.l.b16 %v448
        %v577 = vunpack.c.l.b16 %v449
        %v578 = vunpack.c.l.b16 %v450
        %v579 = vunpack.c.l.b16 %v451
        %v580 = vunpack.c.l.b16 %v452
        %v581 = vunpack.c.l.b16 %v453
        %v582 = vunpack.c.l.b16 %v454
        %v583 = vunpack.c.l.b16 %v455
        %v584 = vunpack.c.l.b16 %v456
        %v585 = vunpack.c.l.b16 %v457
        %v586 = vunpack.c.l.b16 %v458
        %v587 = vunpack.c.l.b16 %v459
        %v588 = vunpack.c.l.b16 %v460
        %v589 = vunpack.c.l.b16 %v461
        %v590 = vunpack.c.l.b16 %v462
        %v591 = vunpack.c.l.b16 %v463
        %v592 = vunpack.c.l.b16 %v464
        %v593 = vunpack.c.l.b16 %v465
        %v594 = vunpack.c.l.b16 %v466
        %v595 = vunpack.c.l.b16 %v467
        %v596 = vpack.c.b16 %v533, %v532
        %v597 = vpack.c.b16 %v535, %v534
        %v598 = vpack.c.b16 %v537, %v536
        %v599 = vpack.c.b16 %v539, %v538
        %v600 = vpack.c.b16 %v541, %v540
        %v601 = vpack.c.b16 %v543, %v542
        %v602 = vpack.c.b16 %v545, %v544
        %v603 = vpack.c.b16 %v547, %v546
        %v604 = vpack.c.b16 %v549, %v548
        %v605 = vpack.c.b16 %v551, %v550
        %v606 = vpack.c.b16 %v553, %v552
        %v607 = vpack.c.b16 %v555, %v554
        %v608 = vpack.c.b16 %v557, %v556
        %v609 = vpack.c.b16 %v559, %v558
        %v610 = vpack.c.b16 %v561, %v560
        %v611 = vpack.c.b16 %v563, %v562
        %v612 = vpack.c.b16 %v565, %v564
        %v613 = vpack.c.b16 %v567, %v566
        %v614 = vpack.c.b16 %v569, %v568
        %v615 = vpack.c.b16 %v571, %v570
        %v616 = vpack.c.b16 %v573, %v572
        %v617 = vpack.c.b16 %v575, %v574
        %v618 = vpack.c.b16 %v577, %v576
        %v619 = vpack.c.b16 %v579, %v578
        %v620 = vpack.c.b16 %v581, %v580
        %v621 = vpack.c.b16 %v583, %v582
        %v622 = vpack.c.b16 %v585, %v584
        %v623 = vpack.c.b16 %v587, %v586
        %v624 = vpack.c.b16 %v589, %v588
        %v625 = vpack.c.b16 %v591, %v590
        %v626 = vpack.c.b16 %v593, %v592
        %v627 = vpack.c.b16 %v595, %v594
        %v632 = vunpack.c.l.b16 %v400
        %v633 = vunpack.c.l.b16 %v401
        %v634 = vunpack.c.l.b16 %v402
        %v635 = vunpack.c.l.b16 %v403
        %v636 = vpack.c.b16 %v633, %v632
        %v637 = vpack.c.b16 %v635, %v634
        %vm639 = vcmask 203776
        %v641 = vsel %vm639, %v596, 0
        %v644 = vsel %vm639, %v597, 0
        %v647 = vsel %vm639, %v598, 0
        %v650 = vsel %vm639, %v599, 0
        %v653 = vsel %vm639, %v600, 0
        %v656 = vsel %vm639, %v601, 0
        %v659 = vsel %vm639, %v602, 0
        %v662 = vsel %vm639, %v603, 0
        %v665 = vsel %vm639, %v604, 0
        %v668 = vsel %vm639, %v605, 0
        %v671 = vsel %vm639, %v606, 0
        %v674 = vsel %vm639, %v607, 0
        %v677 = vsel %vm639, %v608, 0
        %v680 = vsel %vm639, %v609, 0
        %v683 = vsel %vm639, %v610, 0
        %v686 = vsel %vm639, %v611, 0
        %v689 = vsel %vm639, %v612, 0
        %v692 = vsel %vm639, %v613, 0
        %v695 = vsel %vm639, %v614, 0
        %v698 = vsel %vm639, %v615, 0
        %v701 = vsel %vm639, %v616, 0
        %v704 = vsel %vm639, %v617, 0
        %v707 = vsel %vm639, %v618, 0
        %v710 = vsel %vm639, %v619, 0
        %v713 = vsel %vm639, %v620, 0
        %v716 = vsel %vm639, %v621, 0
        %v719 = vsel %vm639, %v622, 0
        %v722 = vsel %vm639, %v623, 0
        %v725 = vsel %vm639, %v624, 0
        %v728 = vsel %vm639, %v625, 0
        %v731 = vsel %vm639, %v626, 0
        %v734 = vsel %vm639, %v627, 0
        %vm736 = vcmask 1043456
        %vm737 = vcmask 1044480
        %v738 = vsel %vm736, 4294967295, 65535
        %v739 = vsel %vm737, %v738, 0
        %v741 = vand.u32 %v637, %v739
        %743 = vmatprep.subr.bf16.mxu0 0
        %744 = vmatpush1.bf16.msra.mxu0 %v636
        %745 = vmatprep.subr.bf16.mxu0 0
        %746 = vmatpush1.bf16.msra.mxu0 %v741
        %747 = vmatprep.subr.bf16.mxu0 0
        %748 = vmatpush1.bf16.msra.mxu0 0
        %749 = vmatprep.subr.bf16.mxu0 0
        %750 = vmatpush1.bf16.msra.mxu0 0
        %751 = vmatprep.subr.bf16.mxu0 0
        %752 = vmatpush1.bf16.msra.mxu0 0
        %753 = vmatprep.subr.bf16.mxu0 0
        %754 = vmatpush1.bf16.msra.mxu0 0
        %755 = vmatprep.subr.bf16.mxu0 0
        %756 = vmatpush1.bf16.msra.mxu0 0
        %757 = vmatprep.subr.bf16.mxu0 0
        %758 = vmatpush1.bf16.msra.mxu0 0
        %759 = vmatprep.subr.bf16.mxu0 0
        %760 = vmatpush1.bf16.msra.mxu0 0
        %761 = vmatprep.subr.bf16.mxu0 0
        %762 = vmatpush1.bf16.msra.mxu0 0
        %763 = vmatprep.subr.bf16.mxu0 0
        %764 = vmatpush1.bf16.msra.mxu0 0
        %765 = vmatprep.subr.bf16.mxu0 0
        %766 = vmatpush1.bf16.msra.mxu0 0
        %767 = vmatprep.subr.bf16.mxu0 0
        %768 = vmatpush1.bf16.msra.mxu0 0
        %769 = vmatprep.subr.bf16.mxu0 0
        %770 = vmatpush1.bf16.msra.mxu0 0
        %771 = vmatprep.subr.bf16.mxu0 0
        %772 = vmatpush1.bf16.msra.mxu0 0
        %773 = vmatprep.subr.bf16.mxu0 0
        %774 = vmatpush1.bf16.msra.mxu0 0
        %775 = vmatprep.mubr.bf16.mxu0 0
        %776 = vmatmul.mubr.bf16.gmra.mrb[0].mxu0 %v641
        %v777 = vpop.f32.mrb[0].mxu0
        %v778 = vadd.f32 0.0, %v777
        %v779 = vpop.f32.mrb[0].mxu0
        %v780 = vpop.f32.mrb[0].mxu0
        %v781 = vadd.f32 0.0, %v780
        %v782 = vpop.f32.mrb[0].mxu0
        %783 = vmatprep.mubr.bf16.mxu0 0
        %784 = vmatmul.mubr.bf16.gmra.mrb[0].mxu0 %v644
        %v785 = vpop.f32.mrb[0].mxu0
        %v786 = vadd.f32 0.0, %v785
        %v787 = vpop.f32.mrb[0].mxu0
        %v788 = vpop.f32.mrb[0].mxu0
        %v789 = vadd.f32 0.0, %v788
        %v790 = vpop.f32.mrb[0].mxu0
        %791 = vmatprep.mubr.bf16.mxu0 0
        %792 = vmatmul.mubr.bf16.gmra.mrb[0].mxu0 %v647
        %v793 = vpop.f32.mrb[0].mxu0
        %v794 = vadd.f32 0.0, %v793
        %v795 = vpop.f32.mrb[0].mxu0
        %v796 = vpop.f32.mrb[0].mxu0
        %v797 = vadd.f32 0.0, %v796
        %v798 = vpop.f32.mrb[0].mxu0
        %799 = vmatprep.mubr.bf16.mxu0 0
        %800 = vmatmul.mubr.bf16.gmra.mrb[0].mxu0 %v650
        %v801 = vpop.f32.mrb[0].mxu0
        %v802 = vadd.f32 0.0, %v801
        %v803 = vpop.f32.mrb[0].mxu0
        %v804 = vpop.f32.mrb[0].mxu0
        %v805 = vadd.f32 0.0, %v804
        %v806 = vpop.f32.mrb[0].mxu0
        %807 = vmatprep.mubr.bf16.mxu0 0
        %808 = vmatmul.mubr.bf16.gmra.mrb[0].mxu0 %v653
        %v809 = vpop.f32.mrb[0].mxu0
        %v810 = vadd.f32 0.0, %v809
        %v811 = vpop.f32.mrb[0].mxu0
        %v812 = vpop.f32.mrb[0].mxu0
        %v813 = vadd.f32 0.0, %v812
        %v814 = vpop.f32.mrb[0].mxu0
        %815 = vmatprep.mubr.bf16.mxu0 0
        %816 = vmatmul.mubr.bf16.gmra.mrb[0].mxu0 %v656
        %v817 = vpop.f32.mrb[0].mxu0
        %v818 = vadd.f32 0.0, %v817
        %v819 = vpop.f32.mrb[0].mxu0
        %v820 = vpop.f32.mrb[0].mxu0
        %v821 = vadd.f32 0.0, %v820
        %v822 = vpop.f32.mrb[0].mxu0
        %823 = vmatprep.mubr.bf16.mxu0 0
        %824 = vmatmul.mubr.bf16.gmra.mrb[0].mxu0 %v659
        %v825 = vpop.f32.mrb[0].mxu0
        %v826 = vadd.f32 0.0, %v825
        %v827 = vpop.f32.mrb[0].mxu0
        %v828 = vpop.f32.mrb[0].mxu0
        %v829 = vadd.f32 0.0, %v828
        %v830 = vpop.f32.mrb[0].mxu0
        %831 = vmatprep.mubr.bf16.mxu0 0
        %832 = vmatmul.mubr.bf16.gmra.mrb[0].mxu0 %v662
        %v833 = vpop.f32.mrb[0].mxu0
        %v834 = vadd.f32 0.0, %v833
        %v835 = vpop.f32.mrb[0].mxu0
        %v836 = vpop.f32.mrb[0].mxu0
        %v837 = vadd.f32 0.0, %v836
        %v838 = vpop.f32.mrb[0].mxu0
        %839 = vmatprep.mubr.bf16.mxu0 0
        %840 = vmatmul.mubr.bf16.gmra.mrb[0].mxu0 %v665
        %v841 = vpop.f32.mrb[0].mxu0
        %v842 = vadd.f32 0.0, %v841
        %v843 = vpop.f32.mrb[0].mxu0
        %v844 = vpop.f32.mrb[0].mxu0
        %v845 = vadd.f32 0.0, %v844
        %v846 = vpop.f32.mrb[0].mxu0
        %847 = vmatprep.mubr.bf16.mxu0 0
        %848 = vmatmul.mubr.bf16.gmra.mrb[0].mxu0 %v668
        %v849 = vpop.f32.mrb[0].mxu0
        %v850 = vadd.f32 0.0, %v849
        %v851 = vpop.f32.mrb[0].mxu0
        %v852 = vpop.f32.mrb[0].mxu0
        %v853 = vadd.f32 0.0, %v852
        %v854 = vpop.f32.mrb[0].mxu0
        %855 = vmatprep.mubr.bf16.mxu0 0
        %856 = vmatmul.mubr.bf16.gmra.mrb[0].mxu0 %v671
        %v857 = vpop.f32.mrb[0].mxu0
        %v858 = vadd.f32 0.0, %v857
        %v859 = vpop.f32.mrb[0].mxu0
        %v860 = vpop.f32.mrb[0].mxu0
        %v861 = vadd.f32 0.0, %v860
        %v862 = vpop.f32.mrb[0].mxu0
        %863 = vmatprep.mubr.bf16.mxu0 0
        %864 = vmatmul.mubr.bf16.gmra.mrb[0].mxu0 %v674
        %v865 = vpop.f32.mrb[0].mxu0
        %v866 = vadd.f32 0.0, %v865
        %v867 = vpop.f32.mrb[0].mxu0
        %v868 = vpop.f32.mrb[0].mxu0
        %v869 = vadd.f32 0.0, %v868
        %v870 = vpop.f32.mrb[0].mxu0
        %871 = vmatprep.mubr.bf16.mxu0 0
        %872 = vmatmul.mubr.bf16.gmra.mrb[0].mxu0 %v677
        %v873 = vpop.f32.mrb[0].mxu0
        %v874 = vadd.f32 0.0, %v873
        %v875 = vpop.f32.mrb[0].mxu0
        %v876 = vpop.f32.mrb[0].mxu0
        %v877 = vadd.f32 0.0, %v876
        %v878 = vpop.f32.mrb[0].mxu0
        %879 = vmatprep.mubr.bf16.mxu0 0
        %880 = vmatmul.mubr.bf16.gmra.mrb[0].mxu0 %v680
        %v881 = vpop.f32.mrb[0].mxu0
        %v882 = vadd.f32 0.0, %v881
        %v883 = vpop.f32.mrb[0].mxu0
        %v884 = vpop.f32.mrb[0].mxu0
        %v885 = vadd.f32 0.0, %v884
        %v886 = vpop.f32.mrb[0].mxu0
        %887 = vmatprep.mubr.bf16.mxu0 0
        %888 = vmatmul.mubr.bf16.gmra.mrb[0].mxu0 %v683
        %v889 = vpop.f32.mrb[0].mxu0
        %v890 = vadd.f32 0.0, %v889
        %v891 = vpop.f32.mrb[0].mxu0
        %v892 = vpop.f32.mrb[0].mxu0
        %v893 = vadd.f32 0.0, %v892
        %v894 = vpop.f32.mrb[0].mxu0
        %895 = vmatprep.mubr.bf16.mxu0 0
        %896 = vmatmul.mubr.bf16.gmra.mrb[0].mxu0 %v686
        %v897 = vpop.f32.mrb[0].mxu0
        %v898 = vadd.f32 0.0, %v897
        %v899 = vpop.f32.mrb[0].mxu0
        %v900 = vpop.f32.mrb[0].mxu0
        %v901 = vadd.f32 0.0, %v900
        %v902 = vpop.f32.mrb[0].mxu0
        %903 = vmatprep.mubr.bf16.mxu0 0
        %904 = vmatmul.mubr.bf16.gmra.mrb[0].mxu0 %v689
        %v905 = vpop.f32.mrb[0].mxu0
        %v906 = vadd.f32 0.0, %v905
        %v907 = vpop.f32.mrb[0].mxu0
        %v908 = vpop.f32.mrb[0].mxu0
        %v909 = vadd.f32 0.0, %v908
        %v910 = vpop.f32.mrb[0].mxu0
        %911 = vmatprep.mubr.bf16.mxu0 0
        %912 = vmatmul.mubr.bf16.gmra.mrb[0].mxu0 %v692
        %v913 = vpop.f32.mrb[0].mxu0
        %v914 = vadd.f32 0.0, %v913
        %v915 = vpop.f32.mrb[0].mxu0
        %v916 = vpop.f32.mrb[0].mxu0
        %v917 = vadd.f32 0.0, %v916
        %v918 = vpop.f32.mrb[0].mxu0
        %919 = vmatprep.mubr.bf16.mxu0 0
        %920 = vmatmul.mubr.bf16.gmra.mrb[0].mxu0 %v695
        %v921 = vpop.f32.mrb[0].mxu0
        %v922 = vadd.f32 0.0, %v921
        %v923 = vpop.f32.mrb[0].mxu0
        %v924 = vpop.f32.mrb[0].mxu0
        %v925 = vadd.f32 0.0, %v924
        %v926 = vpop.f32.mrb[0].mxu0
        %927 = vmatprep.mubr.bf16.mxu0 0
        %928 = vmatmul.mubr.bf16.gmra.mrb[0].mxu0 %v698
        %v929 = vpop.f32.mrb[0].mxu0
        %v930 = vadd.f32 0.0, %v929
        %v931 = vpop.f32.mrb[0].mxu0
        %v932 = vpop.f32.mrb[0].mxu0
        %v933 = vadd.f32 0.0, %v932
        %v934 = vpop.f32.mrb[0].mxu0
        %935 = vmatprep.mubr.bf16.mxu0 0
        %936 = vmatmul.mubr.bf16.gmra.mrb[0].mxu0 %v701
        %v937 = vpop.f32.mrb[0].mxu0
        %v938 = vadd.f32 0.0, %v937
        %v939 = vpop.f32.mrb[0].mxu0
        %v940 = vpop.f32.mrb[0].mxu0
        %v941 = vadd.f32 0.0, %v940
        %v942 = vpop.f32.mrb[0].mxu0
        %943 = vmatprep.mubr.bf16.mxu0 0
        %944 = vmatmul.mubr.bf16.gmra.mrb[0].mxu0 %v704
        %v945 = vpop.f32.mrb[0].mxu0
        %v946 = vadd.f32 0.0, %v945
        %v947 = vpop.f32.mrb[0].mxu0
        %v948 = vpop.f32.mrb[0].mxu0
        %v949 = vadd.f32 0.0, %v948
        %v950 = vpop.f32.mrb[0].mxu0
        %951 = vmatprep.mubr.bf16.mxu0 0
        %952 = vmatmul.mubr.bf16.gmra.mrb[0].mxu0 %v707
        %v953 = vpop.f32.mrb[0].mxu0
        %v954 = vadd.f32 0.0, %v953
        %v955 = vpop.f32.mrb[0].mxu0
        %v956 = vpop.f32.mrb[0].mxu0
        %v957 = vadd.f32 0.0, %v956
        %v958 = vpop.f32.mrb[0].mxu0
        %959 = vmatprep.mubr.bf16.mxu0 0
        %960 = vmatmul.mubr.bf16.gmra.mrb[0].mxu0 %v710
        %v961 = vpop.f32.mrb[0].mxu0
        %v962 = vadd.f32 0.0, %v961
        %v963 = vpop.f32.mrb[0].mxu0
        %v964 = vpop.f32.mrb[0].mxu0
        %v965 = vadd.f32 0.0, %v964
        %v966 = vpop.f32.mrb[0].mxu0
        %967 = vmatprep.mubr.bf16.mxu0 0
        %968 = vmatmul.mubr.bf16.gmra.mrb[0].mxu0 %v713
        %v969 = vpop.f32.mrb[0].mxu0
        %v970 = vadd.f32 0.0, %v969
        %v971 = vpop.f32.mrb[0].mxu0
        %v972 = vpop.f32.mrb[0].mxu0
        %v973 = vadd.f32 0.0, %v972
        %v974 = vpop.f32.mrb[0].mxu0
        %975 = vmatprep.mubr.bf16.mxu0 0
        %976 = vmatmul.mubr.bf16.gmra.mrb[0].mxu0 %v716
        %v977 = vpop.f32.mrb[0].mxu0
        %v978 = vadd.f32 0.0, %v977
        %v979 = vpop.f32.mrb[0].mxu0
        %v980 = vpop.f32.mrb[0].mxu0
        %v981 = vadd.f32 0.0, %v980
        %v982 = vpop.f32.mrb[0].mxu0
        %983 = vmatprep.mubr.bf16.mxu0 0
        %984 = vmatmul.mubr.bf16.gmra.mrb[0].mxu0 %v719
        %v985 = vpop.f32.mrb[0].mxu0
        %v986 = vadd.f32 0.0, %v985
        %v987 = vpop.f32.mrb[0].mxu0
        %v988 = vpop.f32.mrb[0].mxu0
        %v989 = vadd.f32 0.0, %v988
        %v990 = vpop.f32.mrb[0].mxu0
        %991 = vmatprep.mubr.bf16.mxu0 0
        %992 = vmatmul.mubr.bf16.gmra.mrb[0].mxu0 %v722
        %v993 = vpop.f32.mrb[0].mxu0
        %v994 = vadd.f32 0.0, %v993
        %v995 = vpop.f32.mrb[0].mxu0
        %v996 = vpop.f32.mrb[0].mxu0
        %v997 = vadd.f32 0.0, %v996
        %v998 = vpop.f32.mrb[0].mxu0
        %999 = vmatprep.mubr.bf16.mxu0 0
        %1000 = vmatmul.mubr.bf16.gmra.mrb[0].mxu0 %v725
        %v1001 = vpop.f32.mrb[0].mxu0
        %v1002 = vadd.f32 0.0, %v1001
        %v1003 = vpop.f32.mrb[0].mxu0
        %v1004 = vpop.f32.mrb[0].mxu0
        %v1005 = vadd.f32 0.0, %v1004
        %v1006 = vpop.f32.mrb[0].mxu0
        %1007 = vmatprep.mubr.bf16.mxu0 0
        %1008 = vmatmul.mubr.bf16.gmra.mrb[0].mxu0 %v728
        %v1009 = vpop.f32.mrb[0].mxu0
        %v1010 = vadd.f32 0.0, %v1009
        %v1011 = vpop.f32.mrb[0].mxu0
        %v1012 = vpop.f32.mrb[0].mxu0
        %v1013 = vadd.f32 0.0, %v1012
        %v1014 = vpop.f32.mrb[0].mxu0
        %1015 = vmatprep.mubr.bf16.mxu0 0
        %1016 = vmatmul.mubr.bf16.gmra.mrb[0].mxu0 %v731
        %v1017 = vpop.f32.mrb[0].mxu0
        %v1018 = vadd.f32 0.0, %v1017
        %v1019 = vpop.f32.mrb[0].mxu0
        %v1020 = vpop.f32.mrb[0].mxu0
        %v1021 = vadd.f32 0.0, %v1020
        %v1022 = vpop.f32.mrb[0].mxu0
        %1023 = vmatprep.mubr.bf16.mxu0 0
        %1024 = vmatmul.mubr.bf16.gmra.mrb[0].mxu0 %v734
        %v1025 = vpop.f32.mrb[0].mxu0
        %v1026 = vadd.f32 0.0, %v1025
        %v1027 = vpop.f32.mrb[0].mxu0
        %v1028 = vpop.f32.mrb[0].mxu0
        %v1029 = vadd.f32 0.0, %v1028
        %v1030 = vpop.f32.mrb[0].mxu0
        %1031 = vdwg.mxu0
        %v1032 = vld [vmem:[%s360] sm:$0xf]
        %v1033 = vld [vmem:[%s360 + $0x4] sm:$0xf]
        %v1034 = vld [vmem:[%s360 + $0x8] sm:$0xf]
        %v1035 = vld [vmem:[%s360 + $0xc] sm:$0xf]
        %v1036 = vld [vmem:[%s360 + $0x10] sm:$0xf]
        %v1037 = vld [vmem:[%s360 + $0x14] sm:$0xf]
        %v1038 = vld [vmem:[%s360 + $0x18] sm:$0xf]
        %v1039 = vld [vmem:[%s360 + $0x1c] sm:$0xf]
        %v1040 = vld [vmem:[%s360 + $0x20] sm:$0xf]
        %v1041 = vld [vmem:[%s360 + $0x24] sm:$0xf]
        %v1042 = vld [vmem:[%s360 + $0x28] sm:$0xf]
        %v1043 = vld [vmem:[%s360 + $0x2c] sm:$0xf]
        %v1044 = vld [vmem:[%s360 + $0x30] sm:$0xf]
        %v1045 = vld [vmem:[%s360 + $0x34] sm:$0xf]
        %v1046 = vld [vmem:[%s360 + $0x38] sm:$0xf]
        %v1047 = vld [vmem:[%s360 + $0x3c] sm:$0xf]
        %v1048 = vld [vmem:[%s360 + $0x40] sm:$0xf]
        %v1049 = vld [vmem:[%s360 + $0x44] sm:$0xf]
        %v1050 = vld [vmem:[%s360 + $0x48] sm:$0xf]
        %v1051 = vld [vmem:[%s360 + $0x4c] sm:$0xf]
        %v1052 = vld [vmem:[%s360 + $0x50] sm:$0xf]
        %v1053 = vld [vmem:[%s360 + $0x54] sm:$0xf]
        %v1054 = vld [vmem:[%s360 + $0x58] sm:$0xf]
        %v1055 = vld [vmem:[%s360 + $0x5c] sm:$0xf]
        %v1056 = vld [vmem:[%s360 + $0x60] sm:$0xf]
        %v1057 = vld [vmem:[%s360 + $0x64] sm:$0xf]
        %v1058 = vld [vmem:[%s360 + $0x68] sm:$0xf]
        %v1059 = vld [vmem:[%s360 + $0x6c] sm:$0xf]
        %v1060 = vld [vmem:[%s360 + $0x70] sm:$0xf]
        %v1061 = vld [vmem:[%s360 + $0x74] sm:$0xf]
        %v1062 = vld [vmem:[%s360 + $0x78] sm:$0xf]
        %v1063 = vld [vmem:[%s360 + $0x7c] sm:$0xf]
        %v1064 = vld [vmem:[%s360 + $0x80] sm:$0xf]
        %v1065 = vld [vmem:[%s360 + $0x84] sm:$0xf]
        %v1066 = vld [vmem:[%s360 + $0x88] sm:$0xf]
        %v1067 = vld [vmem:[%s360 + $0x8c] sm:$0xf]
        %v1068 = vld [vmem:[%s360 + $0x90] sm:$0xf]
        %v1069 = vld [vmem:[%s360 + $0x94] sm:$0xf]
        %v1070 = vld [vmem:[%s360 + $0x98] sm:$0xf]
        %v1071 = vld [vmem:[%s360 + $0x9c] sm:$0xf]
        %v1072 = vld [vmem:[%s360 + $0xa0] sm:$0xf]
        %v1073 = vld [vmem:[%s360 + $0xa4] sm:$0xf]
        %v1074 = vld [vmem:[%s360 + $0xa8] sm:$0xf]
        %v1075 = vld [vmem:[%s360 + $0xac] sm:$0xf]
        %v1076 = vld [vmem:[%s360 + $0xb0] sm:$0xf]
        %v1077 = vld [vmem:[%s360 + $0xb4] sm:$0xf]
        %v1078 = vld [vmem:[%s360 + $0xb8] sm:$0xf]
        %v1079 = vld [vmem:[%s360 + $0xbc] sm:$0xf]
        %v1080 = vld [vmem:[%s360 + $0xc0] sm:$0xf]
        %v1081 = vld [vmem:[%s360 + $0xc4] sm:$0xf]
        %v1082 = vld [vmem:[%s360 + $0xc8] sm:$0xf]
        %v1083 = vld [vmem:[%s360 + $0xcc] sm:$0xf]
        %v1084 = vld [vmem:[%s360 + $0xd0] sm:$0xf]
        %v1085 = vld [vmem:[%s360 + $0xd4] sm:$0xf]
        %v1086 = vld [vmem:[%s360 + $0xd8] sm:$0xf]
        %v1087 = vld [vmem:[%s360 + $0xdc] sm:$0xf]
        %v1088 = vld [vmem:[%s360 + $0xe0] sm:$0xf]
        %v1089 = vld [vmem:[%s360 + $0xe4] sm:$0xf]
        %v1090 = vld [vmem:[%s360 + $0xe8] sm:$0xf]
        %v1091 = vld [vmem:[%s360 + $0xec] sm:$0xf]
        %v1092 = vld [vmem:[%s360 + $0xf0] sm:$0xf]
        %v1093 = vld [vmem:[%s360 + $0xf4] sm:$0xf]
        %v1094 = vld [vmem:[%s360 + $0xf8] sm:$0xf]
        %v1095 = vld [vmem:[%s360 + $0xfc] sm:$0xf]
        %v1160 = vunpack.c.l.b16 %v1032
        %v1161 = vunpack.c.l.b16 %v1033
        %v1162 = vunpack.c.l.b16 %v1034
        %v1163 = vunpack.c.l.b16 %v1035
        %v1164 = vunpack.c.l.b16 %v1036
        %v1165 = vunpack.c.l.b16 %v1037
        %v1166 = vunpack.c.l.b16 %v1038
        %v1167 = vunpack.c.l.b16 %v1039
        %v1168 = vunpack.c.l.b16 %v1040
        %v1169 = vunpack.c.l.b16 %v1041
        %v1170 = vunpack.c.l.b16 %v1042
        %v1171 = vunpack.c.l.b16 %v1043
        %v1172 = vunpack.c.l.b16 %v1044
        %v1173 = vunpack.c.l.b16 %v1045
        %v1174 = vunpack.c.l.b16 %v1046
        %v1175 = vunpack.c.l.b16 %v1047
        %v1176 = vunpack.c.l.b16 %v1048
        %v1177 = vunpack.c.l.b16 %v1049
        %v1178 = vunpack.c.l.b16 %v1050
        %v1179 = vunpack.c.l.b16 %v1051
        %v1180 = vunpack.c.l.b16 %v1052
        %v1181 = vunpack.c.l.b16 %v1053
        %v1182 = vunpack.c.l.b16 %v1054
        %v1183 = vunpack.c.l.b16 %v1055
        %v1184 = vunpack.c.l.b16 %v1056
        %v1185 = vunpack.c.l.b16 %v1057
        %v1186 = vunpack.c.l.b16 %v1058
        %v1187 = vunpack.c.l.b16 %v1059
        %v1188 = vunpack.c.l.b16 %v1060
        %v1189 = vunpack.c.l.b16 %v1061
        %v1190 = vunpack.c.l.b16 %v1062
        %v1191 = vunpack.c.l.b16 %v1063
        %v1192 = vunpack.c.l.b16 %v1064
        %v1193 = vunpack.c.l.b16 %v1065
        %v1194 = vunpack.c.l.b16 %v1066
        %v1195 = vunpack.c.l.b16 %v1067
        %v1196 = vunpack.c.l.b16 %v1068
        %v1197 = vunpack.c.l.b16 %v1069
        %v1198 = vunpack.c.l.b16 %v1070
        %v1199 = vunpack.c.l.b16 %v1071
        %v1200 = vunpack.c.l.b16 %v1072
        %v1201 = vunpack.c.l.b16 %v1073
        %v1202 = vunpack.c.l.b16 %v1074
        %v1203 = vunpack.c.l.b16 %v1075
        %v1204 = vunpack.c.l.b16 %v1076
        %v1205 = vunpack.c.l.b16 %v1077
        %v1206 = vunpack.c.l.b16 %v1078
        %v1207 = vunpack.c.l.b16 %v1079
        %v1208 = vunpack.c.l.b16 %v1080
        %v1209 = vunpack.c.l.b16 %v1081
        %v1210 = vunpack.c.l.b16 %v1082
        %v1211 = vunpack.c.l.b16 %v1083
        %v1212 = vunpack.c.l.b16 %v1084
        %v1213 = vunpack.c.l.b16 %v1085
        %v1214 = vunpack.c.l.b16 %v1086
        %v1215 = vunpack.c.l.b16 %v1087
        %v1216 = vunpack.c.l.b16 %v1088
        %v1217 = vunpack.c.l.b16 %v1089
        %v1218 = vunpack.c.l.b16 %v1090
        %v1219 = vunpack.c.l.b16 %v1091
        %v1220 = vunpack.c.l.b16 %v1092
        %v1221 = vunpack.c.l.b16 %v1093
        %v1222 = vunpack.c.l.b16 %v1094
        %v1223 = vunpack.c.l.b16 %v1095
        %v1224 = vpack.c.b16 %v1161, %v1160
        %v1225 = vpack.c.b16 %v1163, %v1162
        %v1226 = vpack.c.b16 %v1165, %v1164
        %v1227 = vpack.c.b16 %v1167, %v1166
        %v1228 = vpack.c.b16 %v1169, %v1168
        %v1229 = vpack.c.b16 %v1171, %v1170
        %v1230 = vpack.c.b16 %v1173, %v1172
        %v1231 = vpack.c.b16 %v1175, %v1174
        %v1232 = vpack.c.b16 %v1177, %v1176
        %v1233 = vpack.c.b16 %v1179, %v1178
        %v1234 = vpack.c.b16 %v1181, %v1180
        %v1235 = vpack.c.b16 %v1183, %v1182
        %v1236 = vpack.c.b16 %v1185, %v1184
        %v1237 = vpack.c.b16 %v1187, %v1186
        %v1238 = vpack.c.b16 %v1189, %v1188
        %v1239 = vpack.c.b16 %v1191, %v1190
        %v1240 = vpack.c.b16 %v1193, %v1192
        %v1241 = vpack.c.b16 %v1195, %v1194
        %v1242 = vpack.c.b16 %v1197, %v1196
        %v1243 = vpack.c.b16 %v1199, %v1198
        %v1244 = vpack.c.b16 %v1201, %v1200
        %v1245 = vpack.c.b16 %v1203, %v1202
        %v1246 = vpack.c.b16 %v1205, %v1204
        %v1247 = vpack.c.b16 %v1207, %v1206
        %v1248 = vpack.c.b16 %v1209, %v1208
        %v1249 = vpack.c.b16 %v1211, %v1210
        %v1250 = vpack.c.b16 %v1213, %v1212
        %v1251 = vpack.c.b16 %v1215, %v1214
        %v1252 = vpack.c.b16 %v1217, %v1216
        %v1253 = vpack.c.b16 %v1219, %v1218
        %v1254 = vpack.c.b16 %v1221, %v1220
        %v1255 = vpack.c.b16 %v1223, %v1222
        %v1257 = vsel %vm639, %v1224, 0
        %v1260 = vsel %vm639, %v1225, 0
        %v1263 = vsel %vm639, %v1226, 0
        %v1266 = vsel %vm639, %v1227, 0
        %v1269 = vsel %vm639, %v1228, 0
        %v1272 = vsel %vm639, %v1229, 0
        %v1275 = vsel %vm639, %v1230, 0
        %v1278 = vsel %vm639, %v1231, 0
        %v1281 = vsel %vm639, %v1232, 0
        %v1284 = vsel %vm639, %v1233, 0
        %v1287 = vsel %vm639, %v1234, 0
        %v1290 = vsel %vm639, %v1235, 0
        %v1293 = vsel %vm639, %v1236, 0
        %v1296 = vsel %vm639, %v1237, 0
        %v1299 = vsel %vm639, %v1238, 0
        %v1302 = vsel %vm639, %v1239, 0
        %v1305 = vsel %vm639, %v1240, 0
        %v1308 = vsel %vm639, %v1241, 0
        %v1311 = vsel %vm639, %v1242, 0
        %v1314 = vsel %vm639, %v1243, 0
        %v1317 = vsel %vm639, %v1244, 0
        %v1320 = vsel %vm639, %v1245, 0
        %v1323 = vsel %vm639, %v1246, 0
        %v1326 = vsel %vm639, %v1247, 0
        %v1329 = vsel %vm639, %v1248, 0
        %v1332 = vsel %vm639, %v1249, 0
        %v1335 = vsel %vm639, %v1250, 0
        %v1338 = vsel %vm639, %v1251, 0
        %v1341 = vsel %vm639, %v1252, 0
        %v1344 = vsel %vm639, %v1253, 0
        %v1347 = vsel %vm639, %v1254, 0
        %v1350 = vsel %vm639, %v1255, 0
        %1352 = vmatprep.subr.bf16.mxu0 0
        %1353 = vmatpush1.bf16.msra.mxu0 %v636
        %1354 = vmatprep.subr.bf16.mxu0 0
        %1355 = vmatpush1.bf16.msra.mxu0 %v741
        %1356 = vmatprep.subr.bf16.mxu0 0
        %1357 = vmatpush1.bf16.msra.mxu0 0
        %1358 = vmatprep.subr.bf16.mxu0 0
        %1359 = vmatpush1.bf16.msra.mxu0 0
        %1360 = vmatprep.subr.bf16.mxu0 0
        %1361 = vmatpush1.bf16.msra.mxu0 0
        %1362 = vmatprep.subr.bf16.mxu0 0
        %1363 = vmatpush1.bf16.msra.mxu0 0
        %1364 = vmatprep.subr.bf16.mxu0 0
        %1365 = vmatpush1.bf16.msra.mxu0 0
        %1366 = vmatprep.subr.bf16.mxu0 0
        %1367 = vmatpush1.bf16.msra.mxu0 0
        %1368 = vmatprep.subr.bf16.mxu0 0
        %1369 = vmatpush1.bf16.msra.mxu0 0
        %1370 = vmatprep.subr.bf16.mxu0 0
        %1371 = vmatpush1.bf16.msra.mxu0 0
        %1372 = vmatprep.subr.bf16.mxu0 0
        %1373 = vmatpush1.bf16.msra.mxu0 0
        %1374 = vmatprep.subr.bf16.mxu0 0
        %1375 = vmatpush1.bf16.msra.mxu0 0
        %1376 = vmatprep.subr.bf16.mxu0 0
        %1377 = vmatpush1.bf16.msra.mxu0 0
        %1378 = vmatprep.subr.bf16.mxu0 0
        %1379 = vmatpush1.bf16.msra.mxu0 0
        %1380 = vmatprep.subr.bf16.mxu0 0
        %1381 = vmatpush1.bf16.msra.mxu0 0
        %1382 = vmatprep.subr.bf16.mxu0 0
        %1383 = vmatpush1.bf16.msra.mxu0 0
        %1384 = vmatprep.mubr.bf16.mxu0 0
        %1385 = vmatmul.mubr.bf16.gmra.mrb[0].mxu0 %v1257
        %v1386 = vpop.f32.mrb[0].mxu0
        %v1387 = vadd.f32 0.0, %v1386
        %v1388 = vpop.f32.mrb[0].mxu0
        %v1389 = vpop.f32.mrb[0].mxu0
        %v1390 = vadd.f32 0.0, %v1389
        %v1391 = vpop.f32.mrb[0].mxu0
        %1392 = vmatprep.mubr.bf16.mxu0 0
        %1393 = vmatmul.mubr.bf16.gmra.mrb[0].mxu0 %v1260
        %v1394 = vpop.f32.mrb[0].mxu0
        %v1395 = vadd.f32 0.0, %v1394
        %v1396 = vpop.f32.mrb[0].mxu0
        %v1397 = vpop.f32.mrb[0].mxu0
        %v1398 = vadd.f32 0.0, %v1397
        %v1399 = vpop.f32.mrb[0].mxu0
        %1400 = vmatprep.mubr.bf16.mxu0 0
        %1401 = vmatmul.mubr.bf16.gmra.mrb[0].mxu0 %v1263
        %v1402 = vpop.f32.mrb[0].mxu0
        %v1403 = vadd.f32 0.0, %v1402
        %v1404 = vpop.f32.mrb[0].mxu0
        %v1405 = vpop.f32.mrb[0].mxu0
        %v1406 = vadd.f32 0.0, %v1405
        %v1407 = vpop.f32.mrb[0].mxu0
        %1408 = vmatprep.mubr.bf16.mxu0 0
        %1409 = vmatmul.mubr.bf16.gmra.mrb[0].mxu0 %v1266
        %v1410 = vpop.f32.mrb[0].mxu0
        %v1411 = vadd.f32 0.0, %v1410
        %v1412 = vpop.f32.mrb[0].mxu0
        %v1413 = vpop.f32.mrb[0].mxu0
        %v1414 = vadd.f32 0.0, %v1413
        %v1415 = vpop.f32.mrb[0].mxu0
        %1416 = vmatprep.mubr.bf16.mxu0 0
        %1417 = vmatmul.mubr.bf16.gmra.mrb[0].mxu0 %v1269
        %v1418 = vpop.f32.mrb[0].mxu0
        %v1419 = vadd.f32 0.0, %v1418
        %v1420 = vpop.f32.mrb[0].mxu0
        %v1421 = vpop.f32.mrb[0].mxu0
        %v1422 = vadd.f32 0.0, %v1421
        %v1423 = vpop.f32.mrb[0].mxu0
        %1424 = vmatprep.mubr.bf16.mxu0 0
        %1425 = vmatmul.mubr.bf16.gmra.mrb[0].mxu0 %v1272
        %v1426 = vpop.f32.mrb[0].mxu0
        %v1427 = vadd.f32 0.0, %v1426
        %v1428 = vpop.f32.mrb[0].mxu0
        %v1429 = vpop.f32.mrb[0].mxu0
        %v1430 = vadd.f32 0.0, %v1429
        %v1431 = vpop.f32.mrb[0].mxu0
        %1432 = vmatprep.mubr.bf16.mxu0 0
        %1433 = vmatmul.mubr.bf16.gmra.mrb[0].mxu0 %v1275
        %v1434 = vpop.f32.mrb[0].mxu0
        %v1435 = vadd.f32 0.0, %v1434
        %v1436 = vpop.f32.mrb[0].mxu0
        %v1437 = vpop.f32.mrb[0].mxu0
        %v1438 = vadd.f32 0.0, %v1437
        %v1439 = vpop.f32.mrb[0].mxu0
        %1440 = vmatprep.mubr.bf16.mxu0 0
        %1441 = vmatmul.mubr.bf16.gmra.mrb[0].mxu0 %v1278
        %v1442 = vpop.f32.mrb[0].mxu0
        %v1443 = vadd.f32 0.0, %v1442
        %v1444 = vpop.f32.mrb[0].mxu0
        %v1445 = vpop.f32.mrb[0].mxu0
        %v1446 = vadd.f32 0.0, %v1445
        %v1447 = vpop.f32.mrb[0].mxu0
        %1448 = vmatprep.mubr.bf16.mxu0 0
        %1449 = vmatmul.mubr.bf16.gmra.mrb[0].mxu0 %v1281
        %v1450 = vpop.f32.mrb[0].mxu0
        %v1451 = vadd.f32 0.0, %v1450
        %v1452 = vpop.f32.mrb[0].mxu0
        %v1453 = vpop.f32.mrb[0].mxu0
        %v1454 = vadd.f32 0.0, %v1453
        %v1455 = vpop.f32.mrb[0].mxu0
        %1456 = vmatprep.mubr.bf16.mxu0 0
        %1457 = vmatmul.mubr.bf16.gmra.mrb[0].mxu0 %v1284
        %v1458 = vpop.f32.mrb[0].mxu0
        %v1459 = vadd.f32 0.0, %v1458
        %v1460 = vpop.f32.mrb[0].mxu0
        %v1461 = vpop.f32.mrb[0].mxu0
        %v1462 = vadd.f32 0.0, %v1461
        %v1463 = vpop.f32.mrb[0].mxu0
        %1464 = vmatprep.mubr.bf16.mxu0 0
        %1465 = vmatmul.mubr.bf16.gmra.mrb[0].mxu0 %v1287
        %v1466 = vpop.f32.mrb[0].mxu0
        %v1467 = vadd.f32 0.0, %v1466
        %v1468 = vpop.f32.mrb[0].mxu0
        %v1469 = vpop.f32.mrb[0].mxu0
        %v1470 = vadd.f32 0.0, %v1469
        %v1471 = vpop.f32.mrb[0].mxu0
        %1472 = vmatprep.mubr.bf16.mxu0 0
        %1473 = vmatmul.mubr.bf16.gmra.mrb[0].mxu0 %v1290
        %v1474 = vpop.f32.mrb[0].mxu0
        %v1475 = vadd.f32 0.0, %v1474
        %v1476 = vpop.f32.mrb[0].mxu0
        %v1477 = vpop.f32.mrb[0].mxu0
        %v1478 = vadd.f32 0.0, %v1477
        %v1479 = vpop.f32.mrb[0].mxu0
        %1480 = vmatprep.mubr.bf16.mxu0 0
        %1481 = vmatmul.mubr.bf16.gmra.mrb[0].mxu0 %v1293
        %v1482 = vpop.f32.mrb[0].mxu0
        %v1483 = vadd.f32 0.0, %v1482
        %v1484 = vpop.f32.mrb[0].mxu0
        %v1485 = vpop.f32.mrb[0].mxu0
        %v1486 = vadd.f32 0.0, %v1485
        %v1487 = vpop.f32.mrb[0].mxu0
        %1488 = vmatprep.mubr.bf16.mxu0 0
        %1489 = vmatmul.mubr.bf16.gmra.mrb[0].mxu0 %v1296
        %v1490 = vpop.f32.mrb[0].mxu0
        %v1491 = vadd.f32 0.0, %v1490
        %v1492 = vpop.f32.mrb[0].mxu0
        %v1493 = vpop.f32.mrb[0].mxu0
        %v1494 = vadd.f32 0.0, %v1493
        %v1495 = vpop.f32.mrb[0].mxu0
        %1496 = vmatprep.mubr.bf16.mxu0 0
        %1497 = vmatmul.mubr.bf16.gmra.mrb[0].mxu0 %v1299
        %v1498 = vpop.f32.mrb[0].mxu0
        %v1499 = vadd.f32 0.0, %v1498
        %v1500 = vpop.f32.mrb[0].mxu0
        %v1501 = vpop.f32.mrb[0].mxu0
        %v1502 = vadd.f32 0.0, %v1501
        %v1503 = vpop.f32.mrb[0].mxu0
        %1504 = vmatprep.mubr.bf16.mxu0 0
        %1505 = vmatmul.mubr.bf16.gmra.mrb[0].mxu0 %v1302
        %v1506 = vpop.f32.mrb[0].mxu0
        %v1507 = vadd.f32 0.0, %v1506
        %v1508 = vpop.f32.mrb[0].mxu0
        %v1509 = vpop.f32.mrb[0].mxu0
        %v1510 = vadd.f32 0.0, %v1509
        %v1511 = vpop.f32.mrb[0].mxu0
        %1512 = vmatprep.mubr.bf16.mxu0 0
        %1513 = vmatmul.mubr.bf16.gmra.mrb[0].mxu0 %v1305
        %v1514 = vpop.f32.mrb[0].mxu0
        %v1515 = vadd.f32 0.0, %v1514
        %v1516 = vpop.f32.mrb[0].mxu0
        %v1517 = vpop.f32.mrb[0].mxu0
        %v1518 = vadd.f32 0.0, %v1517
        %v1519 = vpop.f32.mrb[0].mxu0
        %1520 = vmatprep.mubr.bf16.mxu0 0
        %1521 = vmatmul.mubr.bf16.gmra.mrb[0].mxu0 %v1308
        %v1522 = vpop.f32.mrb[0].mxu0
        %v1523 = vadd.f32 0.0, %v1522
        %v1524 = vpop.f32.mrb[0].mxu0
        %v1525 = vpop.f32.mrb[0].mxu0
        %v1526 = vadd.f32 0.0, %v1525
        %v1527 = vpop.f32.mrb[0].mxu0
        %1528 = vmatprep.mubr.bf16.mxu0 0
        %1529 = vmatmul.mubr.bf16.gmra.mrb[0].mxu0 %v1311
        %v1530 = vpop.f32.mrb[0].mxu0
        %v1531 = vadd.f32 0.0, %v1530
        %v1532 = vpop.f32.mrb[0].mxu0
        %v1533 = vpop.f32.mrb[0].mxu0
        %v1534 = vadd.f32 0.0, %v1533
        %v1535 = vpop.f32.mrb[0].mxu0
        %1536 = vmatprep.mubr.bf16.mxu0 0
        %1537 = vmatmul.mubr.bf16.gmra.mrb[0].mxu0 %v1314
        %v1538 = vpop.f32.mrb[0].mxu0
        %v1539 = vadd.f32 0.0, %v1538
        %v1540 = vpop.f32.mrb[0].mxu0
        %v1541 = vpop.f32.mrb[0].mxu0
        %v1542 = vadd.f32 0.0, %v1541
        %v1543 = vpop.f32.mrb[0].mxu0
        %1544 = vmatprep.mubr.bf16.mxu0 0
        %1545 = vmatmul.mubr.bf16.gmra.mrb[0].mxu0 %v1317
        %v1546 = vpop.f32.mrb[0].mxu0
        %v1547 = vadd.f32 0.0, %v1546
        %v1548 = vpop.f32.mrb[0].mxu0
        %v1549 = vpop.f32.mrb[0].mxu0
        %v1550 = vadd.f32 0.0, %v1549
        %v1551 = vpop.f32.mrb[0].mxu0
        %1552 = vmatprep.mubr.bf16.mxu0 0
        %1553 = vmatmul.mubr.bf16.gmra.mrb[0].mxu0 %v1320
        %v1554 = vpop.f32.mrb[0].mxu0
        %v1555 = vadd.f32 0.0, %v1554
        %v1556 = vpop.f32.mrb[0].mxu0
        %v1557 = vpop.f32.mrb[0].mxu0
        %v1558 = vadd.f32 0.0, %v1557
        %v1559 = vpop.f32.mrb[0].mxu0
        %1560 = vmatprep.mubr.bf16.mxu0 0
        %1561 = vmatmul.mubr.bf16.gmra.mrb[0].mxu0 %v1323
        %v1562 = vpop.f32.mrb[0].mxu0
        %v1563 = vadd.f32 0.0, %v1562
        %v1564 = vpop.f32.mrb[0].mxu0
        %v1565 = vpop.f32.mrb[0].mxu0
        %v1566 = vadd.f32 0.0, %v1565
        %v1567 = vpop.f32.mrb[0].mxu0
        %1568 = vmatprep.mubr.bf16.mxu0 0
        %1569 = vmatmul.mubr.bf16.gmra.mrb[0].mxu0 %v1326
        %v1570 = vpop.f32.mrb[0].mxu0
        %v1571 = vadd.f32 0.0, %v1570
        %v1572 = vpop.f32.mrb[0].mxu0
        %v1573 = vpop.f32.mrb[0].mxu0
        %v1574 = vadd.f32 0.0, %v1573
        %v1575 = vpop.f32.mrb[0].mxu0
        %1576 = vmatprep.mubr.bf16.mxu0 0
        %1577 = vmatmul.mubr.bf16.gmra.mrb[0].mxu0 %v1329
        %v1578 = vpop.f32.mrb[0].mxu0
        %v1579 = vadd.f32 0.0, %v1578
        %v1580 = vpop.f32.mrb[0].mxu0
        %v1581 = vpop.f32.mrb[0].mxu0
        %v1582 = vadd.f32 0.0, %v1581
        %v1583 = vpop.f32.mrb[0].mxu0
        %1584 = vmatprep.mubr.bf16.mxu0 0
        %1585 = vmatmul.mubr.bf16.gmra.mrb[0].mxu0 %v1332
        %v1586 = vpop.f32.mrb[0].mxu0
        %v1587 = vadd.f32 0.0, %v1586
        %v1588 = vpop.f32.mrb[0].mxu0
        %v1589 = vpop.f32.mrb[0].mxu0
        %v1590 = vadd.f32 0.0, %v1589
        %v1591 = vpop.f32.mrb[0].mxu0
        %1592 = vmatprep.mubr.bf16.mxu0 0
        %1593 = vmatmul.mubr.bf16.gmra.mrb[0].mxu0 %v1335
        %v1594 = vpop.f32.mrb[0].mxu0
        %v1595 = vadd.f32 0.0, %v1594
        %v1596 = vpop.f32.mrb[0].mxu0
        %v1597 = vpop.f32.mrb[0].mxu0
        %v1598 = vadd.f32 0.0, %v1597
        %v1599 = vpop.f32.mrb[0].mxu0
        %1600 = vmatprep.mubr.bf16.mxu0 0
        %1601 = vmatmul.mubr.bf16.gmra.mrb[0].mxu0 %v1338
        %v1602 = vpop.f32.mrb[0].mxu0
        %v1603 = vadd.f32 0.0, %v1602
        %v1604 = vpop.f32.mrb[0].mxu0
        %v1605 = vpop.f32.mrb[0].mxu0
        %v1606 = vadd.f32 0.0, %v1605
        %v1607 = vpop.f32.mrb[0].mxu0
        %1608 = vmatprep.mubr.bf16.mxu0 0
        %1609 = vmatmul.mubr.bf16.gmra.mrb[0].mxu0 %v1341
        %v1610 = vpop.f32.mrb[0].mxu0
        %v1611 = vadd.f32 0.0, %v1610
        %v1612 = vpop.f32.mrb[0].mxu0
        %v1613 = vpop.f32.mrb[0].mxu0
        %v1614 = vadd.f32 0.0, %v1613
        %v1615 = vpop.f32.mrb[0].mxu0
        %1616 = vmatprep.mubr.bf16.mxu0 0
        %1617 = vmatmul.mubr.bf16.gmra.mrb[0].mxu0 %v1344
        %v1618 = vpop.f32.mrb[0].mxu0
        %v1619 = vadd.f32 0.0, %v1618
        %v1620 = vpop.f32.mrb[0].mxu0
        %v1621 = vpop.f32.mrb[0].mxu0
        %v1622 = vadd.f32 0.0, %v1621
        %v1623 = vpop.f32.mrb[0].mxu0
        %1624 = vmatprep.mubr.bf16.mxu0 0
        %1625 = vmatmul.mubr.bf16.gmra.mrb[0].mxu0 %v1347
        %v1626 = vpop.f32.mrb[0].mxu0
        %v1627 = vadd.f32 0.0, %v1626
        %v1628 = vpop.f32.mrb[0].mxu0
        %v1629 = vpop.f32.mrb[0].mxu0
        %v1630 = vadd.f32 0.0, %v1629
        %v1631 = vpop.f32.mrb[0].mxu0
        %1632 = vmatprep.mubr.bf16.mxu0 0
        %1633 = vmatmul.mubr.bf16.gmra.mrb[0].mxu0 %v1350
        %v1634 = vpop.f32.mrb[0].mxu0
        %v1635 = vadd.f32 0.0, %v1634
        %v1636 = vpop.f32.mrb[0].mxu0
        %v1637 = vpop.f32.mrb[0].mxu0
        %v1638 = vadd.f32 0.0, %v1637
        %v1639 = vpop.f32.mrb[0].mxu0
        %1640 = vdwg.mxu0
        %v1641 = vld [vmem:[%s374] sm:$0xf]
        %v1642 = vld [vmem:[%s374 + $0x4] sm:$0xf]
        %v1643 = vld [vmem:[%s374 + $0x8] sm:$0xf]
        %v1644 = vld [vmem:[%s374 + $0xc] sm:$0xf]
        %v1645 = vld [vmem:[%s374 + $0x10] sm:$0xf]
        %v1646 = vld [vmem:[%s374 + $0x14] sm:$0xf]
        %v1647 = vld [vmem:[%s374 + $0x18] sm:$0xf]
        %v1648 = vld [vmem:[%s374 + $0x1c] sm:$0xf]
        %v1649 = vld [vmem:[%s374 + $0x20] sm:$0xf]
        %v1650 = vld [vmem:[%s374 + $0x24] sm:$0xf]
        %v1651 = vld [vmem:[%s374 + $0x28] sm:$0xf]
        %v1652 = vld [vmem:[%s374 + $0x2c] sm:$0xf]
        %v1653 = vld [vmem:[%s374 + $0x30] sm:$0xf]
        %v1654 = vld [vmem:[%s374 + $0x34] sm:$0xf]
        %v1655 = vld [vmem:[%s374 + $0x38] sm:$0xf]
        %v1656 = vld [vmem:[%s374 + $0x3c] sm:$0xf]
        %v1657 = vld [vmem:[%s374 + $0x40] sm:$0xf]
        %v1658 = vld [vmem:[%s374 + $0x44] sm:$0xf]
        %v1659 = vld [vmem:[%s374 + $0x48] sm:$0xf]
        %v1660 = vld [vmem:[%s374 + $0x4c] sm:$0xf]
        %v1661 = vld [vmem:[%s374 + $0x50] sm:$0xf]
        %v1662 = vld [vmem:[%s374 + $0x54] sm:$0xf]
        %v1663 = vld [vmem:[%s374 + $0x58] sm:$0xf]
        %v1664 = vld [vmem:[%s374 + $0x5c] sm:$0xf]
        %v1665 = vld [vmem:[%s374 + $0x60] sm:$0xf]
        %v1666 = vld [vmem:[%s374 + $0x64] sm:$0xf]
        %v1667 = vld [vmem:[%s374 + $0x68] sm:$0xf]
        %v1668 = vld [vmem:[%s374 + $0x6c] sm:$0xf]
        %v1669 = vld [vmem:[%s374 + $0x70] sm:$0xf]
        %v1670 = vld [vmem:[%s374 + $0x74] sm:$0xf]
        %v1671 = vld [vmem:[%s374 + $0x78] sm:$0xf]
        %v1672 = vld [vmem:[%s374 + $0x7c] sm:$0xf]
        %v1673 = vld [vmem:[%s374 + $0x80] sm:$0xf]
        %v1674 = vld [vmem:[%s374 + $0x84] sm:$0xf]
        %v1675 = vld [vmem:[%s374 + $0x88] sm:$0xf]
        %v1676 = vld [vmem:[%s374 + $0x8c] sm:$0xf]
        %v1677 = vld [vmem:[%s374 + $0x90] sm:$0xf]
        %v1678 = vld [vmem:[%s374 + $0x94] sm:$0xf]
        %v1679 = vld [vmem:[%s374 + $0x98] sm:$0xf]
        %v1680 = vld [vmem:[%s374 + $0x9c] sm:$0xf]
        %v1681 = vld [vmem:[%s374 + $0xa0] sm:$0xf]
        %v1682 = vld [vmem:[%s374 + $0xa4] sm:$0xf]
        %v1683 = vld [vmem:[%s374 + $0xa8] sm:$0xf]
        %v1684 = vld [vmem:[%s374 + $0xac] sm:$0xf]
        %v1685 = vld [vmem:[%s374 + $0xb0] sm:$0xf]
        %v1686 = vld [vmem:[%s374 + $0xb4] sm:$0xf]
        %v1687 = vld [vmem:[%s374 + $0xb8] sm:$0xf]
        %v1688 = vld [vmem:[%s374 + $0xbc] sm:$0xf]
        %v1689 = vld [vmem:[%s374 + $0xc0] sm:$0xf]
        %v1690 = vld [vmem:[%s374 + $0xc4] sm:$0xf]
        %v1691 = vld [vmem:[%s374 + $0xc8] sm:$0xf]
        %v1692 = vld [vmem:[%s374 + $0xcc] sm:$0xf]
        %v1693 = vld [vmem:[%s374 + $0xd0] sm:$0xf]
        %v1694 = vld [vmem:[%s374 + $0xd4] sm:$0xf]
        %v1695 = vld [vmem:[%s374 + $0xd8] sm:$0xf]
        %v1696 = vld [vmem:[%s374 + $0xdc] sm:$0xf]
        %v1697 = vld [vmem:[%s374 + $0xe0] sm:$0xf]
        %v1698 = vld [vmem:[%s374 + $0xe4] sm:$0xf]
        %v1699 = vld [vmem:[%s374 + $0xe8] sm:$0xf]
        %v1700 = vld [vmem:[%s374 + $0xec] sm:$0xf]
        %v1701 = vld [vmem:[%s374 + $0xf0] sm:$0xf]
        %v1702 = vld [vmem:[%s374 + $0xf4] sm:$0xf]
        %v1703 = vld [vmem:[%s374 + $0xf8] sm:$0xf]
        %v1704 = vld [vmem:[%s374 + $0xfc] sm:$0xf]
        %v1769 = vunpack.c.l.b16 %v1641
        %v1770 = vunpack.c.l.b16 %v1642
        %v1771 = vunpack.c.l.b16 %v1643
        %v1772 = vunpack.c.l.b16 %v1644
        %v1773 = vunpack.c.l.b16 %v1645
        %v1774 = vunpack.c.l.b16 %v1646
        %v1775 = vunpack.c.l.b16 %v1647
        %v1776 = vunpack.c.l.b16 %v1648
        %v1777 = vunpack.c.l.b16 %v1649
        %v1778 = vunpack.c.l.b16 %v1650
        %v1779 = vunpack.c.l.b16 %v1651
        %v1780 = vunpack.c.l.b16 %v1652
        %v1781 = vunpack.c.l.b16 %v1653
        %v1782 = vunpack.c.l.b16 %v1654
        %v1783 = vunpack.c.l.b16 %v1655
        %v1784 = vunpack.c.l.b16 %v1656
        %v1785 = vunpack.c.l.b16 %v1657
        %v1786 = vunpack.c.l.b16 %v1658
        %v1787 = vunpack.c.l.b16 %v1659
        %v1788 = vunpack.c.l.b16 %v1660
        %v1789 = vunpack.c.l.b16 %v1661
        %v1790 = vunpack.c.l.b16 %v1662
        %v1791 = vunpack.c.l.b16 %v1663
        %v1792 = vunpack.c.l.b16 %v1664
        %v1793 = vunpack.c.l.b16 %v1665
        %v1794 = vunpack.c.l.b16 %v1666
        %v1795 = vunpack.c.l.b16 %v1667
        %v1796 = vunpack.c.l.b16 %v1668
        %v1797 = vunpack.c.l.b16 %v1669
        %v1798 = vunpack.c.l.b16 %v1670
        %v1799 = vunpack.c.l.b16 %v1671
        %v1800 = vunpack.c.l.b16 %v1672
        %v1801 = vunpack.c.l.b16 %v1673
        %v1802 = vunpack.c.l.b16 %v1674
        %v1803 = vunpack.c.l.b16 %v1675
        %v1804 = vunpack.c.l.b16 %v1676
        %v1805 = vunpack.c.l.b16 %v1677
        %v1806 = vunpack.c.l.b16 %v1678
        %v1807 = vunpack.c.l.b16 %v1679
        %v1808 = vunpack.c.l.b16 %v1680
        %v1809 = vunpack.c.l.b16 %v1681
        %v1810 = vunpack.c.l.b16 %v1682
        %v1811 = vunpack.c.l.b16 %v1683
        %v1812 = vunpack.c.l.b16 %v1684
        %v1813 = vunpack.c.l.b16 %v1685
        %v1814 = vunpack.c.l.b16 %v1686
        %v1815 = vunpack.c.l.b16 %v1687
        %v1816 = vunpack.c.l.b16 %v1688
        %v1817 = vunpack.c.l.b16 %v1689
        %v1818 = vunpack.c.l.b16 %v1690
        %v1819 = vunpack.c.l.b16 %v1691
        %v1820 = vunpack.c.l.b16 %v1692
        %v1821 = vunpack.c.l.b16 %v1693
        %v1822 = vunpack.c.l.b16 %v1694
        %v1823 = vunpack.c.l.b16 %v1695
        %v1824 = vunpack.c.l.b16 %v1696
        %v1825 = vunpack.c.l.b16 %v1697
        %v1826 = vunpack.c.l.b16 %v1698
        %v1827 = vunpack.c.l.b16 %v1699
        %v1828 = vunpack.c.l.b16 %v1700
        %v1829 = vunpack.c.l.b16 %v1701
        %v1830 = vunpack.c.l.b16 %v1702
        %v1831 = vunpack.c.l.b16 %v1703
        %v1832 = vunpack.c.l.b16 %v1704
        %v1833 = vpack.c.b16 %v1770, %v1769
        %v1834 = vpack.c.b16 %v1772, %v1771
        %v1835 = vpack.c.b16 %v1774, %v1773
        %v1836 = vpack.c.b16 %v1776, %v1775
        %v1837 = vpack.c.b16 %v1778, %v1777
        %v1838 = vpack.c.b16 %v1780, %v1779
        %v1839 = vpack.c.b16 %v1782, %v1781
        %v1840 = vpack.c.b16 %v1784, %v1783
        %v1841 = vpack.c.b16 %v1786, %v1785
        %v1842 = vpack.c.b16 %v1788, %v1787
        %v1843 = vpack.c.b16 %v1790, %v1789
        %v1844 = vpack.c.b16 %v1792, %v1791
        %v1845 = vpack.c.b16 %v1794, %v1793
        %v1846 = vpack.c.b16 %v1796, %v1795
        %v1847 = vpack.c.b16 %v1798, %v1797
        %v1848 = vpack.c.b16 %v1800, %v1799
        %v1849 = vpack.c.b16 %v1802, %v1801
        %v1850 = vpack.c.b16 %v1804, %v1803
        %v1851 = vpack.c.b16 %v1806, %v1805
        %v1852 = vpack.c.b16 %v1808, %v1807
        %v1853 = vpack.c.b16 %v1810, %v1809
        %v1854 = vpack.c.b16 %v1812, %v1811
        %v1855 = vpack.c.b16 %v1814, %v1813
        %v1856 = vpack.c.b16 %v1816, %v1815
        %v1857 = vpack.c.b16 %v1818, %v1817
        %v1858 = vpack.c.b16 %v1820, %v1819
        %v1859 = vpack.c.b16 %v1822, %v1821
        %v1860 = vpack.c.b16 %v1824, %v1823
        %v1861 = vpack.c.b16 %v1826, %v1825
        %v1862 = vpack.c.b16 %v1828, %v1827
        %v1863 = vpack.c.b16 %v1830, %v1829
        %v1864 = vpack.c.b16 %v1832, %v1831
        %v1866 = vsel %vm639, %v1833, 0
        %v1869 = vsel %vm639, %v1834, 0
        %v1872 = vsel %vm639, %v1835, 0
        %v1875 = vsel %vm639, %v1836, 0
        %v1878 = vsel %vm639, %v1837, 0
        %v1881 = vsel %vm639, %v1838, 0
        %v1884 = vsel %vm639, %v1839, 0
        %v1887 = vsel %vm639, %v1840, 0
        %v1890 = vsel %vm639, %v1841, 0
        %v1893 = vsel %vm639, %v1842, 0
        %v1896 = vsel %vm639, %v1843, 0
        %v1899 = vsel %vm639, %v1844, 0
        %v1902 = vsel %vm639, %v1845, 0
        %v1905 = vsel %vm639, %v1846, 0
        %v1908 = vsel %vm639, %v1847, 0
        %v1911 = vsel %vm639, %v1848, 0
        %v1914 = vsel %vm639, %v1849, 0
        %v1917 = vsel %vm639, %v1850, 0
        %v1920 = vsel %vm639, %v1851, 0
        %v1923 = vsel %vm639, %v1852, 0
        %v1926 = vsel %vm639, %v1853, 0
        %v1929 = vsel %vm639, %v1854, 0
        %v1932 = vsel %vm639, %v1855, 0
        %v1935 = vsel %vm639, %v1856, 0
        %v1938 = vsel %vm639, %v1857, 0
        %v1941 = vsel %vm639, %v1858, 0
        %v1944 = vsel %vm639, %v1859, 0
        %v1947 = vsel %vm639, %v1860, 0
        %v1950 = vsel %vm639, %v1861, 0
        %v1953 = vsel %vm639, %v1862, 0
        %v1956 = vsel %vm639, %v1863, 0
        %v1959 = vsel %vm639, %v1864, 0
        %1961 = vmatprep.subr.bf16.mxu0 0
        %1962 = vmatpush1.bf16.msra.mxu0 %v636
        %1963 = vmatprep.subr.bf16.mxu0 0
        %1964 = vmatpush1.bf16.msra.mxu0 %v741
        %1965 = vmatprep.subr.bf16.mxu0 0
        %1966 = vmatpush1.bf16.msra.mxu0 0
        %1967 = vmatprep.subr.bf16.mxu0 0
        %1968 = vmatpush1.bf16.msra.mxu0 0
        %1969 = vmatprep.subr.bf16.mxu0 0
        %1970 = vmatpush1.bf16.msra.mxu0 0
        %1971 = vmatprep.subr.bf16.mxu0 0
        %1972 = vmatpush1.bf16.msra.mxu0 0
        %1973 = vmatprep.subr.bf16.mxu0 0
        %1974 = vmatpush1.bf16.msra.mxu0 0
        %1975 = vmatprep.subr.bf16.mxu0 0
        %1976 = vmatpush1.bf16.msra.mxu0 0
        %1977 = vmatprep.subr.bf16.mxu0 0
        %1978 = vmatpush1.bf16.msra.mxu0 0
        %1979 = vmatprep.subr.bf16.mxu0 0
        %1980 = vmatpush1.bf16.msra.mxu0 0
        %1981 = vmatprep.subr.bf16.mxu0 0
        %1982 = vmatpush1.bf16.msra.mxu0 0
        %1983 = vmatprep.subr.bf16.mxu0 0
        %1984 = vmatpush1.bf16.msra.mxu0 0
        %1985 = vmatprep.subr.bf16.mxu0 0
        %1986 = vmatpush1.bf16.msra.mxu0 0
        %1987 = vmatprep.subr.bf16.mxu0 0
        %1988 = vmatpush1.bf16.msra.mxu0 0
        %1989 = vmatprep.subr.bf16.mxu0 0
        %1990 = vmatpush1.bf16.msra.mxu0 0
        %1991 = vmatprep.subr.bf16.mxu0 0
        %1992 = vmatpush1.bf16.msra.mxu0 0
        %1993 = vmatprep.mubr.bf16.mxu0 0
        %1994 = vmatmul.mubr.bf16.gmra.mrb[0].mxu0 %v1866
        %v1995 = vpop.f32.mrb[0].mxu0
        %v1996 = vadd.f32 0.0, %v1995
        %v1997 = vpop.f32.mrb[0].mxu0
        %v1998 = vpop.f32.mrb[0].mxu0
        %v1999 = vadd.f32 0.0, %v1998
        %v2000 = vpop.f32.mrb[0].mxu0
        %2001 = vmatprep.mubr.bf16.mxu0 0
        %2002 = vmatmul.mubr.bf16.gmra.mrb[0].mxu0 %v1869
        %v2003 = vpop.f32.mrb[0].mxu0
        %v2004 = vadd.f32 0.0, %v2003
        %v2005 = vpop.f32.mrb[0].mxu0
        %v2006 = vpop.f32.mrb[0].mxu0
        %v2007 = vadd.f32 0.0, %v2006
        %v2008 = vpop.f32.mrb[0].mxu0
        %2009 = vmatprep.mubr.bf16.mxu0 0
        %2010 = vmatmul.mubr.bf16.gmra.mrb[0].mxu0 %v1872
        %v2011 = vpop.f32.mrb[0].mxu0
        %v2012 = vadd.f32 0.0, %v2011
        %v2013 = vpop.f32.mrb[0].mxu0
        %v2014 = vpop.f32.mrb[0].mxu0
        %v2015 = vadd.f32 0.0, %v2014
        %v2016 = vpop.f32.mrb[0].mxu0
        %2017 = vmatprep.mubr.bf16.mxu0 0
        %2018 = vmatmul.mubr.bf16.gmra.mrb[0].mxu0 %v1875
        %v2019 = vpop.f32.mrb[0].mxu0
        %v2020 = vadd.f32 0.0, %v2019
        %v2021 = vpop.f32.mrb[0].mxu0
        %v2022 = vpop.f32.mrb[0].mxu0
        %v2023 = vadd.f32 0.0, %v2022
        %v2024 = vpop.f32.mrb[0].mxu0
        %2025 = vmatprep.mubr.bf16.mxu0 0
        %2026 = vmatmul.mubr.bf16.gmra.mrb[0].mxu0 %v1878
        %v2027 = vpop.f32.mrb[0].mxu0
        %v2028 = vadd.f32 0.0, %v2027
        %v2029 = vpop.f32.mrb[0].mxu0
        %v2030 = vpop.f32.mrb[0].mxu0
        %v2031 = vadd.f32 0.0, %v2030
        %v2032 = vpop.f32.mrb[0].mxu0
        %2033 = vmatprep.mubr.bf16.mxu0 0
        %2034 = vmatmul.mubr.bf16.gmra.mrb[0].mxu0 %v1881
        %v2035 = vpop.f32.mrb[0].mxu0
        %v2036 = vadd.f32 0.0, %v2035
        %v2037 = vpop.f32.mrb[0].mxu0
        %v2038 = vpop.f32.mrb[0].mxu0
        %v2039 = vadd.f32 0.0, %v2038
        %v2040 = vpop.f32.mrb[0].mxu0
        %2041 = vmatprep.mubr.bf16.mxu0 0
        %2042 = vmatmul.mubr.bf16.gmra.mrb[0].mxu0 %v1884
        %v2043 = vpop.f32.mrb[0].mxu0
        %v2044 = vadd.f32 0.0, %v2043
        %v2045 = vpop.f32.mrb[0].mxu0
        %v2046 = vpop.f32.mrb[0].mxu0
        %v2047 = vadd.f32 0.0, %v2046
        %v2048 = vpop.f32.mrb[0].mxu0
        %2049 = vmatprep.mubr.bf16.mxu0 0
        %2050 = vmatmul.mubr.bf16.gmra.mrb[0].mxu0 %v1887
        %v2051 = vpop.f32.mrb[0].mxu0
        %v2052 = vadd.f32 0.0, %v2051
        %v2053 = vpop.f32.mrb[0].mxu0
        %v2054 = vpop.f32.mrb[0].mxu0
        %v2055 = vadd.f32 0.0, %v2054
        %v2056 = vpop.f32.mrb[0].mxu0
        %2057 = vmatprep.mubr.bf16.mxu0 0
        %2058 = vmatmul.mubr.bf16.gmra.mrb[0].mxu0 %v1890
        %v2059 = vpop.f32.mrb[0].mxu0
        %v2060 = vadd.f32 0.0, %v2059
        %v2061 = vpop.f32.mrb[0].mxu0
        %v2062 = vpop.f32.mrb[0].mxu0
        %v2063 = vadd.f32 0.0, %v2062
        %v2064 = vpop.f32.mrb[0].mxu0
        %2065 = vmatprep.mubr.bf16.mxu0 0
        %2066 = vmatmul.mubr.bf16.gmra.mrb[0].mxu0 %v1893
        %v2067 = vpop.f32.mrb[0].mxu0
        %v2068 = vadd.f32 0.0, %v2067
        %v2069 = vpop.f32.mrb[0].mxu0
        %v2070 = vpop.f32.mrb[0].mxu0
        %v2071 = vadd.f32 0.0, %v2070
        %v2072 = vpop.f32.mrb[0].mxu0
        %2073 = vmatprep.mubr.bf16.mxu0 0
        %2074 = vmatmul.mubr.bf16.gmra.mrb[0].mxu0 %v1896
        %v2075 = vpop.f32.mrb[0].mxu0
        %v2076 = vadd.f32 0.0, %v2075
        %v2077 = vpop.f32.mrb[0].mxu0
        %v2078 = vpop.f32.mrb[0].mxu0
        %v2079 = vadd.f32 0.0, %v2078
        %v2080 = vpop.f32.mrb[0].mxu0
        %2081 = vmatprep.mubr.bf16.mxu0 0
        %2082 = vmatmul.mubr.bf16.gmra.mrb[0].mxu0 %v1899
        %v2083 = vpop.f32.mrb[0].mxu0
        %v2084 = vadd.f32 0.0, %v2083
        %v2085 = vpop.f32.mrb[0].mxu0
        %v2086 = vpop.f32.mrb[0].mxu0
        %v2087 = vadd.f32 0.0, %v2086
        %v2088 = vpop.f32.mrb[0].mxu0
        %2089 = vmatprep.mubr.bf16.mxu0 0
        %2090 = vmatmul.mubr.bf16.gmra.mrb[0].mxu0 %v1902
        %v2091 = vpop.f32.mrb[0].mxu0
        %v2092 = vadd.f32 0.0, %v2091
        %v2093 = vpop.f32.mrb[0].mxu0
        %v2094 = vpop.f32.mrb[0].mxu0
        %v2095 = vadd.f32 0.0, %v2094
        %v2096 = vpop.f32.mrb[0].mxu0
        %2097 = vmatprep.mubr.bf16.mxu0 0
        %2098 = vmatmul.mubr.bf16.gmra.mrb[0].mxu0 %v1905
        %v2099 = vpop.f32.mrb[0].mxu0
        %v2100 = vadd.f32 0.0, %v2099
        %v2101 = vpop.f32.mrb[0].mxu0
        %v2102 = vpop.f32.mrb[0].mxu0
        %v2103 = vadd.f32 0.0, %v2102
        %v2104 = vpop.f32.mrb[0].mxu0
        %2105 = vmatprep.mubr.bf16.mxu0 0
        %2106 = vmatmul.mubr.bf16.gmra.mrb[0].mxu0 %v1908
        %v2107 = vpop.f32.mrb[0].mxu0
        %v2108 = vadd.f32 0.0, %v2107
        %v2109 = vpop.f32.mrb[0].mxu0
        %v2110 = vpop.f32.mrb[0].mxu0
        %v2111 = vadd.f32 0.0, %v2110
        %v2112 = vpop.f32.mrb[0].mxu0
        %2113 = vmatprep.mubr.bf16.mxu0 0
        %2114 = vmatmul.mubr.bf16.gmra.mrb[0].mxu0 %v1911
        %v2115 = vpop.f32.mrb[0].mxu0
        %v2116 = vadd.f32 0.0, %v2115
        %v2117 = vpop.f32.mrb[0].mxu0
        %v2118 = vpop.f32.mrb[0].mxu0
        %v2119 = vadd.f32 0.0, %v2118
        %v2120 = vpop.f32.mrb[0].mxu0
        %2121 = vmatprep.mubr.bf16.mxu0 0
        %2122 = vmatmul.mubr.bf16.gmra.mrb[0].mxu0 %v1914
        %v2123 = vpop.f32.mrb[0].mxu0
        %v2124 = vadd.f32 0.0, %v2123
        %v2125 = vpop.f32.mrb[0].mxu0
        %v2126 = vpop.f32.mrb[0].mxu0
        %v2127 = vadd.f32 0.0, %v2126
        %v2128 = vpop.f32.mrb[0].mxu0
        %2129 = vmatprep.mubr.bf16.mxu0 0
        %2130 = vmatmul.mubr.bf16.gmra.mrb[0].mxu0 %v1917
        %v2131 = vpop.f32.mrb[0].mxu0
        %v2132 = vadd.f32 0.0, %v2131
        %v2133 = vpop.f32.mrb[0].mxu0
        %v2134 = vpop.f32.mrb[0].mxu0
        %v2135 = vadd.f32 0.0, %v2134
        %v2136 = vpop.f32.mrb[0].mxu0
        %2137 = vmatprep.mubr.bf16.mxu0 0
        %2138 = vmatmul.mubr.bf16.gmra.mrb[0].mxu0 %v1920
        %v2139 = vpop.f32.mrb[0].mxu0
        %v2140 = vadd.f32 0.0, %v2139
        %v2141 = vpop.f32.mrb[0].mxu0
        %v2142 = vpop.f32.mrb[0].mxu0
        %v2143 = vadd.f32 0.0, %v2142
        %v2144 = vpop.f32.mrb[0].mxu0
        %2145 = vmatprep.mubr.bf16.mxu0 0
        %2146 = vmatmul.mubr.bf16.gmra.mrb[0].mxu0 %v1923
        %v2147 = vpop.f32.mrb[0].mxu0
        %v2148 = vadd.f32 0.0, %v2147
        %v2149 = vpop.f32.mrb[0].mxu0
        %v2150 = vpop.f32.mrb[0].mxu0
        %v2151 = vadd.f32 0.0, %v2150
        %v2152 = vpop.f32.mrb[0].mxu0
        %2153 = vmatprep.mubr.bf16.mxu0 0
        %2154 = vmatmul.mubr.bf16.gmra.mrb[0].mxu0 %v1926
        %v2155 = vpop.f32.mrb[0].mxu0
        %v2156 = vadd.f32 0.0, %v2155
        %v2157 = vpop.f32.mrb[0].mxu0
        %v2158 = vpop.f32.mrb[0].mxu0
        %v2159 = vadd.f32 0.0, %v2158
        %v2160 = vpop.f32.mrb[0].mxu0
        %2161 = vmatprep.mubr.bf16.mxu0 0
        %2162 = vmatmul.mubr.bf16.gmra.mrb[0].mxu0 %v1929
        %v2163 = vpop.f32.mrb[0].mxu0
        %v2164 = vadd.f32 0.0, %v2163
        %v2165 = vpop.f32.mrb[0].mxu0
        %v2166 = vpop.f32.mrb[0].mxu0
        %v2167 = vadd.f32 0.0, %v2166
        %v2168 = vpop.f32.mrb[0].mxu0
        %2169 = vmatprep.mubr.bf16.mxu0 0
        %2170 = vmatmul.mubr.bf16.gmra.mrb[0].mxu0 %v1932
        %v2171 = vpop.f32.mrb[0].mxu0
        %v2172 = vadd.f32 0.0, %v2171
        %v2173 = vpop.f32.mrb[0].mxu0
        %v2174 = vpop.f32.mrb[0].mxu0
        %v2175 = vadd.f32 0.0, %v2174
        %v2176 = vpop.f32.mrb[0].mxu0
        %2177 = vmatprep.mubr.bf16.mxu0 0
        %2178 = vmatmul.mubr.bf16.gmra.mrb[0].mxu0 %v1935
        %v2179 = vpop.f32.mrb[0].mxu0
        %v2180 = vadd.f32 0.0, %v2179
        %v2181 = vpop.f32.mrb[0].mxu0
        %v2182 = vpop.f32.mrb[0].mxu0
        %v2183 = vadd.f32 0.0, %v2182
        %v2184 = vpop.f32.mrb[0].mxu0
        %2185 = vmatprep.mubr.bf16.mxu0 0
        %2186 = vmatmul.mubr.bf16.gmra.mrb[0].mxu0 %v1938
        %v2187 = vpop.f32.mrb[0].mxu0
        %v2188 = vadd.f32 0.0, %v2187
        %v2189 = vpop.f32.mrb[0].mxu0
        %v2190 = vpop.f32.mrb[0].mxu0
        %v2191 = vadd.f32 0.0, %v2190
        %v2192 = vpop.f32.mrb[0].mxu0
        %2193 = vmatprep.mubr.bf16.mxu0 0
        %2194 = vmatmul.mubr.bf16.gmra.mrb[0].mxu0 %v1941
        %v2195 = vpop.f32.mrb[0].mxu0
        %v2196 = vadd.f32 0.0, %v2195
        %v2197 = vpop.f32.mrb[0].mxu0
        %v2198 = vpop.f32.mrb[0].mxu0
        %v2199 = vadd.f32 0.0, %v2198
        %v2200 = vpop.f32.mrb[0].mxu0
        %2201 = vmatprep.mubr.bf16.mxu0 0
        %2202 = vmatmul.mubr.bf16.gmra.mrb[0].mxu0 %v1944
        %v2203 = vpop.f32.mrb[0].mxu0
        %v2204 = vadd.f32 0.0, %v2203
        %v2205 = vpop.f32.mrb[0].mxu0
        %v2206 = vpop.f32.mrb[0].mxu0
        %v2207 = vadd.f32 0.0, %v2206
        %v2208 = vpop.f32.mrb[0].mxu0
        %2209 = vmatprep.mubr.bf16.mxu0 0
        %2210 = vmatmul.mubr.bf16.gmra.mrb[0].mxu0 %v1947
        %v2211 = vpop.f32.mrb[0].mxu0
        %v2212 = vadd.f32 0.0, %v2211
        %v2213 = vpop.f32.mrb[0].mxu0
        %v2214 = vpop.f32.mrb[0].mxu0
        %v2215 = vadd.f32 0.0, %v2214
        %v2216 = vpop.f32.mrb[0].mxu0
        %2217 = vmatprep.mubr.bf16.mxu0 0
        %2218 = vmatmul.mubr.bf16.gmra.mrb[0].mxu0 %v1950
        %v2219 = vpop.f32.mrb[0].mxu0
        %v2220 = vadd.f32 0.0, %v2219
        %v2221 = vpop.f32.mrb[0].mxu0
        %v2222 = vpop.f32.mrb[0].mxu0
        %v2223 = vadd.f32 0.0, %v2222
        %v2224 = vpop.f32.mrb[0].mxu0
        %2225 = vmatprep.mubr.bf16.mxu0 0
        %2226 = vmatmul.mubr.bf16.gmra.mrb[0].mxu0 %v1953
        %v2227 = vpop.f32.mrb[0].mxu0
        %v2228 = vadd.f32 0.0, %v2227
        %v2229 = vpop.f32.mrb[0].mxu0
        %v2230 = vpop.f32.mrb[0].mxu0
        %v2231 = vadd.f32 0.0, %v2230
        %v2232 = vpop.f32.mrb[0].mxu0
        %2233 = vmatprep.mubr.bf16.mxu0 0
        %2234 = vmatmul.mubr.bf16.gmra.mrb[0].mxu0 %v1956
        %v2235 = vpop.f32.mrb[0].mxu0
        %v2236 = vadd.f32 0.0, %v2235
        %v2237 = vpop.f32.mrb[0].mxu0
        %v2238 = vpop.f32.mrb[0].mxu0
        %v2239 = vadd.f32 0.0, %v2238
        %v2240 = vpop.f32.mrb[0].mxu0
        %2241 = vmatprep.mubr.bf16.mxu0 0
        %2242 = vmatmul.mubr.bf16.gmra.mrb[0].mxu0 %v1959
        %v2243 = vpop.f32.mrb[0].mxu0
        %v2244 = vadd.f32 0.0, %v2243
        %v2245 = vpop.f32.mrb[0].mxu0
        %v2246 = vpop.f32.mrb[0].mxu0
        %v2247 = vadd.f32 0.0, %v2246
        %v2248 = vpop.f32.mrb[0].mxu0
        %2249 = vdwg.mxu0
        %v2250 = vld [vmem:[%s388] sm:$0xf]
        %v2251 = vld [vmem:[%s388 + $0x4] sm:$0xf]
        %v2252 = vld [vmem:[%s388 + $0x8] sm:$0xf]
        %v2253 = vld [vmem:[%s388 + $0xc] sm:$0xf]
        %v2254 = vld [vmem:[%s388 + $0x10] sm:$0xf]
        %v2255 = vld [vmem:[%s388 + $0x14] sm:$0xf]
        %v2256 = vld [vmem:[%s388 + $0x18] sm:$0xf]
        %v2257 = vld [vmem:[%s388 + $0x1c] sm:$0xf]
        %v2258 = vld [vmem:[%s388 + $0x20] sm:$0xf]
        %v2259 = vld [vmem:[%s388 + $0x24] sm:$0xf]
        %v2260 = vld [vmem:[%s388 + $0x28] sm:$0xf]
        %v2261 = vld [vmem:[%s388 + $0x2c] sm:$0xf]
        %v2262 = vld [vmem:[%s388 + $0x30] sm:$0xf]
        %v2263 = vld [vmem:[%s388 + $0x34] sm:$0xf]
        %v2264 = vld [vmem:[%s388 + $0x38] sm:$0xf]
        %v2265 = vld [vmem:[%s388 + $0x3c] sm:$0xf]
        %v2266 = vld [vmem:[%s388 + $0x40] sm:$0xf]
        %v2267 = vld [vmem:[%s388 + $0x44] sm:$0xf]
        %v2268 = vld [vmem:[%s388 + $0x48] sm:$0xf]
        %v2269 = vld [vmem:[%s388 + $0x4c] sm:$0xf]
        %v2270 = vld [vmem:[%s388 + $0x50] sm:$0xf]
        %v2271 = vld [vmem:[%s388 + $0x54] sm:$0xf]
        %v2272 = vld [vmem:[%s388 + $0x58] sm:$0xf]
        %v2273 = vld [vmem:[%s388 + $0x5c] sm:$0xf]
        %v2274 = vld [vmem:[%s388 + $0x60] sm:$0xf]
        %v2275 = vld [vmem:[%s388 + $0x64] sm:$0xf]
        %v2276 = vld [vmem:[%s388 + $0x68] sm:$0xf]
        %v2277 = vld [vmem:[%s388 + $0x6c] sm:$0xf]
        %v2278 = vld [vmem:[%s388 + $0x70] sm:$0xf]
        %v2279 = vld [vmem:[%s388 + $0x74] sm:$0xf]
        %v2280 = vld [vmem:[%s388 + $0x78] sm:$0xf]
        %v2281 = vld [vmem:[%s388 + $0x7c] sm:$0xf]
        %v2282 = vld [vmem:[%s388 + $0x80] sm:$0xf]
        %v2283 = vld [vmem:[%s388 + $0x84] sm:$0xf]
        %v2284 = vld [vmem:[%s388 + $0x88] sm:$0xf]
        %v2285 = vld [vmem:[%s388 + $0x8c] sm:$0xf]
        %v2286 = vld [vmem:[%s388 + $0x90] sm:$0xf]
        %v2287 = vld [vmem:[%s388 + $0x94] sm:$0xf]
        %v2288 = vld [vmem:[%s388 + $0x98] sm:$0xf]
        %v2289 = vld [vmem:[%s388 + $0x9c] sm:$0xf]
        %v2290 = vld [vmem:[%s388 + $0xa0] sm:$0xf]
        %v2291 = vld [vmem:[%s388 + $0xa4] sm:$0xf]
        %v2292 = vld [vmem:[%s388 + $0xa8] sm:$0xf]
        %v2293 = vld [vmem:[%s388 + $0xac] sm:$0xf]
        %v2294 = vld [vmem:[%s388 + $0xb0] sm:$0xf]
        %v2295 = vld [vmem:[%s388 + $0xb4] sm:$0xf]
        %v2296 = vld [vmem:[%s388 + $0xb8] sm:$0xf]
        %v2297 = vld [vmem:[%s388 + $0xbc] sm:$0xf]
        %v2298 = vld [vmem:[%s388 + $0xc0] sm:$0xf]
        %v2299 = vld [vmem:[%s388 + $0xc4] sm:$0xf]
        %v2300 = vld [vmem:[%s388 + $0xc8] sm:$0xf]
        %v2301 = vld [vmem:[%s388 + $0xcc] sm:$0xf]
        %v2302 = vld [vmem:[%s388 + $0xd0] sm:$0xf]
        %v2303 = vld [vmem:[%s388 + $0xd4] sm:$0xf]
        %v2304 = vld [vmem:[%s388 + $0xd8] sm:$0xf]
        %v2305 = vld [vmem:[%s388 + $0xdc] sm:$0xf]
        %v2306 = vld [vmem:[%s388 + $0xe0] sm:$0xf]
        %v2307 = vld [vmem:[%s388 + $0xe4] sm:$0xf]
        %v2308 = vld [vmem:[%s388 + $0xe8] sm:$0xf]
        %v2309 = vld [vmem:[%s388 + $0xec] sm:$0xf]
        %v2310 = vld [vmem:[%s388 + $0xf0] sm:$0xf]
        %v2311 = vld [vmem:[%s388 + $0xf4] sm:$0xf]
        %v2312 = vld [vmem:[%s388 + $0xf8] sm:$0xf]
        %v2313 = vld [vmem:[%s388 + $0xfc] sm:$0xf]
        %v2378 = vunpack.c.l.b16 %v2250
        %v2379 = vunpack.c.l.b16 %v2251
        %v2380 = vunpack.c.l.b16 %v2252
        %v2381 = vunpack.c.l.b16 %v2253
        %v2382 = vunpack.c.l.b16 %v2254
        %v2383 = vunpack.c.l.b16 %v2255
        %v2384 = vunpack.c.l.b16 %v2256
        %v2385 = vunpack.c.l.b16 %v2257
        %v2386 = vunpack.c.l.b16 %v2258
        %v2387 = vunpack.c.l.b16 %v2259
        %v2388 = vunpack.c.l.b16 %v2260
        %v2389 = vunpack.c.l.b16 %v2261
        %v2390 = vunpack.c.l.b16 %v2262
        %v2391 = vunpack.c.l.b16 %v2263
        %v2392 = vunpack.c.l.b16 %v2264
        %v2393 = vunpack.c.l.b16 %v2265
        %v2394 = vunpack.c.l.b16 %v2266
        %v2395 = vunpack.c.l.b16 %v2267
        %v2396 = vunpack.c.l.b16 %v2268
        %v2397 = vunpack.c.l.b16 %v2269
        %v2398 = vunpack.c.l.b16 %v2270
        %v2399 = vunpack.c.l.b16 %v2271
        %v2400 = vunpack.c.l.b16 %v2272
        %v2401 = vunpack.c.l.b16 %v2273
        %v2402 = vunpack.c.l.b16 %v2274
        %v2403 = vunpack.c.l.b16 %v2275
        %v2404 = vunpack.c.l.b16 %v2276
        %v2405 = vunpack.c.l.b16 %v2277
        %v2406 = vunpack.c.l.b16 %v2278
        %v2407 = vunpack.c.l.b16 %v2279
        %v2408 = vunpack.c.l.b16 %v2280
        %v2409 = vunpack.c.l.b16 %v2281
        %v2410 = vunpack.c.l.b16 %v2282
        %v2411 = vunpack.c.l.b16 %v2283
        %v2412 = vunpack.c.l.b16 %v2284
        %v2413 = vunpack.c.l.b16 %v2285
        %v2414 = vunpack.c.l.b16 %v2286
        %v2415 = vunpack.c.l.b16 %v2287
        %v2416 = vunpack.c.l.b16 %v2288
        %v2417 = vunpack.c.l.b16 %v2289
        %v2418 = vunpack.c.l.b16 %v2290
        %v2419 = vunpack.c.l.b16 %v2291
        %v2420 = vunpack.c.l.b16 %v2292
        %v2421 = vunpack.c.l.b16 %v2293
        %v2422 = vunpack.c.l.b16 %v2294
        %v2423 = vunpack.c.l.b16 %v2295
        %v2424 = vunpack.c.l.b16 %v2296
        %v2425 = vunpack.c.l.b16 %v2297
        %v2426 = vunpack.c.l.b16 %v2298
        %v2427 = vunpack.c.l.b16 %v2299
        %v2428 = vunpack.c.l.b16 %v2300
        %v2429 = vunpack.c.l.b16 %v2301
        %v2430 = vunpack.c.l.b16 %v2302
        %v2431 = vunpack.c.l.b16 %v2303
        %v2432 = vunpack.c.l.b16 %v2304
        %v2433 = vunpack.c.l.b16 %v2305
        %v2434 = vunpack.c.l.b16 %v2306
        %v2435 = vunpack.c.l.b16 %v2307
        %v2436 = vunpack.c.l.b16 %v2308
        %v2437 = vunpack.c.l.b16 %v2309
        %v2438 = vunpack.c.l.b16 %v2310
        %v2439 = vunpack.c.l.b16 %v2311
        %v2440 = vunpack.c.l.b16 %v2312
        %v2441 = vunpack.c.l.b16 %v2313
        %v2442 = vpack.c.b16 %v2379, %v2378
        %v2443 = vpack.c.b16 %v2381, %v2380
        %v2444 = vpack.c.b16 %v2383, %v2382
        %v2445 = vpack.c.b16 %v2385, %v2384
        %v2446 = vpack.c.b16 %v2387, %v2386
        %v2447 = vpack.c.b16 %v2389, %v2388
        %v2448 = vpack.c.b16 %v2391, %v2390
        %v2449 = vpack.c.b16 %v2393, %v2392
        %v2450 = vpack.c.b16 %v2395, %v2394
        %v2451 = vpack.c.b16 %v2397, %v2396
        %v2452 = vpack.c.b16 %v2399, %v2398
        %v2453 = vpack.c.b16 %v2401, %v2400
        %v2454 = vpack.c.b16 %v2403, %v2402
        %v2455 = vpack.c.b16 %v2405, %v2404
        %v2456 = vpack.c.b16 %v2407, %v2406
        %v2457 = vpack.c.b16 %v2409, %v2408
        %v2458 = vpack.c.b16 %v2411, %v2410
        %v2459 = vpack.c.b16 %v2413, %v2412
        %v2460 = vpack.c.b16 %v2415, %v2414
        %v2461 = vpack.c.b16 %v2417, %v2416
        %v2462 = vpack.c.b16 %v2419, %v2418
        %v2463 = vpack.c.b16 %v2421, %v2420
        %v2464 = vpack.c.b16 %v2423, %v2422
        %v2465 = vpack.c.b16 %v2425, %v2424
        %v2466 = vpack.c.b16 %v2427, %v2426
        %v2467 = vpack.c.b16 %v2429, %v2428
        %v2468 = vpack.c.b16 %v2431, %v2430
        %v2469 = vpack.c.b16 %v2433, %v2432
        %v2470 = vpack.c.b16 %v2435, %v2434
        %v2471 = vpack.c.b16 %v2437, %v2436
        %v2472 = vpack.c.b16 %v2439, %v2438
        %v2473 = vpack.c.b16 %v2441, %v2440
        %v2475 = vsel %vm639, %v2442, 0
        %v2478 = vsel %vm639, %v2443, 0
        %v2481 = vsel %vm639, %v2444, 0
        %v2484 = vsel %vm639, %v2445, 0
        %v2487 = vsel %vm639, %v2446, 0
        %v2490 = vsel %vm639, %v2447, 0
        %v2493 = vsel %vm639, %v2448, 0
        %v2496 = vsel %vm639, %v2449, 0
        %v2499 = vsel %vm639, %v2450, 0
        %v2502 = vsel %vm639, %v2451, 0
        %v2505 = vsel %vm639, %v2452, 0
        %v2508 = vsel %vm639, %v2453, 0
        %v2511 = vsel %vm639, %v2454, 0
        %v2514 = vsel %vm639, %v2455, 0
        %v2517 = vsel %vm639, %v2456, 0
        %v2520 = vsel %vm639, %v2457, 0
        %v2523 = vsel %vm639, %v2458, 0
        %v2526 = vsel %vm639, %v2459, 0
        %v2529 = vsel %vm639, %v2460, 0
        %v2532 = vsel %vm639, %v2461, 0
        %v2535 = vsel %vm639, %v2462, 0
        %v2538 = vsel %vm639, %v2463, 0
        %v2541 = vsel %vm639, %v2464, 0
        %v2544 = vsel %vm639, %v2465, 0
        %v2547 = vsel %vm639, %v2466, 0
        %v2550 = vsel %vm639, %v2467, 0
        %v2553 = vsel %vm639, %v2468, 0
        %v2556 = vsel %vm639, %v2469, 0
        %v2559 = vsel %vm639, %v2470, 0
        %v2562 = vsel %vm639, %v2471, 0
        %v2565 = vsel %vm639, %v2472, 0
        %v2568 = vsel %vm639, %v2473, 0
        %2570 = vmatprep.subr.bf16.mxu0 0
        %2571 = vmatpush1.bf16.msra.mxu0 %v636
        %2572 = vmatprep.subr.bf16.mxu0 0
        %2573 = vmatpush1.bf16.msra.mxu0 %v741
        %2574 = vmatprep.subr.bf16.mxu0 0
        %2575 = vmatpush1.bf16.msra.mxu0 0
        %2576 = vmatprep.subr.bf16.mxu0 0
        %2577 = vmatpush1.bf16.msra.mxu0 0
        %2578 = vmatprep.subr.bf16.mxu0 0
        %2579 = vmatpush1.bf16.msra.mxu0 0
        %2580 = vmatprep.subr.bf16.mxu0 0
        %2581 = vmatpush1.bf16.msra.mxu0 0
        %2582 = vmatprep.subr.bf16.mxu0 0
        %2583 = vmatpush1.bf16.msra.mxu0 0
        %2584 = vmatprep.subr.bf16.mxu0 0
        %2585 = vmatpush1.bf16.msra.mxu0 0
        %2586 = vmatprep.subr.bf16.mxu0 0
        %2587 = vmatpush1.bf16.msra.mxu0 0
        %2588 = vmatprep.subr.bf16.mxu0 0
        %2589 = vmatpush1.bf16.msra.mxu0 0
        %2590 = vmatprep.subr.bf16.mxu0 0
        %2591 = vmatpush1.bf16.msra.mxu0 0
        %2592 = vmatprep.subr.bf16.mxu0 0
        %2593 = vmatpush1.bf16.msra.mxu0 0
        %2594 = vmatprep.subr.bf16.mxu0 0
        %2595 = vmatpush1.bf16.msra.mxu0 0
        %2596 = vmatprep.subr.bf16.mxu0 0
        %2597 = vmatpush1.bf16.msra.mxu0 0
        %2598 = vmatprep.subr.bf16.mxu0 0
        %2599 = vmatpush1.bf16.msra.mxu0 0
        %2600 = vmatprep.subr.bf16.mxu0 0
        %2601 = vmatpush1.bf16.msra.mxu0 0
        %2602 = vmatprep.mubr.bf16.mxu0 0
        %2603 = vmatmul.mubr.bf16.gmra.mrb[0].mxu0 %v2475
        %v2604 = vpop.f32.mrb[0].mxu0
        %v2605 = vadd.f32 0.0, %v2604
        %v2606 = vpop.f32.mrb[0].mxu0
        %v2607 = vpop.f32.mrb[0].mxu0
        %v2608 = vadd.f32 0.0, %v2607
        %v2609 = vpop.f32.mrb[0].mxu0
        %2610 = vmatprep.mubr.bf16.mxu0 0
        %2611 = vmatmul.mubr.bf16.gmra.mrb[0].mxu0 %v2478
        %v2612 = vpop.f32.mrb[0].mxu0
        %v2613 = vadd.f32 0.0, %v2612
        %v2614 = vpop.f32.mrb[0].mxu0
        %v2615 = vpop.f32.mrb[0].mxu0
        %v2616 = vadd.f32 0.0, %v2615
        %v2617 = vpop.f32.mrb[0].mxu0
        %2618 = vmatprep.mubr.bf16.mxu0 0
        %2619 = vmatmul.mubr.bf16.gmra.mrb[0].mxu0 %v2481
        %v2620 = vpop.f32.mrb[0].mxu0
        %v2621 = vadd.f32 0.0, %v2620
        %v2622 = vpop.f32.mrb[0].mxu0
        %v2623 = vpop.f32.mrb[0].mxu0
        %v2624 = vadd.f32 0.0, %v2623
        %v2625 = vpop.f32.mrb[0].mxu0
        %2626 = vmatprep.mubr.bf16.mxu0 0
        %2627 = vmatmul.mubr.bf16.gmra.mrb[0].mxu0 %v2484
        %v2628 = vpop.f32.mrb[0].mxu0
        %v2629 = vadd.f32 0.0, %v2628
        %v2630 = vpop.f32.mrb[0].mxu0
        %v2631 = vpop.f32.mrb[0].mxu0
        %v2632 = vadd.f32 0.0, %v2631
        %v2633 = vpop.f32.mrb[0].mxu0
        %2634 = vmatprep.mubr.bf16.mxu0 0
        %2635 = vmatmul.mubr.bf16.gmra.mrb[0].mxu0 %v2487
        %v2636 = vpop.f32.mrb[0].mxu0
        %v2637 = vadd.f32 0.0, %v2636
        %v2638 = vpop.f32.mrb[0].mxu0
        %v2639 = vpop.f32.mrb[0].mxu0
        %v2640 = vadd.f32 0.0, %v2639
        %v2641 = vpop.f32.mrb[0].mxu0
        %2642 = vmatprep.mubr.bf16.mxu0 0
        %2643 = vmatmul.mubr.bf16.gmra.mrb[0].mxu0 %v2490
        %v2644 = vpop.f32.mrb[0].mxu0
        %v2645 = vadd.f32 0.0, %v2644
        %v2646 = vpop.f32.mrb[0].mxu0
        %v2647 = vpop.f32.mrb[0].mxu0
        %v2648 = vadd.f32 0.0, %v2647
        %v2649 = vpop.f32.mrb[0].mxu0
        %2650 = vmatprep.mubr.bf16.mxu0 0
        %2651 = vmatmul.mubr.bf16.gmra.mrb[0].mxu0 %v2493
        %v2652 = vpop.f32.mrb[0].mxu0
        %v2653 = vadd.f32 0.0, %v2652
        %v2654 = vpop.f32.mrb[0].mxu0
        %v2655 = vpop.f32.mrb[0].mxu0
        %v2656 = vadd.f32 0.0, %v2655
        %v2657 = vpop.f32.mrb[0].mxu0
        %2658 = vmatprep.mubr.bf16.mxu0 0
        %2659 = vmatmul.mubr.bf16.gmra.mrb[0].mxu0 %v2496
        %v2660 = vpop.f32.mrb[0].mxu0
        %v2661 = vadd.f32 0.0, %v2660
        %v2662 = vpop.f32.mrb[0].mxu0
        %v2663 = vpop.f32.mrb[0].mxu0
        %v2664 = vadd.f32 0.0, %v2663
        %v2665 = vpop.f32.mrb[0].mxu0
        %2666 = vmatprep.mubr.bf16.mxu0 0
        %2667 = vmatmul.mubr.bf16.gmra.mrb[0].mxu0 %v2499
        %v2668 = vpop.f32.mrb[0].mxu0
        %v2669 = vadd.f32 0.0, %v2668
        %v2670 = vpop.f32.mrb[0].mxu0
        %v2671 = vpop.f32.mrb[0].mxu0
        %v2672 = vadd.f32 0.0, %v2671
        %v2673 = vpop.f32.mrb[0].mxu0
        %2674 = vmatprep.mubr.bf16.mxu0 0
        %2675 = vmatmul.mubr.bf16.gmra.mrb[0].mxu0 %v2502
        %v2676 = vpop.f32.mrb[0].mxu0
        %v2677 = vadd.f32 0.0, %v2676
        %v2678 = vpop.f32.mrb[0].mxu0
        %v2679 = vpop.f32.mrb[0].mxu0
        %v2680 = vadd.f32 0.0, %v2679
        %v2681 = vpop.f32.mrb[0].mxu0
        %2682 = vmatprep.mubr.bf16.mxu0 0
        %2683 = vmatmul.mubr.bf16.gmra.mrb[0].mxu0 %v2505
        %v2684 = vpop.f32.mrb[0].mxu0
        %v2685 = vadd.f32 0.0, %v2684
        %v2686 = vpop.f32.mrb[0].mxu0
        %v2687 = vpop.f32.mrb[0].mxu0
        %v2688 = vadd.f32 0.0, %v2687
        %v2689 = vpop.f32.mrb[0].mxu0
        %2690 = vmatprep.mubr.bf16.mxu0 0
        %2691 = vmatmul.mubr.bf16.gmra.mrb[0].mxu0 %v2508
        %v2692 = vpop.f32.mrb[0].mxu0
        %v2693 = vadd.f32 0.0, %v2692
        %v2694 = vpop.f32.mrb[0].mxu0
        %v2695 = vpop.f32.mrb[0].mxu0
        %v2696 = vadd.f32 0.0, %v2695
        %v2697 = vpop.f32.mrb[0].mxu0
        %2698 = vmatprep.mubr.bf16.mxu0 0
        %2699 = vmatmul.mubr.bf16.gmra.mrb[0].mxu0 %v2511
        %v2700 = vpop.f32.mrb[0].mxu0
        %v2701 = vadd.f32 0.0, %v2700
        %v2702 = vpop.f32.mrb[0].mxu0
        %v2703 = vpop.f32.mrb[0].mxu0
        %v2704 = vadd.f32 0.0, %v2703
        %v2705 = vpop.f32.mrb[0].mxu0
        %2706 = vmatprep.mubr.bf16.mxu0 0
        %2707 = vmatmul.mubr.bf16.gmra.mrb[0].mxu0 %v2514
        %v2708 = vpop.f32.mrb[0].mxu0
        %v2709 = vadd.f32 0.0, %v2708
        %v2710 = vpop.f32.mrb[0].mxu0
        %v2711 = vpop.f32.mrb[0].mxu0
        %v2712 = vadd.f32 0.0, %v2711
        %v2713 = vpop.f32.mrb[0].mxu0
        %2714 = vmatprep.mubr.bf16.mxu0 0
        %2715 = vmatmul.mubr.bf16.gmra.mrb[0].mxu0 %v2517
        %v2716 = vpop.f32.mrb[0].mxu0
        %v2717 = vadd.f32 0.0, %v2716
        %v2718 = vpop.f32.mrb[0].mxu0
        %v2719 = vpop.f32.mrb[0].mxu0
        %v2720 = vadd.f32 0.0, %v2719
        %v2721 = vpop.f32.mrb[0].mxu0
        %2722 = vmatprep.mubr.bf16.mxu0 0
        %2723 = vmatmul.mubr.bf16.gmra.mrb[0].mxu0 %v2520
        %v2724 = vpop.f32.mrb[0].mxu0
        %v2725 = vadd.f32 0.0, %v2724
        %v2726 = vpop.f32.mrb[0].mxu0
        %v2727 = vpop.f32.mrb[0].mxu0
        %v2728 = vadd.f32 0.0, %v2727
        %v2729 = vpop.f32.mrb[0].mxu0
        %2730 = vmatprep.mubr.bf16.mxu0 0
        %2731 = vmatmul.mubr.bf16.gmra.mrb[0].mxu0 %v2523
        %v2732 = vpop.f32.mrb[0].mxu0
        %v2733 = vadd.f32 0.0, %v2732
        %v2734 = vpop.f32.mrb[0].mxu0
        %v2735 = vpop.f32.mrb[0].mxu0
        %v2736 = vadd.f32 0.0, %v2735
        %v2737 = vpop.f32.mrb[0].mxu0
        %2738 = vmatprep.mubr.bf16.mxu0 0
        %2739 = vmatmul.mubr.bf16.gmra.mrb[0].mxu0 %v2526
        %v2740 = vpop.f32.mrb[0].mxu0
        %v2741 = vadd.f32 0.0, %v2740
        %v2742 = vpop.f32.mrb[0].mxu0
        %v2743 = vpop.f32.mrb[0].mxu0
        %v2744 = vadd.f32 0.0, %v2743
        %v2745 = vpop.f32.mrb[0].mxu0
        %2746 = vmatprep.mubr.bf16.mxu0 0
        %2747 = vmatmul.mubr.bf16.gmra.mrb[0].mxu0 %v2529
        %v2748 = vpop.f32.mrb[0].mxu0
        %v2749 = vadd.f32 0.0, %v2748
        %v2750 = vpop.f32.mrb[0].mxu0
        %v2751 = vpop.f32.mrb[0].mxu0
        %v2752 = vadd.f32 0.0, %v2751
        %v2753 = vpop.f32.mrb[0].mxu0
        %2754 = vmatprep.mubr.bf16.mxu0 0
        %2755 = vmatmul.mubr.bf16.gmra.mrb[0].mxu0 %v2532
        %v2756 = vpop.f32.mrb[0].mxu0
        %v2757 = vadd.f32 0.0, %v2756
        %v2758 = vpop.f32.mrb[0].mxu0
        %v2759 = vpop.f32.mrb[0].mxu0
        %v2760 = vadd.f32 0.0, %v2759
        %v2761 = vpop.f32.mrb[0].mxu0
        %2762 = vmatprep.mubr.bf16.mxu0 0
        %2763 = vmatmul.mubr.bf16.gmra.mrb[0].mxu0 %v2535
        %v2764 = vpop.f32.mrb[0].mxu0
        %v2765 = vadd.f32 0.0, %v2764
        %v2766 = vpop.f32.mrb[0].mxu0
        %v2767 = vpop.f32.mrb[0].mxu0
        %v2768 = vadd.f32 0.0, %v2767
        %v2769 = vpop.f32.mrb[0].mxu0
        %2770 = vmatprep.mubr.bf16.mxu0 0
        %2771 = vmatmul.mubr.bf16.gmra.mrb[0].mxu0 %v2538
        %v2772 = vpop.f32.mrb[0].mxu0
        %v2773 = vadd.f32 0.0, %v2772
        %v2774 = vpop.f32.mrb[0].mxu0
        %v2775 = vpop.f32.mrb[0].mxu0
        %v2776 = vadd.f32 0.0, %v2775
        %v2777 = vpop.f32.mrb[0].mxu0
        %2778 = vmatprep.mubr.bf16.mxu0 0
        %2779 = vmatmul.mubr.bf16.gmra.mrb[0].mxu0 %v2541
        %v2780 = vpop.f32.mrb[0].mxu0
        %v2781 = vadd.f32 0.0, %v2780
        %v2782 = vpop.f32.mrb[0].mxu0
        %v2783 = vpop.f32.mrb[0].mxu0
        %v2784 = vadd.f32 0.0, %v2783
        %v2785 = vpop.f32.mrb[0].mxu0
        %2786 = vmatprep.mubr.bf16.mxu0 0
        %2787 = vmatmul.mubr.bf16.gmra.mrb[0].mxu0 %v2544
        %v2788 = vpop.f32.mrb[0].mxu0
        %v2789 = vadd.f32 0.0, %v2788
        %v2790 = vpop.f32.mrb[0].mxu0
        %v2791 = vpop.f32.mrb[0].mxu0
        %v2792 = vadd.f32 0.0, %v2791
        %v2793 = vpop.f32.mrb[0].mxu0
        %2794 = vmatprep.mubr.bf16.mxu0 0
        %2795 = vmatmul.mubr.bf16.gmra.mrb[0].mxu0 %v2547
        %v2796 = vpop.f32.mrb[0].mxu0
        %v2797 = vadd.f32 0.0, %v2796
        %v2798 = vpop.f32.mrb[0].mxu0
        %v2799 = vpop.f32.mrb[0].mxu0
        %v2800 = vadd.f32 0.0, %v2799
        %v2801 = vpop.f32.mrb[0].mxu0
        %2802 = vmatprep.mubr.bf16.mxu0 0
        %2803 = vmatmul.mubr.bf16.gmra.mrb[0].mxu0 %v2550
        %v2804 = vpop.f32.mrb[0].mxu0
        %v2805 = vadd.f32 0.0, %v2804
        %v2806 = vpop.f32.mrb[0].mxu0
        %v2807 = vpop.f32.mrb[0].mxu0
        %v2808 = vadd.f32 0.0, %v2807
        %v2809 = vpop.f32.mrb[0].mxu0
        %2810 = vmatprep.mubr.bf16.mxu0 0
        %2811 = vmatmul.mubr.bf16.gmra.mrb[0].mxu0 %v2553
        %v2812 = vpop.f32.mrb[0].mxu0
        %v2813 = vadd.f32 0.0, %v2812
        %v2814 = vpop.f32.mrb[0].mxu0
        %v2815 = vpop.f32.mrb[0].mxu0
        %v2816 = vadd.f32 0.0, %v2815
        %v2817 = vpop.f32.mrb[0].mxu0
        %2818 = vmatprep.mubr.bf16.mxu0 0
        %2819 = vmatmul.mubr.bf16.gmra.mrb[0].mxu0 %v2556
        %v2820 = vpop.f32.mrb[0].mxu0
        %v2821 = vadd.f32 0.0, %v2820
        %v2822 = vpop.f32.mrb[0].mxu0
        %v2823 = vpop.f32.mrb[0].mxu0
        %v2824 = vadd.f32 0.0, %v2823
        %v2825 = vpop.f32.mrb[0].mxu0
        %2826 = vmatprep.mubr.bf16.mxu0 0
        %2827 = vmatmul.mubr.bf16.gmra.mrb[0].mxu0 %v2559
        %v2828 = vpop.f32.mrb[0].mxu0
        %v2829 = vadd.f32 0.0, %v2828
        %v2830 = vpop.f32.mrb[0].mxu0
        %v2831 = vpop.f32.mrb[0].mxu0
        %v2832 = vadd.f32 0.0, %v2831
        %v2833 = vpop.f32.mrb[0].mxu0
        %2834 = vmatprep.mubr.bf16.mxu0 0
        %2835 = vmatmul.mubr.bf16.gmra.mrb[0].mxu0 %v2562
        %v2836 = vpop.f32.mrb[0].mxu0
        %v2837 = vadd.f32 0.0, %v2836
        %v2838 = vpop.f32.mrb[0].mxu0
        %v2839 = vpop.f32.mrb[0].mxu0
        %v2840 = vadd.f32 0.0, %v2839
        %v2841 = vpop.f32.mrb[0].mxu0
        %2842 = vmatprep.mubr.bf16.mxu0 0
        %2843 = vmatmul.mubr.bf16.gmra.mrb[0].mxu0 %v2565
        %v2844 = vpop.f32.mrb[0].mxu0
        %v2845 = vadd.f32 0.0, %v2844
        %v2846 = vpop.f32.mrb[0].mxu0
        %v2847 = vpop.f32.mrb[0].mxu0
        %v2848 = vadd.f32 0.0, %v2847
        %v2849 = vpop.f32.mrb[0].mxu0
        %2850 = vmatprep.mubr.bf16.mxu0 0
        %2851 = vmatmul.mubr.bf16.gmra.mrb[0].mxu0 %v2568
        %v2852 = vpop.f32.mrb[0].mxu0
        %v2853 = vadd.f32 0.0, %v2852
        %v2854 = vpop.f32.mrb[0].mxu0
        %v2855 = vpop.f32.mrb[0].mxu0
        %v2856 = vadd.f32 0.0, %v2855
        %v2857 = vpop.f32.mrb[0].mxu0
        %2858 = vdwg.mxu0
        %v2859 = vmax.f32 %v778, %v1387
        %v2860 = vmax.f32 %v781, %v1390
        %v2861 = vmax.f32 %v786, %v1395
        %v2862 = vmax.f32 %v789, %v1398
        %v2863 = vmax.f32 %v794, %v1403
        %v2864 = vmax.f32 %v797, %v1406
        %v2865 = vmax.f32 %v802, %v1411
        %v2866 = vmax.f32 %v805, %v1414
        %v2867 = vmax.f32 %v810, %v1419
        %v2868 = vmax.f32 %v813, %v1422
        %v2869 = vmax.f32 %v818, %v1427
        %v2870 = vmax.f32 %v821, %v1430
        %v2871 = vmax.f32 %v826, %v1435
        %v2872 = vmax.f32 %v829, %v1438
        %v2873 = vmax.f32 %v834, %v1443
        %v2874 = vmax.f32 %v837, %v1446
        %v2875 = vmax.f32 %v842, %v1451
        %v2876 = vmax.f32 %v845, %v1454
        %v2877 = vmax.f32 %v850, %v1459
        %v2878 = vmax.f32 %v853, %v1462
        %v2879 = vmax.f32 %v858, %v1467
        %v2880 = vmax.f32 %v861, %v1470
        %v2881 = vmax.f32 %v866, %v1475
        %v2882 = vmax.f32 %v869, %v1478
        %v2883 = vmax.f32 %v874, %v1483
        %v2884 = vmax.f32 %v877, %v1486
        %v2885 = vmax.f32 %v882, %v1491
        %v2886 = vmax.f32 %v885, %v1494
        %v2887 = vmax.f32 %v890, %v1499
        %v2888 = vmax.f32 %v893, %v1502
        %v2889 = vmax.f32 %v898, %v1507
        %v2890 = vmax.f32 %v901, %v1510
        %v2891 = vmax.f32 %v906, %v1515
        %v2892 = vmax.f32 %v909, %v1518
        %v2893 = vmax.f32 %v914, %v1523
        %v2894 = vmax.f32 %v917, %v1526
        %v2895 = vmax.f32 %v922, %v1531
        %v2896 = vmax.f32 %v925, %v1534
        %v2897 = vmax.f32 %v930, %v1539
        %v2898 = vmax.f32 %v933, %v1542
        %v2899 = vmax.f32 %v938, %v1547
        %v2900 = vmax.f32 %v941, %v1550
        %v2901 = vmax.f32 %v946, %v1555
        %v2902 = vmax.f32 %v949, %v1558
        %v2903 = vmax.f32 %v954, %v1563
        %v2904 = vmax.f32 %v957, %v1566
        %v2905 = vmax.f32 %v962, %v1571
        %v2906 = vmax.f32 %v965, %v1574
        %v2907 = vmax.f32 %v970, %v1579
        %v2908 = vmax.f32 %v973, %v1582
        %v2909 = vmax.f32 %v978, %v1587
        %v2910 = vmax.f32 %v981, %v1590
        %v2911 = vmax.f32 %v986, %v1595
        %v2912 = vmax.f32 %v989, %v1598
        %v2913 = vmax.f32 %v994, %v1603
        %v2914 = vmax.f32 %v997, %v1606
        %v2915 = vmax.f32 %v1002, %v1611
        %v2916 = vmax.f32 %v1005, %v1614
        %v2917 = vmax.f32 %v1010, %v1619
        %v2918 = vmax.f32 %v1013, %v1622
        %v2919 = vmax.f32 %v1018, %v1627
        %v2920 = vmax.f32 %v1021, %v1630
        %v2921 = vmax.f32 %v1026, %v1635
        %v2922 = vmax.f32 %v1029, %v1638
        %v2923 = vmax.f32 %v1996, %v2605
        %v2924 = vmax.f32 %v1999, %v2608
        %v2925 = vmax.f32 %v2004, %v2613
        %v2926 = vmax.f32 %v2007, %v2616
        %v2927 = vmax.f32 %v2012, %v2621
        %v2928 = vmax.f32 %v2015, %v2624
        %v2929 = vmax.f32 %v2020, %v2629
        %v2930 = vmax.f32 %v2023, %v2632
        %v2931 = vmax.f32 %v2028, %v2637
        %v2932 = vmax.f32 %v2031, %v2640
        %v2933 = vmax.f32 %v2036, %v2645
        %v2934 = vmax.f32 %v2039, %v2648
        %v2935 = vmax.f32 %v2044, %v2653
        %v2936 = vmax.f32 %v2047, %v2656
        %v2937 = vmax.f32 %v2052, %v2661
        %v2938 = vmax.f32 %v2055, %v2664
        %v2939 = vmax.f32 %v2060, %v2669
        %v2940 = vmax.f32 %v2063, %v2672
        %v2941 = vmax.f32 %v2068, %v2677
        %v2942 = vmax.f32 %v2071, %v2680
        %v2943 = vmax.f32 %v2076, %v2685
        %v2944 = vmax.f32 %v2079, %v2688
        %v2945 = vmax.f32 %v2084, %v2693
        %v2946 = vmax.f32 %v2087, %v2696
        %v2947 = vmax.f32 %v2092, %v2701
        %v2948 = vmax.f32 %v2095, %v2704
        %v2949 = vmax.f32 %v2100, %v2709
        %v2950 = vmax.f32 %v2103, %v2712
        %v2951 = vmax.f32 %v2108, %v2717
        %v2952 = vmax.f32 %v2111, %v2720
        %v2953 = vmax.f32 %v2116, %v2725
        %v2954 = vmax.f32 %v2119, %v2728
        %v2955 = vmax.f32 %v2124, %v2733
        %v2956 = vmax.f32 %v2127, %v2736
        %v2957 = vmax.f32 %v2132, %v2741
        %v2958 = vmax.f32 %v2135, %v2744
        %v2959 = vmax.f32 %v2140, %v2749
        %v2960 = vmax.f32 %v2143, %v2752
        %v2961 = vmax.f32 %v2148, %v2757
        %v2962 = vmax.f32 %v2151, %v2760
        %v2963 = vmax.f32 %v2156, %v2765
        %v2964 = vmax.f32 %v2159, %v2768
        %v2965 = vmax.f32 %v2164, %v2773
        %v2966 = vmax.f32 %v2167, %v2776
        %v2967 = vmax.f32 %v2172, %v2781
        %v2968 = vmax.f32 %v2175, %v2784
        %v2969 = vmax.f32 %v2180, %v2789
        %v2970 = vmax.f32 %v2183, %v2792
        %v2971 = vmax.f32 %v2188, %v2797
        %v2972 = vmax.f32 %v2191, %v2800
        %v2973 = vmax.f32 %v2196, %v2805
        %v2974 = vmax.f32 %v2199, %v2808
        %v2975 = vmax.f32 %v2204, %v2813
        %v2976 = vmax.f32 %v2207, %v2816
        %v2977 = vmax.f32 %v2212, %v2821
        %v2978 = vmax.f32 %v2215, %v2824
        %v2979 = vmax.f32 %v2220, %v2829
        %v2980 = vmax.f32 %v2223, %v2832
        %v2981 = vmax.f32 %v2228, %v2837
        %v2982 = vmax.f32 %v2231, %v2840
        %v2983 = vmax.f32 %v2236, %v2845
        %v2984 = vmax.f32 %v2239, %v2848
        %v2985 = vmax.f32 %v2244, %v2853
        %v2986 = vmax.f32 %v2247, %v2856
        %v2987 = vmax.f32 %v2859, %v2923
        %v2988 = vmax.f32 %v2860, %v2924
        %v2989 = vmax.f32 %v2861, %v2925
        %v2990 = vmax.f32 %v2862, %v2926
        %v2991 = vmax.f32 %v2863, %v2927
        %v2992 = vmax.f32 %v2864, %v2928
        %v2993 = vmax.f32 %v2865, %v2929
        %v2994 = vmax.f32 %v2866, %v2930
        %v2995 = vmax.f32 %v2867, %v2931
        %v2996 = vmax.f32 %v2868, %v2932
        %v2997 = vmax.f32 %v2869, %v2933
        %v2998 = vmax.f32 %v2870, %v2934
        %v2999 = vmax.f32 %v2871, %v2935
        %v3000 = vmax.f32 %v2872, %v2936
        %v3001 = vmax.f32 %v2873, %v2937
        %v3002 = vmax.f32 %v2874, %v2938
        %v3003 = vmax.f32 %v2875, %v2939
        %v3004 = vmax.f32 %v2876, %v2940
        %v3005 = vmax.f32 %v2877, %v2941
        %v3006 = vmax.f32 %v2878, %v2942
        %v3007 = vmax.f32 %v2879, %v2943
        %v3008 = vmax.f32 %v2880, %v2944
        %v3009 = vmax.f32 %v2881, %v2945
        %v3010 = vmax.f32 %v2882, %v2946
        %v3011 = vmax.f32 %v2883, %v2947
        %v3012 = vmax.f32 %v2884, %v2948
        %v3013 = vmax.f32 %v2885, %v2949
        %v3014 = vmax.f32 %v2886, %v2950
        %v3015 = vmax.f32 %v2887, %v2951
        %v3016 = vmax.f32 %v2888, %v2952
        %v3017 = vmax.f32 %v2889, %v2953
        %v3018 = vmax.f32 %v2890, %v2954
        %v3019 = vmax.f32 %v2891, %v2955
        %v3020 = vmax.f32 %v2892, %v2956
        %v3021 = vmax.f32 %v2893, %v2957
        %v3022 = vmax.f32 %v2894, %v2958
        %v3023 = vmax.f32 %v2895, %v2959
        %v3024 = vmax.f32 %v2896, %v2960
        %v3025 = vmax.f32 %v2897, %v2961
        %v3026 = vmax.f32 %v2898, %v2962
        %v3027 = vmax.f32 %v2899, %v2963
        %v3028 = vmax.f32 %v2900, %v2964
        %v3029 = vmax.f32 %v2901, %v2965
        %v3030 = vmax.f32 %v2902, %v2966
        %v3031 = vmax.f32 %v2903, %v2967
        %v3032 = vmax.f32 %v2904, %v2968
        %v3033 = vmax.f32 %v2905, %v2969
        %v3034 = vmax.f32 %v2906, %v2970
        %v3035 = vmax.f32 %v2907, %v2971
        %v3036 = vmax.f32 %v2908, %v2972
        %v3037 = vmax.f32 %v2909, %v2973
        %v3038 = vmax.f32 %v2910, %v2974
        %v3039 = vmax.f32 %v2911, %v2975
        %v3040 = vmax.f32 %v2912, %v2976
        %v3041 = vmax.f32 %v2913, %v2977
        %v3042 = vmax.f32 %v2914, %v2978
        %v3043 = vmax.f32 %v2915, %v2979
        %v3044 = vmax.f32 %v2916, %v2980
        %v3045 = vmax.f32 %v2917, %v2981
        %v3046 = vmax.f32 %v2918, %v2982
        %v3047 = vmax.f32 %v2919, %v2983
        %v3048 = vmax.f32 %v2920, %v2984
        %v3049 = vmax.f32 %v2921, %v2985
        %v3050 = vmax.f32 %v2922, %v2986
        %v3051 = vld [vmem:[%s5] sm:$0x1]
        %v3053 = vlaneseq
        %v3054 = vshrl.u32 %v3053, 7
        %v3055 = vsub.s32 0, %v3054
        %v3056 = vrot.slane %v3051, %v3055
        %v3058 = vadd.f32 %v2987, %v3056
        %v3059 = vadd.f32 %v2988, %v3056
        %v3060 = vadd.f32 %v2989, %v3056
        %v3061 = vadd.f32 %v2990, %v3056
        %v3062 = vadd.f32 %v2991, %v3056
        %v3063 = vadd.f32 %v2992, %v3056
        %v3064 = vadd.f32 %v2993, %v3056
        %v3065 = vadd.f32 %v2994, %v3056
        %v3066 = vadd.f32 %v2995, %v3056
        %v3067 = vadd.f32 %v2996, %v3056
        %v3068 = vadd.f32 %v2997, %v3056
        %v3069 = vadd.f32 %v2998, %v3056
        %v3070 = vadd.f32 %v2999, %v3056
        %v3071 = vadd.f32 %v3000, %v3056
        %v3072 = vadd.f32 %v3001, %v3056
        %v3073 = vadd.f32 %v3002, %v3056
        %v3074 = vadd.f32 %v3003, %v3056
        %v3075 = vadd.f32 %v3004, %v3056
        %v3076 = vadd.f32 %v3005, %v3056
        %v3077 = vadd.f32 %v3006, %v3056
        %v3078 = vadd.f32 %v3007, %v3056
        %v3079 = vadd.f32 %v3008, %v3056
        %v3080 = vadd.f32 %v3009, %v3056
        %v3081 = vadd.f32 %v3010, %v3056
        %v3082 = vadd.f32 %v3011, %v3056
        %v3083 = vadd.f32 %v3012, %v3056
        %v3084 = vadd.f32 %v3013, %v3056
        %v3085 = vadd.f32 %v3014, %v3056
        %v3086 = vadd.f32 %v3015, %v3056
        %v3087 = vadd.f32 %v3016, %v3056
        %v3088 = vadd.f32 %v3017, %v3056
        %v3089 = vadd.f32 %v3018, %v3056
        %v3090 = vadd.f32 %v3019, %v3056
        %v3091 = vadd.f32 %v3020, %v3056
        %v3092 = vadd.f32 %v3021, %v3056
        %v3093 = vadd.f32 %v3022, %v3056
        %v3094 = vadd.f32 %v3023, %v3056
        %v3095 = vadd.f32 %v3024, %v3056
        %v3096 = vadd.f32 %v3025, %v3056
        %v3097 = vadd.f32 %v3026, %v3056
        %v3098 = vadd.f32 %v3027, %v3056
        %v3099 = vadd.f32 %v3028, %v3056
        %v3100 = vadd.f32 %v3029, %v3056
        %v3101 = vadd.f32 %v3030, %v3056
        %v3102 = vadd.f32 %v3031, %v3056
        %v3103 = vadd.f32 %v3032, %v3056
        %v3104 = vadd.f32 %v3033, %v3056
        %v3105 = vadd.f32 %v3034, %v3056
        %v3106 = vadd.f32 %v3035, %v3056
        %v3107 = vadd.f32 %v3036, %v3056
        %v3108 = vadd.f32 %v3037, %v3056
        %v3109 = vadd.f32 %v3038, %v3056
        %v3110 = vadd.f32 %v3039, %v3056
        %v3111 = vadd.f32 %v3040, %v3056
        %v3112 = vadd.f32 %v3041, %v3056
        %v3113 = vadd.f32 %v3042, %v3056
        %v3114 = vadd.f32 %v3043, %v3056
        %v3115 = vadd.f32 %v3044, %v3056
        %v3116 = vadd.f32 %v3045, %v3056
        %v3117 = vadd.f32 %v3046, %v3056
        %v3118 = vadd.f32 %v3047, %v3056
        %v3119 = vadd.f32 %v3048, %v3056
        %v3120 = vadd.f32 %v3049, %v3056
        %v3121 = vadd.f32 %v3050, %v3056
        %v3122 = vmax.f32 %v3058, 0.0
        %v3123 = vmax.f32 %v3059, 0.0
        %v3124 = vmax.f32 %v3060, 0.0
        %v3125 = vmax.f32 %v3061, 0.0
        %v3126 = vmax.f32 %v3062, 0.0
        %v3127 = vmax.f32 %v3063, 0.0
        %v3128 = vmax.f32 %v3064, 0.0
        %v3129 = vmax.f32 %v3065, 0.0
        %v3130 = vmax.f32 %v3066, 0.0
        %v3131 = vmax.f32 %v3067, 0.0
        %v3132 = vmax.f32 %v3068, 0.0
        %v3133 = vmax.f32 %v3069, 0.0
        %v3134 = vmax.f32 %v3070, 0.0
        %v3135 = vmax.f32 %v3071, 0.0
        %v3136 = vmax.f32 %v3072, 0.0
        %v3137 = vmax.f32 %v3073, 0.0
        %v3138 = vmax.f32 %v3074, 0.0
        %v3139 = vmax.f32 %v3075, 0.0
        %v3140 = vmax.f32 %v3076, 0.0
        %v3141 = vmax.f32 %v3077, 0.0
        %v3142 = vmax.f32 %v3078, 0.0
        %v3143 = vmax.f32 %v3079, 0.0
        %v3144 = vmax.f32 %v3080, 0.0
        %v3145 = vmax.f32 %v3081, 0.0
        %v3146 = vmax.f32 %v3082, 0.0
        %v3147 = vmax.f32 %v3083, 0.0
        %v3148 = vmax.f32 %v3084, 0.0
        %v3149 = vmax.f32 %v3085, 0.0
        %v3150 = vmax.f32 %v3086, 0.0
        %v3151 = vmax.f32 %v3087, 0.0
        %v3152 = vmax.f32 %v3088, 0.0
        %v3153 = vmax.f32 %v3089, 0.0
        %v3154 = vmax.f32 %v3090, 0.0
        %v3155 = vmax.f32 %v3091, 0.0
        %v3156 = vmax.f32 %v3092, 0.0
        %v3157 = vmax.f32 %v3093, 0.0
        %v3158 = vmax.f32 %v3094, 0.0
        %v3159 = vmax.f32 %v3095, 0.0
        %v3160 = vmax.f32 %v3096, 0.0
        %v3161 = vmax.f32 %v3097, 0.0
        %v3162 = vmax.f32 %v3098, 0.0
        %v3163 = vmax.f32 %v3099, 0.0
        %v3164 = vmax.f32 %v3100, 0.0
        %v3165 = vmax.f32 %v3101, 0.0
        %v3166 = vmax.f32 %v3102, 0.0
        %v3167 = vmax.f32 %v3103, 0.0
        %v3168 = vmax.f32 %v3104, 0.0
        %v3169 = vmax.f32 %v3105, 0.0
        %v3170 = vmax.f32 %v3106, 0.0
        %v3171 = vmax.f32 %v3107, 0.0
        %v3172 = vmax.f32 %v3108, 0.0
        %v3173 = vmax.f32 %v3109, 0.0
        %v3174 = vmax.f32 %v3110, 0.0
        %v3175 = vmax.f32 %v3111, 0.0
        %v3176 = vmax.f32 %v3112, 0.0
        %v3177 = vmax.f32 %v3113, 0.0
        %v3178 = vmax.f32 %v3114, 0.0
        %v3179 = vmax.f32 %v3115, 0.0
        %v3180 = vmax.f32 %v3116, 0.0
        %v3181 = vmax.f32 %v3117, 0.0
        %v3182 = vmax.f32 %v3118, 0.0
        %v3183 = vmax.f32 %v3119, 0.0
        %v3184 = vmax.f32 %v3120, 0.0
        %v3185 = vmax.f32 %v3121, 0.0
        %v3186 = vpack.c.bf16 %v3123, %v3122
        %v3187 = vpack.c.bf16 %v3125, %v3124
        %v3188 = vpack.c.bf16 %v3127, %v3126
        %v3189 = vpack.c.bf16 %v3129, %v3128
        %v3190 = vpack.c.bf16 %v3131, %v3130
        %v3191 = vpack.c.bf16 %v3133, %v3132
        %v3192 = vpack.c.bf16 %v3135, %v3134
        %v3193 = vpack.c.bf16 %v3137, %v3136
        %v3194 = vpack.c.bf16 %v3139, %v3138
        %v3195 = vpack.c.bf16 %v3141, %v3140
        %v3196 = vpack.c.bf16 %v3143, %v3142
        %v3197 = vpack.c.bf16 %v3145, %v3144
        %v3198 = vpack.c.bf16 %v3147, %v3146
        %v3199 = vpack.c.bf16 %v3149, %v3148
        %v3200 = vpack.c.bf16 %v3151, %v3150
        %v3201 = vpack.c.bf16 %v3153, %v3152
        %v3202 = vpack.c.bf16 %v3155, %v3154
        %v3203 = vpack.c.bf16 %v3157, %v3156
        %v3204 = vpack.c.bf16 %v3159, %v3158
        %v3205 = vpack.c.bf16 %v3161, %v3160
        %v3206 = vpack.c.bf16 %v3163, %v3162
        %v3207 = vpack.c.bf16 %v3165, %v3164
        %v3208 = vpack.c.bf16 %v3167, %v3166
        %v3209 = vpack.c.bf16 %v3169, %v3168
        %v3210 = vpack.c.bf16 %v3171, %v3170
        %v3211 = vpack.c.bf16 %v3173, %v3172
        %v3212 = vpack.c.bf16 %v3175, %v3174
        %v3213 = vpack.c.bf16 %v3177, %v3176
        %v3214 = vpack.c.bf16 %v3179, %v3178
        %v3215 = vpack.c.bf16 %v3181, %v3180
        %v3216 = vpack.c.bf16 %v3183, %v3182
        %v3217 = vpack.c.bf16 %v3185, %v3184
        %v3250 = vunpack.c.l.b16 %v3186
        %v3251 = vunpack.c.h.b16 %v3186
        %v3252 = vunpack.c.l.b16 %v3187
        %v3253 = vunpack.c.h.b16 %v3187
        %v3254 = vunpack.c.l.b16 %v3188
        %v3255 = vunpack.c.h.b16 %v3188
        %v3256 = vunpack.c.l.b16 %v3189
        %v3257 = vunpack.c.h.b16 %v3189
        %v3258 = vunpack.c.l.b16 %v3190
        %v3259 = vunpack.c.h.b16 %v3190
        %v3260 = vunpack.c.l.b16 %v3191
        %v3261 = vunpack.c.h.b16 %v3191
        %v3262 = vunpack.c.l.b16 %v3192
        %v3263 = vunpack.c.h.b16 %v3192
        %v3264 = vunpack.c.l.b16 %v3193
        %v3265 = vunpack.c.h.b16 %v3193
        %v3266 = vunpack.c.l.b16 %v3194
        %v3267 = vunpack.c.h.b16 %v3194
        %v3268 = vunpack.c.l.b16 %v3195
        %v3269 = vunpack.c.h.b16 %v3195
        %v3270 = vunpack.c.l.b16 %v3196
        %v3271 = vunpack.c.h.b16 %v3196
        %v3272 = vunpack.c.l.b16 %v3197
        %v3273 = vunpack.c.h.b16 %v3197
        %v3274 = vunpack.c.l.b16 %v3198
        %v3275 = vunpack.c.h.b16 %v3198
        %v3276 = vunpack.c.l.b16 %v3199
        %v3277 = vunpack.c.h.b16 %v3199
        %v3278 = vunpack.c.l.b16 %v3200
        %v3279 = vunpack.c.h.b16 %v3200
        %v3280 = vunpack.c.l.b16 %v3201
        %v3281 = vunpack.c.h.b16 %v3201
        %v3282 = vunpack.c.l.b16 %v3202
        %v3283 = vunpack.c.h.b16 %v3202
        %v3284 = vunpack.c.l.b16 %v3203
        %v3285 = vunpack.c.h.b16 %v3203
        %v3286 = vunpack.c.l.b16 %v3204
        %v3287 = vunpack.c.h.b16 %v3204
        %v3288 = vunpack.c.l.b16 %v3205
        %v3289 = vunpack.c.h.b16 %v3205
        %v3290 = vunpack.c.l.b16 %v3206
        %v3291 = vunpack.c.h.b16 %v3206
        %v3292 = vunpack.c.l.b16 %v3207
        %v3293 = vunpack.c.h.b16 %v3207
        %v3294 = vunpack.c.l.b16 %v3208
        %v3295 = vunpack.c.h.b16 %v3208
        %v3296 = vunpack.c.l.b16 %v3209
        %v3297 = vunpack.c.h.b16 %v3209
        %v3298 = vunpack.c.l.b16 %v3210
        %v3299 = vunpack.c.h.b16 %v3210
        %v3300 = vunpack.c.l.b16 %v3211
        %v3301 = vunpack.c.h.b16 %v3211
        %v3302 = vunpack.c.l.b16 %v3212
        %v3303 = vunpack.c.h.b16 %v3212
        %v3304 = vunpack.c.l.b16 %v3213
        %v3305 = vunpack.c.h.b16 %v3213
        %v3306 = vunpack.c.l.b16 %v3214
        %v3307 = vunpack.c.h.b16 %v3214
        %v3308 = vunpack.c.l.b16 %v3215
        %v3309 = vunpack.c.h.b16 %v3215
        %v3310 = vunpack.c.l.b16 %v3216
        %v3311 = vunpack.c.h.b16 %v3216
        %v3312 = vunpack.c.l.b16 %v3217
        %v3313 = vunpack.c.h.b16 %v3217
        %v3314 = vpack.c.b16 %v3250, %v3250
        %v3315 = vpack.c.b16 %v3251, %v3251
        %v3316 = vpack.c.b16 %v3252, %v3252
        %v3317 = vpack.c.b16 %v3253, %v3253
        %v3318 = vpack.c.b16 %v3254, %v3254
        %v3319 = vpack.c.b16 %v3255, %v3255
        %v3320 = vpack.c.b16 %v3256, %v3256
        %v3321 = vpack.c.b16 %v3257, %v3257
        %v3322 = vpack.c.b16 %v3258, %v3258
        %v3323 = vpack.c.b16 %v3259, %v3259
        %v3324 = vpack.c.b16 %v3260, %v3260
        %v3325 = vpack.c.b16 %v3261, %v3261
        %v3326 = vpack.c.b16 %v3262, %v3262
        %v3327 = vpack.c.b16 %v3263, %v3263
        %v3328 = vpack.c.b16 %v3264, %v3264
        %v3329 = vpack.c.b16 %v3265, %v3265
        %v3330 = vpack.c.b16 %v3266, %v3266
        %v3331 = vpack.c.b16 %v3267, %v3267
        %v3332 = vpack.c.b16 %v3268, %v3268
        %v3333 = vpack.c.b16 %v3269, %v3269
        %v3334 = vpack.c.b16 %v3270, %v3270
        %v3335 = vpack.c.b16 %v3271, %v3271
        %v3336 = vpack.c.b16 %v3272, %v3272
        %v3337 = vpack.c.b16 %v3273, %v3273
        %v3338 = vpack.c.b16 %v3274, %v3274
        %v3339 = vpack.c.b16 %v3275, %v3275
        %v3340 = vpack.c.b16 %v3276, %v3276
        %v3341 = vpack.c.b16 %v3277, %v3277
        %v3342 = vpack.c.b16 %v3278, %v3278
        %v3343 = vpack.c.b16 %v3279, %v3279
        %v3344 = vpack.c.b16 %v3280, %v3280
        %v3345 = vpack.c.b16 %v3281, %v3281
        %v3346 = vpack.c.b16 %v3282, %v3282
        %v3347 = vpack.c.b16 %v3283, %v3283
        %v3348 = vpack.c.b16 %v3284, %v3284
        %v3349 = vpack.c.b16 %v3285, %v3285
        %v3350 = vpack.c.b16 %v3286, %v3286
        %v3351 = vpack.c.b16 %v3287, %v3287
        %v3352 = vpack.c.b16 %v3288, %v3288
        %v3353 = vpack.c.b16 %v3289, %v3289
        %v3354 = vpack.c.b16 %v3290, %v3290
        %v3355 = vpack.c.b16 %v3291, %v3291
        %v3356 = vpack.c.b16 %v3292, %v3292
        %v3357 = vpack.c.b16 %v3293, %v3293
        %v3358 = vpack.c.b16 %v3294, %v3294
        %v3359 = vpack.c.b16 %v3295, %v3295
        %v3360 = vpack.c.b16 %v3296, %v3296
        %v3361 = vpack.c.b16 %v3297, %v3297
        %v3362 = vpack.c.b16 %v3298, %v3298
        %v3363 = vpack.c.b16 %v3299, %v3299
        %v3364 = vpack.c.b16 %v3300, %v3300
        %v3365 = vpack.c.b16 %v3301, %v3301
        %v3366 = vpack.c.b16 %v3302, %v3302
        %v3367 = vpack.c.b16 %v3303, %v3303
        %v3368 = vpack.c.b16 %v3304, %v3304
        %v3369 = vpack.c.b16 %v3305, %v3305
        %v3370 = vpack.c.b16 %v3306, %v3306
        %v3371 = vpack.c.b16 %v3307, %v3307
        %v3372 = vpack.c.b16 %v3308, %v3308
        %v3373 = vpack.c.b16 %v3309, %v3309
        %v3374 = vpack.c.b16 %v3310, %v3310
        %v3375 = vpack.c.b16 %v3311, %v3311
        %v3376 = vpack.c.b16 %v3312, %v3312
        %v3377 = vpack.c.b16 %v3313, %v3313
        %vm3442 = vcmask 93184
        %3443 = vst.msk [vmem:[%s337] sm:$0xf] %vm3442, %v3314
        %3444 = vst.msk [vmem:[%s337 + $0x4] sm:$0xf] %vm3442, %v3315
        %3445 = vst.msk [vmem:[%s337 + $0x8] sm:$0xf] %vm3442, %v3316
        %3446 = vst.msk [vmem:[%s337 + $0xc] sm:$0xf] %vm3442, %v3317
        %3447 = vst.msk [vmem:[%s337 + $0x10] sm:$0xf] %vm3442, %v3318
        %3448 = vst.msk [vmem:[%s337 + $0x14] sm:$0xf] %vm3442, %v3319
        %3449 = vst.msk [vmem:[%s337 + $0x18] sm:$0xf] %vm3442, %v3320
        %3450 = vst.msk [vmem:[%s337 + $0x1c] sm:$0xf] %vm3442, %v3321
        %3451 = vst.msk [vmem:[%s337 + $0x20] sm:$0xf] %vm3442, %v3322
        %3452 = vst.msk [vmem:[%s337 + $0x24] sm:$0xf] %vm3442, %v3323
        %3453 = vst.msk [vmem:[%s337 + $0x28] sm:$0xf] %vm3442, %v3324
        %3454 = vst.msk [vmem:[%s337 + $0x2c] sm:$0xf] %vm3442, %v3325
        %3455 = vst.msk [vmem:[%s337 + $0x30] sm:$0xf] %vm3442, %v3326
        %3456 = vst.msk [vmem:[%s337 + $0x34] sm:$0xf] %vm3442, %v3327
        %3457 = vst.msk [vmem:[%s337 + $0x38] sm:$0xf] %vm3442, %v3328
        %3458 = vst.msk [vmem:[%s337 + $0x3c] sm:$0xf] %vm3442, %v3329
        %3459 = vst.msk [vmem:[%s337 + $0x40] sm:$0xf] %vm3442, %v3330
        %3460 = vst.msk [vmem:[%s337 + $0x44] sm:$0xf] %vm3442, %v3331
        %3461 = vst.msk [vmem:[%s337 + $0x48] sm:$0xf] %vm3442, %v3332
        %3462 = vst.msk [vmem:[%s337 + $0x4c] sm:$0xf] %vm3442, %v3333
        %3463 = vst.msk [vmem:[%s337 + $0x50] sm:$0xf] %vm3442, %v3334
        %3464 = vst.msk [vmem:[%s337 + $0x54] sm:$0xf] %vm3442, %v3335
        %3465 = vst.msk [vmem:[%s337 + $0x58] sm:$0xf] %vm3442, %v3336
        %3466 = vst.msk [vmem:[%s337 + $0x5c] sm:$0xf] %vm3442, %v3337
        %3467 = vst.msk [vmem:[%s337 + $0x60] sm:$0xf] %vm3442, %v3338
        %3468 = vst.msk [vmem:[%s337 + $0x64] sm:$0xf] %vm3442, %v3339
        %3469 = vst.msk [vmem:[%s337 + $0x68] sm:$0xf] %vm3442, %v3340
        %3470 = vst.msk [vmem:[%s337 + $0x6c] sm:$0xf] %vm3442, %v3341
        %3471 = vst.msk [vmem:[%s337 + $0x70] sm:$0xf] %vm3442, %v3342
        %3472 = vst.msk [vmem:[%s337 + $0x74] sm:$0xf] %vm3442, %v3343
        %3473 = vst.msk [vmem:[%s337 + $0x78] sm:$0xf] %vm3442, %v3344
        %3474 = vst.msk [vmem:[%s337 + $0x7c] sm:$0xf] %vm3442, %v3345
        %3475 = vst.msk [vmem:[%s337 + $0x80] sm:$0xf] %vm3442, %v3346
        %3476 = vst.msk [vmem:[%s337 + $0x84] sm:$0xf] %vm3442, %v3347
        %3477 = vst.msk [vmem:[%s337 + $0x88] sm:$0xf] %vm3442, %v3348
        %3478 = vst.msk [vmem:[%s337 + $0x8c] sm:$0xf] %vm3442, %v3349
        %3479 = vst.msk [vmem:[%s337 + $0x90] sm:$0xf] %vm3442, %v3350
        %3480 = vst.msk [vmem:[%s337 + $0x94] sm:$0xf] %vm3442, %v3351
        %3481 = vst.msk [vmem:[%s337 + $0x98] sm:$0xf] %vm3442, %v3352
        %3482 = vst.msk [vmem:[%s337 + $0x9c] sm:$0xf] %vm3442, %v3353
        %3483 = vst.msk [vmem:[%s337 + $0xa0] sm:$0xf] %vm3442, %v3354
        %3484 = vst.msk [vmem:[%s337 + $0xa4] sm:$0xf] %vm3442, %v3355
        %3485 = vst.msk [vmem:[%s337 + $0xa8] sm:$0xf] %vm3442, %v3356
        %3486 = vst.msk [vmem:[%s337 + $0xac] sm:$0xf] %vm3442, %v3357
        %3487 = vst.msk [vmem:[%s337 + $0xb0] sm:$0xf] %vm3442, %v3358
        %3488 = vst.msk [vmem:[%s337 + $0xb4] sm:$0xf] %vm3442, %v3359
        %3489 = vst.msk [vmem:[%s337 + $0xb8] sm:$0xf] %vm3442, %v3360
        %3490 = vst.msk [vmem:[%s337 + $0xbc] sm:$0xf] %vm3442, %v3361
        %3491 = vst.msk [vmem:[%s337 + $0xc0] sm:$0xf] %vm3442, %v3362
        %3492 = vst.msk [vmem:[%s337 + $0xc4] sm:$0xf] %vm3442, %v3363
        %3493 = vst.msk [vmem:[%s337 + $0xc8] sm:$0xf] %vm3442, %v3364
        %3494 = vst.msk [vmem:[%s337 + $0xcc] sm:$0xf] %vm3442, %v3365
        %3495 = vst.msk [vmem:[%s337 + $0xd0] sm:$0xf] %vm3442, %v3366
        %3496 = vst.msk [vmem:[%s337 + $0xd4] sm:$0xf] %vm3442, %v3367
        %3497 = vst.msk [vmem:[%s337 + $0xd8] sm:$0xf] %vm3442, %v3368
        %3498 = vst.msk [vmem:[%s337 + $0xdc] sm:$0xf] %vm3442, %v3369
        %3499 = vst.msk [vmem:[%s337 + $0xe0] sm:$0xf] %vm3442, %v3370
        %3500 = vst.msk [vmem:[%s337 + $0xe4] sm:$0xf] %vm3442, %v3371
        %3501 = vst.msk [vmem:[%s337 + $0xe8] sm:$0xf] %vm3442, %v3372
        %3502 = vst.msk [vmem:[%s337 + $0xec] sm:$0xf] %vm3442, %v3373
        %3503 = vst.msk [vmem:[%s337 + $0xf0] sm:$0xf] %vm3442, %v3374
        %3504 = vst.msk [vmem:[%s337 + $0xf4] sm:$0xf] %vm3442, %v3375
        %3505 = vst.msk [vmem:[%s337 + $0xf8] sm:$0xf] %vm3442, %v3376
        %3506 = vst.msk [vmem:[%s337 + $0xfc] sm:$0xf] %vm3442, %v3377
        %s3507 = sand.u32 %s171, 1
        %s3508 = sand.u32 %s171, 1
        %s3509 = smul.addr %s3508, 256
        %s3510 = scalar_lea.vmem [#allocation2], %s3509
        // Predicated region
        $region45: #{net_forward.4} parent=43 // pred_check
          %p3511 = pneg %p181
        $region46: #{net_forward.4} parent=43 // pred_check_branch
          %3513 = sbr.rel (%p3511) target = $region48
        $region47: #{net_forward.4} parent=43 // pred_region
          %s3514 = smul.u32 64, %s17
          %s3515 = ssub.s32 169, %s3514
          %p3516 = scmp.lt.s32.totalorder %s3515, 64
          %s3517 = scalar_select %p3516, %s3515, 64
          %s3518 = smul.u32 64, %s3517
          %p3519 = scmp.ne.s32.totalorder 0, %s3518
          %s3520 = smul.addr %s3514, 4
          %s3521 = scalar_lea.vmem %s6, %s3520
          // Predicated region
          $region49: #{net_forward.4} parent=47 // pred_check
            %p3522 = pneg %p3519
          $region50: #{net_forward.4} parent=47 // pred_check_branch
            %3524 = sbr.rel (%p3522) target = $region52
          $region51: #{net_forward.4} parent=47 // pred_region
            // Predicated region
            $region53: #{net_forward.4} parent=51 // pred_check
              _
            $region54: #{net_forward.4} parent=51 // pred_check_branch
              %3526 = sbr.rel target = $region56
            $region55: #{net_forward.4} parent=51 // pred_region
              // Predicated region
              $region75: #{net_forward.4} parent=55 // pred_check
                _
              $region76: #{net_forward.4} parent=55 // pred_check_branch
                %3701 = sbr.rel (0) target = $region78
              $region77: #{net_forward.4} parent=55 // pred_region
                %s3703 = sshrl.u32 %s3517, 6
                // While loop
                $region79: #{net_forward.4} parent=77 // loop_pre_header
                  _
                $region80: #{net_forward.4} parent=77 // loop_header
                  %s3705 = sphi 0, %s3707
                  %p3706 = scmp.ge.s32.totalorder %s3705, %s3703
                  %s3710 = sphi 0, %s3843
                  %s3711 = sphi %s3510, %s3846
                  %s3712 = sphi %s3521, %s3847
                $region81: #{net_forward.4} parent=77 // loop_header_branch
                  %3709 = sbr.rel (%p3706) target = $region85
                $region82: #{net_forward.4} parent=77 // loop_body
                  %v3713 = vld [vmem:[%s3711] sm:$0xf]
                  %3714 = vst [vmem:[%s3712] sm:$0xf] %v3713
                  %v3715 = vld [vmem:[%s3711 + $0x4] sm:$0xf]
                  %3716 = vst [vmem:[%s3712 + $0x4] sm:$0xf] %v3715
                  %v3717 = vld [vmem:[%s3711 + $0x8] sm:$0xf]
                  %3718 = vst [vmem:[%s3712 + $0x8] sm:$0xf] %v3717
                  %v3719 = vld [vmem:[%s3711 + $0xc] sm:$0xf]
                  %3720 = vst [vmem:[%s3712 + $0xc] sm:$0xf] %v3719
                  %v3721 = vld [vmem:[%s3711 + $0x10] sm:$0xf]
                  %3722 = vst [vmem:[%s3712 + $0x10] sm:$0xf] %v3721
                  %v3723 = vld [vmem:[%s3711 + $0x14] sm:$0xf]
                  %3724 = vst [vmem:[%s3712 + $0x14] sm:$0xf] %v3723
                  %v3725 = vld [vmem:[%s3711 + $0x18] sm:$0xf]
                  %3726 = vst [vmem:[%s3712 + $0x18] sm:$0xf] %v3725
                  %v3727 = vld [vmem:[%s3711 + $0x1c] sm:$0xf]
                  %3728 = vst [vmem:[%s3712 + $0x1c] sm:$0xf] %v3727
                  %v3729 = vld [vmem:[%s3711 + $0x20] sm:$0xf]
                  %3730 = vst [vmem:[%s3712 + $0x20] sm:$0xf] %v3729
                  %v3731 = vld [vmem:[%s3711 + $0x24] sm:$0xf]
                  %3732 = vst [vmem:[%s3712 + $0x24] sm:$0xf] %v3731
                  %v3733 = vld [vmem:[%s3711 + $0x28] sm:$0xf]
                  %3734 = vst [vmem:[%s3712 + $0x28] sm:$0xf] %v3733
                  %v3735 = vld [vmem:[%s3711 + $0x2c] sm:$0xf]
                  %3736 = vst [vmem:[%s3712 + $0x2c] sm:$0xf] %v3735
                  %v3737 = vld [vmem:[%s3711 + $0x30] sm:$0xf]
                  %3738 = vst [vmem:[%s3712 + $0x30] sm:$0xf] %v3737
                  %v3739 = vld [vmem:[%s3711 + $0x34] sm:$0xf]
                  %3740 = vst [vmem:[%s3712 + $0x34] sm:$0xf] %v3739
                  %v3741 = vld [vmem:[%s3711 + $0x38] sm:$0xf]
                  %3742 = vst [vmem:[%s3712 + $0x38] sm:$0xf] %v3741
                  %v3743 = vld [vmem:[%s3711 + $0x3c] sm:$0xf]
                  %3744 = vst [vmem:[%s3712 + $0x3c] sm:$0xf] %v3743
                  %v3745 = vld [vmem:[%s3711 + $0x40] sm:$0xf]
                  %3746 = vst [vmem:[%s3712 + $0x40] sm:$0xf] %v3745
                  %v3747 = vld [vmem:[%s3711 + $0x44] sm:$0xf]
                  %3748 = vst [vmem:[%s3712 + $0x44] sm:$0xf] %v3747
                  %v3749 = vld [vmem:[%s3711 + $0x48] sm:$0xf]
                  %3750 = vst [vmem:[%s3712 + $0x48] sm:$0xf] %v3749
                  %v3751 = vld [vmem:[%s3711 + $0x4c] sm:$0xf]
                  %3752 = vst [vmem:[%s3712 + $0x4c] sm:$0xf] %v3751
                  %v3753 = vld [vmem:[%s3711 + $0x50] sm:$0xf]
                  %3754 = vst [vmem:[%s3712 + $0x50] sm:$0xf] %v3753
                  %v3755 = vld [vmem:[%s3711 + $0x54] sm:$0xf]
                  %3756 = vst [vmem:[%s3712 + $0x54] sm:$0xf] %v3755
                  %v3757 = vld [vmem:[%s3711 + $0x58] sm:$0xf]
                  %3758 = vst [vmem:[%s3712 + $0x58] sm:$0xf] %v3757
                  %v3759 = vld [vmem:[%s3711 + $0x5c] sm:$0xf]
                  %3760 = vst [vmem:[%s3712 + $0x5c] sm:$0xf] %v3759
                  %v3761 = vld [vmem:[%s3711 + $0x60] sm:$0xf]
                  %3762 = vst [vmem:[%s3712 + $0x60] sm:$0xf] %v3761
                  %v3763 = vld [vmem:[%s3711 + $0x64] sm:$0xf]
                  %3764 = vst [vmem:[%s3712 + $0x64] sm:$0xf] %v3763
                  %v3765 = vld [vmem:[%s3711 + $0x68] sm:$0xf]
                  %3766 = vst [vmem:[%s3712 + $0x68] sm:$0xf] %v3765
                  %v3767 = vld [vmem:[%s3711 + $0x6c] sm:$0xf]
                  %3768 = vst [vmem:[%s3712 + $0x6c] sm:$0xf] %v3767
                  %v3769 = vld [vmem:[%s3711 + $0x70] sm:$0xf]
                  %3770 = vst [vmem:[%s3712 + $0x70] sm:$0xf] %v3769
                  %v3771 = vld [vmem:[%s3711 + $0x74] sm:$0xf]
                  %3772 = vst [vmem:[%s3712 + $0x74] sm:$0xf] %v3771
                  %v3773 = vld [vmem:[%s3711 + $0x78] sm:$0xf]
                  %3774 = vst [vmem:[%s3712 + $0x78] sm:$0xf] %v3773
                  %v3775 = vld [vmem:[%s3711 + $0x7c] sm:$0xf]
                  %3776 = vst [vmem:[%s3712 + $0x7c] sm:$0xf] %v3775
                  %v3777 = vld [vmem:[%s3711 + $0x80] sm:$0xf]
                  %3778 = vst [vmem:[%s3712 + $0x80] sm:$0xf] %v3777
                  %v3779 = vld [vmem:[%s3711 + $0x84] sm:$0xf]
                  %3780 = vst [vmem:[%s3712 + $0x84] sm:$0xf] %v3779
                  %v3781 = vld [vmem:[%s3711 + $0x88] sm:$0xf]
                  %3782 = vst [vmem:[%s3712 + $0x88] sm:$0xf] %v3781
                  %v3783 = vld [vmem:[%s3711 + $0x8c] sm:$0xf]
                  %3784 = vst [vmem:[%s3712 + $0x8c] sm:$0xf] %v3783
                  %v3785 = vld [vmem:[%s3711 + $0x90] sm:$0xf]
                  %3786 = vst [vmem:[%s3712 + $0x90] sm:$0xf] %v3785
                  %v3787 = vld [vmem:[%s3711 + $0x94] sm:$0xf]
                  %3788 = vst [vmem:[%s3712 + $0x94] sm:$0xf] %v3787
                  %v3789 = vld [vmem:[%s3711 + $0x98] sm:$0xf]
                  %3790 = vst [vmem:[%s3712 + $0x98] sm:$0xf] %v3789
                  %v3791 = vld [vmem:[%s3711 + $0x9c] sm:$0xf]
                  %3792 = vst [vmem:[%s3712 + $0x9c] sm:$0xf] %v3791
                  %v3793 = vld [vmem:[%s3711 + $0xa0] sm:$0xf]
                  %3794 = vst [vmem:[%s3712 + $0xa0] sm:$0xf] %v3793
                  %v3795 = vld [vmem:[%s3711 + $0xa4] sm:$0xf]
                  %3796 = vst [vmem:[%s3712 + $0xa4] sm:$0xf] %v3795
                  %v3797 = vld [vmem:[%s3711 + $0xa8] sm:$0xf]
                  %3798 = vst [vmem:[%s3712 + $0xa8] sm:$0xf] %v3797
                  %v3799 = vld [vmem:[%s3711 + $0xac] sm:$0xf]
                  %3800 = vst [vmem:[%s3712 + $0xac] sm:$0xf] %v3799
                  %v3801 = vld [vmem:[%s3711 + $0xb0] sm:$0xf]
                  %3802 = vst [vmem:[%s3712 + $0xb0] sm:$0xf] %v3801
                  %v3803 = vld [vmem:[%s3711 + $0xb4] sm:$0xf]
                  %3804 = vst [vmem:[%s3712 + $0xb4] sm:$0xf] %v3803
                  %v3805 = vld [vmem:[%s3711 + $0xb8] sm:$0xf]
                  %3806 = vst [vmem:[%s3712 + $0xb8] sm:$0xf] %v3805
                  %v3807 = vld [vmem:[%s3711 + $0xbc] sm:$0xf]
                  %3808 = vst [vmem:[%s3712 + $0xbc] sm:$0xf] %v3807
                  %v3809 = vld [vmem:[%s3711 + $0xc0] sm:$0xf]
                  %3810 = vst [vmem:[%s3712 + $0xc0] sm:$0xf] %v3809
                  %v3811 = vld [vmem:[%s3711 + $0xc4] sm:$0xf]
                  %3812 = vst [vmem:[%s3712 + $0xc4] sm:$0xf] %v3811
                  %v3813 = vld [vmem:[%s3711 + $0xc8] sm:$0xf]
                  %3814 = vst [vmem:[%s3712 + $0xc8] sm:$0xf] %v3813
                  %v3815 = vld [vmem:[%s3711 + $0xcc] sm:$0xf]
                  %3816 = vst [vmem:[%s3712 + $0xcc] sm:$0xf] %v3815
                  %v3817 = vld [vmem:[%s3711 + $0xd0] sm:$0xf]
                  %3818 = vst [vmem:[%s3712 + $0xd0] sm:$0xf] %v3817
                  %v3819 = vld [vmem:[%s3711 + $0xd4] sm:$0xf]
                  %3820 = vst [vmem:[%s3712 + $0xd4] sm:$0xf] %v3819
                  %v3821 = vld [vmem:[%s3711 + $0xd8] sm:$0xf]
                  %3822 = vst [vmem:[%s3712 + $0xd8] sm:$0xf] %v3821
                  %v3823 = vld [vmem:[%s3711 + $0xdc] sm:$0xf]
                  %3824 = vst [vmem:[%s3712 + $0xdc] sm:$0xf] %v3823
                  %v3825 = vld [vmem:[%s3711 + $0xe0] sm:$0xf]
                  %3826 = vst [vmem:[%s3712 + $0xe0] sm:$0xf] %v3825
                  %v3827 = vld [vmem:[%s3711 + $0xe4] sm:$0xf]
                  %3828 = vst [vmem:[%s3712 + $0xe4] sm:$0xf] %v3827
                  %v3829 = vld [vmem:[%s3711 + $0xe8] sm:$0xf]
                  %3830 = vst [vmem:[%s3712 + $0xe8] sm:$0xf] %v3829
                  %v3831 = vld [vmem:[%s3711 + $0xec] sm:$0xf]
                  %3832 = vst [vmem:[%s3712 + $0xec] sm:$0xf] %v3831
                  %v3833 = vld [vmem:[%s3711 + $0xf0] sm:$0xf]
                  %3834 = vst [vmem:[%s3712 + $0xf0] sm:$0xf] %v3833
                  %v3835 = vld [vmem:[%s3711 + $0xf4] sm:$0xf]
                  %3836 = vst [vmem:[%s3712 + $0xf4] sm:$0xf] %v3835
                  %v3837 = vld [vmem:[%s3711 + $0xf8] sm:$0xf]
                  %3838 = vst [vmem:[%s3712 + $0xf8] sm:$0xf] %v3837
                  %v3839 = vld [vmem:[%s3711 + $0xfc] sm:$0xf]
                  %3840 = vst [vmem:[%s3712 + $0xfc] sm:$0xf] %v3839
                  %s3841 = sadd.s32 1, %s3710
                  %p3842 = scmp.ge.s32.totalorder %s3841, %s3703
                  %s3843 = scalar_select %p3842, 0, %s3841
                  %s3844 = smul.u32 %s3843, 256
                  %s3845 = smul.u32 %s3843, 256
                  %s3846 = scalar_lea.vmem %s3510, %s3844 [#allocation2]
                  %s3847 = scalar_lea.vmem %s3521, %s3845
                $region83: #{net_forward.4} parent=77 // loop_footer
                  %s3707 = sadd.s32 %s3705, 1
                $region84: #{net_forward.4} parent=77 // loop_footer_branch
                  %3704 = sbr.rel target = $region80
                $region85: #{net_forward.4} parent=77 // loop_exit
                  _
                %s3848 = sshrl.u32 %s3517, 6
                %s3849 = sand.u32 %s3517, 63
                %s3850 = smul.u32 %s3848, 64
                %s3851 = smul.u32 4, %s3850
                %s3852 = scalar_lea.vmem %s3510, %s3851 [#allocation2]
                %s3853 = smul.u32 4, %s3850
                %s3854 = scalar_lea.vmem %s3521, %s3853
                // While loop
                $region86: #{net_forward.4} parent=77 // loop_pre_header
                  _
                $region87: #{net_forward.4} parent=77 // loop_header
                  %s3856 = sphi 0, %s3858
                  %p3857 = scmp.ge.s32.totalorder %s3856, %s3849
                  %s3861 = sphi 0, %s3868
                  %s3862 = sphi %s3852, %s3871
                  %s3863 = sphi %s3854, %s3872
                $region88: #{net_forward.4} parent=77 // loop_header_branch
                  %3860 = sbr.rel (%p3857) target = $region92
                $region89: #{net_forward.4} parent=77 // loop_body
                  %v3864 = vld [vmem:[%s3862] sm:$0xf]
                  %3865 = vst [vmem:[%s3863] sm:$0xf] %v3864
                  %s3866 = sadd.s32 1, %s3861
                  %p3867 = scmp.ge.s32.totalorder %s3866, %s3849
                  %s3868 = scalar_select %p3867, 0, %s3866
                  %s3869 = smul.u32 %s3868, 4
                  %s3870 = smul.u32 %s3868, 4
                  %s3871 = scalar_lea.vmem %s3852, %s3869 [#allocation2]
                  %s3872 = scalar_lea.vmem %s3854, %s3870
                $region90: #{net_forward.4} parent=77 // loop_footer
                  %s3858 = sadd.s32 %s3856, 1
                $region91: #{net_forward.4} parent=77 // loop_footer_branch
                  %3855 = sbr.rel target = $region87
                $region92: #{net_forward.4} parent=77 // loop_exit
                  _
              $region78: #{net_forward.4} parent=55 // pred_fallthru
                _
            $region56: #{net_forward.4} parent=51 // pred_fallthru
              _
            // Predicated region
            $region57: #{net_forward.4} parent=51 // pred_check
              _
            $region58: #{net_forward.4} parent=51 // pred_check_branch
              %3528 = sbr.rel (0) target = $region60
            $region59: #{net_forward.4} parent=51 // pred_region
              %s3530 = sshrl.u32 %s3517, 6
              // While loop
              $region61: #{net_forward.4} parent=59 // loop_pre_header
                _
              $region62: #{net_forward.4} parent=59 // loop_header
                %s3532 = sphi 0, %s3534
                %p3533 = scmp.ge.s32.totalorder %s3532, %s3530
                %s3537 = sphi 0, %s3670
                %s3538 = sphi %s3510, %s3673
                %s3539 = sphi %s3521, %s3674
              $region63: #{net_forward.4} parent=59 // loop_header_branch
                %3536 = sbr.rel (%p3533) target = $region67
              $region64: #{net_forward.4} parent=59 // loop_body
                %v3540 = vld [vmem:[%s3538] sm:$0xf]
                %3541 = vst [vmem:[%s3539] sm:$0xf] %v3540
                %v3542 = vld [vmem:[%s3538 + $0x4] sm:$0xf]
                %3543 = vst [vmem:[%s3539 + $0x4] sm:$0xf] %v3542
                %v3544 = vld [vmem:[%s3538 + $0x8] sm:$0xf]
                %3545 = vst [vmem:[%s3539 + $0x8] sm:$0xf] %v3544
                %v3546 = vld [vmem:[%s3538 + $0xc] sm:$0xf]
                %3547 = vst [vmem:[%s3539 + $0xc] sm:$0xf] %v3546
                %v3548 = vld [vmem:[%s3538 + $0x10] sm:$0xf]
                %3549 = vst [vmem:[%s3539 + $0x10] sm:$0xf] %v3548
                %v3550 = vld [vmem:[%s3538 + $0x14] sm:$0xf]
                %3551 = vst [vmem:[%s3539 + $0x14] sm:$0xf] %v3550
                %v3552 = vld [vmem:[%s3538 + $0x18] sm:$0xf]
                %3553 = vst [vmem:[%s3539 + $0x18] sm:$0xf] %v3552
                %v3554 = vld [vmem:[%s3538 + $0x1c] sm:$0xf]
                %3555 = vst [vmem:[%s3539 + $0x1c] sm:$0xf] %v3554
                %v3556 = vld [vmem:[%s3538 + $0x20] sm:$0xf]
                %3557 = vst [vmem:[%s3539 + $0x20] sm:$0xf] %v3556
                %v3558 = vld [vmem:[%s3538 + $0x24] sm:$0xf]
                %3559 = vst [vmem:[%s3539 + $0x24] sm:$0xf] %v3558
                %v3560 = vld [vmem:[%s3538 + $0x28] sm:$0xf]
                %3561 = vst [vmem:[%s3539 + $0x28] sm:$0xf] %v3560
                %v3562 = vld [vmem:[%s3538 + $0x2c] sm:$0xf]
                %3563 = vst [vmem:[%s3539 + $0x2c] sm:$0xf] %v3562
                %v3564 = vld [vmem:[%s3538 + $0x30] sm:$0xf]
                %3565 = vst [vmem:[%s3539 + $0x30] sm:$0xf] %v3564
                %v3566 = vld [vmem:[%s3538 + $0x34] sm:$0xf]
                %3567 = vst [vmem:[%s3539 + $0x34] sm:$0xf] %v3566
                %v3568 = vld [vmem:[%s3538 + $0x38] sm:$0xf]
                %3569 = vst [vmem:[%s3539 + $0x38] sm:$0xf] %v3568
                %v3570 = vld [vmem:[%s3538 + $0x3c] sm:$0xf]
                %3571 = vst [vmem:[%s3539 + $0x3c] sm:$0xf] %v3570
                %v3572 = vld [vmem:[%s3538 + $0x40] sm:$0xf]
                %3573 = vst [vmem:[%s3539 + $0x40] sm:$0xf] %v3572
                %v3574 = vld [vmem:[%s3538 + $0x44] sm:$0xf]
                %3575 = vst [vmem:[%s3539 + $0x44] sm:$0xf] %v3574
                %v3576 = vld [vmem:[%s3538 + $0x48] sm:$0xf]
                %3577 = vst [vmem:[%s3539 + $0x48] sm:$0xf] %v3576
                %v3578 = vld [vmem:[%s3538 + $0x4c] sm:$0xf]
                %3579 = vst [vmem:[%s3539 + $0x4c] sm:$0xf] %v3578
                %v3580 = vld [vmem:[%s3538 + $0x50] sm:$0xf]
                %3581 = vst [vmem:[%s3539 + $0x50] sm:$0xf] %v3580
                %v3582 = vld [vmem:[%s3538 + $0x54] sm:$0xf]
                %3583 = vst [vmem:[%s3539 + $0x54] sm:$0xf] %v3582
                %v3584 = vld [vmem:[%s3538 + $0x58] sm:$0xf]
                %3585 = vst [vmem:[%s3539 + $0x58] sm:$0xf] %v3584
                %v3586 = vld [vmem:[%s3538 + $0x5c] sm:$0xf]
                %3587 = vst [vmem:[%s3539 + $0x5c] sm:$0xf] %v3586
                %v3588 = vld [vmem:[%s3538 + $0x60] sm:$0xf]
                %3589 = vst [vmem:[%s3539 + $0x60] sm:$0xf] %v3588
                %v3590 = vld [vmem:[%s3538 + $0x64] sm:$0xf]
                %3591 = vst [vmem:[%s3539 + $0x64] sm:$0xf] %v3590
                %v3592 = vld [vmem:[%s3538 + $0x68] sm:$0xf]
                %3593 = vst [vmem:[%s3539 + $0x68] sm:$0xf] %v3592
                %v3594 = vld [vmem:[%s3538 + $0x6c] sm:$0xf]
                %3595 = vst [vmem:[%s3539 + $0x6c] sm:$0xf] %v3594
                %v3596 = vld [vmem:[%s3538 + $0x70] sm:$0xf]
                %3597 = vst [vmem:[%s3539 + $0x70] sm:$0xf] %v3596
                %v3598 = vld [vmem:[%s3538 + $0x74] sm:$0xf]
                %3599 = vst [vmem:[%s3539 + $0x74] sm:$0xf] %v3598
                %v3600 = vld [vmem:[%s3538 + $0x78] sm:$0xf]
                %3601 = vst [vmem:[%s3539 + $0x78] sm:$0xf] %v3600
                %v3602 = vld [vmem:[%s3538 + $0x7c] sm:$0xf]
                %3603 = vst [vmem:[%s3539 + $0x7c] sm:$0xf] %v3602
                %v3604 = vld [vmem:[%s3538 + $0x80] sm:$0xf]
                %3605 = vst [vmem:[%s3539 + $0x80] sm:$0xf] %v3604
                %v3606 = vld [vmem:[%s3538 + $0x84] sm:$0xf]
                %3607 = vst [vmem:[%s3539 + $0x84] sm:$0xf] %v3606
                %v3608 = vld [vmem:[%s3538 + $0x88] sm:$0xf]
                %3609 = vst [vmem:[%s3539 + $0x88] sm:$0xf] %v3608
                %v3610 = vld [vmem:[%s3538 + $0x8c] sm:$0xf]
                %3611 = vst [vmem:[%s3539 + $0x8c] sm:$0xf] %v3610
                %v3612 = vld [vmem:[%s3538 + $0x90] sm:$0xf]
                %3613 = vst [vmem:[%s3539 + $0x90] sm:$0xf] %v3612
                %v3614 = vld [vmem:[%s3538 + $0x94] sm:$0xf]
                %3615 = vst [vmem:[%s3539 + $0x94] sm:$0xf] %v3614
                %v3616 = vld [vmem:[%s3538 + $0x98] sm:$0xf]
                %3617 = vst [vmem:[%s3539 + $0x98] sm:$0xf] %v3616
                %v3618 = vld [vmem:[%s3538 + $0x9c] sm:$0xf]
                %3619 = vst [vmem:[%s3539 + $0x9c] sm:$0xf] %v3618
                %v3620 = vld [vmem:[%s3538 + $0xa0] sm:$0xf]
                %3621 = vst [vmem:[%s3539 + $0xa0] sm:$0xf] %v3620
                %v3622 = vld [vmem:[%s3538 + $0xa4] sm:$0xf]
                %3623 = vst [vmem:[%s3539 + $0xa4] sm:$0xf] %v3622
                %v3624 = vld [vmem:[%s3538 + $0xa8] sm:$0xf]
                %3625 = vst [vmem:[%s3539 + $0xa8] sm:$0xf] %v3624
                %v3626 = vld [vmem:[%s3538 + $0xac] sm:$0xf]
                %3627 = vst [vmem:[%s3539 + $0xac] sm:$0xf] %v3626
                %v3628 = vld [vmem:[%s3538 + $0xb0] sm:$0xf]
                %3629 = vst [vmem:[%s3539 + $0xb0] sm:$0xf] %v3628
                %v3630 = vld [vmem:[%s3538 + $0xb4] sm:$0xf]
                %3631 = vst [vmem:[%s3539 + $0xb4] sm:$0xf] %v3630
                %v3632 = vld [vmem:[%s3538 + $0xb8] sm:$0xf]
                %3633 = vst [vmem:[%s3539 + $0xb8] sm:$0xf] %v3632
                %v3634 = vld [vmem:[%s3538 + $0xbc] sm:$0xf]
                %3635 = vst [vmem:[%s3539 + $0xbc] sm:$0xf] %v3634
                %v3636 = vld [vmem:[%s3538 + $0xc0] sm:$0xf]
                %3637 = vst [vmem:[%s3539 + $0xc0] sm:$0xf] %v3636
                %v3638 = vld [vmem:[%s3538 + $0xc4] sm:$0xf]
                %3639 = vst [vmem:[%s3539 + $0xc4] sm:$0xf] %v3638
                %v3640 = vld [vmem:[%s3538 + $0xc8] sm:$0xf]
                %3641 = vst [vmem:[%s3539 + $0xc8] sm:$0xf] %v3640
                %v3642 = vld [vmem:[%s3538 + $0xcc] sm:$0xf]
                %3643 = vst [vmem:[%s3539 + $0xcc] sm:$0xf] %v3642
                %v3644 = vld [vmem:[%s3538 + $0xd0] sm:$0xf]
                %3645 = vst [vmem:[%s3539 + $0xd0] sm:$0xf] %v3644
                %v3646 = vld [vmem:[%s3538 + $0xd4] sm:$0xf]
                %3647 = vst [vmem:[%s3539 + $0xd4] sm:$0xf] %v3646
                %v3648 = vld [vmem:[%s3538 + $0xd8] sm:$0xf]
                %3649 = vst [vmem:[%s3539 + $0xd8] sm:$0xf] %v3648
                %v3650 = vld [vmem:[%s3538 + $0xdc] sm:$0xf]
                %3651 = vst [vmem:[%s3539 + $0xdc] sm:$0xf] %v3650
                %v3652 = vld [vmem:[%s3538 + $0xe0] sm:$0xf]
                %3653 = vst [vmem:[%s3539 + $0xe0] sm:$0xf] %v3652
                %v3654 = vld [vmem:[%s3538 + $0xe4] sm:$0xf]
                %3655 = vst [vmem:[%s3539 + $0xe4] sm:$0xf] %v3654
                %v3656 = vld [vmem:[%s3538 + $0xe8] sm:$0xf]
                %3657 = vst [vmem:[%s3539 + $0xe8] sm:$0xf] %v3656
                %v3658 = vld [vmem:[%s3538 + $0xec] sm:$0xf]
                %3659 = vst [vmem:[%s3539 + $0xec] sm:$0xf] %v3658
                %v3660 = vld [vmem:[%s3538 + $0xf0] sm:$0xf]
                %3661 = vst [vmem:[%s3539 + $0xf0] sm:$0xf] %v3660
                %v3662 = vld [vmem:[%s3538 + $0xf4] sm:$0xf]
                %3663 = vst [vmem:[%s3539 + $0xf4] sm:$0xf] %v3662
                %v3664 = vld [vmem:[%s3538 + $0xf8] sm:$0xf]
                %3665 = vst [vmem:[%s3539 + $0xf8] sm:$0xf] %v3664
                %v3666 = vld [vmem:[%s3538 + $0xfc] sm:$0xf]
                %3667 = vst [vmem:[%s3539 + $0xfc] sm:$0xf] %v3666
                %s3668 = sadd.s32 1, %s3537
                %p3669 = scmp.ge.s32.totalorder %s3668, %s3530
                %s3670 = scalar_select %p3669, 0, %s3668
                %s3671 = smul.u32 %s3670, 256
                %s3672 = smul.u32 %s3670, 256
                %s3673 = scalar_lea.vmem %s3510, %s3671 [#allocation2]
                %s3674 = scalar_lea.vmem %s3521, %s3672
              $region65: #{net_forward.4} parent=59 // loop_footer
                %s3534 = sadd.s32 %s3532, 1
              $region66: #{net_forward.4} parent=59 // loop_footer_branch
                %3531 = sbr.rel target = $region62
              $region67: #{net_forward.4} parent=59 // loop_exit
                _
              %s3675 = sshrl.u32 %s3517, 6
              %s3676 = sand.u32 %s3517, 63
              %s3677 = smul.u32 %s3675, 64
              %s3678 = smul.u32 4, %s3677
              %s3679 = scalar_lea.vmem %s3510, %s3678 [#allocation2]
              %s3680 = smul.u32 4, %s3677
              %s3681 = scalar_lea.vmem %s3521, %s3680
              // While loop
              $region68: #{net_forward.4} parent=59 // loop_pre_header
                _
              $region69: #{net_forward.4} parent=59 // loop_header
                %s3683 = sphi 0, %s3685
                %p3684 = scmp.ge.s32.totalorder %s3683, %s3676
                %s3688 = sphi 0, %s3695
                %s3689 = sphi %s3679, %s3698
                %s3690 = sphi %s3681, %s3699
              $region70: #{net_forward.4} parent=59 // loop_header_branch
                %3687 = sbr.rel (%p3684) target = $region74
              $region71: #{net_forward.4} parent=59 // loop_body
                %v3691 = vld [vmem:[%s3689] sm:$0xf]
                %3692 = vst [vmem:[%s3690] sm:$0xf] %v3691
                %s3693 = sadd.s32 1, %s3688
                %p3694 = scmp.ge.s32.totalorder %s3693, %s3676
                %s3695 = scalar_select %p3694, 0, %s3693
                %s3696 = smul.u32 %s3695, 4
                %s3697 = smul.u32 %s3695, 4
                %s3698 = scalar_lea.vmem %s3679, %s3696 [#allocation2]
                %s3699 = scalar_lea.vmem %s3681, %s3697
              $region72: #{net_forward.4} parent=59 // loop_footer
                %s3685 = sadd.s32 %s3683, 1
              $region73: #{net_forward.4} parent=59 // loop_footer_branch
                %3682 = sbr.rel target = $region69
              $region74: #{net_forward.4} parent=59 // loop_exit
                _
            $region60: #{net_forward.4} parent=51 // pred_fallthru
              _
          $region52: #{net_forward.4} parent=47 // pred_fallthru
            _
          %3873 = vnop
        $region48: #{net_forward.4} parent=43 // pred_fallthru
          _
      $region44: #{net_forward.4} parent=5 // pred_fallthru
        _
      %p3874 = scmp.le.s32.totalorder 2, %s12
      // Predicated region
      $region93: #{net_forward.4} parent=5 // pred_check
        %p3875 = pneg %p3874
      $region94: #{net_forward.4} parent=5 // pred_check_branch
        %3877 = sbr.rel (%p3875) target = $region96
      $region95: #{net_forward.4} parent=5 // pred_region
        %s3878 = ssub.s32 %s12, 2
        // Predicated region
        $region97: #{net_forward.4} parent=95 // pred_check
          %p3879 = pneg %p187
        $region98: #{net_forward.4} parent=95 // pred_check_branch
          %3881 = sbr.rel (%p3879) target = $region100
        $region99: #{net_forward.4} parent=95 // pred_region
          %s3882 = sand.u32 %s172, 1
          %s3883 = sand.u32 %s172, 1
          %s3884 = smul.addr %s3883, 256
          %s3885 = scalar_lea.vmem [#allocation2], %s3884
        $region100: #{net_forward.4} parent=95 // pred_fallthru
          _
      $region96: #{net_forward.4} parent=5 // pred_fallthru
        _
    $region6: #{net_forward.4} parent=1 // loop_footer
      %s16 = sadd.s32 1, %s12
    $region7: #{net_forward.4} parent=1 // loop_footer_branch
      %11 = sbr.rel target = $region3
    $region8: #{net_forward.4} parent=1 // loop_exit
      _

// kernel: net_forward.5
$region0: #{net_forward.5}
  #allocation0 [shape = 'u32[]', space=smem, size = 0x4, offset = 0x4, fixed_abs, tag = 'smem constant byte address 0x4 - core index']
  #allocation1 [shape = 'u32[144,128]{1,0:T(1,128)}', space=vmem, size = 0x12000, scoped, tag = 'internal scratch']
  %s0 = inlined_call_operand.vmem [shape: bf16[288,108], index: 0, kind: input, shape index: {}]
  %s1 = inlined_call_operand.vmem [shape: bf16[288,108], index: 1, kind: input, shape index: {}]
  %s2 = inlined_call_operand.vmem [shape: bf16[288,108], index: 2, kind: input, shape index: {}]
  %s3 = inlined_call_operand.vmem [shape: bf16[288,108], index: 3, kind: input, shape index: {}]
  %s4 = inlined_call_operand.vmem [shape: bf16[108,24], index: 4, kind: input, shape index: {}]
  %s5 = inlined_call_operand.vmem [shape: f32[1,24], index: 5, kind: input, shape index: {}]
  %s6 = inlined_call_operand.vmem [shape: bf16[288,24], index: 6, kind: output, shape index: {}]
  %s7 = sld [smem:[#allocation0]]
  $region34: #{net_forward.5} parent=0
    _
  %s9 = ssub.s32 1, %s7
  %s10 = scalar_select 0, %s9, %s7
  // Predicated region
  $region2: #{net_forward.5} parent=0 // pred_check
    _
  $region3: #{net_forward.5} parent=0 // pred_check_branch
    %12 = sbr.rel (0) target = $region5
  $region4: #{net_forward.5} parent=0 // pred_region
    _
  $region5: #{net_forward.5} parent=0 // pred_fallthru
    _
  // Predicated region
  $region6: #{net_forward.5} parent=0 // pred_check
    _
  $region7: #{net_forward.5} parent=0 // pred_check_branch
    %14 = sbr.rel (0) target = $region9
  $region8: #{net_forward.5} parent=0 // pred_region
    _
  $region9: #{net_forward.5} parent=0 // pred_fallthru
    _
  // Predicated region
  $region10: #{net_forward.5} parent=0 // pred_check
    _
  $region11: #{net_forward.5} parent=0 // pred_check_branch
    %16 = sbr.rel (0) target = $region13
  $region12: #{net_forward.5} parent=0 // pred_region
    _
  $region13: #{net_forward.5} parent=0 // pred_fallthru
    _
  // Predicated region
  $region14: #{net_forward.5} parent=0 // pred_check
    _
  $region15: #{net_forward.5} parent=0 // pred_check_branch
    %18 = sbr.rel (0) target = $region17
  $region16: #{net_forward.5} parent=0 // pred_region
    _
  $region17: #{net_forward.5} parent=0 // pred_fallthru
    _
  // Predicated region
  $region18: #{net_forward.5} parent=0 // pred_check
    _
  $region19: #{net_forward.5} parent=0 // pred_check_branch
    %20 = sbr.rel (0) target = $region21
  $region20: #{net_forward.5} parent=0 // pred_region
    _
  $region21: #{net_forward.5} parent=0 // pred_fallthru
    _
  // Predicated region
  $region22: #{net_forward.5} parent=0 // pred_check
    _
  $region23: #{net_forward.5} parent=0 // pred_check_branch
    %22 = sbr.rel (0) target = $region25
  $region24: #{net_forward.5} parent=0 // pred_region
    _
  $region25: #{net_forward.5} parent=0 // pred_fallthru
    _
  %v24 = vld [vmem:[%s4] sm:$0xf]
  %v25 = vld [vmem:[%s4 + $0x4] sm:$0xf]
  %v26 = vld [vmem:[%s4 + $0x8] sm:$0xf]
  %v27 = vld [vmem:[%s4 + $0xc] sm:$0xf]
  %v28 = vld [vmem:[%s4 + $0x10] sm:$0xf]
  %v29 = vld [vmem:[%s4 + $0x14] sm:$0xf]
  %v30 = vld [vmem:[%s4 + $0x18] sm:$0xf]
  %v31 = vld [vmem:[%s4 + $0x1c] sm:$0xf]
  %v32 = vld [vmem:[%s4 + $0x20] sm:$0xf]
  %v33 = vld [vmem:[%s4 + $0x24] sm:$0xf]
  %v34 = vld [vmem:[%s4 + $0x28] sm:$0xf]
  %v35 = vld [vmem:[%s4 + $0x2c] sm:$0xf]
  %v36 = vld [vmem:[%s4 + $0x30] sm:$0xf]
  %v37 = vld [vmem:[%s4 + $0x34] sm:$0x3]
  %v38 = vld [vmem:[%s0] sm:$0xf]
  %v39 = vld [vmem:[%s0 + $0x4] sm:$0xf]
  %v40 = vld [vmem:[%s0 + $0x8] sm:$0xf]
  %v41 = vld [vmem:[%s0 + $0xc] sm:$0xf]
  %v42 = vld [vmem:[%s0 + $0x10] sm:$0xf]
  %v43 = vld [vmem:[%s0 + $0x14] sm:$0xf]
  %v44 = vld [vmem:[%s0 + $0x18] sm:$0xf]
  %v45 = vld [vmem:[%s0 + $0x1c] sm:$0xf]
  %v46 = vld [vmem:[%s0 + $0x20] sm:$0xf]
  %v47 = vld [vmem:[%s0 + $0x24] sm:$0xf]
  %v48 = vld [vmem:[%s0 + $0x28] sm:$0xf]
  %v49 = vld [vmem:[%s0 + $0x2c] sm:$0xf]
  %v50 = vld [vmem:[%s0 + $0x30] sm:$0xf]
  %v51 = vld [vmem:[%s0 + $0x34] sm:$0xf]
  %v52 = vld [vmem:[%s0 + $0x38] sm:$0xf]
  %v53 = vld [vmem:[%s0 + $0x3c] sm:$0xf]
  %v54 = vld [vmem:[%s0 + $0x40] sm:$0xf]
  %v55 = vld [vmem:[%s0 + $0x44] sm:$0xf]
  %v56 = vld [vmem:[%s0 + $0x48] sm:$0xf]
  %v57 = vld [vmem:[%s0 + $0x4c] sm:$0xf]
  %v58 = vld [vmem:[%s0 + $0x50] sm:$0xf]
  %v59 = vld [vmem:[%s0 + $0x54] sm:$0xf]
  %v60 = vld [vmem:[%s0 + $0x58] sm:$0xf]
  %v61 = vld [vmem:[%s0 + $0x5c] sm:$0xf]
  %v62 = vld [vmem:[%s0 + $0x60] sm:$0xf]
  %v63 = vld [vmem:[%s0 + $0x64] sm:$0xf]
  %v64 = vld [vmem:[%s0 + $0x68] sm:$0xf]
  %v65 = vld [vmem:[%s0 + $0x6c] sm:$0xf]
  %v66 = vld [vmem:[%s0 + $0x70] sm:$0xf]
  %v67 = vld [vmem:[%s0 + $0x74] sm:$0xf]
  %v68 = vld [vmem:[%s0 + $0x78] sm:$0xf]
  %v69 = vld [vmem:[%s0 + $0x7c] sm:$0xf]
  %v70 = vld [vmem:[%s0 + $0x80] sm:$0xf]
  %v71 = vld [vmem:[%s0 + $0x84] sm:$0xf]
  %v72 = vld [vmem:[%s0 + $0x88] sm:$0xf]
  %v73 = vld [vmem:[%s0 + $0x8c] sm:$0xf]
  %v110 = vunpack.c.l.b16 %v38
  %v111 = vunpack.c.l.b16 %v39
  %v112 = vunpack.c.l.b16 %v40
  %v113 = vunpack.c.l.b16 %v41
  %v114 = vunpack.c.l.b16 %v42
  %v115 = vunpack.c.l.b16 %v43
  %v116 = vunpack.c.l.b16 %v44
  %v117 = vunpack.c.l.b16 %v45
  %v118 = vunpack.c.l.b16 %v46
  %v119 = vunpack.c.l.b16 %v47
  %v120 = vunpack.c.l.b16 %v48
  %v121 = vunpack.c.l.b16 %v49
  %v122 = vunpack.c.l.b16 %v50
  %v123 = vunpack.c.l.b16 %v51
  %v124 = vunpack.c.l.b16 %v52
  %v125 = vunpack.c.l.b16 %v53
  %v126 = vunpack.c.l.b16 %v54
  %v127 = vunpack.c.l.b16 %v55
  %v128 = vunpack.c.l.b16 %v56
  %v129 = vunpack.c.l.b16 %v57
  %v130 = vunpack.c.l.b16 %v58
  %v131 = vunpack.c.l.b16 %v59
  %v132 = vunpack.c.l.b16 %v60
  %v133 = vunpack.c.l.b16 %v61
  %v134 = vunpack.c.l.b16 %v62
  %v135 = vunpack.c.l.b16 %v63
  %v136 = vunpack.c.l.b16 %v64
  %v137 = vunpack.c.l.b16 %v65
  %v138 = vunpack.c.l.b16 %v66
  %v139 = vunpack.c.l.b16 %v67
  %v140 = vunpack.c.l.b16 %v68
  %v141 = vunpack.c.l.b16 %v69
  %v142 = vunpack.c.l.b16 %v70
  %v143 = vunpack.c.l.b16 %v71
  %v144 = vunpack.c.l.b16 %v72
  %v145 = vunpack.c.l.b16 %v73
  %v146 = vpack.c.b16 %v111, %v110
  %v147 = vpack.c.b16 %v113, %v112
  %v148 = vpack.c.b16 %v115, %v114
  %v149 = vpack.c.b16 %v117, %v116
  %v150 = vpack.c.b16 %v119, %v118
  %v151 = vpack.c.b16 %v121, %v120
  %v152 = vpack.c.b16 %v123, %v122
  %v153 = vpack.c.b16 %v125, %v124
  %v154 = vpack.c.b16 %v127, %v126
  %v155 = vpack.c.b16 %v129, %v128
  %v156 = vpack.c.b16 %v131, %v130
  %v157 = vpack.c.b16 %v133, %v132
  %v158 = vpack.c.b16 %v135, %v134
  %v159 = vpack.c.b16 %v137, %v136
  %v160 = vpack.c.b16 %v139, %v138
  %v161 = vpack.c.b16 %v141, %v140
  %v162 = vpack.c.b16 %v143, %v142
  %v163 = vpack.c.b16 %v145, %v144
  %v178 = vunpack.c.l.b16 %v24
  %v179 = vunpack.c.l.b16 %v25
  %v180 = vunpack.c.l.b16 %v26
  %v181 = vunpack.c.l.b16 %v27
  %v182 = vunpack.c.l.b16 %v28
  %v183 = vunpack.c.l.b16 %v29
  %v184 = vunpack.c.l.b16 %v30
  %v185 = vunpack.c.l.b16 %v31
  %v186 = vunpack.c.l.b16 %v32
  %v187 = vunpack.c.l.b16 %v33
  %v188 = vunpack.c.l.b16 %v34
  %v189 = vunpack.c.l.b16 %v35
  %v190 = vunpack.c.l.b16 %v36
  %v191 = vunpack.c.l.b16 %v37
  %v192 = vpack.c.b16 %v179, %v178
  %v193 = vpack.c.b16 %v181, %v180
  %v194 = vpack.c.b16 %v183, %v182
  %v195 = vpack.c.b16 %v185, %v184
  %v196 = vpack.c.b16 %v187, %v186
  %v197 = vpack.c.b16 %v189, %v188
  %v198 = vpack.c.b16 %v191, %v190
  %vm205 = vcmask 883712
  %v207 = vsel %vm205, %v146, 0
  %v210 = vsel %vm205, %v147, 0
  %v213 = vsel %vm205, %v148, 0
  %v216 = vsel %vm205, %v149, 0
  %v219 = vsel %vm205, %v150, 0
  %v222 = vsel %vm205, %v151, 0
  %v225 = vsel %vm205, %v152, 0
  %v228 = vsel %vm205, %v153, 0
  %v231 = vsel %vm205, %v154, 0
  %v234 = vsel %vm205, %v155, 0
  %v237 = vsel %vm205, %v156, 0
  %v240 = vsel %vm205, %v157, 0
  %v243 = vsel %vm205, %v158, 0
  %v246 = vsel %vm205, %v159, 0
  %v249 = vsel %vm205, %v160, 0
  %v252 = vsel %vm205, %v161, 0
  %v255 = vsel %vm205, %v162, 0
  %v258 = vsel %vm205, %v163, 0
  %vm260 = vcmask 1045504
  %v262 = vsel %vm260, %v198, 0
  %264 = vmatprep.subr.bf16.mxu0 0
  %265 = vmatpush1.bf16.msra.mxu0 %v192
  %266 = vmatprep.subr.bf16.mxu0 0
  %267 = vmatpush1.bf16.msra.mxu0 %v193
  %268 = vmatprep.subr.bf16.mxu0 0
  %269 = vmatpush1.bf16.msra.mxu0 %v194
  %270 = vmatprep.subr.bf16.mxu0 0
  %271 = vmatpush1.bf16.msra.mxu0 %v195
  %272 = vmatprep.subr.bf16.mxu0 0
  %273 = vmatpush1.bf16.msra.mxu0 %v196
  %274 = vmatprep.subr.bf16.mxu0 0
  %275 = vmatpush1.bf16.msra.mxu0 %v197
  %276 = vmatprep.subr.bf16.mxu0 0
  %277 = vmatpush1.bf16.msra.mxu0 %v262
  %278 = vmatprep.subr.bf16.mxu0 0
  %279 = vmatpush1.bf16.msra.mxu0 0
  %280 = vmatprep.subr.bf16.mxu0 0
  %281 = vmatpush1.bf16.msra.mxu0 0
  %282 = vmatprep.subr.bf16.mxu0 0
  %283 = vmatpush1.bf16.msra.mxu0 0
  %284 = vmatprep.subr.bf16.mxu0 0
  %285 = vmatpush1.bf16.msra.mxu0 0
  %286 = vmatprep.subr.bf16.mxu0 0
  %287 = vmatpush1.bf16.msra.mxu0 0
  %288 = vmatprep.subr.bf16.mxu0 0
  %289 = vmatpush1.bf16.msra.mxu0 0
  %290 = vmatprep.subr.bf16.mxu0 0
  %291 = vmatpush1.bf16.msra.mxu0 0
  %292 = vmatprep.subr.bf16.mxu0 0
  %293 = vmatpush1.bf16.msra.mxu0 0
  %294 = vmatprep.subr.bf16.mxu0 0
  %295 = vmatpush1.bf16.msra.mxu0 0
  %296 = vmatprep.mubr.bf16.mxu0 0
  %297 = vmatmul.mubr.bf16.gmra.mrb[0].mxu0 %v207
  %v298 = vpop.f32.mrb[0].mxu0
  %v299 = vadd.f32 0.0, %v298
  %v300 = vpop.f32.mrb[0].mxu0
  %v301 = vpop.f32.mrb[0].mxu0
  %v302 = vadd.f32 0.0, %v301
  %v303 = vpop.f32.mrb[0].mxu0
  %304 = vmatprep.mubr.bf16.mxu0 0
  %305 = vmatmul.mubr.bf16.gmra.mrb[0].mxu0 %v210
  %v306 = vpop.f32.mrb[0].mxu0
  %v307 = vadd.f32 0.0, %v306
  %v308 = vpop.f32.mrb[0].mxu0
  %v309 = vpop.f32.mrb[0].mxu0
  %v310 = vadd.f32 0.0, %v309
  %v311 = vpop.f32.mrb[0].mxu0
  %312 = vmatprep.mubr.bf16.mxu0 0
  %313 = vmatmul.mubr.bf16.gmra.mrb[0].mxu0 %v213
  %v314 = vpop.f32.mrb[0].mxu0
  %v315 = vadd.f32 0.0, %v314
  %v316 = vpop.f32.mrb[0].mxu0
  %v317 = vpop.f32.mrb[0].mxu0
  %v318 = vadd.f32 0.0, %v317
  %v319 = vpop.f32.mrb[0].mxu0
  %320 = vmatprep.mubr.bf16.mxu0 0
  %321 = vmatmul.mubr.bf16.gmra.mrb[0].mxu0 %v216
  %v322 = vpop.f32.mrb[0].mxu0
  %v323 = vadd.f32 0.0, %v322
  %v324 = vpop.f32.mrb[0].mxu0
  %v325 = vpop.f32.mrb[0].mxu0
  %v326 = vadd.f32 0.0, %v325
  %v327 = vpop.f32.mrb[0].mxu0
  %328 = vmatprep.mubr.bf16.mxu0 0
  %329 = vmatmul.mubr.bf16.gmra.mrb[0].mxu0 %v219
  %v330 = vpop.f32.mrb[0].mxu0
  %v331 = vadd.f32 0.0, %v330
  %v332 = vpop.f32.mrb[0].mxu0
  %v333 = vpop.f32.mrb[0].mxu0
  %v334 = vadd.f32 0.0, %v333
  %v335 = vpop.f32.mrb[0].mxu0
  %336 = vmatprep.mubr.bf16.mxu0 0
  %337 = vmatmul.mubr.bf16.gmra.mrb[0].mxu0 %v222
  %v338 = vpop.f32.mrb[0].mxu0
  %v339 = vadd.f32 0.0, %v338
  %v340 = vpop.f32.mrb[0].mxu0
  %v341 = vpop.f32.mrb[0].mxu0
  %v342 = vadd.f32 0.0, %v341
  %v343 = vpop.f32.mrb[0].mxu0
  %344 = vmatprep.mubr.bf16.mxu0 0
  %345 = vmatmul.mubr.bf16.gmra.mrb[0].mxu0 %v225
  %v346 = vpop.f32.mrb[0].mxu0
  %v347 = vadd.f32 0.0, %v346
  %v348 = vpop.f32.mrb[0].mxu0
  %v349 = vpop.f32.mrb[0].mxu0
  %v350 = vadd.f32 0.0, %v349
  %v351 = vpop.f32.mrb[0].mxu0
  %352 = vmatprep.mubr.bf16.mxu0 0
  %353 = vmatmul.mubr.bf16.gmra.mrb[0].mxu0 %v228
  %v354 = vpop.f32.mrb[0].mxu0
  %v355 = vadd.f32 0.0, %v354
  %v356 = vpop.f32.mrb[0].mxu0
  %v357 = vpop.f32.mrb[0].mxu0
  %v358 = vadd.f32 0.0, %v357
  %v359 = vpop.f32.mrb[0].mxu0
  %360 = vmatprep.mubr.bf16.mxu0 0
  %361 = vmatmul.mubr.bf16.gmra.mrb[0].mxu0 %v231
  %v362 = vpop.f32.mrb[0].mxu0
  %v363 = vadd.f32 0.0, %v362
  %v364 = vpop.f32.mrb[0].mxu0
  %v365 = vpop.f32.mrb[0].mxu0
  %v366 = vadd.f32 0.0, %v365
  %v367 = vpop.f32.mrb[0].mxu0
  %368 = vmatprep.mubr.bf16.mxu0 0
  %369 = vmatmul.mubr.bf16.gmra.mrb[0].mxu0 %v234
  %v370 = vpop.f32.mrb[0].mxu0
  %v371 = vadd.f32 0.0, %v370
  %v372 = vpop.f32.mrb[0].mxu0
  %v373 = vpop.f32.mrb[0].mxu0
  %v374 = vadd.f32 0.0, %v373
  %v375 = vpop.f32.mrb[0].mxu0
  %376 = vmatprep.mubr.bf16.mxu0 0
  %377 = vmatmul.mubr.bf16.gmra.mrb[0].mxu0 %v237
  %v378 = vpop.f32.mrb[0].mxu0
  %v379 = vadd.f32 0.0, %v378
  %v380 = vpop.f32.mrb[0].mxu0
  %v381 = vpop.f32.mrb[0].mxu0
  %v382 = vadd.f32 0.0, %v381
  %v383 = vpop.f32.mrb[0].mxu0
  %384 = vmatprep.mubr.bf16.mxu0 0
  %385 = vmatmul.mubr.bf16.gmra.mrb[0].mxu0 %v240
  %v386 = vpop.f32.mrb[0].mxu0
  %v387 = vadd.f32 0.0, %v386
  %v388 = vpop.f32.mrb[0].mxu0
  %v389 = vpop.f32.mrb[0].mxu0
  %v390 = vadd.f32 0.0, %v389
  %v391 = vpop.f32.mrb[0].mxu0
  %392 = vmatprep.mubr.bf16.mxu0 0
  %393 = vmatmul.mubr.bf16.gmra.mrb[0].mxu0 %v243
  %v394 = vpop.f32.mrb[0].mxu0
  %v395 = vadd.f32 0.0, %v394
  %v396 = vpop.f32.mrb[0].mxu0
  %v397 = vpop.f32.mrb[0].mxu0
  %v398 = vadd.f32 0.0, %v397
  %v399 = vpop.f32.mrb[0].mxu0
  %400 = vmatprep.mubr.bf16.mxu0 0
  %401 = vmatmul.mubr.bf16.gmra.mrb[0].mxu0 %v246
  %v402 = vpop.f32.mrb[0].mxu0
  %v403 = vadd.f32 0.0, %v402
  %v404 = vpop.f32.mrb[0].mxu0
  %v405 = vpop.f32.mrb[0].mxu0
  %v406 = vadd.f32 0.0, %v405
  %v407 = vpop.f32.mrb[0].mxu0
  %408 = vmatprep.mubr.bf16.mxu0 0
  %409 = vmatmul.mubr.bf16.gmra.mrb[0].mxu0 %v249
  %v410 = vpop.f32.mrb[0].mxu0
  %v411 = vadd.f32 0.0, %v410
  %v412 = vpop.f32.mrb[0].mxu0
  %v413 = vpop.f32.mrb[0].mxu0
  %v414 = vadd.f32 0.0, %v413
  %v415 = vpop.f32.mrb[0].mxu0
  %416 = vmatprep.mubr.bf16.mxu0 0
  %417 = vmatmul.mubr.bf16.gmra.mrb[0].mxu0 %v252
  %v418 = vpop.f32.mrb[0].mxu0
  %v419 = vadd.f32 0.0, %v418
  %v420 = vpop.f32.mrb[0].mxu0
  %v421 = vpop.f32.mrb[0].mxu0
  %v422 = vadd.f32 0.0, %v421
  %v423 = vpop.f32.mrb[0].mxu0
  %424 = vmatprep.mubr.bf16.mxu0 0
  %425 = vmatmul.mubr.bf16.gmra.mrb[0].mxu0 %v255
  %v426 = vpop.f32.mrb[0].mxu0
  %v427 = vadd.f32 0.0, %v426
  %v428 = vpop.f32.mrb[0].mxu0
  %v429 = vpop.f32.mrb[0].mxu0
  %v430 = vadd.f32 0.0, %v429
  %v431 = vpop.f32.mrb[0].mxu0
  %432 = vmatprep.mubr.bf16.mxu0 0
  %433 = vmatmul.mubr.bf16.gmra.mrb[0].mxu0 %v258
  %v434 = vpop.f32.mrb[0].mxu0
  %v435 = vadd.f32 0.0, %v434
  %v436 = vpop.f32.mrb[0].mxu0
  %v437 = vpop.f32.mrb[0].mxu0
  %v438 = vadd.f32 0.0, %v437
  %v439 = vpop.f32.mrb[0].mxu0
  %440 = vdwg.mxu0
  %v441 = vld [vmem:[%s1] sm:$0xf]
  %v442 = vld [vmem:[%s1 + $0x4] sm:$0xf]
  %v443 = vld [vmem:[%s1 + $0x8] sm:$0xf]
  %v444 = vld [vmem:[%s1 + $0xc] sm:$0xf]
  %v445 = vld [vmem:[%s1 + $0x10] sm:$0xf]
  %v446 = vld [vmem:[%s1 + $0x14] sm:$0xf]
  %v447 = vld [vmem:[%s1 + $0x18] sm:$0xf]
  %v448 = vld [vmem:[%s1 + $0x1c] sm:$0xf]
  %v449 = vld [vmem:[%s1 + $0x20] sm:$0xf]
  %v450 = vld [vmem:[%s1 + $0x24] sm:$0xf]
  %v451 = vld [vmem:[%s1 + $0x28] sm:$0xf]
  %v452 = vld [vmem:[%s1 + $0x2c] sm:$0xf]
  %v453 = vld [vmem:[%s1 + $0x30] sm:$0xf]
  %v454 = vld [vmem:[%s1 + $0x34] sm:$0xf]
  %v455 = vld [vmem:[%s1 + $0x38] sm:$0xf]
  %v456 = vld [vmem:[%s1 + $0x3c] sm:$0xf]
  %v457 = vld [vmem:[%s1 + $0x40] sm:$0xf]
  %v458 = vld [vmem:[%s1 + $0x44] sm:$0xf]
  %v459 = vld [vmem:[%s1 + $0x48] sm:$0xf]
  %v460 = vld [vmem:[%s1 + $0x4c] sm:$0xf]
  %v461 = vld [vmem:[%s1 + $0x50] sm:$0xf]
  %v462 = vld [vmem:[%s1 + $0x54] sm:$0xf]
  %v463 = vld [vmem:[%s1 + $0x58] sm:$0xf]
  %v464 = vld [vmem:[%s1 + $0x5c] sm:$0xf]
  %v465 = vld [vmem:[%s1 + $0x60] sm:$0xf]
  %v466 = vld [vmem:[%s1 + $0x64] sm:$0xf]
  %v467 = vld [vmem:[%s1 + $0x68] sm:$0xf]
  %v468 = vld [vmem:[%s1 + $0x6c] sm:$0xf]
  %v469 = vld [vmem:[%s1 + $0x70] sm:$0xf]
  %v470 = vld [vmem:[%s1 + $0x74] sm:$0xf]
  %v471 = vld [vmem:[%s1 + $0x78] sm:$0xf]
  %v472 = vld [vmem:[%s1 + $0x7c] sm:$0xf]
  %v473 = vld [vmem:[%s1 + $0x80] sm:$0xf]
  %v474 = vld [vmem:[%s1 + $0x84] sm:$0xf]
  %v475 = vld [vmem:[%s1 + $0x88] sm:$0xf]
  %v476 = vld [vmem:[%s1 + $0x8c] sm:$0xf]
  %v513 = vunpack.c.l.b16 %v441
  %v514 = vunpack.c.l.b16 %v442
  %v515 = vunpack.c.l.b16 %v443
  %v516 = vunpack.c.l.b16 %v444
  %v517 = vunpack.c.l.b16 %v445
  %v518 = vunpack.c.l.b16 %v446
  %v519 = vunpack.c.l.b16 %v447
  %v520 = vunpack.c.l.b16 %v448
  %v521 = vunpack.c.l.b16 %v449
  %v522 = vunpack.c.l.b16 %v450
  %v523 = vunpack.c.l.b16 %v451
  %v524 = vunpack.c.l.b16 %v452
  %v525 = vunpack.c.l.b16 %v453
  %v526 = vunpack.c.l.b16 %v454
  %v527 = vunpack.c.l.b16 %v455
  %v528 = vunpack.c.l.b16 %v456
  %v529 = vunpack.c.l.b16 %v457
  %v530 = vunpack.c.l.b16 %v458
  %v531 = vunpack.c.l.b16 %v459
  %v532 = vunpack.c.l.b16 %v460
  %v533 = vunpack.c.l.b16 %v461
  %v534 = vunpack.c.l.b16 %v462
  %v535 = vunpack.c.l.b16 %v463
  %v536 = vunpack.c.l.b16 %v464
  %v537 = vunpack.c.l.b16 %v465
  %v538 = vunpack.c.l.b16 %v466
  %v539 = vunpack.c.l.b16 %v467
  %v540 = vunpack.c.l.b16 %v468
  %v541 = vunpack.c.l.b16 %v469
  %v542 = vunpack.c.l.b16 %v470
  %v543 = vunpack.c.l.b16 %v471
  %v544 = vunpack.c.l.b16 %v472
  %v545 = vunpack.c.l.b16 %v473
  %v546 = vunpack.c.l.b16 %v474
  %v547 = vunpack.c.l.b16 %v475
  %v548 = vunpack.c.l.b16 %v476
  %v549 = vpack.c.b16 %v514, %v513
  %v550 = vpack.c.b16 %v516, %v515
  %v551 = vpack.c.b16 %v518, %v517
  %v552 = vpack.c.b16 %v520, %v519
  %v553 = vpack.c.b16 %v522, %v521
  %v554 = vpack.c.b16 %v524, %v523
  %v555 = vpack.c.b16 %v526, %v525
  %v556 = vpack.c.b16 %v528, %v527
  %v557 = vpack.c.b16 %v530, %v529
  %v558 = vpack.c.b16 %v532, %v531
  %v559 = vpack.c.b16 %v534, %v533
  %v560 = vpack.c.b16 %v536, %v535
  %v561 = vpack.c.b16 %v538, %v537
  %v562 = vpack.c.b16 %v540, %v539
  %v563 = vpack.c.b16 %v542, %v541
  %v564 = vpack.c.b16 %v544, %v543
  %v565 = vpack.c.b16 %v546, %v545
  %v566 = vpack.c.b16 %v548, %v547
  %v568 = vsel %vm205, %v549, 0
  %v571 = vsel %vm205, %v550, 0
  %v574 = vsel %vm205, %v551, 0
  %v577 = vsel %vm205, %v552, 0
  %v580 = vsel %vm205, %v553, 0
  %v583 = vsel %vm205, %v554, 0
  %v586 = vsel %vm205, %v555, 0
  %v589 = vsel %vm205, %v556, 0
  %v592 = vsel %vm205, %v557, 0
  %v595 = vsel %vm205, %v558, 0
  %v598 = vsel %vm205, %v559, 0
  %v601 = vsel %vm205, %v560, 0
  %v604 = vsel %vm205, %v561, 0
  %v607 = vsel %vm205, %v562, 0
  %v610 = vsel %vm205, %v563, 0
  %v613 = vsel %vm205, %v564, 0
  %v616 = vsel %vm205, %v565, 0
  %v619 = vsel %vm205, %v566, 0
  %621 = vmatprep.subr.bf16.mxu0 0
  %622 = vmatpush1.bf16.msra.mxu0 %v192
  %623 = vmatprep.subr.bf16.mxu0 0
  %624 = vmatpush1.bf16.msra.mxu0 %v193
  %625 = vmatprep.subr.bf16.mxu0 0
  %626 = vmatpush1.bf16.msra.mxu0 %v194
  %627 = vmatprep.subr.bf16.mxu0 0
  %628 = vmatpush1.bf16.msra.mxu0 %v195
  %629 = vmatprep.subr.bf16.mxu0 0
  %630 = vmatpush1.bf16.msra.mxu0 %v196
  %631 = vmatprep.subr.bf16.mxu0 0
  %632 = vmatpush1.bf16.msra.mxu0 %v197
  %633 = vmatprep.subr.bf16.mxu0 0
  %634 = vmatpush1.bf16.msra.mxu0 %v262
  %635 = vmatprep.subr.bf16.mxu0 0
  %636 = vmatpush1.bf16.msra.mxu0 0
  %637 = vmatprep.subr.bf16.mxu0 0
  %638 = vmatpush1.bf16.msra.mxu0 0
  %639 = vmatprep.subr.bf16.mxu0 0
  %640 = vmatpush1.bf16.msra.mxu0 0
  %641 = vmatprep.subr.bf16.mxu0 0
  %642 = vmatpush1.bf16.msra.mxu0 0
  %643 = vmatprep.subr.bf16.mxu0 0
  %644 = vmatpush1.bf16.msra.mxu0 0
  %645 = vmatprep.subr.bf16.mxu0 0
  %646 = vmatpush1.bf16.msra.mxu0 0
  %647 = vmatprep.subr.bf16.mxu0 0
  %648 = vmatpush1.bf16.msra.mxu0 0
  %649 = vmatprep.subr.bf16.mxu0 0
  %650 = vmatpush1.bf16.msra.mxu0 0
  %651 = vmatprep.subr.bf16.mxu0 0
  %652 = vmatpush1.bf16.msra.mxu0 0
  %653 = vmatprep.mubr.bf16.mxu0 0
  %654 = vmatmul.mubr.bf16.gmra.mrb[0].mxu0 %v568
  %v655 = vpop.f32.mrb[0].mxu0
  %v656 = vadd.f32 0.0, %v655
  %v657 = vpop.f32.mrb[0].mxu0
  %v658 = vpop.f32.mrb[0].mxu0
  %v659 = vadd.f32 0.0, %v658
  %v660 = vpop.f32.mrb[0].mxu0
  %661 = vmatprep.mubr.bf16.mxu0 0
  %662 = vmatmul.mubr.bf16.gmra.mrb[0].mxu0 %v571
  %v663 = vpop.f32.mrb[0].mxu0
  %v664 = vadd.f32 0.0, %v663
  %v665 = vpop.f32.mrb[0].mxu0
  %v666 = vpop.f32.mrb[0].mxu0
  %v667 = vadd.f32 0.0, %v666
  %v668 = vpop.f32.mrb[0].mxu0
  %669 = vmatprep.mubr.bf16.mxu0 0
  %670 = vmatmul.mubr.bf16.gmra.mrb[0].mxu0 %v574
  %v671 = vpop.f32.mrb[0].mxu0
  %v672 = vadd.f32 0.0, %v671
  %v673 = vpop.f32.mrb[0].mxu0
  %v674 = vpop.f32.mrb[0].mxu0
  %v675 = vadd.f32 0.0, %v674
  %v676 = vpop.f32.mrb[0].mxu0
  %677 = vmatprep.mubr.bf16.mxu0 0
  %678 = vmatmul.mubr.bf16.gmra.mrb[0].mxu0 %v577
  %v679 = vpop.f32.mrb[0].mxu0
  %v680 = vadd.f32 0.0, %v679
  %v681 = vpop.f32.mrb[0].mxu0
  %v682 = vpop.f32.mrb[0].mxu0
  %v683 = vadd.f32 0.0, %v682
  %v684 = vpop.f32.mrb[0].mxu0
  %685 = vmatprep.mubr.bf16.mxu0 0
  %686 = vmatmul.mubr.bf16.gmra.mrb[0].mxu0 %v580
  %v687 = vpop.f32.mrb[0].mxu0
  %v688 = vadd.f32 0.0, %v687
  %v689 = vpop.f32.mrb[0].mxu0
  %v690 = vpop.f32.mrb[0].mxu0
  %v691 = vadd.f32 0.0, %v690
  %v692 = vpop.f32.mrb[0].mxu0
  %693 = vmatprep.mubr.bf16.mxu0 0
  %694 = vmatmul.mubr.bf16.gmra.mrb[0].mxu0 %v583
  %v695 = vpop.f32.mrb[0].mxu0
  %v696 = vadd.f32 0.0, %v695
  %v697 = vpop.f32.mrb[0].mxu0
  %v698 = vpop.f32.mrb[0].mxu0
  %v699 = vadd.f32 0.0, %v698
  %v700 = vpop.f32.mrb[0].mxu0
  %701 = vmatprep.mubr.bf16.mxu0 0
  %702 = vmatmul.mubr.bf16.gmra.mrb[0].mxu0 %v586
  %v703 = vpop.f32.mrb[0].mxu0
  %v704 = vadd.f32 0.0, %v703
  %v705 = vpop.f32.mrb[0].mxu0
  %v706 = vpop.f32.mrb[0].mxu0
  %v707 = vadd.f32 0.0, %v706
  %v708 = vpop.f32.mrb[0].mxu0
  %709 = vmatprep.mubr.bf16.mxu0 0
  %710 = vmatmul.mubr.bf16.gmra.mrb[0].mxu0 %v589
  %v711 = vpop.f32.mrb[0].mxu0
  %v712 = vadd.f32 0.0, %v711
  %v713 = vpop.f32.mrb[0].mxu0
  %v714 = vpop.f32.mrb[0].mxu0
  %v715 = vadd.f32 0.0, %v714
  %v716 = vpop.f32.mrb[0].mxu0
  %717 = vmatprep.mubr.bf16.mxu0 0
  %718 = vmatmul.mubr.bf16.gmra.mrb[0].mxu0 %v592
  %v719 = vpop.f32.mrb[0].mxu0
  %v720 = vadd.f32 0.0, %v719
  %v721 = vpop.f32.mrb[0].mxu0
  %v722 = vpop.f32.mrb[0].mxu0
  %v723 = vadd.f32 0.0, %v722
  %v724 = vpop.f32.mrb[0].mxu0
  %725 = vmatprep.mubr.bf16.mxu0 0
  %726 = vmatmul.mubr.bf16.gmra.mrb[0].mxu0 %v595
  %v727 = vpop.f32.mrb[0].mxu0
  %v728 = vadd.f32 0.0, %v727
  %v729 = vpop.f32.mrb[0].mxu0
  %v730 = vpop.f32.mrb[0].mxu0
  %v731 = vadd.f32 0.0, %v730
  %v732 = vpop.f32.mrb[0].mxu0
  %733 = vmatprep.mubr.bf16.mxu0 0
  %734 = vmatmul.mubr.bf16.gmra.mrb[0].mxu0 %v598
  %v735 = vpop.f32.mrb[0].mxu0
  %v736 = vadd.f32 0.0, %v735
  %v737 = vpop.f32.mrb[0].mxu0
  %v738 = vpop.f32.mrb[0].mxu0
  %v739 = vadd.f32 0.0, %v738
  %v740 = vpop.f32.mrb[0].mxu0
  %741 = vmatprep.mubr.bf16.mxu0 0
  %742 = vmatmul.mubr.bf16.gmra.mrb[0].mxu0 %v601
  %v743 = vpop.f32.mrb[0].mxu0
  %v744 = vadd.f32 0.0, %v743
  %v745 = vpop.f32.mrb[0].mxu0
  %v746 = vpop.f32.mrb[0].mxu0
  %v747 = vadd.f32 0.0, %v746
  %v748 = vpop.f32.mrb[0].mxu0
  %749 = vmatprep.mubr.bf16.mxu0 0
  %750 = vmatmul.mubr.bf16.gmra.mrb[0].mxu0 %v604
  %v751 = vpop.f32.mrb[0].mxu0
  %v752 = vadd.f32 0.0, %v751
  %v753 = vpop.f32.mrb[0].mxu0
  %v754 = vpop.f32.mrb[0].mxu0
  %v755 = vadd.f32 0.0, %v754
  %v756 = vpop.f32.mrb[0].mxu0
  %757 = vmatprep.mubr.bf16.mxu0 0
  %758 = vmatmul.mubr.bf16.gmra.mrb[0].mxu0 %v607
  %v759 = vpop.f32.mrb[0].mxu0
  %v760 = vadd.f32 0.0, %v759
  %v761 = vpop.f32.mrb[0].mxu0
  %v762 = vpop.f32.mrb[0].mxu0
  %v763 = vadd.f32 0.0, %v762
  %v764 = vpop.f32.mrb[0].mxu0
  %765 = vmatprep.mubr.bf16.mxu0 0
  %766 = vmatmul.mubr.bf16.gmra.mrb[0].mxu0 %v610
  %v767 = vpop.f32.mrb[0].mxu0
  %v768 = vadd.f32 0.0, %v767
  %v769 = vpop.f32.mrb[0].mxu0
  %v770 = vpop.f32.mrb[0].mxu0
  %v771 = vadd.f32 0.0, %v770
  %v772 = vpop.f32.mrb[0].mxu0
  %773 = vmatprep.mubr.bf16.mxu0 0
  %774 = vmatmul.mubr.bf16.gmra.mrb[0].mxu0 %v613
  %v775 = vpop.f32.mrb[0].mxu0
  %v776 = vadd.f32 0.0, %v775
  %v777 = vpop.f32.mrb[0].mxu0
  %v778 = vpop.f32.mrb[0].mxu0
  %v779 = vadd.f32 0.0, %v778
  %v780 = vpop.f32.mrb[0].mxu0
  %781 = vmatprep.mubr.bf16.mxu0 0
  %782 = vmatmul.mubr.bf16.gmra.mrb[0].mxu0 %v616
  %v783 = vpop.f32.mrb[0].mxu0
  %v784 = vadd.f32 0.0, %v783
  %v785 = vpop.f32.mrb[0].mxu0
  %v786 = vpop.f32.mrb[0].mxu0
  %v787 = vadd.f32 0.0, %v786
  %v788 = vpop.f32.mrb[0].mxu0
  %789 = vmatprep.mubr.bf16.mxu0 0
  %790 = vmatmul.mubr.bf16.gmra.mrb[0].mxu0 %v619
  %v791 = vpop.f32.mrb[0].mxu0
  %v792 = vadd.f32 0.0, %v791
  %v793 = vpop.f32.mrb[0].mxu0
  %v794 = vpop.f32.mrb[0].mxu0
  %v795 = vadd.f32 0.0, %v794
  %v796 = vpop.f32.mrb[0].mxu0
  %797 = vdwg.mxu0
  %v798 = vld [vmem:[%s2] sm:$0xf]
  %v799 = vld [vmem:[%s2 + $0x4] sm:$0xf]
  %v800 = vld [vmem:[%s2 + $0x8] sm:$0xf]
  %v801 = vld [vmem:[%s2 + $0xc] sm:$0xf]
  %v802 = vld [vmem:[%s2 + $0x10] sm:$0xf]
  %v803 = vld [vmem:[%s2 + $0x14] sm:$0xf]
  %v804 = vld [vmem:[%s2 + $0x18] sm:$0xf]
  %v805 = vld [vmem:[%s2 + $0x1c] sm:$0xf]
  %v806 = vld [vmem:[%s2 + $0x20] sm:$0xf]
  %v807 = vld [vmem:[%s2 + $0x24] sm:$0xf]
  %v808 = vld [vmem:[%s2 + $0x28] sm:$0xf]
  %v809 = vld [vmem:[%s2 + $0x2c] sm:$0xf]
  %v810 = vld [vmem:[%s2 + $0x30] sm:$0xf]
  %v811 = vld [vmem:[%s2 + $0x34] sm:$0xf]
  %v812 = vld [vmem:[%s2 + $0x38] sm:$0xf]
  %v813 = vld [vmem:[%s2 + $0x3c] sm:$0xf]
  %v814 = vld [vmem:[%s2 + $0x40] sm:$0xf]
  %v815 = vld [vmem:[%s2 + $0x44] sm:$0xf]
  %v816 = vld [vmem:[%s2 + $0x48] sm:$0xf]
  %v817 = vld [vmem:[%s2 + $0x4c] sm:$0xf]
  %v818 = vld [vmem:[%s2 + $0x50] sm:$0xf]
  %v819 = vld [vmem:[%s2 + $0x54] sm:$0xf]
  %v820 = vld [vmem:[%s2 + $0x58] sm:$0xf]
  %v821 = vld [vmem:[%s2 + $0x5c] sm:$0xf]
  %v822 = vld [vmem:[%s2 + $0x60] sm:$0xf]
  %v823 = vld [vmem:[%s2 + $0x64] sm:$0xf]
  %v824 = vld [vmem:[%s2 + $0x68] sm:$0xf]
  %v825 = vld [vmem:[%s2 + $0x6c] sm:$0xf]
  %v826 = vld [vmem:[%s2 + $0x70] sm:$0xf]
  %v827 = vld [vmem:[%s2 + $0x74] sm:$0xf]
  %v828 = vld [vmem:[%s2 + $0x78] sm:$0xf]
  %v829 = vld [vmem:[%s2 + $0x7c] sm:$0xf]
  %v830 = vld [vmem:[%s2 + $0x80] sm:$0xf]
  %v831 = vld [vmem:[%s2 + $0x84] sm:$0xf]
  %v832 = vld [vmem:[%s2 + $0x88] sm:$0xf]
  %v833 = vld [vmem:[%s2 + $0x8c] sm:$0xf]
  %v870 = vunpack.c.l.b16 %v798
  %v871 = vunpack.c.l.b16 %v799
  %v872 = vunpack.c.l.b16 %v800
  %v873 = vunpack.c.l.b16 %v801
  %v874 = vunpack.c.l.b16 %v802
  %v875 = vunpack.c.l.b16 %v803
  %v876 = vunpack.c.l.b16 %v804
  %v877 = vunpack.c.l.b16 %v805
  %v878 = vunpack.c.l.b16 %v806
  %v879 = vunpack.c.l.b16 %v807
  %v880 = vunpack.c.l.b16 %v808
  %v881 = vunpack.c.l.b16 %v809
  %v882 = vunpack.c.l.b16 %v810
  %v883 = vunpack.c.l.b16 %v811
  %v884 = vunpack.c.l.b16 %v812
  %v885 = vunpack.c.l.b16 %v813
  %v886 = vunpack.c.l.b16 %v814
  %v887 = vunpack.c.l.b16 %v815
  %v888 = vunpack.c.l.b16 %v816
  %v889 = vunpack.c.l.b16 %v817
  %v890 = vunpack.c.l.b16 %v818
  %v891 = vunpack.c.l.b16 %v819
  %v892 = vunpack.c.l.b16 %v820
  %v893 = vunpack.c.l.b16 %v821
  %v894 = vunpack.c.l.b16 %v822
  %v895 = vunpack.c.l.b16 %v823
  %v896 = vunpack.c.l.b16 %v824
  %v897 = vunpack.c.l.b16 %v825
  %v898 = vunpack.c.l.b16 %v826
  %v899 = vunpack.c.l.b16 %v827
  %v900 = vunpack.c.l.b16 %v828
  %v901 = vunpack.c.l.b16 %v829
  %v902 = vunpack.c.l.b16 %v830
  %v903 = vunpack.c.l.b16 %v831
  %v904 = vunpack.c.l.b16 %v832
  %v905 = vunpack.c.l.b16 %v833
  %v906 = vpack.c.b16 %v871, %v870
  %v907 = vpack.c.b16 %v873, %v872
  %v908 = vpack.c.b16 %v875, %v874
  %v909 = vpack.c.b16 %v877, %v876
  %v910 = vpack.c.b16 %v879, %v878
  %v911 = vpack.c.b16 %v881, %v880
  %v912 = vpack.c.b16 %v883, %v882
  %v913 = vpack.c.b16 %v885, %v884
  %v914 = vpack.c.b16 %v887, %v886
  %v915 = vpack.c.b16 %v889, %v888
  %v916 = vpack.c.b16 %v891, %v890
  %v917 = vpack.c.b16 %v893, %v892
  %v918 = vpack.c.b16 %v895, %v894
  %v919 = vpack.c.b16 %v897, %v896
  %v920 = vpack.c.b16 %v899, %v898
  %v921 = vpack.c.b16 %v901, %v900
  %v922 = vpack.c.b16 %v903, %v902
  %v923 = vpack.c.b16 %v905, %v904
  %v925 = vsel %vm205, %v906, 0
  %v928 = vsel %vm205, %v907, 0
  %v931 = vsel %vm205, %v908, 0
  %v934 = vsel %vm205, %v909, 0
  %v937 = vsel %vm205, %v910, 0
  %v940 = vsel %vm205, %v911, 0
  %v943 = vsel %vm205, %v912, 0
  %v946 = vsel %vm205, %v913, 0
  %v949 = vsel %vm205, %v914, 0
  %v952 = vsel %vm205, %v915, 0
  %v955 = vsel %vm205, %v916, 0
  %v958 = vsel %vm205, %v917, 0
  %v961 = vsel %vm205, %v918, 0
  %v964 = vsel %vm205, %v919, 0
  %v967 = vsel %vm205, %v920, 0
  %v970 = vsel %vm205, %v921, 0
  %v973 = vsel %vm205, %v922, 0
  %v976 = vsel %vm205, %v923, 0
  %978 = vmatprep.subr.bf16.mxu0 0
  %979 = vmatpush1.bf16.msra.mxu0 %v192
  %980 = vmatprep.subr.bf16.mxu0 0
  %981 = vmatpush1.bf16.msra.mxu0 %v193
  %982 = vmatprep.subr.bf16.mxu0 0
  %983 = vmatpush1.bf16.msra.mxu0 %v194
  %984 = vmatprep.subr.bf16.mxu0 0
  %985 = vmatpush1.bf16.msra.mxu0 %v195
  %986 = vmatprep.subr.bf16.mxu0 0
  %987 = vmatpush1.bf16.msra.mxu0 %v196
  %988 = vmatprep.subr.bf16.mxu0 0
  %989 = vmatpush1.bf16.msra.mxu0 %v197
  %990 = vmatprep.subr.bf16.mxu0 0
  %991 = vmatpush1.bf16.msra.mxu0 %v262
  %992 = vmatprep.subr.bf16.mxu0 0
  %993 = vmatpush1.bf16.msra.mxu0 0
  %994 = vmatprep.subr.bf16.mxu0 0
  %995 = vmatpush1.bf16.msra.mxu0 0
  %996 = vmatprep.subr.bf16.mxu0 0
  %997 = vmatpush1.bf16.msra.mxu0 0
  %998 = vmatprep.subr.bf16.mxu0 0
  %999 = vmatpush1.bf16.msra.mxu0 0
  %1000 = vmatprep.subr.bf16.mxu0 0
  %1001 = vmatpush1.bf16.msra.mxu0 0
  %1002 = vmatprep.subr.bf16.mxu0 0
  %1003 = vmatpush1.bf16.msra.mxu0 0
  %1004 = vmatprep.subr.bf16.mxu0 0
  %1005 = vmatpush1.bf16.msra.mxu0 0
  %1006 = vmatprep.subr.bf16.mxu0 0
  %1007 = vmatpush1.bf16.msra.mxu0 0
  %1008 = vmatprep.subr.bf16.mxu0 0
  %1009 = vmatpush1.bf16.msra.mxu0 0
  %1010 = vmatprep.mubr.bf16.mxu0 0
  %1011 = vmatmul.mubr.bf16.gmra.mrb[0].mxu0 %v925
  %v1012 = vpop.f32.mrb[0].mxu0
  %v1013 = vadd.f32 0.0, %v1012
  %v1014 = vpop.f32.mrb[0].mxu0
  %v1015 = vpop.f32.mrb[0].mxu0
  %v1016 = vadd.f32 0.0, %v1015
  %v1017 = vpop.f32.mrb[0].mxu0
  %1018 = vmatprep.mubr.bf16.mxu0 0
  %1019 = vmatmul.mubr.bf16.gmra.mrb[0].mxu0 %v928
  %v1020 = vpop.f32.mrb[0].mxu0
  %v1021 = vadd.f32 0.0, %v1020
  %v1022 = vpop.f32.mrb[0].mxu0
  %v1023 = vpop.f32.mrb[0].mxu0
  %v1024 = vadd.f32 0.0, %v1023
  %v1025 = vpop.f32.mrb[0].mxu0
  %1026 = vmatprep.mubr.bf16.mxu0 0
  %1027 = vmatmul.mubr.bf16.gmra.mrb[0].mxu0 %v931
  %v1028 = vpop.f32.mrb[0].mxu0
  %v1029 = vadd.f32 0.0, %v1028
  %v1030 = vpop.f32.mrb[0].mxu0
  %v1031 = vpop.f32.mrb[0].mxu0
  %v1032 = vadd.f32 0.0, %v1031
  %v1033 = vpop.f32.mrb[0].mxu0
  %1034 = vmatprep.mubr.bf16.mxu0 0
  %1035 = vmatmul.mubr.bf16.gmra.mrb[0].mxu0 %v934
  %v1036 = vpop.f32.mrb[0].mxu0
  %v1037 = vadd.f32 0.0, %v1036
  %v1038 = vpop.f32.mrb[0].mxu0
  %v1039 = vpop.f32.mrb[0].mxu0
  %v1040 = vadd.f32 0.0, %v1039
  %v1041 = vpop.f32.mrb[0].mxu0
  %1042 = vmatprep.mubr.bf16.mxu0 0
  %1043 = vmatmul.mubr.bf16.gmra.mrb[0].mxu0 %v937
  %v1044 = vpop.f32.mrb[0].mxu0
  %v1045 = vadd.f32 0.0, %v1044
  %v1046 = vpop.f32.mrb[0].mxu0
  %v1047 = vpop.f32.mrb[0].mxu0
  %v1048 = vadd.f32 0.0, %v1047
  %v1049 = vpop.f32.mrb[0].mxu0
  %1050 = vmatprep.mubr.bf16.mxu0 0
  %1051 = vmatmul.mubr.bf16.gmra.mrb[0].mxu0 %v940
  %v1052 = vpop.f32.mrb[0].mxu0
  %v1053 = vadd.f32 0.0, %v1052
  %v1054 = vpop.f32.mrb[0].mxu0
  %v1055 = vpop.f32.mrb[0].mxu0
  %v1056 = vadd.f32 0.0, %v1055
  %v1057 = vpop.f32.mrb[0].mxu0
  %1058 = vmatprep.mubr.bf16.mxu0 0
  %1059 = vmatmul.mubr.bf16.gmra.mrb[0].mxu0 %v943
  %v1060 = vpop.f32.mrb[0].mxu0
  %v1061 = vadd.f32 0.0, %v1060
  %v1062 = vpop.f32.mrb[0].mxu0
  %v1063 = vpop.f32.mrb[0].mxu0
  %v1064 = vadd.f32 0.0, %v1063
  %v1065 = vpop.f32.mrb[0].mxu0
  %1066 = vmatprep.mubr.bf16.mxu0 0
  %1067 = vmatmul.mubr.bf16.gmra.mrb[0].mxu0 %v946
  %v1068 = vpop.f32.mrb[0].mxu0
  %v1069 = vadd.f32 0.0, %v1068
  %v1070 = vpop.f32.mrb[0].mxu0
  %v1071 = vpop.f32.mrb[0].mxu0
  %v1072 = vadd.f32 0.0, %v1071
  %v1073 = vpop.f32.mrb[0].mxu0
  %1074 = vmatprep.mubr.bf16.mxu0 0
  %1075 = vmatmul.mubr.bf16.gmra.mrb[0].mxu0 %v949
  %v1076 = vpop.f32.mrb[0].mxu0
  %v1077 = vadd.f32 0.0, %v1076
  %v1078 = vpop.f32.mrb[0].mxu0
  %v1079 = vpop.f32.mrb[0].mxu0
  %v1080 = vadd.f32 0.0, %v1079
  %v1081 = vpop.f32.mrb[0].mxu0
  %1082 = vmatprep.mubr.bf16.mxu0 0
  %1083 = vmatmul.mubr.bf16.gmra.mrb[0].mxu0 %v952
  %v1084 = vpop.f32.mrb[0].mxu0
  %v1085 = vadd.f32 0.0, %v1084
  %v1086 = vpop.f32.mrb[0].mxu0
  %v1087 = vpop.f32.mrb[0].mxu0
  %v1088 = vadd.f32 0.0, %v1087
  %v1089 = vpop.f32.mrb[0].mxu0
  %1090 = vmatprep.mubr.bf16.mxu0 0
  %1091 = vmatmul.mubr.bf16.gmra.mrb[0].mxu0 %v955
  %v1092 = vpop.f32.mrb[0].mxu0
  %v1093 = vadd.f32 0.0, %v1092
  %v1094 = vpop.f32.mrb[0].mxu0
  %v1095 = vpop.f32.mrb[0].mxu0
  %v1096 = vadd.f32 0.0, %v1095
  %v1097 = vpop.f32.mrb[0].mxu0
  %1098 = vmatprep.mubr.bf16.mxu0 0
  %1099 = vmatmul.mubr.bf16.gmra.mrb[0].mxu0 %v958
  %v1100 = vpop.f32.mrb[0].mxu0
  %v1101 = vadd.f32 0.0, %v1100
  %v1102 = vpop.f32.mrb[0].mxu0
  %v1103 = vpop.f32.mrb[0].mxu0
  %v1104 = vadd.f32 0.0, %v1103
  %v1105 = vpop.f32.mrb[0].mxu0
  %1106 = vmatprep.mubr.bf16.mxu0 0
  %1107 = vmatmul.mubr.bf16.gmra.mrb[0].mxu0 %v961
  %v1108 = vpop.f32.mrb[0].mxu0
  %v1109 = vadd.f32 0.0, %v1108
  %v1110 = vpop.f32.mrb[0].mxu0
  %v1111 = vpop.f32.mrb[0].mxu0
  %v1112 = vadd.f32 0.0, %v1111
  %v1113 = vpop.f32.mrb[0].mxu0
  %1114 = vmatprep.mubr.bf16.mxu0 0
  %1115 = vmatmul.mubr.bf16.gmra.mrb[0].mxu0 %v964
  %v1116 = vpop.f32.mrb[0].mxu0
  %v1117 = vadd.f32 0.0, %v1116
  %v1118 = vpop.f32.mrb[0].mxu0
  %v1119 = vpop.f32.mrb[0].mxu0
  %v1120 = vadd.f32 0.0, %v1119
  %v1121 = vpop.f32.mrb[0].mxu0
  %1122 = vmatprep.mubr.bf16.mxu0 0
  %1123 = vmatmul.mubr.bf16.gmra.mrb[0].mxu0 %v967
  %v1124 = vpop.f32.mrb[0].mxu0
  %v1125 = vadd.f32 0.0, %v1124
  %v1126 = vpop.f32.mrb[0].mxu0
  %v1127 = vpop.f32.mrb[0].mxu0
  %v1128 = vadd.f32 0.0, %v1127
  %v1129 = vpop.f32.mrb[0].mxu0
  %1130 = vmatprep.mubr.bf16.mxu0 0
  %1131 = vmatmul.mubr.bf16.gmra.mrb[0].mxu0 %v970
  %v1132 = vpop.f32.mrb[0].mxu0
  %v1133 = vadd.f32 0.0, %v1132
  %v1134 = vpop.f32.mrb[0].mxu0
  %v1135 = vpop.f32.mrb[0].mxu0
  %v1136 = vadd.f32 0.0, %v1135
  %v1137 = vpop.f32.mrb[0].mxu0
  %1138 = vmatprep.mubr.bf16.mxu0 0
  %1139 = vmatmul.mubr.bf16.gmra.mrb[0].mxu0 %v973
  %v1140 = vpop.f32.mrb[0].mxu0
  %v1141 = vadd.f32 0.0, %v1140
  %v1142 = vpop.f32.mrb[0].mxu0
  %v1143 = vpop.f32.mrb[0].mxu0
  %v1144 = vadd.f32 0.0, %v1143
  %v1145 = vpop.f32.mrb[0].mxu0
  %1146 = vmatprep.mubr.bf16.mxu0 0
  %1147 = vmatmul.mubr.bf16.gmra.mrb[0].mxu0 %v976
  %v1148 = vpop.f32.mrb[0].mxu0
  %v1149 = vadd.f32 0.0, %v1148
  %v1150 = vpop.f32.mrb[0].mxu0
  %v1151 = vpop.f32.mrb[0].mxu0
  %v1152 = vadd.f32 0.0, %v1151
  %v1153 = vpop.f32.mrb[0].mxu0
  %1154 = vdwg.mxu0
  %v1155 = vld [vmem:[%s3] sm:$0xf]
  %v1156 = vld [vmem:[%s3 + $0x4] sm:$0xf]
  %v1157 = vld [vmem:[%s3 + $0x8] sm:$0xf]
  %v1158 = vld [vmem:[%s3 + $0xc] sm:$0xf]
  %v1159 = vld [vmem:[%s3 + $0x10] sm:$0xf]
  %v1160 = vld [vmem:[%s3 + $0x14] sm:$0xf]
  %v1161 = vld [vmem:[%s3 + $0x18] sm:$0xf]
  %v1162 = vld [vmem:[%s3 + $0x1c] sm:$0xf]
  %v1163 = vld [vmem:[%s3 + $0x20] sm:$0xf]
  %v1164 = vld [vmem:[%s3 + $0x24] sm:$0xf]
  %v1165 = vld [vmem:[%s3 + $0x28] sm:$0xf]
  %v1166 = vld [vmem:[%s3 + $0x2c] sm:$0xf]
  %v1167 = vld [vmem:[%s3 + $0x30] sm:$0xf]
  %v1168 = vld [vmem:[%s3 + $0x34] sm:$0xf]
  %v1169 = vld [vmem:[%s3 + $0x38] sm:$0xf]
  %v1170 = vld [vmem:[%s3 + $0x3c] sm:$0xf]
  %v1171 = vld [vmem:[%s3 + $0x40] sm:$0xf]
  %v1172 = vld [vmem:[%s3 + $0x44] sm:$0xf]
  %v1173 = vld [vmem:[%s3 + $0x48] sm:$0xf]
  %v1174 = vld [vmem:[%s3 + $0x4c] sm:$0xf]
  %v1175 = vld [vmem:[%s3 + $0x50] sm:$0xf]
  %v1176 = vld [vmem:[%s3 + $0x54] sm:$0xf]
  %v1177 = vld [vmem:[%s3 + $0x58] sm:$0xf]
  %v1178 = vld [vmem:[%s3 + $0x5c] sm:$0xf]
  %v1179 = vld [vmem:[%s3 + $0x60] sm:$0xf]
  %v1180 = vld [vmem:[%s3 + $0x64] sm:$0xf]
  %v1181 = vld [vmem:[%s3 + $0x68] sm:$0xf]
  %v1182 = vld [vmem:[%s3 + $0x6c] sm:$0xf]
  %v1183 = vld [vmem:[%s3 + $0x70] sm:$0xf]
  %v1184 = vld [vmem:[%s3 + $0x74] sm:$0xf]
  %v1185 = vld [vmem:[%s3 + $0x78] sm:$0xf]
  %v1186 = vld [vmem:[%s3 + $0x7c] sm:$0xf]
  %v1187 = vld [vmem:[%s3 + $0x80] sm:$0xf]
  %v1188 = vld [vmem:[%s3 + $0x84] sm:$0xf]
  %v1189 = vld [vmem:[%s3 + $0x88] sm:$0xf]
  %v1190 = vld [vmem:[%s3 + $0x8c] sm:$0xf]
  %v1227 = vunpack.c.l.b16 %v1155
  %v1228 = vunpack.c.l.b16 %v1156
  %v1229 = vunpack.c.l.b16 %v1157
  %v1230 = vunpack.c.l.b16 %v1158
  %v1231 = vunpack.c.l.b16 %v1159
  %v1232 = vunpack.c.l.b16 %v1160
  %v1233 = vunpack.c.l.b16 %v1161
  %v1234 = vunpack.c.l.b16 %v1162
  %v1235 = vunpack.c.l.b16 %v1163
  %v1236 = vunpack.c.l.b16 %v1164
  %v1237 = vunpack.c.l.b16 %v1165
  %v1238 = vunpack.c.l.b16 %v1166
  %v1239 = vunpack.c.l.b16 %v1167
  %v1240 = vunpack.c.l.b16 %v1168
  %v1241 = vunpack.c.l.b16 %v1169
  %v1242 = vunpack.c.l.b16 %v1170
  %v1243 = vunpack.c.l.b16 %v1171
  %v1244 = vunpack.c.l.b16 %v1172
  %v1245 = vunpack.c.l.b16 %v1173
  %v1246 = vunpack.c.l.b16 %v1174
  %v1247 = vunpack.c.l.b16 %v1175
  %v1248 = vunpack.c.l.b16 %v1176
  %v1249 = vunpack.c.l.b16 %v1177
  %v1250 = vunpack.c.l.b16 %v1178
  %v1251 = vunpack.c.l.b16 %v1179
  %v1252 = vunpack.c.l.b16 %v1180
  %v1253 = vunpack.c.l.b16 %v1181
  %v1254 = vunpack.c.l.b16 %v1182
  %v1255 = vunpack.c.l.b16 %v1183
  %v1256 = vunpack.c.l.b16 %v1184
  %v1257 = vunpack.c.l.b16 %v1185
  %v1258 = vunpack.c.l.b16 %v1186
  %v1259 = vunpack.c.l.b16 %v1187
  %v1260 = vunpack.c.l.b16 %v1188
  %v1261 = vunpack.c.l.b16 %v1189
  %v1262 = vunpack.c.l.b16 %v1190
  %v1263 = vpack.c.b16 %v1228, %v1227
  %v1264 = vpack.c.b16 %v1230, %v1229
  %v1265 = vpack.c.b16 %v1232, %v1231
  %v1266 = vpack.c.b16 %v1234, %v1233
  %v1267 = vpack.c.b16 %v1236, %v1235
  %v1268 = vpack.c.b16 %v1238, %v1237
  %v1269 = vpack.c.b16 %v1240, %v1239
  %v1270 = vpack.c.b16 %v1242, %v1241
  %v1271 = vpack.c.b16 %v1244, %v1243
  %v1272 = vpack.c.b16 %v1246, %v1245
  %v1273 = vpack.c.b16 %v1248, %v1247
  %v1274 = vpack.c.b16 %v1250, %v1249
  %v1275 = vpack.c.b16 %v1252, %v1251
  %v1276 = vpack.c.b16 %v1254, %v1253
  %v1277 = vpack.c.b16 %v1256, %v1255
  %v1278 = vpack.c.b16 %v1258, %v1257
  %v1279 = vpack.c.b16 %v1260, %v1259
  %v1280 = vpack.c.b16 %v1262, %v1261
  %v1282 = vsel %vm205, %v1263, 0
  %v1285 = vsel %vm205, %v1264, 0
  %v1288 = vsel %vm205, %v1265, 0
  %v1291 = vsel %vm205, %v1266, 0
  %v1294 = vsel %vm205, %v1267, 0
  %v1297 = vsel %vm205, %v1268, 0
  %v1300 = vsel %vm205, %v1269, 0
  %v1303 = vsel %vm205, %v1270, 0
  %v1306 = vsel %vm205, %v1271, 0
  %v1309 = vsel %vm205, %v1272, 0
  %v1312 = vsel %vm205, %v1273, 0
  %v1315 = vsel %vm205, %v1274, 0
  %v1318 = vsel %vm205, %v1275, 0
  %v1321 = vsel %vm205, %v1276, 0
  %v1324 = vsel %vm205, %v1277, 0
  %v1327 = vsel %vm205, %v1278, 0
  %v1330 = vsel %vm205, %v1279, 0
  %v1333 = vsel %vm205, %v1280, 0
  %1335 = vmatprep.subr.bf16.mxu0 0
  %1336 = vmatpush1.bf16.msra.mxu0 %v192
  %1337 = vmatprep.subr.bf16.mxu0 0
  %1338 = vmatpush1.bf16.msra.mxu0 %v193
  %1339 = vmatprep.subr.bf16.mxu0 0
  %1340 = vmatpush1.bf16.msra.mxu0 %v194
  %1341 = vmatprep.subr.bf16.mxu0 0
  %1342 = vmatpush1.bf16.msra.mxu0 %v195
  %1343 = vmatprep.subr.bf16.mxu0 0
  %1344 = vmatpush1.bf16.msra.mxu0 %v196
  %1345 = vmatprep.subr.bf16.mxu0 0
  %1346 = vmatpush1.bf16.msra.mxu0 %v197
  %1347 = vmatprep.subr.bf16.mxu0 0
  %1348 = vmatpush1.bf16.msra.mxu0 %v262
  %1349 = vmatprep.subr.bf16.mxu0 0
  %1350 = vmatpush1.bf16.msra.mxu0 0
  %1351 = vmatprep.subr.bf16.mxu0 0
  %1352 = vmatpush1.bf16.msra.mxu0 0
  %1353 = vmatprep.subr.bf16.mxu0 0
  %1354 = vmatpush1.bf16.msra.mxu0 0
  %1355 = vmatprep.subr.bf16.mxu0 0
  %1356 = vmatpush1.bf16.msra.mxu0 0
  %1357 = vmatprep.subr.bf16.mxu0 0
  %1358 = vmatpush1.bf16.msra.mxu0 0
  %1359 = vmatprep.subr.bf16.mxu0 0
  %1360 = vmatpush1.bf16.msra.mxu0 0
  %1361 = vmatprep.subr.bf16.mxu0 0
  %1362 = vmatpush1.bf16.msra.mxu0 0
  %1363 = vmatprep.subr.bf16.mxu0 0
  %1364 = vmatpush1.bf16.msra.mxu0 0
  %1365 = vmatprep.subr.bf16.mxu0 0
  %1366 = vmatpush1.bf16.msra.mxu0 0
  %1367 = vmatprep.mubr.bf16.mxu0 0
  %1368 = vmatmul.mubr.bf16.gmra.mrb[0].mxu0 %v1282
  %v1369 = vpop.f32.mrb[0].mxu0
  %v1370 = vadd.f32 0.0, %v1369
  %v1371 = vpop.f32.mrb[0].mxu0
  %v1372 = vpop.f32.mrb[0].mxu0
  %v1373 = vadd.f32 0.0, %v1372
  %v1374 = vpop.f32.mrb[0].mxu0
  %1375 = vmatprep.mubr.bf16.mxu0 0
  %1376 = vmatmul.mubr.bf16.gmra.mrb[0].mxu0 %v1285
  %v1377 = vpop.f32.mrb[0].mxu0
  %v1378 = vadd.f32 0.0, %v1377
  %v1379 = vpop.f32.mrb[0].mxu0
  %v1380 = vpop.f32.mrb[0].mxu0
  %v1381 = vadd.f32 0.0, %v1380
  %v1382 = vpop.f32.mrb[0].mxu0
  %1383 = vmatprep.mubr.bf16.mxu0 0
  %1384 = vmatmul.mubr.bf16.gmra.mrb[0].mxu0 %v1288
  %v1385 = vpop.f32.mrb[0].mxu0
  %v1386 = vadd.f32 0.0, %v1385
  %v1387 = vpop.f32.mrb[0].mxu0
  %v1388 = vpop.f32.mrb[0].mxu0
  %v1389 = vadd.f32 0.0, %v1388
  %v1390 = vpop.f32.mrb[0].mxu0
  %1391 = vmatprep.mubr.bf16.mxu0 0
  %1392 = vmatmul.mubr.bf16.gmra.mrb[0].mxu0 %v1291
  %v1393 = vpop.f32.mrb[0].mxu0
  %v1394 = vadd.f32 0.0, %v1393
  %v1395 = vpop.f32.mrb[0].mxu0
  %v1396 = vpop.f32.mrb[0].mxu0
  %v1397 = vadd.f32 0.0, %v1396
  %v1398 = vpop.f32.mrb[0].mxu0
  %1399 = vmatprep.mubr.bf16.mxu0 0
  %1400 = vmatmul.mubr.bf16.gmra.mrb[0].mxu0 %v1294
  %v1401 = vpop.f32.mrb[0].mxu0
  %v1402 = vadd.f32 0.0, %v1401
  %v1403 = vpop.f32.mrb[0].mxu0
  %v1404 = vpop.f32.mrb[0].mxu0
  %v1405 = vadd.f32 0.0, %v1404
  %v1406 = vpop.f32.mrb[0].mxu0
  %1407 = vmatprep.mubr.bf16.mxu0 0
  %1408 = vmatmul.mubr.bf16.gmra.mrb[0].mxu0 %v1297
  %v1409 = vpop.f32.mrb[0].mxu0
  %v1410 = vadd.f32 0.0, %v1409
  %v1411 = vpop.f32.mrb[0].mxu0
  %v1412 = vpop.f32.mrb[0].mxu0
  %v1413 = vadd.f32 0.0, %v1412
  %v1414 = vpop.f32.mrb[0].mxu0
  %1415 = vmatprep.mubr.bf16.mxu0 0
  %1416 = vmatmul.mubr.bf16.gmra.mrb[0].mxu0 %v1300
  %v1417 = vpop.f32.mrb[0].mxu0
  %v1418 = vadd.f32 0.0, %v1417
  %v1419 = vpop.f32.mrb[0].mxu0
  %v1420 = vpop.f32.mrb[0].mxu0
  %v1421 = vadd.f32 0.0, %v1420
  %v1422 = vpop.f32.mrb[0].mxu0
  %1423 = vmatprep.mubr.bf16.mxu0 0
  %1424 = vmatmul.mubr.bf16.gmra.mrb[0].mxu0 %v1303
  %v1425 = vpop.f32.mrb[0].mxu0
  %v1426 = vadd.f32 0.0, %v1425
  %v1427 = vpop.f32.mrb[0].mxu0
  %v1428 = vpop.f32.mrb[0].mxu0
  %v1429 = vadd.f32 0.0, %v1428
  %v1430 = vpop.f32.mrb[0].mxu0
  %1431 = vmatprep.mubr.bf16.mxu0 0
  %1432 = vmatmul.mubr.bf16.gmra.mrb[0].mxu0 %v1306
  %v1433 = vpop.f32.mrb[0].mxu0
  %v1434 = vadd.f32 0.0, %v1433
  %v1435 = vpop.f32.mrb[0].mxu0
  %v1436 = vpop.f32.mrb[0].mxu0
  %v1437 = vadd.f32 0.0, %v1436
  %v1438 = vpop.f32.mrb[0].mxu0
  %1439 = vmatprep.mubr.bf16.mxu0 0
  %1440 = vmatmul.mubr.bf16.gmra.mrb[0].mxu0 %v1309
  %v1441 = vpop.f32.mrb[0].mxu0
  %v1442 = vadd.f32 0.0, %v1441
  %v1443 = vpop.f32.mrb[0].mxu0
  %v1444 = vpop.f32.mrb[0].mxu0
  %v1445 = vadd.f32 0.0, %v1444
  %v1446 = vpop.f32.mrb[0].mxu0
  %1447 = vmatprep.mubr.bf16.mxu0 0
  %1448 = vmatmul.mubr.bf16.gmra.mrb[0].mxu0 %v1312
  %v1449 = vpop.f32.mrb[0].mxu0
  %v1450 = vadd.f32 0.0, %v1449
  %v1451 = vpop.f32.mrb[0].mxu0
  %v1452 = vpop.f32.mrb[0].mxu0
  %v1453 = vadd.f32 0.0, %v1452
  %v1454 = vpop.f32.mrb[0].mxu0
  %1455 = vmatprep.mubr.bf16.mxu0 0
  %1456 = vmatmul.mubr.bf16.gmra.mrb[0].mxu0 %v1315
  %v1457 = vpop.f32.mrb[0].mxu0
  %v1458 = vadd.f32 0.0, %v1457
  %v1459 = vpop.f32.mrb[0].mxu0
  %v1460 = vpop.f32.mrb[0].mxu0
  %v1461 = vadd.f32 0.0, %v1460
  %v1462 = vpop.f32.mrb[0].mxu0
  %1463 = vmatprep.mubr.bf16.mxu0 0
  %1464 = vmatmul.mubr.bf16.gmra.mrb[0].mxu0 %v1318
  %v1465 = vpop.f32.mrb[0].mxu0
  %v1466 = vadd.f32 0.0, %v1465
  %v1467 = vpop.f32.mrb[0].mxu0
  %v1468 = vpop.f32.mrb[0].mxu0
  %v1469 = vadd.f32 0.0, %v1468
  %v1470 = vpop.f32.mrb[0].mxu0
  %1471 = vmatprep.mubr.bf16.mxu0 0
  %1472 = vmatmul.mubr.bf16.gmra.mrb[0].mxu0 %v1321
  %v1473 = vpop.f32.mrb[0].mxu0
  %v1474 = vadd.f32 0.0, %v1473
  %v1475 = vpop.f32.mrb[0].mxu0
  %v1476 = vpop.f32.mrb[0].mxu0
  %v1477 = vadd.f32 0.0, %v1476
  %v1478 = vpop.f32.mrb[0].mxu0
  %1479 = vmatprep.mubr.bf16.mxu0 0
  %1480 = vmatmul.mubr.bf16.gmra.mrb[0].mxu0 %v1324
  %v1481 = vpop.f32.mrb[0].mxu0
  %v1482 = vadd.f32 0.0, %v1481
  %v1483 = vpop.f32.mrb[0].mxu0
  %v1484 = vpop.f32.mrb[0].mxu0
  %v1485 = vadd.f32 0.0, %v1484
  %v1486 = vpop.f32.mrb[0].mxu0
  %1487 = vmatprep.mubr.bf16.mxu0 0
  %1488 = vmatmul.mubr.bf16.gmra.mrb[0].mxu0 %v1327
  %v1489 = vpop.f32.mrb[0].mxu0
  %v1490 = vadd.f32 0.0, %v1489
  %v1491 = vpop.f32.mrb[0].mxu0
  %v1492 = vpop.f32.mrb[0].mxu0
  %v1493 = vadd.f32 0.0, %v1492
  %v1494 = vpop.f32.mrb[0].mxu0
  %1495 = vmatprep.mubr.bf16.mxu0 0
  %1496 = vmatmul.mubr.bf16.gmra.mrb[0].mxu0 %v1330
  %v1497 = vpop.f32.mrb[0].mxu0
  %v1498 = vadd.f32 0.0, %v1497
  %v1499 = vpop.f32.mrb[0].mxu0
  %v1500 = vpop.f32.mrb[0].mxu0
  %v1501 = vadd.f32 0.0, %v1500
  %v1502 = vpop.f32.mrb[0].mxu0
  %1503 = vmatprep.mubr.bf16.mxu0 0
  %1504 = vmatmul.mubr.bf16.gmra.mrb[0].mxu0 %v1333
  %v1505 = vpop.f32.mrb[0].mxu0
  %v1506 = vadd.f32 0.0, %v1505
  %v1507 = vpop.f32.mrb[0].mxu0
  %v1508 = vpop.f32.mrb[0].mxu0
  %v1509 = vadd.f32 0.0, %v1508
  %v1510 = vpop.f32.mrb[0].mxu0
  %1511 = vdwg.mxu0
  %v1512 = vmax.f32 %v299, %v656
  %v1513 = vmax.f32 %v302, %v659
  %v1514 = vmax.f32 %v307, %v664
  %v1515 = vmax.f32 %v310, %v667
  %v1516 = vmax.f32 %v315, %v672
  %v1517 = vmax.f32 %v318, %v675
  %v1518 = vmax.f32 %v323, %v680
  %v1519 = vmax.f32 %v326, %v683
  %v1520 = vmax.f32 %v331, %v688
  %v1521 = vmax.f32 %v334, %v691
  %v1522 = vmax.f32 %v339, %v696
  %v1523 = vmax.f32 %v342, %v699
  %v1524 = vmax.f32 %v347, %v704
  %v1525 = vmax.f32 %v350, %v707
  %v1526 = vmax.f32 %v355, %v712
  %v1527 = vmax.f32 %v358, %v715
  %v1528 = vmax.f32 %v363, %v720
  %v1529 = vmax.f32 %v366, %v723
  %v1530 = vmax.f32 %v371, %v728
  %v1531 = vmax.f32 %v374, %v731
  %v1532 = vmax.f32 %v379, %v736
  %v1533 = vmax.f32 %v382, %v739
  %v1534 = vmax.f32 %v387, %v744
  %v1535 = vmax.f32 %v390, %v747
  %v1536 = vmax.f32 %v395, %v752
  %v1537 = vmax.f32 %v398, %v755
  %v1538 = vmax.f32 %v403, %v760
  %v1539 = vmax.f32 %v406, %v763
  %v1540 = vmax.f32 %v411, %v768
  %v1541 = vmax.f32 %v414, %v771
  %v1542 = vmax.f32 %v419, %v776
  %v1543 = vmax.f32 %v422, %v779
  %v1544 = vmax.f32 %v427, %v784
  %v1545 = vmax.f32 %v430, %v787
  %v1546 = vmax.f32 %v435, %v792
  %v1547 = vmax.f32 %v438, %v795
  %v1548 = vmax.f32 %v1013, %v1370
  %v1549 = vmax.f32 %v1016, %v1373
  %v1550 = vmax.f32 %v1021, %v1378
  %v1551 = vmax.f32 %v1024, %v1381
  %v1552 = vmax.f32 %v1029, %v1386
  %v1553 = vmax.f32 %v1032, %v1389
  %v1554 = vmax.f32 %v1037, %v1394
  %v1555 = vmax.f32 %v1040, %v1397
  %v1556 = vmax.f32 %v1045, %v1402
  %v1557 = vmax.f32 %v1048, %v1405
  %v1558 = vmax.f32 %v1053, %v1410
  %v1559 = vmax.f32 %v1056, %v1413
  %v1560 = vmax.f32 %v1061, %v1418
  %v1561 = vmax.f32 %v1064, %v1421
  %v1562 = vmax.f32 %v1069, %v1426
  %v1563 = vmax.f32 %v1072, %v1429
  %v1564 = vmax.f32 %v1077, %v1434
  %v1565 = vmax.f32 %v1080, %v1437
  %v1566 = vmax.f32 %v1085, %v1442
  %v1567 = vmax.f32 %v1088, %v1445
  %v1568 = vmax.f32 %v1093, %v1450
  %v1569 = vmax.f32 %v1096, %v1453
  %v1570 = vmax.f32 %v1101, %v1458
  %v1571 = vmax.f32 %v1104, %v1461
  %v1572 = vmax.f32 %v1109, %v1466
  %v1573 = vmax.f32 %v1112, %v1469
  %v1574 = vmax.f32 %v1117, %v1474
  %v1575 = vmax.f32 %v1120, %v1477
  %v1576 = vmax.f32 %v1125, %v1482
  %v1577 = vmax.f32 %v1128, %v1485
  %v1578 = vmax.f32 %v1133, %v1490
  %v1579 = vmax.f32 %v1136, %v1493
  %v1580 = vmax.f32 %v1141, %v1498
  %v1581 = vmax.f32 %v1144, %v1501
  %v1582 = vmax.f32 %v1149, %v1506
  %v1583 = vmax.f32 %v1152, %v1509
  %v1584 = vmax.f32 %v1512, %v1548
  %v1585 = vmax.f32 %v1513, %v1549
  %v1586 = vmax.f32 %v1514, %v1550
  %v1587 = vmax.f32 %v1515, %v1551
  %v1588 = vmax.f32 %v1516, %v1552
  %v1589 = vmax.f32 %v1517, %v1553
  %v1590 = vmax.f32 %v1518, %v1554
  %v1591 = vmax.f32 %v1519, %v1555
  %v1592 = vmax.f32 %v1520, %v1556
  %v1593 = vmax.f32 %v1521, %v1557
  %v1594 = vmax.f32 %v1522, %v1558
  %v1595 = vmax.f32 %v1523, %v1559
  %v1596 = vmax.f32 %v1524, %v1560
  %v1597 = vmax.f32 %v1525, %v1561
  %v1598 = vmax.f32 %v1526, %v1562
  %v1599 = vmax.f32 %v1527, %v1563
  %v1600 = vmax.f32 %v1528, %v1564
  %v1601 = vmax.f32 %v1529, %v1565
  %v1602 = vmax.f32 %v1530, %v1566
  %v1603 = vmax.f32 %v1531, %v1567
  %v1604 = vmax.f32 %v1532, %v1568
  %v1605 = vmax.f32 %v1533, %v1569
  %v1606 = vmax.f32 %v1534, %v1570
  %v1607 = vmax.f32 %v1535, %v1571
  %v1608 = vmax.f32 %v1536, %v1572
  %v1609 = vmax.f32 %v1537, %v1573
  %v1610 = vmax.f32 %v1538, %v1574
  %v1611 = vmax.f32 %v1539, %v1575
  %v1612 = vmax.f32 %v1540, %v1576
  %v1613 = vmax.f32 %v1541, %v1577
  %v1614 = vmax.f32 %v1542, %v1578
  %v1615 = vmax.f32 %v1543, %v1579
  %v1616 = vmax.f32 %v1544, %v1580
  %v1617 = vmax.f32 %v1545, %v1581
  %v1618 = vmax.f32 %v1546, %v1582
  %v1619 = vmax.f32 %v1547, %v1583
  %v1620 = vld [vmem:[%s5] sm:$0x1]
  %v1622 = vlaneseq
  %v1623 = vshrl.u32 %v1622, 7
  %v1624 = vsub.s32 0, %v1623
  %v1625 = vrot.slane %v1620, %v1624
  %v1627 = vadd.f32 %v1584, %v1625
  %v1628 = vadd.f32 %v1585, %v1625
  %v1629 = vadd.f32 %v1586, %v1625
  %v1630 = vadd.f32 %v1587, %v1625
  %v1631 = vadd.f32 %v1588, %v1625
  %v1632 = vadd.f32 %v1589, %v1625
  %v1633 = vadd.f32 %v1590, %v1625
  %v1634 = vadd.f32 %v1591, %v1625
  %v1635 = vadd.f32 %v1592, %v1625
  %v1636 = vadd.f32 %v1593, %v1625
  %v1637 = vadd.f32 %v1594, %v1625
  %v1638 = vadd.f32 %v1595, %v1625
  %v1639 = vadd.f32 %v1596, %v1625
  %v1640 = vadd.f32 %v1597, %v1625
  %v1641 = vadd.f32 %v1598, %v1625
  %v1642 = vadd.f32 %v1599, %v1625
  %v1643 = vadd.f32 %v1600, %v1625
  %v1644 = vadd.f32 %v1601, %v1625
  %v1645 = vadd.f32 %v1602, %v1625
  %v1646 = vadd.f32 %v1603, %v1625
  %v1647 = vadd.f32 %v1604, %v1625
  %v1648 = vadd.f32 %v1605, %v1625
  %v1649 = vadd.f32 %v1606, %v1625
  %v1650 = vadd.f32 %v1607, %v1625
  %v1651 = vadd.f32 %v1608, %v1625
  %v1652 = vadd.f32 %v1609, %v1625
  %v1653 = vadd.f32 %v1610, %v1625
  %v1654 = vadd.f32 %v1611, %v1625
  %v1655 = vadd.f32 %v1612, %v1625
  %v1656 = vadd.f32 %v1613, %v1625
  %v1657 = vadd.f32 %v1614, %v1625
  %v1658 = vadd.f32 %v1615, %v1625
  %v1659 = vadd.f32 %v1616, %v1625
  %v1660 = vadd.f32 %v1617, %v1625
  %v1661 = vadd.f32 %v1618, %v1625
  %v1662 = vadd.f32 %v1619, %v1625
  %v1663 = vmax.f32 %v1627, 0.0
  %v1664 = vmax.f32 %v1628, 0.0
  %v1665 = vmax.f32 %v1629, 0.0
  %v1666 = vmax.f32 %v1630, 0.0
  %v1667 = vmax.f32 %v1631, 0.0
  %v1668 = vmax.f32 %v1632, 0.0
  %v1669 = vmax.f32 %v1633, 0.0
  %v1670 = vmax.f32 %v1634, 0.0
  %v1671 = vmax.f32 %v1635, 0.0
  %v1672 = vmax.f32 %v1636, 0.0
  %v1673 = vmax.f32 %v1637, 0.0
  %v1674 = vmax.f32 %v1638, 0.0
  %v1675 = vmax.f32 %v1639, 0.0
  %v1676 = vmax.f32 %v1640, 0.0
  %v1677 = vmax.f32 %v1641, 0.0
  %v1678 = vmax.f32 %v1642, 0.0
  %v1679 = vmax.f32 %v1643, 0.0
  %v1680 = vmax.f32 %v1644, 0.0
  %v1681 = vmax.f32 %v1645, 0.0
  %v1682 = vmax.f32 %v1646, 0.0
  %v1683 = vmax.f32 %v1647, 0.0
  %v1684 = vmax.f32 %v1648, 0.0
  %v1685 = vmax.f32 %v1649, 0.0
  %v1686 = vmax.f32 %v1650, 0.0
  %v1687 = vmax.f32 %v1651, 0.0
  %v1688 = vmax.f32 %v1652, 0.0
  %v1689 = vmax.f32 %v1653, 0.0
  %v1690 = vmax.f32 %v1654, 0.0
  %v1691 = vmax.f32 %v1655, 0.0
  %v1692 = vmax.f32 %v1656, 0.0
  %v1693 = vmax.f32 %v1657, 0.0
  %v1694 = vmax.f32 %v1658, 0.0
  %v1695 = vmax.f32 %v1659, 0.0
  %v1696 = vmax.f32 %v1660, 0.0
  %v1697 = vmax.f32 %v1661, 0.0
  %v1698 = vmax.f32 %v1662, 0.0
  %v1699 = vpack.c.bf16 %v1664, %v1663
  %v1700 = vpack.c.bf16 %v1666, %v1665
  %v1701 = vpack.c.bf16 %v1668, %v1667
  %v1702 = vpack.c.bf16 %v1670, %v1669
  %v1703 = vpack.c.bf16 %v1672, %v1671
  %v1704 = vpack.c.bf16 %v1674, %v1673
  %v1705 = vpack.c.bf16 %v1676, %v1675
  %v1706 = vpack.c.bf16 %v1678, %v1677
  %v1707 = vpack.c.bf16 %v1680, %v1679
  %v1708 = vpack.c.bf16 %v1682, %v1681
  %v1709 = vpack.c.bf16 %v1684, %v1683
  %v1710 = vpack.c.bf16 %v1686, %v1685
  %v1711 = vpack.c.bf16 %v1688, %v1687
  %v1712 = vpack.c.bf16 %v1690, %v1689
  %v1713 = vpack.c.bf16 %v1692, %v1691
  %v1714 = vpack.c.bf16 %v1694, %v1693
  %v1715 = vpack.c.bf16 %v1696, %v1695
  %v1716 = vpack.c.bf16 %v1698, %v1697
  %v1735 = vunpack.c.l.b16 %v1699
  %v1736 = vunpack.c.h.b16 %v1699
  %v1737 = vunpack.c.l.b16 %v1700
  %v1738 = vunpack.c.h.b16 %v1700
  %v1739 = vunpack.c.l.b16 %v1701
  %v1740 = vunpack.c.h.b16 %v1701
  %v1741 = vunpack.c.l.b16 %v1702
  %v1742 = vunpack.c.h.b16 %v1702
  %v1743 = vunpack.c.l.b16 %v1703
  %v1744 = vunpack.c.h.b16 %v1703
  %v1745 = vunpack.c.l.b16 %v1704
  %v1746 = vunpack.c.h.b16 %v1704
  %v1747 = vunpack.c.l.b16 %v1705
  %v1748 = vunpack.c.h.b16 %v1705
  %v1749 = vunpack.c.l.b16 %v1706
  %v1750 = vunpack.c.h.b16 %v1706
  %v1751 = vunpack.c.l.b16 %v1707
  %v1752 = vunpack.c.h.b16 %v1707
  %v1753 = vunpack.c.l.b16 %v1708
  %v1754 = vunpack.c.h.b16 %v1708
  %v1755 = vunpack.c.l.b16 %v1709
  %v1756 = vunpack.c.h.b16 %v1709
  %v1757 = vunpack.c.l.b16 %v1710
  %v1758 = vunpack.c.h.b16 %v1710
  %v1759 = vunpack.c.l.b16 %v1711
  %v1760 = vunpack.c.h.b16 %v1711
  %v1761 = vunpack.c.l.b16 %v1712
  %v1762 = vunpack.c.h.b16 %v1712
  %v1763 = vunpack.c.l.b16 %v1713
  %v1764 = vunpack.c.h.b16 %v1713
  %v1765 = vunpack.c.l.b16 %v1714
  %v1766 = vunpack.c.h.b16 %v1714
  %v1767 = vunpack.c.l.b16 %v1715
  %v1768 = vunpack.c.h.b16 %v1715
  %v1769 = vunpack.c.l.b16 %v1716
  %v1770 = vunpack.c.h.b16 %v1716
  %v1771 = vpack.c.b16 %v1735, %v1735
  %v1772 = vpack.c.b16 %v1736, %v1736
  %v1773 = vpack.c.b16 %v1737, %v1737
  %v1774 = vpack.c.b16 %v1738, %v1738
  %v1775 = vpack.c.b16 %v1739, %v1739
  %v1776 = vpack.c.b16 %v1740, %v1740
  %v1777 = vpack.c.b16 %v1741, %v1741
  %v1778 = vpack.c.b16 %v1742, %v1742
  %v1779 = vpack.c.b16 %v1743, %v1743
  %v1780 = vpack.c.b16 %v1744, %v1744
  %v1781 = vpack.c.b16 %v1745, %v1745
  %v1782 = vpack.c.b16 %v1746, %v1746
  %v1783 = vpack.c.b16 %v1747, %v1747
  %v1784 = vpack.c.b16 %v1748, %v1748
  %v1785 = vpack.c.b16 %v1749, %v1749
  %v1786 = vpack.c.b16 %v1750, %v1750
  %v1787 = vpack.c.b16 %v1751, %v1751
  %v1788 = vpack.c.b16 %v1752, %v1752
  %v1789 = vpack.c.b16 %v1753, %v1753
  %v1790 = vpack.c.b16 %v1754, %v1754
  %v1791 = vpack.c.b16 %v1755, %v1755
  %v1792 = vpack.c.b16 %v1756, %v1756
  %v1793 = vpack.c.b16 %v1757, %v1757
  %v1794 = vpack.c.b16 %v1758, %v1758
  %v1795 = vpack.c.b16 %v1759, %v1759
  %v1796 = vpack.c.b16 %v1760, %v1760
  %v1797 = vpack.c.b16 %v1761, %v1761
  %v1798 = vpack.c.b16 %v1762, %v1762
  %v1799 = vpack.c.b16 %v1763, %v1763
  %v1800 = vpack.c.b16 %v1764, %v1764
  %v1801 = vpack.c.b16 %v1765, %v1765
  %v1802 = vpack.c.b16 %v1766, %v1766
  %v1803 = vpack.c.b16 %v1767, %v1767
  %v1804 = vpack.c.b16 %v1768, %v1768
  %v1805 = vpack.c.b16 %v1769, %v1769
  %v1806 = vpack.c.b16 %v1770, %v1770
  %vm1843 = vcmask 191488
  %1844 = vst.msk [vmem:[%s6] sm:$0xf] %vm1843, %v1771
  %1845 = vst.msk [vmem:[%s6 + $0x4] sm:$0xf] %vm1843, %v1772
  %1846 = vst.msk [vmem:[%s6 + $0x8] sm:$0xf] %vm1843, %v1773
  %1847 = vst.msk [vmem:[%s6 + $0xc] sm:$0xf] %vm1843, %v1774
  %1848 = vst.msk [vmem:[%s6 + $0x10] sm:$0xf] %vm1843, %v1775
  %1849 = vst.msk [vmem:[%s6 + $0x14] sm:$0xf] %vm1843, %v1776
  %1850 = vst.msk [vmem:[%s6 + $0x18] sm:$0xf] %vm1843, %v1777
  %1851 = vst.msk [vmem:[%s6 + $0x1c] sm:$0xf] %vm1843, %v1778
  %1852 = vst.msk [vmem:[%s6 + $0x20] sm:$0xf] %vm1843, %v1779
  %1853 = vst.msk [vmem:[%s6 + $0x24] sm:$0xf] %vm1843, %v1780
  %1854 = vst.msk [vmem:[%s6 + $0x28] sm:$0xf] %vm1843, %v1781
  %1855 = vst.msk [vmem:[%s6 + $0x2c] sm:$0xf] %vm1843, %v1782
  %1856 = vst.msk [vmem:[%s6 + $0x30] sm:$0xf] %vm1843, %v1783
  %1857 = vst.msk [vmem:[%s6 + $0x34] sm:$0xf] %vm1843, %v1784
  %1858 = vst.msk [vmem:[%s6 + $0x38] sm:$0xf] %vm1843, %v1785
  %1859 = vst.msk [vmem:[%s6 + $0x3c] sm:$0xf] %vm1843, %v1786
  %1860 = vst.msk [vmem:[%s6 + $0x40] sm:$0xf] %vm1843, %v1787
  %1861 = vst.msk [vmem:[%s6 + $0x44] sm:$0xf] %vm1843, %v1788
  %1862 = vst.msk [vmem:[%s6 + $0x48] sm:$0xf] %vm1843, %v1789
  %1863 = vst.msk [vmem:[%s6 + $0x4c] sm:$0xf] %vm1843, %v1790
  %1864 = vst.msk [vmem:[%s6 + $0x50] sm:$0xf] %vm1843, %v1791
  %1865 = vst.msk [vmem:[%s6 + $0x54] sm:$0xf] %vm1843, %v1792
  %1866 = vst.msk [vmem:[%s6 + $0x58] sm:$0xf] %vm1843, %v1793
  %1867 = vst.msk [vmem:[%s6 + $0x5c] sm:$0xf] %vm1843, %v1794
  %1868 = vst.msk [vmem:[%s6 + $0x60] sm:$0xf] %vm1843, %v1795
  %1869 = vst.msk [vmem:[%s6 + $0x64] sm:$0xf] %vm1843, %v1796
  %1870 = vst.msk [vmem:[%s6 + $0x68] sm:$0xf] %vm1843, %v1797
  %1871 = vst.msk [vmem:[%s6 + $0x6c] sm:$0xf] %vm1843, %v1798
  %1872 = vst.msk [vmem:[%s6 + $0x70] sm:$0xf] %vm1843, %v1799
  %1873 = vst.msk [vmem:[%s6 + $0x74] sm:$0xf] %vm1843, %v1800
  %1874 = vst.msk [vmem:[%s6 + $0x78] sm:$0xf] %vm1843, %v1801
  %1875 = vst.msk [vmem:[%s6 + $0x7c] sm:$0xf] %vm1843, %v1802
  %1876 = vst.msk [vmem:[%s6 + $0x80] sm:$0xf] %vm1843, %v1803
  %1877 = vst.msk [vmem:[%s6 + $0x84] sm:$0xf] %vm1843, %v1804
  %1878 = vst.msk [vmem:[%s6 + $0x88] sm:$0xf] %vm1843, %v1805
  %1879 = vst.msk [vmem:[%s6 + $0x8c] sm:$0xf] %vm1843, %v1806
  // Predicated region
  $region26: #{net_forward.5} parent=0 // pred_check
    _
  $region27: #{net_forward.5} parent=0 // pred_check_branch
    %1881 = sbr.rel (0) target = $region29
  $region28: #{net_forward.5} parent=0 // pred_region
    _
  $region29: #{net_forward.5} parent=0 // pred_fallthru
    _
  // Predicated region
  $region30: #{net_forward.5} parent=0 // pred_check
    _
  $region31: #{net_forward.5} parent=0 // pred_check_branch
    %1883 = sbr.rel (0) target = $region33
  $region32: #{net_forward.5} parent=0 // pred_region
    _
  $region33: #{net_forward.5} parent=0 // pred_fallthru
    _

// kernel: net_forward.6
$region0: #{net_forward.6}
  #allocation0 [shape = 'u32[]', space=smem, size = 0x4, offset = 0x4, fixed_abs, tag = 'smem constant byte address 0x4 - core index']
  #allocation1 [shape = 'u32[144,128]{1,0:T(1,128)}', space=vmem, size = 0x12000, scoped, tag = 'internal scratch']
  %s0 = inlined_call_operand.vmem [shape: bf16[50,216], index: 0, kind: input, shape index: {}]
  %s1 = inlined_call_operand.vmem [shape: bf16[50,216], index: 1, kind: input, shape index: {}]
  %s2 = inlined_call_operand.vmem [shape: bf16[50,216], index: 2, kind: input, shape index: {}]
  %s3 = inlined_call_operand.vmem [shape: bf16[50,216], index: 3, kind: input, shape index: {}]
  %s4 = inlined_call_operand.vmem [shape: bf16[216,48], index: 4, kind: input, shape index: {}]
  %s5 = inlined_call_operand.vmem [shape: f32[1,48], index: 5, kind: input, shape index: {}]
  %s6 = inlined_call_operand.vmem [shape: bf16[50,48], index: 6, kind: output, shape index: {}]
  %s7 = sld [smem:[#allocation0]]
  $region34: #{net_forward.6} parent=0
    _
  %s9 = ssub.s32 1, %s7
  %s10 = scalar_select 0, %s9, %s7
  // Predicated region
  $region2: #{net_forward.6} parent=0 // pred_check
    _
  $region3: #{net_forward.6} parent=0 // pred_check_branch
    %12 = sbr.rel (0) target = $region5
  $region4: #{net_forward.6} parent=0 // pred_region
    _
  $region5: #{net_forward.6} parent=0 // pred_fallthru
    _
  // Predicated region
  $region6: #{net_forward.6} parent=0 // pred_check
    _
  $region7: #{net_forward.6} parent=0 // pred_check_branch
    %14 = sbr.rel (0) target = $region9
  $region8: #{net_forward.6} parent=0 // pred_region
    _
  $region9: #{net_forward.6} parent=0 // pred_fallthru
    _
  // Predicated region
  $region10: #{net_forward.6} parent=0 // pred_check
    _
  $region11: #{net_forward.6} parent=0 // pred_check_branch
    %16 = sbr.rel (0) target = $region13
  $region12: #{net_forward.6} parent=0 // pred_region
    _
  $region13: #{net_forward.6} parent=0 // pred_fallthru
    _
  // Predicated region
  $region14: #{net_forward.6} parent=0 // pred_check
    _
  $region15: #{net_forward.6} parent=0 // pred_check_branch
    %18 = sbr.rel (0) target = $region17
  $region16: #{net_forward.6} parent=0 // pred_region
    _
  $region17: #{net_forward.6} parent=0 // pred_fallthru
    _
  // Predicated region
  $region18: #{net_forward.6} parent=0 // pred_check
    _
  $region19: #{net_forward.6} parent=0 // pred_check_branch
    %20 = sbr.rel (0) target = $region21
  $region20: #{net_forward.6} parent=0 // pred_region
    _
  $region21: #{net_forward.6} parent=0 // pred_fallthru
    _
  // Predicated region
  $region22: #{net_forward.6} parent=0 // pred_check
    _
  $region23: #{net_forward.6} parent=0 // pred_check_branch
    %22 = sbr.rel (0) target = $region25
  $region24: #{net_forward.6} parent=0 // pred_region
    _
  $region25: #{net_forward.6} parent=0 // pred_fallthru
    _
  %v24 = vld [vmem:[%s4] sm:$0xf]
  %v25 = vld [vmem:[%s4 + $0x4] sm:$0xf]
  %v26 = vld [vmem:[%s4 + $0x8] sm:$0xf]
  %v27 = vld [vmem:[%s4 + $0xc] sm:$0xf]
  %v28 = vld [vmem:[%s4 + $0x10] sm:$0xf]
  %v29 = vld [vmem:[%s4 + $0x14] sm:$0xf]
  %v30 = vld [vmem:[%s4 + $0x18] sm:$0xf]
  %v31 = vld [vmem:[%s4 + $0x1c] sm:$0xf]
  %v32 = vld [vmem:[%s4 + $0x20] sm:$0xf]
  %v33 = vld [vmem:[%s4 + $0x24] sm:$0xf]
  %v34 = vld [vmem:[%s4 + $0x28] sm:$0xf]
  %v35 = vld [vmem:[%s4 + $0x2c] sm:$0xf]
  %v36 = vld [vmem:[%s4 + $0x30] sm:$0xf]
  %v37 = vld [vmem:[%s4 + $0x34] sm:$0xf]
  %v38 = vld [vmem:[%s4 + $0x38] sm:$0xf]
  %v39 = vld [vmem:[%s4 + $0x3c] sm:$0xf]
  %v40 = vld [vmem:[%s4 + $0x40] sm:$0xf]
  %v41 = vld [vmem:[%s4 + $0x44] sm:$0xf]
  %v42 = vld [vmem:[%s4 + $0x48] sm:$0xf]
  %v43 = vld [vmem:[%s4 + $0x4c] sm:$0xf]
  %v44 = vld [vmem:[%s4 + $0x50] sm:$0xf]
  %v45 = vld [vmem:[%s4 + $0x54] sm:$0xf]
  %v46 = vld [vmem:[%s4 + $0x58] sm:$0xf]
  %v47 = vld [vmem:[%s4 + $0x5c] sm:$0xf]
  %v48 = vld [vmem:[%s4 + $0x60] sm:$0xf]
  %v49 = vld [vmem:[%s4 + $0x64] sm:$0xf]
  %v50 = vld [vmem:[%s4 + $0x68] sm:$0xf]
  %v51 = vld [vmem:[%s0] sm:$0xff]
  %v52 = vld [vmem:[%s0 + $0x8] sm:$0xff]
  %v53 = vld [vmem:[%s0 + $0x10] sm:$0xff]
  %v54 = vld [vmem:[%s0 + $0x18] sm:$0xff]
  %v55 = vld [vmem:[%s0 + $0x20] sm:$0xff]
  %v56 = vld [vmem:[%s0 + $0x28] sm:$0xff]
  %v57 = vld [vmem:[%s0 + $0x30] sm:$0xff]
  %v65 = vunpack.c.l.b16 %v51
  %v66 = vunpack.c.h.b16 %v51
  %v67 = vunpack.c.l.b16 %v52
  %v68 = vunpack.c.h.b16 %v52
  %v69 = vunpack.c.l.b16 %v53
  %v70 = vunpack.c.h.b16 %v53
  %v71 = vunpack.c.l.b16 %v54
  %v72 = vunpack.c.h.b16 %v54
  %v73 = vunpack.c.l.b16 %v55
  %v74 = vunpack.c.h.b16 %v55
  %v75 = vunpack.c.l.b16 %v56
  %v76 = vunpack.c.h.b16 %v56
  %v77 = vunpack.c.l.b16 %v57
  %v78 = vunpack.c.h.b16 %v57
  %v79 = vpack.c.b16 %v67, %v65
  %v80 = vpack.c.b16 %v68, %v66
  %v81 = vpack.c.b16 %v71, %v69
  %v82 = vpack.c.b16 %v72, %v70
  %v83 = vpack.c.b16 %v75, %v73
  %v84 = vpack.c.b16 %v76, %v74
  %v85 = vpack.c.b16 %v77, %v77
  %v86 = vpack.c.b16 %v78, %v78
  %v118 = vunpack.c.l.b16 %v24
  %v119 = vunpack.c.l.b16 %v25
  %v120 = vunpack.c.l.b16 %v26
  %v121 = vunpack.c.l.b16 %v27
  %v122 = vunpack.c.l.b16 %v28
  %v123 = vunpack.c.l.b16 %v29
  %v124 = vunpack.c.l.b16 %v30
  %v125 = vunpack.c.l.b16 %v31
  %v126 = vunpack.c.l.b16 %v32
  %v127 = vunpack.c.l.b16 %v33
  %v128 = vunpack.c.l.b16 %v34
  %v129 = vunpack.c.l.b16 %v35
  %v130 = vunpack.c.l.b16 %v36
  %v131 = vunpack.c.l.b16 %v37
  %v132 = vunpack.c.l.b16 %v38
  %v133 = vunpack.c.l.b16 %v39
  %v134 = vunpack.c.l.b16 %v40
  %v135 = vunpack.c.l.b16 %v41
  %v136 = vunpack.c.l.b16 %v42
  %v137 = vunpack.c.l.b16 %v43
  %v138 = vunpack.c.l.b16 %v44
  %v139 = vunpack.c.l.b16 %v45
  %v140 = vunpack.c.l.b16 %v46
  %v141 = vunpack.c.l.b16 %v47
  %v142 = vunpack.c.l.b16 %v48
  %v143 = vunpack.c.l.b16 %v49
  %v144 = vunpack.c.l.b16 %v50
  %v145 = vpack.c.b16 %v119, %v118
  %v146 = vpack.c.b16 %v121, %v120
  %v147 = vpack.c.b16 %v123, %v122
  %v148 = vpack.c.b16 %v125, %v124
  %v149 = vpack.c.b16 %v127, %v126
  %v150 = vpack.c.b16 %v129, %v128
  %v151 = vpack.c.b16 %v131, %v130
  %v152 = vpack.c.b16 %v133, %v132
  %v153 = vpack.c.b16 %v135, %v134
  %v154 = vpack.c.b16 %v137, %v136
  %v155 = vpack.c.b16 %v139, %v138
  %v156 = vpack.c.b16 %v141, %v140
  %v157 = vpack.c.b16 %v143, %v142
  %v158 = vpack.c.b16 %v144, %v144
  %vm172 = vcmask 719872
  %v174 = vsel %vm172, %v80, 0
  %v177 = vsel %vm172, %v82, 0
  %v180 = vsel %vm172, %v84, 0
  %v183 = vsel %vm172, %v86, 0
  %vm185 = vcmask 1043456
  %v187 = vsel %vm185, %v158, 0
  %189 = vmatprep.subr.bf16.mxu0 0
  %190 = vmatpush1.bf16.msra.mxu0 %v145
  %191 = vmatprep.subr.bf16.mxu0 0
  %192 = vmatpush1.bf16.msra.mxu0 %v146
  %193 = vmatprep.subr.bf16.mxu0 0
  %194 = vmatpush1.bf16.msra.mxu0 %v147
  %195 = vmatprep.subr.bf16.mxu0 0
  %196 = vmatpush1.bf16.msra.mxu0 %v148
  %197 = vmatprep.subr.bf16.mxu0 0
  %198 = vmatpush1.bf16.msra.mxu0 %v149
  %199 = vmatprep.subr.bf16.mxu0 0
  %200 = vmatpush1.bf16.msra.mxu0 %v150
  %201 = vmatprep.subr.bf16.mxu0 0
  %202 = vmatpush1.bf16.msra.mxu0 %v151
  %203 = vmatprep.subr.bf16.mxu0 0
  %204 = vmatpush1.bf16.msra.mxu0 %v152
  %205 = vmatprep.subr.bf16.mxu0 0
  %206 = vmatpush1.bf16.msra.mxu0 %v153
  %207 = vmatprep.subr.bf16.mxu0 0
  %208 = vmatpush1.bf16.msra.mxu0 %v154
  %209 = vmatprep.subr.bf16.mxu0 0
  %210 = vmatpush1.bf16.msra.mxu0 %v155
  %211 = vmatprep.subr.bf16.mxu0 0
  %212 = vmatpush1.bf16.msra.mxu0 %v156
  %213 = vmatprep.subr.bf16.mxu0 0
  %214 = vmatpush1.bf16.msra.mxu0 %v157
  %215 = vmatprep.subr.bf16.mxu0 0
  %216 = vmatpush1.bf16.msra.mxu0 %v187
  %217 = vmatprep.subr.bf16.mxu0 0
  %218 = vmatpush1.bf16.msra.mxu0 0
  %219 = vmatprep.subr.bf16.mxu0 0
  %220 = vmatpush1.bf16.msra.mxu0 0
  %221 = vmatprep.mubr.bf16.mxu0 %v174
  %222 = vmatmul.mubr.bf16.gmra.mrb[0].mxu0 %v79
  %v223 = vpop.f32.mrb[0].mxu0
  %v224 = vadd.f32 0.0, %v223
  %v225 = vpop.f32.mrb[0].mxu0
  %v226 = vpop.f32.mrb[0].mxu0
  %v227 = vadd.f32 0.0, %v226
  %v228 = vpop.f32.mrb[0].mxu0
  %229 = vmatprep.mubr.bf16.mxu0 %v177
  %230 = vmatmul.mubr.bf16.gmra.mrb[0].mxu0 %v81
  %v231 = vpop.f32.mrb[0].mxu0
  %v232 = vadd.f32 0.0, %v231
  %v233 = vpop.f32.mrb[0].mxu0
  %v234 = vpop.f32.mrb[0].mxu0
  %v235 = vadd.f32 0.0, %v234
  %v236 = vpop.f32.mrb[0].mxu0
  %237 = vmatprep.mubr.bf16.mxu0 %v180
  %238 = vmatmul.mubr.bf16.gmra.mrb[0].mxu0 %v83
  %v239 = vpop.f32.mrb[0].mxu0
  %v240 = vadd.f32 0.0, %v239
  %v241 = vpop.f32.mrb[0].mxu0
  %v242 = vpop.f32.mrb[0].mxu0
  %v243 = vadd.f32 0.0, %v242
  %v244 = vpop.f32.mrb[0].mxu0
  %245 = vmatprep.mubr.bf16.mxu0 %v183
  %246 = vmatmul.mubr.bf16.gmra.mrb[0].mxu0 %v85
  %v247 = vpop.f32.mrb[0].mxu0
  %v248 = vadd.f32 0.0, %v247
  %v249 = vpop.f32.mrb[0].mxu0
  %v250 = vpop.f32.mrb[0].mxu0
  %v251 = vpop.f32.mrb[0].mxu0
  %252 = vdwg.mxu0
  %v253 = vld [vmem:[%s1] sm:$0xff]
  %v254 = vld [vmem:[%s1 + $0x8] sm:$0xff]
  %v255 = vld [vmem:[%s1 + $0x10] sm:$0xff]
  %v256 = vld [vmem:[%s1 + $0x18] sm:$0xff]
  %v257 = vld [vmem:[%s1 + $0x20] sm:$0xff]
  %v258 = vld [vmem:[%s1 + $0x28] sm:$0xff]
  %v259 = vld [vmem:[%s1 + $0x30] sm:$0xff]
  %v267 = vunpack.c.l.b16 %v253
  %v268 = vunpack.c.h.b16 %v253
  %v269 = vunpack.c.l.b16 %v254
  %v270 = vunpack.c.h.b16 %v254
  %v271 = vunpack.c.l.b16 %v255
  %v272 = vunpack.c.h.b16 %v255
  %v273 = vunpack.c.l.b16 %v256
  %v274 = vunpack.c.h.b16 %v256
  %v275 = vunpack.c.l.b16 %v257
  %v276 = vunpack.c.h.b16 %v257
  %v277 = vunpack.c.l.b16 %v258
  %v278 = vunpack.c.h.b16 %v258
  %v279 = vunpack.c.l.b16 %v259
  %v280 = vunpack.c.h.b16 %v259
  %v281 = vpack.c.b16 %v269, %v267
  %v282 = vpack.c.b16 %v270, %v268
  %v283 = vpack.c.b16 %v273, %v271
  %v284 = vpack.c.b16 %v274, %v272
  %v285 = vpack.c.b16 %v277, %v275
  %v286 = vpack.c.b16 %v278, %v276
  %v287 = vpack.c.b16 %v279, %v279
  %v288 = vpack.c.b16 %v280, %v280
  %v294 = vsel %vm172, %v282, 0
  %v297 = vsel %vm172, %v284, 0
  %v300 = vsel %vm172, %v286, 0
  %v303 = vsel %vm172, %v288, 0
  %305 = vmatprep.subr.bf16.mxu0 0
  %306 = vmatpush1.bf16.msra.mxu0 %v145
  %307 = vmatprep.subr.bf16.mxu0 0
  %308 = vmatpush1.bf16.msra.mxu0 %v146
  %309 = vmatprep.subr.bf16.mxu0 0
  %310 = vmatpush1.bf16.msra.mxu0 %v147
  %311 = vmatprep.subr.bf16.mxu0 0
  %312 = vmatpush1.bf16.msra.mxu0 %v148
  %313 = vmatprep.subr.bf16.mxu0 0
  %314 = vmatpush1.bf16.msra.mxu0 %v149
  %315 = vmatprep.subr.bf16.mxu0 0
  %316 = vmatpush1.bf16.msra.mxu0 %v150
  %317 = vmatprep.subr.bf16.mxu0 0
  %318 = vmatpush1.bf16.msra.mxu0 %v151
  %319 = vmatprep.subr.bf16.mxu0 0
  %320 = vmatpush1.bf16.msra.mxu0 %v152
  %321 = vmatprep.subr.bf16.mxu0 0
  %322 = vmatpush1.bf16.msra.mxu0 %v153
  %323 = vmatprep.subr.bf16.mxu0 0
  %324 = vmatpush1.bf16.msra.mxu0 %v154
  %325 = vmatprep.subr.bf16.mxu0 0
  %326 = vmatpush1.bf16.msra.mxu0 %v155
  %327 = vmatprep.subr.bf16.mxu0 0
  %328 = vmatpush1.bf16.msra.mxu0 %v156
  %329 = vmatprep.subr.bf16.mxu0 0
  %330 = vmatpush1.bf16.msra.mxu0 %v157
  %331 = vmatprep.subr.bf16.mxu0 0
  %332 = vmatpush1.bf16.msra.mxu0 %v187
  %333 = vmatprep.subr.bf16.mxu0 0
  %334 = vmatpush1.bf16.msra.mxu0 0
  %335 = vmatprep.subr.bf16.mxu0 0
  %336 = vmatpush1.bf16.msra.mxu0 0
  %337 = vmatprep.mubr.bf16.mxu0 %v294
  %338 = vmatmul.mubr.bf16.gmra.mrb[0].mxu0 %v281
  %v339 = vpop.f32.mrb[0].mxu0
  %v340 = vadd.f32 0.0, %v339
  %v341 = vpop.f32.mrb[0].mxu0
  %v342 = vpop.f32.mrb[0].mxu0
  %v343 = vadd.f32 0.0, %v342
  %v344 = vpop.f32.mrb[0].mxu0
  %345 = vmatprep.mubr.bf16.mxu0 %v297
  %346 = vmatmul.mubr.bf16.gmra.mrb[0].mxu0 %v283
  %v347 = vpop.f32.mrb[0].mxu0
  %v348 = vadd.f32 0.0, %v347
  %v349 = vpop.f32.mrb[0].mxu0
  %v350 = vpop.f32.mrb[0].mxu0
  %v351 = vadd.f32 0.0, %v350
  %v352 = vpop.f32.mrb[0].mxu0
  %353 = vmatprep.mubr.bf16.mxu0 %v300
  %354 = vmatmul.mubr.bf16.gmra.mrb[0].mxu0 %v285
  %v355 = vpop.f32.mrb[0].mxu0
  %v356 = vadd.f32 0.0, %v355
  %v357 = vpop.f32.mrb[0].mxu0
  %v358 = vpop.f32.mrb[0].mxu0
  %v359 = vadd.f32 0.0, %v358
  %v360 = vpop.f32.mrb[0].mxu0
  %361 = vmatprep.mubr.bf16.mxu0 %v303
  %362 = vmatmul.mubr.bf16.gmra.mrb[0].mxu0 %v287
  %v363 = vpop.f32.mrb[0].mxu0
  %v364 = vadd.f32 0.0, %v363
  %v365 = vpop.f32.mrb[0].mxu0
  %v366 = vpop.f32.mrb[0].mxu0
  %v367 = vpop.f32.mrb[0].mxu0
  %368 = vdwg.mxu0
  %v369 = vld [vmem:[%s2] sm:$0xff]
  %v370 = vld [vmem:[%s2 + $0x8] sm:$0xff]
  %v371 = vld [vmem:[%s2 + $0x10] sm:$0xff]
  %v372 = vld [vmem:[%s2 + $0x18] sm:$0xff]
  %v373 = vld [vmem:[%s2 + $0x20] sm:$0xff]
  %v374 = vld [vmem:[%s2 + $0x28] sm:$0xff]
  %v375 = vld [vmem:[%s2 + $0x30] sm:$0xff]
  %v383 = vunpack.c.l.b16 %v369
  %v384 = vunpack.c.h.b16 %v369
  %v385 = vunpack.c.l.b16 %v370
  %v386 = vunpack.c.h.b16 %v370
  %v387 = vunpack.c.l.b16 %v371
  %v388 = vunpack.c.h.b16 %v371
  %v389 = vunpack.c.l.b16 %v372
  %v390 = vunpack.c.h.b16 %v372
  %v391 = vunpack.c.l.b16 %v373
  %v392 = vunpack.c.h.b16 %v373
  %v393 = vunpack.c.l.b16 %v374
  %v394 = vunpack.c.h.b16 %v374
  %v395 = vunpack.c.l.b16 %v375
  %v396 = vunpack.c.h.b16 %v375
  %v397 = vpack.c.b16 %v385, %v383
  %v398 = vpack.c.b16 %v386, %v384
  %v399 = vpack.c.b16 %v389, %v387
  %v400 = vpack.c.b16 %v390, %v388
  %v401 = vpack.c.b16 %v393, %v391
  %v402 = vpack.c.b16 %v394, %v392
  %v403 = vpack.c.b16 %v395, %v395
  %v404 = vpack.c.b16 %v396, %v396
  %v410 = vsel %vm172, %v398, 0
  %v413 = vsel %vm172, %v400, 0
  %v416 = vsel %vm172, %v402, 0
  %v419 = vsel %vm172, %v404, 0
  %421 = vmatprep.subr.bf16.mxu0 0
  %422 = vmatpush1.bf16.msra.mxu0 %v145
  %423 = vmatprep.subr.bf16.mxu0 0
  %424 = vmatpush1.bf16.msra.mxu0 %v146
  %425 = vmatprep.subr.bf16.mxu0 0
  %426 = vmatpush1.bf16.msra.mxu0 %v147
  %427 = vmatprep.subr.bf16.mxu0 0
  %428 = vmatpush1.bf16.msra.mxu0 %v148
  %429 = vmatprep.subr.bf16.mxu0 0
  %430 = vmatpush1.bf16.msra.mxu0 %v149
  %431 = vmatprep.subr.bf16.mxu0 0
  %432 = vmatpush1.bf16.msra.mxu0 %v150
  %433 = vmatprep.subr.bf16.mxu0 0
  %434 = vmatpush1.bf16.msra.mxu0 %v151
  %435 = vmatprep.subr.bf16.mxu0 0
  %436 = vmatpush1.bf16.msra.mxu0 %v152
  %437 = vmatprep.subr.bf16.mxu0 0
  %438 = vmatpush1.bf16.msra.mxu0 %v153
  %439 = vmatprep.subr.bf16.mxu0 0
  %440 = vmatpush1.bf16.msra.mxu0 %v154
  %441 = vmatprep.subr.bf16.mxu0 0
  %442 = vmatpush1.bf16.msra.mxu0 %v155
  %443 = vmatprep.subr.bf16.mxu0 0
  %444 = vmatpush1.bf16.msra.mxu0 %v156
  %445 = vmatprep.subr.bf16.mxu0 0
  %446 = vmatpush1.bf16.msra.mxu0 %v157
  %447 = vmatprep.subr.bf16.mxu0 0
  %448 = vmatpush1.bf16.msra.mxu0 %v187
  %449 = vmatprep.subr.bf16.mxu0 0
  %450 = vmatpush1.bf16.msra.mxu0 0
  %451 = vmatprep.subr.bf16.mxu0 0
  %452 = vmatpush1.bf16.msra.mxu0 0
  %453 = vmatprep.mubr.bf16.mxu0 %v410
  %454 = vmatmul.mubr.bf16.gmra.mrb[0].mxu0 %v397
  %v455 = vpop.f32.mrb[0].mxu0
  %v456 = vadd.f32 0.0, %v455
  %v457 = vpop.f32.mrb[0].mxu0
  %v458 = vpop.f32.mrb[0].mxu0
  %v459 = vadd.f32 0.0, %v458
  %v460 = vpop.f32.mrb[0].mxu0
  %461 = vmatprep.mubr.bf16.mxu0 %v413
  %462 = vmatmul.mubr.bf16.gmra.mrb[0].mxu0 %v399
  %v463 = vpop.f32.mrb[0].mxu0
  %v464 = vadd.f32 0.0, %v463
  %v465 = vpop.f32.mrb[0].mxu0
  %v466 = vpop.f32.mrb[0].mxu0
  %v467 = vadd.f32 0.0, %v466
  %v468 = vpop.f32.mrb[0].mxu0
  %469 = vmatprep.mubr.bf16.mxu0 %v416
  %470 = vmatmul.mubr.bf16.gmra.mrb[0].mxu0 %v401
  %v471 = vpop.f32.mrb[0].mxu0
  %v472 = vadd.f32 0.0, %v471
  %v473 = vpop.f32.mrb[0].mxu0
  %v474 = vpop.f32.mrb[0].mxu0
  %v475 = vadd.f32 0.0, %v474
  %v476 = vpop.f32.mrb[0].mxu0
  %477 = vmatprep.mubr.bf16.mxu0 %v419
  %478 = vmatmul.mubr.bf16.gmra.mrb[0].mxu0 %v403
  %v479 = vpop.f32.mrb[0].mxu0
  %v480 = vadd.f32 0.0, %v479
  %v481 = vpop.f32.mrb[0].mxu0
  %v482 = vpop.f32.mrb[0].mxu0
  %v483 = vpop.f32.mrb[0].mxu0
  %484 = vdwg.mxu0
  %v485 = vld [vmem:[%s3] sm:$0xff]
  %v486 = vld [vmem:[%s3 + $0x8] sm:$0xff]
  %v487 = vld [vmem:[%s3 + $0x10] sm:$0xff]
  %v488 = vld [vmem:[%s3 + $0x18] sm:$0xff]
  %v489 = vld [vmem:[%s3 + $0x20] sm:$0xff]
  %v490 = vld [vmem:[%s3 + $0x28] sm:$0xff]
  %v491 = vld [vmem:[%s3 + $0x30] sm:$0xff]
  %v499 = vunpack.c.l.b16 %v485
  %v500 = vunpack.c.h.b16 %v485
  %v501 = vunpack.c.l.b16 %v486
  %v502 = vunpack.c.h.b16 %v486
  %v503 = vunpack.c.l.b16 %v487
  %v504 = vunpack.c.h.b16 %v487
  %v505 = vunpack.c.l.b16 %v488
  %v506 = vunpack.c.h.b16 %v488
  %v507 = vunpack.c.l.b16 %v489
  %v508 = vunpack.c.h.b16 %v489
  %v509 = vunpack.c.l.b16 %v490
  %v510 = vunpack.c.h.b16 %v490
  %v511 = vunpack.c.l.b16 %v491
  %v512 = vunpack.c.h.b16 %v491
  %v513 = vpack.c.b16 %v501, %v499
  %v514 = vpack.c.b16 %v502, %v500
  %v515 = vpack.c.b16 %v505, %v503
  %v516 = vpack.c.b16 %v506, %v504
  %v517 = vpack.c.b16 %v509, %v507
  %v518 = vpack.c.b16 %v510, %v508
  %v519 = vpack.c.b16 %v511, %v511
  %v520 = vpack.c.b16 %v512, %v512
  %v526 = vsel %vm172, %v514, 0
  %v529 = vsel %vm172, %v516, 0
  %v532 = vsel %vm172, %v518, 0
  %v535 = vsel %vm172, %v520, 0
  %537 = vmatprep.subr.bf16.mxu0 0
  %538 = vmatpush1.bf16.msra.mxu0 %v145
  %539 = vmatprep.subr.bf16.mxu0 0
  %540 = vmatpush1.bf16.msra.mxu0 %v146
  %541 = vmatprep.subr.bf16.mxu0 0
  %542 = vmatpush1.bf16.msra.mxu0 %v147
  %543 = vmatprep.subr.bf16.mxu0 0
  %544 = vmatpush1.bf16.msra.mxu0 %v148
  %545 = vmatprep.subr.bf16.mxu0 0
  %546 = vmatpush1.bf16.msra.mxu0 %v149
  %547 = vmatprep.subr.bf16.mxu0 0
  %548 = vmatpush1.bf16.msra.mxu0 %v150
  %549 = vmatprep.subr.bf16.mxu0 0
  %550 = vmatpush1.bf16.msra.mxu0 %v151
  %551 = vmatprep.subr.bf16.mxu0 0
  %552 = vmatpush1.bf16.msra.mxu0 %v152
  %553 = vmatprep.subr.bf16.mxu0 0
  %554 = vmatpush1.bf16.msra.mxu0 %v153
  %555 = vmatprep.subr.bf16.mxu0 0
  %556 = vmatpush1.bf16.msra.mxu0 %v154
  %557 = vmatprep.subr.bf16.mxu0 0
  %558 = vmatpush1.bf16.msra.mxu0 %v155
  %559 = vmatprep.subr.bf16.mxu0 0
  %560 = vmatpush1.bf16.msra.mxu0 %v156
  %561 = vmatprep.subr.bf16.mxu0 0
  %562 = vmatpush1.bf16.msra.mxu0 %v157
  %563 = vmatprep.subr.bf16.mxu0 0
  %564 = vmatpush1.bf16.msra.mxu0 %v187
  %565 = vmatprep.subr.bf16.mxu0 0
  %566 = vmatpush1.bf16.msra.mxu0 0
  %567 = vmatprep.subr.bf16.mxu0 0
  %568 = vmatpush1.bf16.msra.mxu0 0
  %569 = vmatprep.mubr.bf16.mxu0 %v526
  %570 = vmatmul.mubr.bf16.gmra.mrb[0].mxu0 %v513
  %v571 = vpop.f32.mrb[0].mxu0
  %v572 = vadd.f32 0.0, %v571
  %v573 = vpop.f32.mrb[0].mxu0
  %v574 = vpop.f32.mrb[0].mxu0
  %v575 = vadd.f32 0.0, %v574
  %v576 = vpop.f32.mrb[0].mxu0
  %577 = vmatprep.mubr.bf16.mxu0 %v529
  %578 = vmatmul.mubr.bf16.gmra.mrb[0].mxu0 %v515
  %v579 = vpop.f32.mrb[0].mxu0
  %v580 = vadd.f32 0.0, %v579
  %v581 = vpop.f32.mrb[0].mxu0
  %v582 = vpop.f32.mrb[0].mxu0
  %v583 = vadd.f32 0.0, %v582
  %v584 = vpop.f32.mrb[0].mxu0
  %585 = vmatprep.mubr.bf16.mxu0 %v532
  %586 = vmatmul.mubr.bf16.gmra.mrb[0].mxu0 %v517
  %v587 = vpop.f32.mrb[0].mxu0
  %v588 = vadd.f32 0.0, %v587
  %v589 = vpop.f32.mrb[0].mxu0
  %v590 = vpop.f32.mrb[0].mxu0
  %v591 = vadd.f32 0.0, %v590
  %v592 = vpop.f32.mrb[0].mxu0
  %593 = vmatprep.mubr.bf16.mxu0 %v535
  %594 = vmatmul.mubr.bf16.gmra.mrb[0].mxu0 %v519
  %v595 = vpop.f32.mrb[0].mxu0
  %v596 = vadd.f32 0.0, %v595
  %v597 = vpop.f32.mrb[0].mxu0
  %v598 = vpop.f32.mrb[0].mxu0
  %v599 = vpop.f32.mrb[0].mxu0
  %600 = vdwg.mxu0
  %v601 = vmax.f32 %v224, %v340
  %v602 = vmax.f32 %v227, %v343
  %v603 = vmax.f32 %v232, %v348
  %v604 = vmax.f32 %v235, %v351
  %v605 = vmax.f32 %v240, %v356
  %v606 = vmax.f32 %v243, %v359
  %v607 = vmax.f32 %v248, %v364
  %v608 = vmax.f32 %v456, %v572
  %v609 = vmax.f32 %v459, %v575
  %v610 = vmax.f32 %v464, %v580
  %v611 = vmax.f32 %v467, %v583
  %v612 = vmax.f32 %v472, %v588
  %v613 = vmax.f32 %v475, %v591
  %v614 = vmax.f32 %v480, %v596
  %v615 = vmax.f32 %v601, %v608
  %v616 = vmax.f32 %v602, %v609
  %v617 = vmax.f32 %v603, %v610
  %v618 = vmax.f32 %v604, %v611
  %v619 = vmax.f32 %v605, %v612
  %v620 = vmax.f32 %v606, %v613
  %v621 = vmax.f32 %v607, %v614
  %v622 = vld [vmem:[%s5] sm:$0x1]
  %v624 = vlaneseq
  %v625 = vshrl.u32 %v624, 7
  %v626 = vsub.s32 0, %v625
  %v627 = vrot.slane %v622, %v626
  %v629 = vadd.f32 %v615, %v627
  %v630 = vadd.f32 %v616, %v627
  %v631 = vadd.f32 %v617, %v627
  %v632 = vadd.f32 %v618, %v627
  %v633 = vadd.f32 %v619, %v627
  %v634 = vadd.f32 %v620, %v627
  %v635 = vadd.f32 %v621, %v627
  %v636 = vmax.f32 %v629, 0.0
  %v637 = vmax.f32 %v630, 0.0
  %v638 = vmax.f32 %v631, 0.0
  %v639 = vmax.f32 %v632, 0.0
  %v640 = vmax.f32 %v633, 0.0
  %v641 = vmax.f32 %v634, 0.0
  %v642 = vmax.f32 %v635, 0.0
  %v643 = vpack.c.bf16 %v637, %v636
  %v644 = vpack.c.bf16 %v639, %v638
  %v645 = vpack.c.bf16 %v641, %v640
  %v646 = vpack.c.bf16 %v642, %v642
  %v651 = vunpack.c.l.b16 %v643
  %v652 = vunpack.c.h.b16 %v643
  %v653 = vunpack.c.l.b16 %v644
  %v654 = vunpack.c.h.b16 %v644
  %v655 = vunpack.c.l.b16 %v645
  %v656 = vunpack.c.h.b16 %v645
  %v657 = vunpack.c.l.b16 %v646
  %v658 = vpack.c.b16 %v651, %v651
  %v659 = vpack.c.b16 %v652, %v652
  %v660 = vpack.c.b16 %v653, %v653
  %v661 = vpack.c.b16 %v654, %v654
  %v662 = vpack.c.b16 %v655, %v655
  %v663 = vpack.c.b16 %v656, %v656
  %v664 = vpack.c.b16 %v657, %v657
  %vm672 = vcmask 388096
  %673 = vst.msk [vmem:[%s6] sm:$0xf] %vm672, %v658
  %674 = vst.msk [vmem:[%s6 + $0x4] sm:$0xf] %vm672, %v659
  %675 = vst.msk [vmem:[%s6 + $0x8] sm:$0xf] %vm672, %v660
  %676 = vst.msk [vmem:[%s6 + $0xc] sm:$0xf] %vm672, %v661
  %677 = vst.msk [vmem:[%s6 + $0x10] sm:$0xf] %vm672, %v662
  %678 = vst.msk [vmem:[%s6 + $0x14] sm:$0xf] %vm672, %v663
  %679 = vst.msk [vmem:[%s6 + $0x18] sm:$0xf] %vm672, %v664
  // Predicated region
  $region26: #{net_forward.6} parent=0 // pred_check
    _
  $region27: #{net_forward.6} parent=0 // pred_check_branch
    %681 = sbr.rel (0) target = $region29
  $region28: #{net_forward.6} parent=0 // pred_region
    _
  $region29: #{net_forward.6} parent=0 // pred_fallthru
    _
  // Predicated region
  $region30: #{net_forward.6} parent=0 // pred_check
    _
  $region31: #{net_forward.6} parent=0 // pred_check_branch
    %683 = sbr.rel (0) target = $region33
  $region32: #{net_forward.6} parent=0 // pred_region
    _
  $region33: #{net_forward.6} parent=0 // pred_fallthru
    _

// kernel: net_forward.7
$region0: #{net_forward.7}
  #allocation0 [shape = 'u32[]', space=smem, size = 0x4, offset = 0x4, fixed_abs, tag = 'smem constant byte address 0x4 - core index']
  #allocation1 [shape = 'u32[144,128]{1,0:T(1,128)}', space=vmem, size = 0x12000, scoped, tag = 'internal scratch']
  %s0 = inlined_call_operand.vmem [shape: bf16[2,1200], index: 0, kind: input, shape index: {}]
  %s1 = inlined_call_operand.vmem [shape: bf16[1200,400], index: 1, kind: input, shape index: {}]
  %s2 = inlined_call_operand.vmem [shape: f32[1,400], index: 2, kind: input, shape index: {}]
  %s3 = inlined_call_operand.vmem [shape: bf16[400,100], index: 3, kind: input, shape index: {}]
  %s4 = inlined_call_operand.vmem [shape: f32[1,100], index: 4, kind: input, shape index: {}]
  %s5 = inlined_call_operand.vmem [shape: bf16[100,43], index: 5, kind: input, shape index: {}]
  %s6 = inlined_call_operand.vmem [shape: f32[1,43], index: 6, kind: input, shape index: {}]
  %s7 = inlined_call_operand.hbm [shape: f32[2,43], index: 7, kind: output, shape index: {}]
  %s8 = sld [smem:[#allocation0]]
  $region38: #{net_forward.7} parent=0
    _
  %s10 = ssub.s32 1, %s8
  %s11 = scalar_select 0, %s10, %s8
  $region1: #{net_forward.7} parent=0
    #allocation2 [shape = 'u8[4096]{0}', space=vmem, size = 0x1000, scoped, tag = 'output window, operand 0, single buffered']
    #allocation3 [shape = 's32[1]{0}', space=sflag, size = 0x4, scoped, tag = 'scoped memory for net_forward.7']
    %12 = vsyncpa [#allocation3], 0
    // Predicated region
    $region2: #{net_forward.7} parent=1 // pred_check
      _
    $region3: #{net_forward.7} parent=1 // pred_check_branch
      %14 = sbr.rel (0) target = $region5
    $region4: #{net_forward.7} parent=1 // pred_region
      _
    $region5: #{net_forward.7} parent=1 // pred_fallthru
      _
    // Predicated region
    $region6: #{net_forward.7} parent=1 // pred_check
      _
    $region7: #{net_forward.7} parent=1 // pred_check_branch
      %16 = sbr.rel (0) target = $region9
    $region8: #{net_forward.7} parent=1 // pred_region
      _
    $region9: #{net_forward.7} parent=1 // pred_fallthru
      _
    // Predicated region
    $region10: #{net_forward.7} parent=1 // pred_check
      _
    $region11: #{net_forward.7} parent=1 // pred_check_branch
      %18 = sbr.rel (0) target = $region13
    $region12: #{net_forward.7} parent=1 // pred_region
      _
    $region13: #{net_forward.7} parent=1 // pred_fallthru
      _
    // Predicated region
    $region14: #{net_forward.7} parent=1 // pred_check
      _
    $region15: #{net_forward.7} parent=1 // pred_check_branch
      %20 = sbr.rel (0) target = $region17
    $region16: #{net_forward.7} parent=1 // pred_region
      _
    $region17: #{net_forward.7} parent=1 // pred_fallthru
      _
    // Predicated region
    $region18: #{net_forward.7} parent=1 // pred_check
      _
    $region19: #{net_forward.7} parent=1 // pred_check_branch
      %22 = sbr.rel (0) target = $region21
    $region20: #{net_forward.7} parent=1 // pred_region
      _
    $region21: #{net_forward.7} parent=1 // pred_fallthru
      _
    // Predicated region
    $region22: #{net_forward.7} parent=1 // pred_check
      _
    $region23: #{net_forward.7} parent=1 // pred_check_branch
      %24 = sbr.rel (0) target = $region25
    $region24: #{net_forward.7} parent=1 // pred_region
      _
    $region25: #{net_forward.7} parent=1 // pred_fallthru
      _
    // Predicated region
    $region26: #{net_forward.7} parent=1 // pred_check
      _
    $region27: #{net_forward.7} parent=1 // pred_check_branch
      %26 = sbr.rel (0) target = $region29
    $region28: #{net_forward.7} parent=1 // pred_region
      _
    $region29: #{net_forward.7} parent=1 // pred_fallthru
      _
    %v28 = vld [vmem:[%s0] sm:$0xff]
    %v29 = vld [vmem:[%s0 + $0x8] sm:$0x3]
    %v30 = vld [vmem:[%s0 + $0xa] sm:$0xff]
    %v31 = vld [vmem:[%s0 + $0x12] sm:$0x3]
    %v32 = vld [vmem:[%s0 + $0x14] sm:$0xff]
    %v33 = vld [vmem:[%s0 + $0x1c] sm:$0x3]
    %v34 = vld [vmem:[%s0 + $0x1e] sm:$0xff]
    %v35 = vld [vmem:[%s0 + $0x26] sm:$0x3]
    %v36 = vld [vmem:[%s1] sm:$0xff]
    %v37 = vld [vmem:[%s1 + $0x8] sm:$0xff]
    %v38 = vld [vmem:[%s1 + $0x10] sm:$0xff]
    %v39 = vld [vmem:[%s1 + $0x18] sm:$0xff]
    %v40 = vld [vmem:[%s1 + $0x20] sm:$0xff]
    %v41 = vld [vmem:[%s1 + $0x28] sm:$0xff]
    %v42 = vld [vmem:[%s1 + $0x30] sm:$0xff]
    %v43 = vld [vmem:[%s1 + $0x38] sm:$0xff]
    %v44 = vld [vmem:[%s1 + $0x40] sm:$0xff]
    %v45 = vld [vmem:[%s1 + $0x48] sm:$0xff]
    %v46 = vld [vmem:[%s1 + $0x50] sm:$0xff]
    %v47 = vld [vmem:[%s1 + $0x58] sm:$0xff]
    %v48 = vld [vmem:[%s1 + $0x60] sm:$0xff]
    %v49 = vld [vmem:[%s1 + $0x68] sm:$0xff]
    %v50 = vld [vmem:[%s1 + $0x70] sm:$0xff]
    %v51 = vld [vmem:[%s1 + $0x78] sm:$0xff]
    %v52 = vld [vmem:[%s1 + $0x80] sm:$0xff]
    %v53 = vld [vmem:[%s1 + $0x88] sm:$0xff]
    %v54 = vld [vmem:[%s1 + $0x90] sm:$0xff]
    %v55 = vld [vmem:[%s1 + $0x98] sm:$0xff]
    %v56 = vld [vmem:[%s1 + $0xa0] sm:$0xff]
    %v57 = vld [vmem:[%s1 + $0xa8] sm:$0xff]
    %v58 = vld [vmem:[%s1 + $0xb0] sm:$0xff]
    %v59 = vld [vmem:[%s1 + $0xb8] sm:$0xff]
    %v60 = vld [vmem:[%s1 + $0xc0] sm:$0xff]
    %v61 = vld [vmem:[%s1 + $0xc8] sm:$0xff]
    %v62 = vld [vmem:[%s1 + $0xd0] sm:$0xff]
    %v63 = vld [vmem:[%s1 + $0xd8] sm:$0xff]
    %v64 = vld [vmem:[%s1 + $0xe0] sm:$0xff]
    %v65 = vld [vmem:[%s1 + $0xe8] sm:$0xff]
    %v66 = vld [vmem:[%s1 + $0xf0] sm:$0xff]
    %v67 = vld [vmem:[%s1 + $0xf8] sm:$0xff]
    %v68 = vld [vmem:[%s1 + $0x100] sm:$0xff]
    %v69 = vld [vmem:[%s1 + $0x108] sm:$0xff]
    %v70 = vld [vmem:[%s1 + $0x110] sm:$0xff]
    %v71 = vld [vmem:[%s1 + $0x118] sm:$0xff]
    %v72 = vld [vmem:[%s1 + $0x120] sm:$0xff]
    %v73 = vld [vmem:[%s1 + $0x128] sm:$0xff]
    %v74 = vld [vmem:[%s1 + $0x130] sm:$0xff]
    %v75 = vld [vmem:[%s1 + $0x138] sm:$0xff]
    %v76 = vld [vmem:[%s1 + $0x140] sm:$0xff]
    %v77 = vld [vmem:[%s1 + $0x148] sm:$0xff]
    %v78 = vld [vmem:[%s1 + $0x150] sm:$0xff]
    %v79 = vld [vmem:[%s1 + $0x158] sm:$0xff]
    %v80 = vld [vmem:[%s1 + $0x160] sm:$0xff]
    %v81 = vld [vmem:[%s1 + $0x168] sm:$0xff]
    %v82 = vld [vmem:[%s1 + $0x170] sm:$0xff]
    %v83 = vld [vmem:[%s1 + $0x178] sm:$0xff]
    %v84 = vld [vmem:[%s1 + $0x180] sm:$0xff]
    %v85 = vld [vmem:[%s1 + $0x188] sm:$0xff]
    %v86 = vld [vmem:[%s1 + $0x190] sm:$0xff]
    %v87 = vld [vmem:[%s1 + $0x198] sm:$0xff]
    %v88 = vld [vmem:[%s1 + $0x1a0] sm:$0xff]
    %v89 = vld [vmem:[%s1 + $0x1a8] sm:$0xff]
    %v90 = vld [vmem:[%s1 + $0x1b0] sm:$0xff]
    %v91 = vld [vmem:[%s1 + $0x1b8] sm:$0xff]
    %v92 = vld [vmem:[%s1 + $0x1c0] sm:$0xff]
    %v93 = vld [vmem:[%s1 + $0x1c8] sm:$0xff]
    %v94 = vld [vmem:[%s1 + $0x1d0] sm:$0xff]
    %v95 = vld [vmem:[%s1 + $0x1d8] sm:$0xff]
    %v96 = vld [vmem:[%s1 + $0x1e0] sm:$0xff]
    %v97 = vld [vmem:[%s1 + $0x1e8] sm:$0xff]
    %v98 = vld [vmem:[%s1 + $0x1f0] sm:$0xff]
    %v99 = vld [vmem:[%s1 + $0x1f8] sm:$0xff]
    %v100 = vld [vmem:[%s1 + $0x200] sm:$0xff]
    %v101 = vld [vmem:[%s1 + $0x208] sm:$0xff]
    %v102 = vld [vmem:[%s1 + $0x210] sm:$0xff]
    %v103 = vld [vmem:[%s1 + $0x218] sm:$0xff]
    %v104 = vld [vmem:[%s1 + $0x220] sm:$0xff]
    %v105 = vld [vmem:[%s1 + $0x228] sm:$0xff]
    %v106 = vld [vmem:[%s1 + $0x230] sm:$0xff]
    %v107 = vld [vmem:[%s1 + $0x238] sm:$0xff]
    %v108 = vld [vmem:[%s1 + $0x240] sm:$0xff]
    %v109 = vld [vmem:[%s1 + $0x248] sm:$0xff]
    %v110 = vld [vmem:[%s1 + $0x250] sm:$0xff]
    %v111 = vld [vmem:[%s1 + $0x258] sm:$0xff]
    %v112 = vld [vmem:[%s1 + $0x260] sm:$0xff]
    %v113 = vld [vmem:[%s1 + $0x268] sm:$0xff]
    %v114 = vld [vmem:[%s1 + $0x270] sm:$0xff]
    %v115 = vld [vmem:[%s1 + $0x278] sm:$0xff]
    %v116 = vld [vmem:[%s1 + $0x280] sm:$0xff]
    %v117 = vld [vmem:[%s1 + $0x288] sm:$0xff]
    %v118 = vld [vmem:[%s1 + $0x290] sm:$0xff]
    %v119 = vld [vmem:[%s1 + $0x298] sm:$0xff]
    %v120 = vld [vmem:[%s1 + $0x2a0] sm:$0xff]
    %v121 = vld [vmem:[%s1 + $0x2a8] sm:$0xff]
    %v122 = vld [vmem:[%s1 + $0x2b0] sm:$0xff]
    %v123 = vld [vmem:[%s1 + $0x2b8] sm:$0xff]
    %v124 = vld [vmem:[%s1 + $0x2c0] sm:$0xff]
    %v125 = vld [vmem:[%s1 + $0x2c8] sm:$0xff]
    %v126 = vld [vmem:[%s1 + $0x2d0] sm:$0xff]
    %v127 = vld [vmem:[%s1 + $0x2d8] sm:$0xff]
    %v128 = vld [vmem:[%s1 + $0x2e0] sm:$0xff]
    %v129 = vld [vmem:[%s1 + $0x2e8] sm:$0xff]
    %v130 = vld [vmem:[%s1 + $0x2f0] sm:$0xff]
    %v131 = vld [vmem:[%s1 + $0x2f8] sm:$0xff]
    %v132 = vld [vmem:[%s1 + $0x300] sm:$0xff]
    %v133 = vld [vmem:[%s1 + $0x308] sm:$0xff]
    %v134 = vld [vmem:[%s1 + $0x310] sm:$0xff]
    %v135 = vld [vmem:[%s1 + $0x318] sm:$0xff]
    %v136 = vld [vmem:[%s1 + $0x320] sm:$0xff]
    %v137 = vld [vmem:[%s1 + $0x328] sm:$0xff]
    %v138 = vld [vmem:[%s1 + $0x330] sm:$0xff]
    %v139 = vld [vmem:[%s1 + $0x338] sm:$0xff]
    %v140 = vld [vmem:[%s1 + $0x340] sm:$0xff]
    %v141 = vld [vmem:[%s1 + $0x348] sm:$0xff]
    %v142 = vld [vmem:[%s1 + $0x350] sm:$0xff]
    %v143 = vld [vmem:[%s1 + $0x358] sm:$0xff]
    %v144 = vld [vmem:[%s1 + $0x360] sm:$0xff]
    %v145 = vld [vmem:[%s1 + $0x368] sm:$0xff]
    %v146 = vld [vmem:[%s1 + $0x370] sm:$0xff]
    %v147 = vld [vmem:[%s1 + $0x378] sm:$0xff]
    %v148 = vld [vmem:[%s1 + $0x380] sm:$0xff]
    %v149 = vld [vmem:[%s1 + $0x388] sm:$0xff]
    %v150 = vld [vmem:[%s1 + $0x390] sm:$0xff]
    %v151 = vld [vmem:[%s1 + $0x398] sm:$0xff]
    %v152 = vld [vmem:[%s1 + $0x3a0] sm:$0xff]
    %v153 = vld [vmem:[%s1 + $0x3a8] sm:$0xff]
    %v154 = vld [vmem:[%s1 + $0x3b0] sm:$0xff]
    %v155 = vld [vmem:[%s1 + $0x3b8] sm:$0xff]
    %v156 = vld [vmem:[%s1 + $0x3c0] sm:$0xff]
    %v157 = vld [vmem:[%s1 + $0x3c8] sm:$0xff]
    %v158 = vld [vmem:[%s1 + $0x3d0] sm:$0xff]
    %v159 = vld [vmem:[%s1 + $0x3d8] sm:$0xff]
    %v160 = vld [vmem:[%s1 + $0x3e0] sm:$0xff]
    %v161 = vld [vmem:[%s1 + $0x3e8] sm:$0xff]
    %v162 = vld [vmem:[%s1 + $0x3f0] sm:$0xff]
    %v163 = vld [vmem:[%s1 + $0x3f8] sm:$0xff]
    %v164 = vld [vmem:[%s1 + $0x400] sm:$0xff]
    %v165 = vld [vmem:[%s1 + $0x408] sm:$0xff]
    %v166 = vld [vmem:[%s1 + $0x410] sm:$0xff]
    %v167 = vld [vmem:[%s1 + $0x418] sm:$0xff]
    %v168 = vld [vmem:[%s1 + $0x420] sm:$0xff]
    %v169 = vld [vmem:[%s1 + $0x428] sm:$0xff]
    %v170 = vld [vmem:[%s1 + $0x430] sm:$0xff]
    %v171 = vld [vmem:[%s1 + $0x438] sm:$0xff]
    %v172 = vld [vmem:[%s1 + $0x440] sm:$0xff]
    %v173 = vld [vmem:[%s1 + $0x448] sm:$0xff]
    %v174 = vld [vmem:[%s1 + $0x450] sm:$0xff]
    %v175 = vld [vmem:[%s1 + $0x458] sm:$0xff]
    %v176 = vld [vmem:[%s1 + $0x460] sm:$0xff]
    %v177 = vld [vmem:[%s1 + $0x468] sm:$0xff]
    %v178 = vld [vmem:[%s1 + $0x470] sm:$0xff]
    %v179 = vld [vmem:[%s1 + $0x478] sm:$0xff]
    %v180 = vld [vmem:[%s1 + $0x480] sm:$0xff]
    %v181 = vld [vmem:[%s1 + $0x488] sm:$0xff]
    %v182 = vld [vmem:[%s1 + $0x490] sm:$0xff]
    %v183 = vld [vmem:[%s1 + $0x498] sm:$0xff]
    %v184 = vld [vmem:[%s1 + $0x4a0] sm:$0xff]
    %v185 = vld [vmem:[%s1 + $0x4a8] sm:$0xff]
    %v186 = vld [vmem:[%s1 + $0x4b0] sm:$0xff]
    %v187 = vld [vmem:[%s1 + $0x4b8] sm:$0xff]
    %v188 = vld [vmem:[%s1 + $0x4c0] sm:$0xff]
    %v189 = vld [vmem:[%s1 + $0x4c8] sm:$0xff]
    %v190 = vld [vmem:[%s1 + $0x4d0] sm:$0xff]
    %v191 = vld [vmem:[%s1 + $0x4d8] sm:$0xff]
    %v192 = vld [vmem:[%s1 + $0x4e0] sm:$0xff]
    %v193 = vld [vmem:[%s1 + $0x4e8] sm:$0xff]
    %v194 = vld [vmem:[%s1 + $0x4f0] sm:$0xff]
    %v195 = vld [vmem:[%s1 + $0x4f8] sm:$0xff]
    %v196 = vld [vmem:[%s1 + $0x500] sm:$0xff]
    %v197 = vld [vmem:[%s1 + $0x508] sm:$0xff]
    %v198 = vld [vmem:[%s1 + $0x510] sm:$0xff]
    %v199 = vld [vmem:[%s1 + $0x518] sm:$0xff]
    %v200 = vld [vmem:[%s1 + $0x520] sm:$0xff]
    %v201 = vld [vmem:[%s1 + $0x528] sm:$0xff]
    %v202 = vld [vmem:[%s1 + $0x530] sm:$0xff]
    %v203 = vld [vmem:[%s1 + $0x538] sm:$0xff]
    %v204 = vld [vmem:[%s1 + $0x540] sm:$0xff]
    %v205 = vld [vmem:[%s1 + $0x548] sm:$0xff]
    %v206 = vld [vmem:[%s1 + $0x550] sm:$0xff]
    %v207 = vld [vmem:[%s1 + $0x558] sm:$0xff]
    %v208 = vld [vmem:[%s1 + $0x560] sm:$0xff]
    %v209 = vld [vmem:[%s1 + $0x568] sm:$0xff]
    %v210 = vld [vmem:[%s1 + $0x570] sm:$0xff]
    %v211 = vld [vmem:[%s1 + $0x578] sm:$0xff]
    %v212 = vld [vmem:[%s1 + $0x580] sm:$0xff]
    %v213 = vld [vmem:[%s1 + $0x588] sm:$0xff]
    %v214 = vld [vmem:[%s1 + $0x590] sm:$0xff]
    %v215 = vld [vmem:[%s1 + $0x598] sm:$0xff]
    %v216 = vld [vmem:[%s1 + $0x5a0] sm:$0xff]
    %v217 = vld [vmem:[%s1 + $0x5a8] sm:$0xff]
    %v218 = vld [vmem:[%s1 + $0x5b0] sm:$0xff]
    %v219 = vld [vmem:[%s1 + $0x5b8] sm:$0xff]
    %v220 = vld [vmem:[%s1 + $0x5c0] sm:$0xff]
    %v221 = vld [vmem:[%s1 + $0x5c8] sm:$0xff]
    %v222 = vld [vmem:[%s1 + $0x5d0] sm:$0xff]
    %v223 = vld [vmem:[%s1 + $0x5d8] sm:$0xff]
    %v224 = vld [vmem:[%s1 + $0x5e0] sm:$0xff]
    %v225 = vld [vmem:[%s1 + $0x5e8] sm:$0xff]
    %v226 = vld [vmem:[%s1 + $0x5f0] sm:$0xff]
    %v227 = vld [vmem:[%s1 + $0x5f8] sm:$0xff]
    %v228 = vld [vmem:[%s1 + $0x600] sm:$0xff]
    %v229 = vld [vmem:[%s1 + $0x608] sm:$0xff]
    %v230 = vld [vmem:[%s1 + $0x610] sm:$0xff]
    %v231 = vld [vmem:[%s1 + $0x618] sm:$0xff]
    %v232 = vld [vmem:[%s1 + $0x620] sm:$0xff]
    %v233 = vld [vmem:[%s1 + $0x628] sm:$0xff]
    %v234 = vld [vmem:[%s1 + $0x630] sm:$0xff]
    %v235 = vld [vmem:[%s1 + $0x638] sm:$0xff]
    %v236 = vld [vmem:[%s1 + $0x640] sm:$0xff]
    %v237 = vld [vmem:[%s1 + $0x648] sm:$0xff]
    %v238 = vld [vmem:[%s1 + $0x650] sm:$0xff]
    %v239 = vld [vmem:[%s1 + $0x658] sm:$0xff]
    %v240 = vld [vmem:[%s1 + $0x660] sm:$0xff]
    %v241 = vld [vmem:[%s1 + $0x668] sm:$0xff]
    %v242 = vld [vmem:[%s1 + $0x670] sm:$0xff]
    %v243 = vld [vmem:[%s1 + $0x678] sm:$0xff]
    %v244 = vld [vmem:[%s1 + $0x680] sm:$0xff]
    %v245 = vld [vmem:[%s1 + $0x688] sm:$0xff]
    %v246 = vld [vmem:[%s1 + $0x690] sm:$0xff]
    %v247 = vld [vmem:[%s1 + $0x698] sm:$0xff]
    %v248 = vld [vmem:[%s1 + $0x6a0] sm:$0xff]
    %v249 = vld [vmem:[%s1 + $0x6a8] sm:$0xff]
    %v250 = vld [vmem:[%s1 + $0x6b0] sm:$0xff]
    %v251 = vld [vmem:[%s1 + $0x6b8] sm:$0xff]
    %v252 = vld [vmem:[%s1 + $0x6c0] sm:$0xff]
    %v253 = vld [vmem:[%s1 + $0x6c8] sm:$0xff]
    %v254 = vld [vmem:[%s1 + $0x6d0] sm:$0xff]
    %v255 = vld [vmem:[%s1 + $0x6d8] sm:$0xff]
    %v256 = vld [vmem:[%s1 + $0x6e0] sm:$0xff]
    %v257 = vld [vmem:[%s1 + $0x6e8] sm:$0xff]
    %v258 = vld [vmem:[%s1 + $0x6f0] sm:$0xff]
    %v259 = vld [vmem:[%s1 + $0x6f8] sm:$0xff]
    %v260 = vld [vmem:[%s1 + $0x700] sm:$0xff]
    %v261 = vld [vmem:[%s1 + $0x708] sm:$0xff]
    %v262 = vld [vmem:[%s1 + $0x710] sm:$0xff]
    %v263 = vld [vmem:[%s1 + $0x718] sm:$0xff]
    %v264 = vld [vmem:[%s1 + $0x720] sm:$0xff]
    %v265 = vld [vmem:[%s1 + $0x728] sm:$0xff]
    %v266 = vld [vmem:[%s1 + $0x730] sm:$0xff]
    %v267 = vld [vmem:[%s1 + $0x738] sm:$0xff]
    %v268 = vld [vmem:[%s1 + $0x740] sm:$0xff]
    %v269 = vld [vmem:[%s1 + $0x748] sm:$0xff]
    %v270 = vld [vmem:[%s1 + $0x750] sm:$0xff]
    %v271 = vld [vmem:[%s1 + $0x758] sm:$0xff]
    %v272 = vld [vmem:[%s1 + $0x760] sm:$0xff]
    %v273 = vld [vmem:[%s1 + $0x768] sm:$0xff]
    %v274 = vld [vmem:[%s1 + $0x770] sm:$0xff]
    %v275 = vld [vmem:[%s1 + $0x778] sm:$0xff]
    %v276 = vld [vmem:[%s1 + $0x780] sm:$0xff]
    %v277 = vld [vmem:[%s1 + $0x788] sm:$0xff]
    %v278 = vld [vmem:[%s1 + $0x790] sm:$0xff]
    %v279 = vld [vmem:[%s1 + $0x798] sm:$0xff]
    %v280 = vld [vmem:[%s1 + $0x7a0] sm:$0xff]
    %v281 = vld [vmem:[%s1 + $0x7a8] sm:$0xff]
    %v282 = vld [vmem:[%s1 + $0x7b0] sm:$0xff]
    %v283 = vld [vmem:[%s1 + $0x7b8] sm:$0xff]
    %v284 = vld [vmem:[%s1 + $0x7c0] sm:$0xff]
    %v285 = vld [vmem:[%s1 + $0x7c8] sm:$0xff]
    %v286 = vld [vmem:[%s1 + $0x7d0] sm:$0xff]
    %v287 = vld [vmem:[%s1 + $0x7d8] sm:$0xff]
    %v288 = vld [vmem:[%s1 + $0x7e0] sm:$0xff]
    %v289 = vld [vmem:[%s1 + $0x7e8] sm:$0xff]
    %v290 = vld [vmem:[%s1 + $0x7f0] sm:$0xff]
    %v291 = vld [vmem:[%s1 + $0x7f8] sm:$0xff]
    %v292 = vld [vmem:[%s1 + $0x800] sm:$0xff]
    %v293 = vld [vmem:[%s1 + $0x808] sm:$0xff]
    %v294 = vld [vmem:[%s1 + $0x810] sm:$0xff]
    %v295 = vld [vmem:[%s1 + $0x818] sm:$0xff]
    %v296 = vld [vmem:[%s1 + $0x820] sm:$0xff]
    %v297 = vld [vmem:[%s1 + $0x828] sm:$0xff]
    %v298 = vld [vmem:[%s1 + $0x830] sm:$0xff]
    %v299 = vld [vmem:[%s1 + $0x838] sm:$0xff]
    %v300 = vld [vmem:[%s1 + $0x840] sm:$0xff]
    %v301 = vld [vmem:[%s1 + $0x848] sm:$0xff]
    %v302 = vld [vmem:[%s1 + $0x850] sm:$0xff]
    %v303 = vld [vmem:[%s1 + $0x858] sm:$0xff]
    %v304 = vld [vmem:[%s1 + $0x860] sm:$0xff]
    %v305 = vld [vmem:[%s1 + $0x868] sm:$0xff]
    %v306 = vld [vmem:[%s1 + $0x870] sm:$0xff]
    %v307 = vld [vmem:[%s1 + $0x878] sm:$0xff]
    %v308 = vld [vmem:[%s1 + $0x880] sm:$0xff]
    %v309 = vld [vmem:[%s1 + $0x888] sm:$0xff]
    %v310 = vld [vmem:[%s1 + $0x890] sm:$0xff]
    %v311 = vld [vmem:[%s1 + $0x898] sm:$0xff]
    %v312 = vld [vmem:[%s1 + $0x8a0] sm:$0xff]
    %v313 = vld [vmem:[%s1 + $0x8a8] sm:$0xff]
    %v314 = vld [vmem:[%s1 + $0x8b0] sm:$0xff]
    %v315 = vld [vmem:[%s1 + $0x8b8] sm:$0xff]
    %v316 = vld [vmem:[%s1 + $0x8c0] sm:$0xff]
    %v317 = vld [vmem:[%s1 + $0x8c8] sm:$0xff]
    %v318 = vld [vmem:[%s1 + $0x8d0] sm:$0xff]
    %v319 = vld [vmem:[%s1 + $0x8d8] sm:$0xff]
    %v320 = vld [vmem:[%s1 + $0x8e0] sm:$0xff]
    %v321 = vld [vmem:[%s1 + $0x8e8] sm:$0xff]
    %v322 = vld [vmem:[%s1 + $0x8f0] sm:$0xff]
    %v323 = vld [vmem:[%s1 + $0x8f8] sm:$0xff]
    %v324 = vld [vmem:[%s1 + $0x900] sm:$0xff]
    %v325 = vld [vmem:[%s1 + $0x908] sm:$0xff]
    %v326 = vld [vmem:[%s1 + $0x910] sm:$0xff]
    %v327 = vld [vmem:[%s1 + $0x918] sm:$0xff]
    %v328 = vld [vmem:[%s1 + $0x920] sm:$0xff]
    %v329 = vld [vmem:[%s1 + $0x928] sm:$0xff]
    %v330 = vld [vmem:[%s1 + $0x930] sm:$0xff]
    %v331 = vld [vmem:[%s1 + $0x938] sm:$0xff]
    %v332 = vld [vmem:[%s1 + $0x940] sm:$0xff]
    %v333 = vld [vmem:[%s1 + $0x948] sm:$0xff]
    %v334 = vld [vmem:[%s1 + $0x950] sm:$0xff]
    %v335 = vld [vmem:[%s1 + $0x958] sm:$0xff]
    %v336 = vld [vmem:[%s2] sm:$0xf]
    %v338 = vlaneseq
    %v339 = vshrl.u32 %v338, 7
    %v340 = vsub.s32 0, %v339
    %v341 = vrot.slane %v336, %v340
    %v342 = vlaneseq
    %v343 = vshrl.u32 %v342, 7
    %v344 = vsub.s32 1, %v343
    %v345 = vrot.slane %v336, %v344
    %v346 = vlaneseq
    %v347 = vshrl.u32 %v346, 7
    %v348 = vsub.s32 2, %v347
    %v349 = vrot.slane %v336, %v348
    %v350 = vlaneseq
    %v351 = vshrl.u32 %v350, 7
    %v352 = vsub.s32 3, %v351
    %v353 = vrot.slane %v336, %v352
    %v366 = vcombine.low %v28, %v30
    %v367 = vcombine.high %v28, %v30
    %v368 = vcombine.low %v32, %v34
    %v369 = vcombine.high %v32, %v34
    %v371 = vunpack.c.l.s4 1966171168
    %v372 = vunpack.c.0.s8 %v371
    %v373 = vlaneseq
    %v374 = vshrl.u32 %v373, 7
    %v375 = vsub.s32 %v372, %v374
    %v376 = vrot.slane %v366, %v375
    %v378 = vunpack.c.l.s4 1966171168
    %v379 = vunpack.c.0.s8 %v378
    %v380 = vlaneseq
    %v381 = vshrl.u32 %v380, 7
    %v382 = vsub.s32 %v379, %v381
    %v383 = vrot.slane %v367, %v382
    %v385 = vunpack.c.l.s4 1966171168
    %v386 = vunpack.c.0.s8 %v385
    %v387 = vlaneseq
    %v388 = vshrl.u32 %v387, 7
    %v389 = vsub.s32 %v386, %v388
    %v390 = vrot.slane %v368, %v389
    %v392 = vunpack.c.l.s4 1966171168
    %v393 = vunpack.c.0.s8 %v392
    %v394 = vlaneseq
    %v395 = vshrl.u32 %v394, 7
    %v396 = vsub.s32 %v393, %v395
    %v397 = vrot.slane %v369, %v396
    %v398 = vcombine.low %v376, %v390
    %v399 = vcombine.high %v376, %v390
    %v400 = vcombine.low %v383, %v397
    %v401 = vcombine.high %v383, %v397
    %v403 = vunpack.c.l.s4 1966171168
    %v404 = vunpack.c.0.s8 %v403
    %v405 = vlaneseq
    %v406 = vshrl.u32 %v405, 7
    %v407 = vsub.s32 %v404, %v406
    %v408 = vrot.slane %v398, %v407
    %v410 = vunpack.c.l.s4 1966171168
    %v411 = vunpack.c.0.s8 %v410
    %v412 = vlaneseq
    %v413 = vshrl.u32 %v412, 7
    %v414 = vsub.s32 %v411, %v413
    %v415 = vrot.slane %v400, %v414
    %v417 = vunpack.c.l.s4 1966171168
    %v418 = vunpack.c.0.s8 %v417
    %v419 = vlaneseq
    %v420 = vshrl.u32 %v419, 7
    %v421 = vsub.s32 %v418, %v420
    %v422 = vrot.slane %v399, %v421
    %v424 = vunpack.c.l.s4 1966171168
    %v425 = vunpack.c.0.s8 %v424
    %v426 = vlaneseq
    %v427 = vshrl.u32 %v426, 7
    %v428 = vsub.s32 %v425, %v427
    %v429 = vrot.slane %v401, %v428
    %v430 = vcombine.high %v408, %v408
    %v431 = vcombine.high %v415, %v415
    %v432 = vcombine.high %v422, %v422
    %v433 = vcombine.high %v429, %v429
    %v434 = vcombine.low %v29, %v31
    %v435 = vcombine.low %v33, %v35
    %v437 = vunpack.c.l.s4 1966171168
    %v438 = vunpack.c.0.s8 %v437
    %v439 = vlaneseq
    %v440 = vshrl.u32 %v439, 7
    %v441 = vsub.s32 %v438, %v440
    %v442 = vrot.slane %v434, %v441
    %v444 = vunpack.c.l.s4 1966171168
    %v445 = vunpack.c.0.s8 %v444
    %v446 = vlaneseq
    %v447 = vshrl.u32 %v446, 7
    %v448 = vsub.s32 %v445, %v447
    %v449 = vrot.slane %v435, %v448
    %v450 = vcombine.low %v442, %v449
    %v451 = vcombine.high %v442, %v449
    %v453 = vunpack.c.l.s4 1966171168
    %v454 = vunpack.c.0.s8 %v453
    %v455 = vlaneseq
    %v456 = vshrl.u32 %v455, 7
    %v457 = vsub.s32 %v454, %v456
    %v458 = vrot.slane %v450, %v457
    %v460 = vunpack.c.l.s4 1966171168
    %v461 = vunpack.c.0.s8 %v460
    %v462 = vlaneseq
    %v463 = vshrl.u32 %v462, 7
    %v464 = vsub.s32 %v461, %v463
    %v465 = vrot.slane %v451, %v464
    %v775 = vunpack.c.l.b16 %v36
    %v776 = vunpack.c.h.b16 %v36
    %v777 = vunpack.c.l.b16 %v37
    %v778 = vunpack.c.h.b16 %v37
    %v779 = vunpack.c.l.b16 %v38
    %v780 = vunpack.c.h.b16 %v38
    %v781 = vunpack.c.l.b16 %v39
    %v782 = vunpack.c.h.b16 %v39
    %v783 = vunpack.c.l.b16 %v40
    %v784 = vunpack.c.h.b16 %v40
    %v785 = vunpack.c.l.b16 %v41
    %v786 = vunpack.c.h.b16 %v41
    %v787 = vunpack.c.l.b16 %v42
    %v788 = vunpack.c.h.b16 %v42
    %v789 = vunpack.c.l.b16 %v43
    %v790 = vunpack.c.h.b16 %v43
    %v791 = vunpack.c.l.b16 %v44
    %v792 = vunpack.c.h.b16 %v44
    %v793 = vunpack.c.l.b16 %v45
    %v794 = vunpack.c.h.b16 %v45
    %v795 = vunpack.c.l.b16 %v46
    %v796 = vunpack.c.h.b16 %v46
    %v797 = vunpack.c.l.b16 %v47
    %v798 = vunpack.c.h.b16 %v47
    %v799 = vunpack.c.l.b16 %v48
    %v800 = vunpack.c.h.b16 %v48
    %v801 = vunpack.c.l.b16 %v49
    %v802 = vunpack.c.h.b16 %v49
    %v803 = vunpack.c.l.b16 %v50
    %v804 = vunpack.c.h.b16 %v50
    %v805 = vunpack.c.l.b16 %v51
    %v806 = vunpack.c.h.b16 %v51
    %v807 = vunpack.c.l.b16 %v52
    %v808 = vunpack.c.h.b16 %v52
    %v809 = vunpack.c.l.b16 %v53
    %v810 = vunpack.c.h.b16 %v53
    %v811 = vunpack.c.l.b16 %v54
    %v812 = vunpack.c.h.b16 %v54
    %v813 = vunpack.c.l.b16 %v55
    %v814 = vunpack.c.h.b16 %v55
    %v815 = vunpack.c.l.b16 %v56
    %v816 = vunpack.c.h.b16 %v56
    %v817 = vunpack.c.l.b16 %v57
    %v818 = vunpack.c.h.b16 %v57
    %v819 = vunpack.c.l.b16 %v58
    %v820 = vunpack.c.h.b16 %v58
    %v821 = vunpack.c.l.b16 %v59
    %v822 = vunpack.c.h.b16 %v59
    %v823 = vunpack.c.l.b16 %v60
    %v824 = vunpack.c.h.b16 %v60
    %v825 = vunpack.c.l.b16 %v61
    %v826 = vunpack.c.h.b16 %v61
    %v827 = vunpack.c.l.b16 %v62
    %v828 = vunpack.c.h.b16 %v62
    %v829 = vunpack.c.l.b16 %v63
    %v830 = vunpack.c.h.b16 %v63
    %v831 = vunpack.c.l.b16 %v64
    %v832 = vunpack.c.h.b16 %v64
    %v833 = vunpack.c.l.b16 %v65
    %v834 = vunpack.c.h.b16 %v65
    %v835 = vunpack.c.l.b16 %v66
    %v836 = vunpack.c.h.b16 %v66
    %v837 = vunpack.c.l.b16 %v67
    %v838 = vunpack.c.h.b16 %v67
    %v839 = vunpack.c.l.b16 %v68
    %v840 = vunpack.c.h.b16 %v68
    %v841 = vunpack.c.l.b16 %v69
    %v842 = vunpack.c.h.b16 %v69
    %v843 = vunpack.c.l.b16 %v70
    %v844 = vunpack.c.h.b16 %v70
    %v845 = vunpack.c.l.b16 %v71
    %v846 = vunpack.c.h.b16 %v71
    %v847 = vunpack.c.l.b16 %v72
    %v848 = vunpack.c.h.b16 %v72
    %v849 = vunpack.c.l.b16 %v73
    %v850 = vunpack.c.h.b16 %v73
    %v851 = vunpack.c.l.b16 %v74
    %v852 = vunpack.c.h.b16 %v74
    %v853 = vunpack.c.l.b16 %v75
    %v854 = vunpack.c.h.b16 %v75
    %v855 = vunpack.c.l.b16 %v76
    %v856 = vunpack.c.h.b16 %v76
    %v857 = vunpack.c.l.b16 %v77
    %v858 = vunpack.c.h.b16 %v77
    %v859 = vunpack.c.l.b16 %v78
    %v860 = vunpack.c.h.b16 %v78
    %v861 = vunpack.c.l.b16 %v79
    %v862 = vunpack.c.h.b16 %v79
    %v863 = vunpack.c.l.b16 %v80
    %v864 = vunpack.c.h.b16 %v80
    %v865 = vunpack.c.l.b16 %v81
    %v866 = vunpack.c.h.b16 %v81
    %v867 = vunpack.c.l.b16 %v82
    %v868 = vunpack.c.h.b16 %v82
    %v869 = vunpack.c.l.b16 %v83
    %v870 = vunpack.c.h.b16 %v83
    %v871 = vunpack.c.l.b16 %v84
    %v872 = vunpack.c.h.b16 %v84
    %v873 = vunpack.c.l.b16 %v85
    %v874 = vunpack.c.h.b16 %v85
    %v875 = vunpack.c.l.b16 %v86
    %v876 = vunpack.c.h.b16 %v86
    %v877 = vunpack.c.l.b16 %v87
    %v878 = vunpack.c.h.b16 %v87
    %v879 = vunpack.c.l.b16 %v88
    %v880 = vunpack.c.h.b16 %v88
    %v881 = vunpack.c.l.b16 %v89
    %v882 = vunpack.c.h.b16 %v89
    %v883 = vunpack.c.l.b16 %v90
    %v884 = vunpack.c.h.b16 %v90
    %v885 = vunpack.c.l.b16 %v91
    %v886 = vunpack.c.h.b16 %v91
    %v887 = vunpack.c.l.b16 %v92
    %v888 = vunpack.c.h.b16 %v92
    %v889 = vunpack.c.l.b16 %v93
    %v890 = vunpack.c.h.b16 %v93
    %v891 = vunpack.c.l.b16 %v94
    %v892 = vunpack.c.h.b16 %v94
    %v893 = vunpack.c.l.b16 %v95
    %v894 = vunpack.c.h.b16 %v95
    %v895 = vunpack.c.l.b16 %v96
    %v896 = vunpack.c.h.b16 %v96
    %v897 = vunpack.c.l.b16 %v97
    %v898 = vunpack.c.h.b16 %v97
    %v899 = vunpack.c.l.b16 %v98
    %v900 = vunpack.c.h.b16 %v98
    %v901 = vunpack.c.l.b16 %v99
    %v902 = vunpack.c.h.b16 %v99
    %v903 = vunpack.c.l.b16 %v100
    %v904 = vunpack.c.h.b16 %v100
    %v905 = vunpack.c.l.b16 %v101
    %v906 = vunpack.c.h.b16 %v101
    %v907 = vunpack.c.l.b16 %v102
    %v908 = vunpack.c.h.b16 %v102
    %v909 = vunpack.c.l.b16 %v103
    %v910 = vunpack.c.h.b16 %v103
    %v911 = vunpack.c.l.b16 %v104
    %v912 = vunpack.c.h.b16 %v104
    %v913 = vunpack.c.l.b16 %v105
    %v914 = vunpack.c.h.b16 %v105
    %v915 = vunpack.c.l.b16 %v106
    %v916 = vunpack.c.h.b16 %v106
    %v917 = vunpack.c.l.b16 %v107
    %v918 = vunpack.c.h.b16 %v107
    %v919 = vunpack.c.l.b16 %v108
    %v920 = vunpack.c.h.b16 %v108
    %v921 = vunpack.c.l.b16 %v109
    %v922 = vunpack.c.h.b16 %v109
    %v923 = vunpack.c.l.b16 %v110
    %v924 = vunpack.c.h.b16 %v110
    %v925 = vunpack.c.l.b16 %v111
    %v926 = vunpack.c.h.b16 %v111
    %v927 = vunpack.c.l.b16 %v112
    %v928 = vunpack.c.h.b16 %v112
    %v929 = vunpack.c.l.b16 %v113
    %v930 = vunpack.c.h.b16 %v113
    %v931 = vunpack.c.l.b16 %v114
    %v932 = vunpack.c.h.b16 %v114
    %v933 = vunpack.c.l.b16 %v115
    %v934 = vunpack.c.h.b16 %v115
    %v935 = vunpack.c.l.b16 %v116
    %v936 = vunpack.c.h.b16 %v116
    %v937 = vunpack.c.l.b16 %v117
    %v938 = vunpack.c.h.b16 %v117
    %v939 = vunpack.c.l.b16 %v118
    %v940 = vunpack.c.h.b16 %v118
    %v941 = vunpack.c.l.b16 %v119
    %v942 = vunpack.c.h.b16 %v119
    %v943 = vunpack.c.l.b16 %v120
    %v944 = vunpack.c.h.b16 %v120
    %v945 = vunpack.c.l.b16 %v121
    %v946 = vunpack.c.h.b16 %v121
    %v947 = vunpack.c.l.b16 %v122
    %v948 = vunpack.c.h.b16 %v122
    %v949 = vunpack.c.l.b16 %v123
    %v950 = vunpack.c.h.b16 %v123
    %v951 = vunpack.c.l.b16 %v124
    %v952 = vunpack.c.h.b16 %v124
    %v953 = vunpack.c.l.b16 %v125
    %v954 = vunpack.c.h.b16 %v125
    %v955 = vunpack.c.l.b16 %v126
    %v956 = vunpack.c.h.b16 %v126
    %v957 = vunpack.c.l.b16 %v127
    %v958 = vunpack.c.h.b16 %v127
    %v959 = vunpack.c.l.b16 %v128
    %v960 = vunpack.c.h.b16 %v128
    %v961 = vunpack.c.l.b16 %v129
    %v962 = vunpack.c.h.b16 %v129
    %v963 = vunpack.c.l.b16 %v130
    %v964 = vunpack.c.h.b16 %v130
    %v965 = vunpack.c.l.b16 %v131
    %v966 = vunpack.c.h.b16 %v131
    %v967 = vunpack.c.l.b16 %v132
    %v968 = vunpack.c.h.b16 %v132
    %v969 = vunpack.c.l.b16 %v133
    %v970 = vunpack.c.h.b16 %v133
    %v971 = vunpack.c.l.b16 %v134
    %v972 = vunpack.c.h.b16 %v134
    %v973 = vunpack.c.l.b16 %v135
    %v974 = vunpack.c.h.b16 %v135
    %v975 = vunpack.c.l.b16 %v136
    %v976 = vunpack.c.h.b16 %v136
    %v977 = vunpack.c.l.b16 %v137
    %v978 = vunpack.c.h.b16 %v137
    %v979 = vunpack.c.l.b16 %v138
    %v980 = vunpack.c.h.b16 %v138
    %v981 = vunpack.c.l.b16 %v139
    %v982 = vunpack.c.h.b16 %v139
    %v983 = vunpack.c.l.b16 %v140
    %v984 = vunpack.c.h.b16 %v140
    %v985 = vunpack.c.l.b16 %v141
    %v986 = vunpack.c.h.b16 %v141
    %v987 = vunpack.c.l.b16 %v142
    %v988 = vunpack.c.h.b16 %v142
    %v989 = vunpack.c.l.b16 %v143
    %v990 = vunpack.c.h.b16 %v143
    %v991 = vunpack.c.l.b16 %v144
    %v992 = vunpack.c.h.b16 %v144
    %v993 = vunpack.c.l.b16 %v145
    %v994 = vunpack.c.h.b16 %v145
    %v995 = vunpack.c.l.b16 %v146
    %v996 = vunpack.c.h.b16 %v146
    %v997 = vunpack.c.l.b16 %v147
    %v998 = vunpack.c.h.b16 %v147
    %v999 = vunpack.c.l.b16 %v148
    %v1000 = vunpack.c.h.b16 %v148
    %v1001 = vunpack.c.l.b16 %v149
    %v1002 = vunpack.c.h.b16 %v149
    %v1003 = vunpack.c.l.b16 %v150
    %v1004 = vunpack.c.h.b16 %v150
    %v1005 = vunpack.c.l.b16 %v151
    %v1006 = vunpack.c.h.b16 %v151
    %v1007 = vunpack.c.l.b16 %v152
    %v1008 = vunpack.c.h.b16 %v152
    %v1009 = vunpack.c.l.b16 %v153
    %v1010 = vunpack.c.h.b16 %v153
    %v1011 = vunpack.c.l.b16 %v154
    %v1012 = vunpack.c.h.b16 %v154
    %v1013 = vunpack.c.l.b16 %v155
    %v1014 = vunpack.c.h.b16 %v155
    %v1015 = vunpack.c.l.b16 %v156
    %v1016 = vunpack.c.h.b16 %v156
    %v1017 = vunpack.c.l.b16 %v157
    %v1018 = vunpack.c.h.b16 %v157
    %v1019 = vunpack.c.l.b16 %v158
    %v1020 = vunpack.c.h.b16 %v158
    %v1021 = vunpack.c.l.b16 %v159
    %v1022 = vunpack.c.h.b16 %v159
    %v1023 = vunpack.c.l.b16 %v160
    %v1024 = vunpack.c.h.b16 %v160
    %v1025 = vunpack.c.l.b16 %v161
    %v1026 = vunpack.c.h.b16 %v161
    %v1027 = vunpack.c.l.b16 %v162
    %v1028 = vunpack.c.h.b16 %v162
    %v1029 = vunpack.c.l.b16 %v163
    %v1030 = vunpack.c.h.b16 %v163
    %v1031 = vunpack.c.l.b16 %v164
    %v1032 = vunpack.c.h.b16 %v164
    %v1033 = vunpack.c.l.b16 %v165
    %v1034 = vunpack.c.h.b16 %v165
    %v1035 = vunpack.c.l.b16 %v166
    %v1036 = vunpack.c.h.b16 %v166
    %v1037 = vunpack.c.l.b16 %v167
    %v1038 = vunpack.c.h.b16 %v167
    %v1039 = vunpack.c.l.b16 %v168
    %v1040 = vunpack.c.h.b16 %v168
    %v1041 = vunpack.c.l.b16 %v169
    %v1042 = vunpack.c.h.b16 %v169
    %v1043 = vunpack.c.l.b16 %v170
    %v1044 = vunpack.c.h.b16 %v170
    %v1045 = vunpack.c.l.b16 %v171
    %v1046 = vunpack.c.h.b16 %v171
    %v1047 = vunpack.c.l.b16 %v172
    %v1048 = vunpack.c.h.b16 %v172
    %v1049 = vunpack.c.l.b16 %v173
    %v1050 = vunpack.c.h.b16 %v173
    %v1051 = vunpack.c.l.b16 %v174
    %v1052 = vunpack.c.h.b16 %v174
    %v1053 = vunpack.c.l.b16 %v175
    %v1054 = vunpack.c.h.b16 %v175
    %v1055 = vunpack.c.l.b16 %v176
    %v1056 = vunpack.c.h.b16 %v176
    %v1057 = vunpack.c.l.b16 %v177
    %v1058 = vunpack.c.h.b16 %v177
    %v1059 = vunpack.c.l.b16 %v178
    %v1060 = vunpack.c.h.b16 %v178
    %v1061 = vunpack.c.l.b16 %v179
    %v1062 = vunpack.c.h.b16 %v179
    %v1063 = vunpack.c.l.b16 %v180
    %v1064 = vunpack.c.h.b16 %v180
    %v1065 = vunpack.c.l.b16 %v181
    %v1066 = vunpack.c.h.b16 %v181
    %v1067 = vunpack.c.l.b16 %v182
    %v1068 = vunpack.c.h.b16 %v182
    %v1069 = vunpack.c.l.b16 %v183
    %v1070 = vunpack.c.h.b16 %v183
    %v1071 = vunpack.c.l.b16 %v184
    %v1072 = vunpack.c.h.b16 %v184
    %v1073 = vunpack.c.l.b16 %v185
    %v1074 = vunpack.c.h.b16 %v185
    %v1075 = vunpack.c.l.b16 %v186
    %v1076 = vunpack.c.h.b16 %v186
    %v1077 = vunpack.c.l.b16 %v187
    %v1078 = vunpack.c.h.b16 %v187
    %v1079 = vunpack.c.l.b16 %v188
    %v1080 = vunpack.c.h.b16 %v188
    %v1081 = vunpack.c.l.b16 %v189
    %v1082 = vunpack.c.h.b16 %v189
    %v1083 = vunpack.c.l.b16 %v190
    %v1084 = vunpack.c.h.b16 %v190
    %v1085 = vunpack.c.l.b16 %v191
    %v1086 = vunpack.c.h.b16 %v191
    %v1087 = vunpack.c.l.b16 %v192
    %v1088 = vunpack.c.h.b16 %v192
    %v1089 = vunpack.c.l.b16 %v193
    %v1090 = vunpack.c.h.b16 %v193
    %v1091 = vunpack.c.l.b16 %v194
    %v1092 = vunpack.c.h.b16 %v194
    %v1093 = vunpack.c.l.b16 %v195
    %v1094 = vunpack.c.h.b16 %v195
    %v1095 = vunpack.c.l.b16 %v196
    %v1096 = vunpack.c.h.b16 %v196
    %v1097 = vunpack.c.l.b16 %v197
    %v1098 = vunpack.c.h.b16 %v197
    %v1099 = vunpack.c.l.b16 %v198
    %v1100 = vunpack.c.h.b16 %v198
    %v1101 = vunpack.c.l.b16 %v199
    %v1102 = vunpack.c.h.b16 %v199
    %v1103 = vunpack.c.l.b16 %v200
    %v1104 = vunpack.c.h.b16 %v200
    %v1105 = vunpack.c.l.b16 %v201
    %v1106 = vunpack.c.h.b16 %v201
    %v1107 = vunpack.c.l.b16 %v202
    %v1108 = vunpack.c.h.b16 %v202
    %v1109 = vunpack.c.l.b16 %v203
    %v1110 = vunpack.c.h.b16 %v203
    %v1111 = vunpack.c.l.b16 %v204
    %v1112 = vunpack.c.h.b16 %v204
    %v1113 = vunpack.c.l.b16 %v205
    %v1114 = vunpack.c.h.b16 %v205
    %v1115 = vunpack.c.l.b16 %v206
    %v1116 = vunpack.c.h.b16 %v206
    %v1117 = vunpack.c.l.b16 %v207
    %v1118 = vunpack.c.h.b16 %v207
    %v1119 = vunpack.c.l.b16 %v208
    %v1120 = vunpack.c.h.b16 %v208
    %v1121 = vunpack.c.l.b16 %v209
    %v1122 = vunpack.c.h.b16 %v209
    %v1123 = vunpack.c.l.b16 %v210
    %v1124 = vunpack.c.h.b16 %v210
    %v1125 = vunpack.c.l.b16 %v211
    %v1126 = vunpack.c.h.b16 %v211
    %v1127 = vunpack.c.l.b16 %v212
    %v1128 = vunpack.c.h.b16 %v212
    %v1129 = vunpack.c.l.b16 %v213
    %v1130 = vunpack.c.h.b16 %v213
    %v1131 = vunpack.c.l.b16 %v214
    %v1132 = vunpack.c.h.b16 %v214
    %v1133 = vunpack.c.l.b16 %v215
    %v1134 = vunpack.c.h.b16 %v215
    %v1135 = vunpack.c.l.b16 %v216
    %v1136 = vunpack.c.h.b16 %v216
    %v1137 = vunpack.c.l.b16 %v217
    %v1138 = vunpack.c.h.b16 %v217
    %v1139 = vunpack.c.l.b16 %v218
    %v1140 = vunpack.c.h.b16 %v218
    %v1141 = vunpack.c.l.b16 %v219
    %v1142 = vunpack.c.h.b16 %v219
    %v1143 = vunpack.c.l.b16 %v220
    %v1144 = vunpack.c.h.b16 %v220
    %v1145 = vunpack.c.l.b16 %v221
    %v1146 = vunpack.c.h.b16 %v221
    %v1147 = vunpack.c.l.b16 %v222
    %v1148 = vunpack.c.h.b16 %v222
    %v1149 = vunpack.c.l.b16 %v223
    %v1150 = vunpack.c.h.b16 %v223
    %v1151 = vunpack.c.l.b16 %v224
    %v1152 = vunpack.c.h.b16 %v224
    %v1153 = vunpack.c.l.b16 %v225
    %v1154 = vunpack.c.h.b16 %v225
    %v1155 = vunpack.c.l.b16 %v226
    %v1156 = vunpack.c.h.b16 %v226
    %v1157 = vunpack.c.l.b16 %v227
    %v1158 = vunpack.c.h.b16 %v227
    %v1159 = vunpack.c.l.b16 %v228
    %v1160 = vunpack.c.h.b16 %v228
    %v1161 = vunpack.c.l.b16 %v229
    %v1162 = vunpack.c.h.b16 %v229
    %v1163 = vunpack.c.l.b16 %v230
    %v1164 = vunpack.c.h.b16 %v230
    %v1165 = vunpack.c.l.b16 %v231
    %v1166 = vunpack.c.h.b16 %v231
    %v1167 = vunpack.c.l.b16 %v232
    %v1168 = vunpack.c.h.b16 %v232
    %v1169 = vunpack.c.l.b16 %v233
    %v1170 = vunpack.c.h.b16 %v233
    %v1171 = vunpack.c.l.b16 %v234
    %v1172 = vunpack.c.h.b16 %v234
    %v1173 = vunpack.c.l.b16 %v235
    %v1174 = vunpack.c.h.b16 %v235
    %v1175 = vunpack.c.l.b16 %v236
    %v1176 = vunpack.c.h.b16 %v236
    %v1177 = vunpack.c.l.b16 %v237
    %v1178 = vunpack.c.h.b16 %v237
    %v1179 = vunpack.c.l.b16 %v238
    %v1180 = vunpack.c.h.b16 %v238
    %v1181 = vunpack.c.l.b16 %v239
    %v1182 = vunpack.c.h.b16 %v239
    %v1183 = vunpack.c.l.b16 %v240
    %v1184 = vunpack.c.h.b16 %v240
    %v1185 = vunpack.c.l.b16 %v241
    %v1186 = vunpack.c.h.b16 %v241
    %v1187 = vunpack.c.l.b16 %v242
    %v1188 = vunpack.c.h.b16 %v242
    %v1189 = vunpack.c.l.b16 %v243
    %v1190 = vunpack.c.h.b16 %v243
    %v1191 = vunpack.c.l.b16 %v244
    %v1192 = vunpack.c.h.b16 %v244
    %v1193 = vunpack.c.l.b16 %v245
    %v1194 = vunpack.c.h.b16 %v245
    %v1195 = vunpack.c.l.b16 %v246
    %v1196 = vunpack.c.h.b16 %v246
    %v1197 = vunpack.c.l.b16 %v247
    %v1198 = vunpack.c.h.b16 %v247
    %v1199 = vunpack.c.l.b16 %v248
    %v1200 = vunpack.c.h.b16 %v248
    %v1201 = vunpack.c.l.b16 %v249
    %v1202 = vunpack.c.h.b16 %v249
    %v1203 = vunpack.c.l.b16 %v250
    %v1204 = vunpack.c.h.b16 %v250
    %v1205 = vunpack.c.l.b16 %v251
    %v1206 = vunpack.c.h.b16 %v251
    %v1207 = vunpack.c.l.b16 %v252
    %v1208 = vunpack.c.h.b16 %v252
    %v1209 = vunpack.c.l.b16 %v253
    %v1210 = vunpack.c.h.b16 %v253
    %v1211 = vunpack.c.l.b16 %v254
    %v1212 = vunpack.c.h.b16 %v254
    %v1213 = vunpack.c.l.b16 %v255
    %v1214 = vunpack.c.h.b16 %v255
    %v1215 = vunpack.c.l.b16 %v256
    %v1216 = vunpack.c.h.b16 %v256
    %v1217 = vunpack.c.l.b16 %v257
    %v1218 = vunpack.c.h.b16 %v257
    %v1219 = vunpack.c.l.b16 %v258
    %v1220 = vunpack.c.h.b16 %v258
    %v1221 = vunpack.c.l.b16 %v259
    %v1222 = vunpack.c.h.b16 %v259
    %v1223 = vunpack.c.l.b16 %v260
    %v1224 = vunpack.c.h.b16 %v260
    %v1225 = vunpack.c.l.b16 %v261
    %v1226 = vunpack.c.h.b16 %v261
    %v1227 = vunpack.c.l.b16 %v262
    %v1228 = vunpack.c.h.b16 %v262
    %v1229 = vunpack.c.l.b16 %v263
    %v1230 = vunpack.c.h.b16 %v263
    %v1231 = vunpack.c.l.b16 %v264
    %v1232 = vunpack.c.h.b16 %v264
    %v1233 = vunpack.c.l.b16 %v265
    %v1234 = vunpack.c.h.b16 %v265
    %v1235 = vunpack.c.l.b16 %v266
    %v1236 = vunpack.c.h.b16 %v266
    %v1237 = vunpack.c.l.b16 %v267
    %v1238 = vunpack.c.h.b16 %v267
    %v1239 = vunpack.c.l.b16 %v268
    %v1240 = vunpack.c.h.b16 %v268
    %v1241 = vunpack.c.l.b16 %v269
    %v1242 = vunpack.c.h.b16 %v269
    %v1243 = vunpack.c.l.b16 %v270
    %v1244 = vunpack.c.h.b16 %v270
    %v1245 = vunpack.c.l.b16 %v271
    %v1246 = vunpack.c.h.b16 %v271
    %v1247 = vunpack.c.l.b16 %v272
    %v1248 = vunpack.c.h.b16 %v272
    %v1249 = vunpack.c.l.b16 %v273
    %v1250 = vunpack.c.h.b16 %v273
    %v1251 = vunpack.c.l.b16 %v274
    %v1252 = vunpack.c.h.b16 %v274
    %v1253 = vunpack.c.l.b16 %v275
    %v1254 = vunpack.c.h.b16 %v275
    %v1255 = vunpack.c.l.b16 %v276
    %v1256 = vunpack.c.h.b16 %v276
    %v1257 = vunpack.c.l.b16 %v277
    %v1258 = vunpack.c.h.b16 %v277
    %v1259 = vunpack.c.l.b16 %v278
    %v1260 = vunpack.c.h.b16 %v278
    %v1261 = vunpack.c.l.b16 %v279
    %v1262 = vunpack.c.h.b16 %v279
    %v1263 = vunpack.c.l.b16 %v280
    %v1264 = vunpack.c.h.b16 %v280
    %v1265 = vunpack.c.l.b16 %v281
    %v1266 = vunpack.c.h.b16 %v281
    %v1267 = vunpack.c.l.b16 %v282
    %v1268 = vunpack.c.h.b16 %v282
    %v1269 = vunpack.c.l.b16 %v283
    %v1270 = vunpack.c.h.b16 %v283
    %v1271 = vunpack.c.l.b16 %v284
    %v1272 = vunpack.c.h.b16 %v284
    %v1273 = vunpack.c.l.b16 %v285
    %v1274 = vunpack.c.h.b16 %v285
    %v1275 = vunpack.c.l.b16 %v286
    %v1276 = vunpack.c.h.b16 %v286
    %v1277 = vunpack.c.l.b16 %v287
    %v1278 = vunpack.c.h.b16 %v287
    %v1279 = vunpack.c.l.b16 %v288
    %v1280 = vunpack.c.h.b16 %v288
    %v1281 = vunpack.c.l.b16 %v289
    %v1282 = vunpack.c.h.b16 %v289
    %v1283 = vunpack.c.l.b16 %v290
    %v1284 = vunpack.c.h.b16 %v290
    %v1285 = vunpack.c.l.b16 %v291
    %v1286 = vunpack.c.h.b16 %v291
    %v1287 = vunpack.c.l.b16 %v292
    %v1288 = vunpack.c.h.b16 %v292
    %v1289 = vunpack.c.l.b16 %v293
    %v1290 = vunpack.c.h.b16 %v293
    %v1291 = vunpack.c.l.b16 %v294
    %v1292 = vunpack.c.h.b16 %v294
    %v1293 = vunpack.c.l.b16 %v295
    %v1294 = vunpack.c.h.b16 %v295
    %v1295 = vunpack.c.l.b16 %v296
    %v1296 = vunpack.c.h.b16 %v296
    %v1297 = vunpack.c.l.b16 %v297
    %v1298 = vunpack.c.h.b16 %v297
    %v1299 = vunpack.c.l.b16 %v298
    %v1300 = vunpack.c.h.b16 %v298
    %v1301 = vunpack.c.l.b16 %v299
    %v1302 = vunpack.c.h.b16 %v299
    %v1303 = vunpack.c.l.b16 %v300
    %v1304 = vunpack.c.h.b16 %v300
    %v1305 = vunpack.c.l.b16 %v301
    %v1306 = vunpack.c.h.b16 %v301
    %v1307 = vunpack.c.l.b16 %v302
    %v1308 = vunpack.c.h.b16 %v302
    %v1309 = vunpack.c.l.b16 %v303
    %v1310 = vunpack.c.h.b16 %v303
    %v1311 = vunpack.c.l.b16 %v304
    %v1312 = vunpack.c.h.b16 %v304
    %v1313 = vunpack.c.l.b16 %v305
    %v1314 = vunpack.c.h.b16 %v305
    %v1315 = vunpack.c.l.b16 %v306
    %v1316 = vunpack.c.h.b16 %v306
    %v1317 = vunpack.c.l.b16 %v307
    %v1318 = vunpack.c.h.b16 %v307
    %v1319 = vunpack.c.l.b16 %v308
    %v1320 = vunpack.c.h.b16 %v308
    %v1321 = vunpack.c.l.b16 %v309
    %v1322 = vunpack.c.h.b16 %v309
    %v1323 = vunpack.c.l.b16 %v310
    %v1324 = vunpack.c.h.b16 %v310
    %v1325 = vunpack.c.l.b16 %v311
    %v1326 = vunpack.c.h.b16 %v311
    %v1327 = vunpack.c.l.b16 %v312
    %v1328 = vunpack.c.h.b16 %v312
    %v1329 = vunpack.c.l.b16 %v313
    %v1330 = vunpack.c.h.b16 %v313
    %v1331 = vunpack.c.l.b16 %v314
    %v1332 = vunpack.c.h.b16 %v314
    %v1333 = vunpack.c.l.b16 %v315
    %v1334 = vunpack.c.h.b16 %v315
    %v1335 = vunpack.c.l.b16 %v316
    %v1336 = vunpack.c.h.b16 %v316
    %v1337 = vunpack.c.l.b16 %v317
    %v1338 = vunpack.c.h.b16 %v317
    %v1339 = vunpack.c.l.b16 %v318
    %v1340 = vunpack.c.h.b16 %v318
    %v1341 = vunpack.c.l.b16 %v319
    %v1342 = vunpack.c.h.b16 %v319
    %v1343 = vunpack.c.l.b16 %v320
    %v1344 = vunpack.c.h.b16 %v320
    %v1345 = vunpack.c.l.b16 %v321
    %v1346 = vunpack.c.h.b16 %v321
    %v1347 = vunpack.c.l.b16 %v322
    %v1348 = vunpack.c.h.b16 %v322
    %v1349 = vunpack.c.l.b16 %v323
    %v1350 = vunpack.c.h.b16 %v323
    %v1351 = vunpack.c.l.b16 %v324
    %v1352 = vunpack.c.h.b16 %v324
    %v1353 = vunpack.c.l.b16 %v325
    %v1354 = vunpack.c.h.b16 %v325
    %v1355 = vunpack.c.l.b16 %v326
    %v1356 = vunpack.c.h.b16 %v326
    %v1357 = vunpack.c.l.b16 %v327
    %v1358 = vunpack.c.h.b16 %v327
    %v1359 = vunpack.c.l.b16 %v328
    %v1360 = vunpack.c.h.b16 %v328
    %v1361 = vunpack.c.l.b16 %v329
    %v1362 = vunpack.c.h.b16 %v329
    %v1363 = vunpack.c.l.b16 %v330
    %v1364 = vunpack.c.h.b16 %v330
    %v1365 = vunpack.c.l.b16 %v331
    %v1366 = vunpack.c.h.b16 %v331
    %v1367 = vunpack.c.l.b16 %v332
    %v1368 = vunpack.c.h.b16 %v332
    %v1369 = vunpack.c.l.b16 %v333
    %v1370 = vunpack.c.h.b16 %v333
    %v1371 = vunpack.c.l.b16 %v334
    %v1372 = vunpack.c.h.b16 %v334
    %v1373 = vunpack.c.l.b16 %v335
    %v1374 = vunpack.c.h.b16 %v335
    %v1375 = vpack.c.b16 %v779, %v775
    %v1376 = vpack.c.b16 %v780, %v776
    %v1377 = vpack.c.b16 %v781, %v777
    %v1378 = vpack.c.b16 %v782, %v778
    %v1379 = vpack.c.b16 %v787, %v783
    %v1380 = vpack.c.b16 %v788, %v784
    %v1381 = vpack.c.b16 %v789, %v785
    %v1382 = vpack.c.b16 %v790, %v786
    %v1383 = vpack.c.b16 %v795, %v791
    %v1384 = vpack.c.b16 %v796, %v792
    %v1385 = vpack.c.b16 %v797, %v793
    %v1386 = vpack.c.b16 %v798, %v794
    %v1387 = vpack.c.b16 %v803, %v799
    %v1388 = vpack.c.b16 %v804, %v800
    %v1389 = vpack.c.b16 %v805, %v801
    %v1390 = vpack.c.b16 %v806, %v802
    %v1391 = vpack.c.b16 %v811, %v807
    %v1392 = vpack.c.b16 %v812, %v808
    %v1393 = vpack.c.b16 %v813, %v809
    %v1394 = vpack.c.b16 %v814, %v810
    %v1395 = vpack.c.b16 %v819, %v815
    %v1396 = vpack.c.b16 %v820, %v816
    %v1397 = vpack.c.b16 %v821, %v817
    %v1398 = vpack.c.b16 %v822, %v818
    %v1399 = vpack.c.b16 %v827, %v823
    %v1400 = vpack.c.b16 %v828, %v824
    %v1401 = vpack.c.b16 %v829, %v825
    %v1402 = vpack.c.b16 %v830, %v826
    %v1403 = vpack.c.b16 %v835, %v831
    %v1404 = vpack.c.b16 %v836, %v832
    %v1405 = vpack.c.b16 %v837, %v833
    %v1406 = vpack.c.b16 %v838, %v834
    %v1407 = vpack.c.b16 %v843, %v839
    %v1408 = vpack.c.b16 %v844, %v840
    %v1409 = vpack.c.b16 %v845, %v841
    %v1410 = vpack.c.b16 %v846, %v842
    %v1411 = vpack.c.b16 %v851, %v847
    %v1412 = vpack.c.b16 %v852, %v848
    %v1413 = vpack.c.b16 %v853, %v849
    %v1414 = vpack.c.b16 %v854, %v850
    %v1415 = vpack.c.b16 %v859, %v855
    %v1416 = vpack.c.b16 %v860, %v856
    %v1417 = vpack.c.b16 %v861, %v857
    %v1418 = vpack.c.b16 %v862, %v858
    %v1419 = vpack.c.b16 %v867, %v863
    %v1420 = vpack.c.b16 %v868, %v864
    %v1421 = vpack.c.b16 %v869, %v865
    %v1422 = vpack.c.b16 %v870, %v866
    %v1423 = vpack.c.b16 %v875, %v871
    %v1424 = vpack.c.b16 %v876, %v872
    %v1425 = vpack.c.b16 %v877, %v873
    %v1426 = vpack.c.b16 %v878, %v874
    %v1427 = vpack.c.b16 %v883, %v879
    %v1428 = vpack.c.b16 %v884, %v880
    %v1429 = vpack.c.b16 %v885, %v881
    %v1430 = vpack.c.b16 %v886, %v882
    %v1431 = vpack.c.b16 %v891, %v887
    %v1432 = vpack.c.b16 %v892, %v888
    %v1433 = vpack.c.b16 %v893, %v889
    %v1434 = vpack.c.b16 %v894, %v890
    %v1435 = vpack.c.b16 %v899, %v895
    %v1436 = vpack.c.b16 %v900, %v896
    %v1437 = vpack.c.b16 %v901, %v897
    %v1438 = vpack.c.b16 %v902, %v898
    %v1439 = vpack.c.b16 %v907, %v903
    %v1440 = vpack.c.b16 %v908, %v904
    %v1441 = vpack.c.b16 %v909, %v905
    %v1442 = vpack.c.b16 %v910, %v906
    %v1443 = vpack.c.b16 %v915, %v911
    %v1444 = vpack.c.b16 %v916, %v912
    %v1445 = vpack.c.b16 %v917, %v913
    %v1446 = vpack.c.b16 %v918, %v914
    %v1447 = vpack.c.b16 %v923, %v919
    %v1448 = vpack.c.b16 %v924, %v920
    %v1449 = vpack.c.b16 %v925, %v921
    %v1450 = vpack.c.b16 %v926, %v922
    %v1451 = vpack.c.b16 %v931, %v927
    %v1452 = vpack.c.b16 %v932, %v928
    %v1453 = vpack.c.b16 %v933, %v929
    %v1454 = vpack.c.b16 %v934, %v930
    %v1455 = vpack.c.b16 %v939, %v935
    %v1456 = vpack.c.b16 %v940, %v936
    %v1457 = vpack.c.b16 %v941, %v937
    %v1458 = vpack.c.b16 %v942, %v938
    %v1459 = vpack.c.b16 %v947, %v943
    %v1460 = vpack.c.b16 %v948, %v944
    %v1461 = vpack.c.b16 %v949, %v945
    %v1462 = vpack.c.b16 %v950, %v946
    %v1463 = vpack.c.b16 %v955, %v951
    %v1464 = vpack.c.b16 %v956, %v952
    %v1465 = vpack.c.b16 %v957, %v953
    %v1466 = vpack.c.b16 %v958, %v954
    %v1467 = vpack.c.b16 %v963, %v959
    %v1468 = vpack.c.b16 %v964, %v960
    %v1469 = vpack.c.b16 %v965, %v961
    %v1470 = vpack.c.b16 %v966, %v962
    %v1471 = vpack.c.b16 %v971, %v967
    %v1472 = vpack.c.b16 %v972, %v968
    %v1473 = vpack.c.b16 %v973, %v969
    %v1474 = vpack.c.b16 %v974, %v970
    %v1475 = vpack.c.b16 %v979, %v975
    %v1476 = vpack.c.b16 %v980, %v976
    %v1477 = vpack.c.b16 %v981, %v977
    %v1478 = vpack.c.b16 %v982, %v978
    %v1479 = vpack.c.b16 %v987, %v983
    %v1480 = vpack.c.b16 %v988, %v984
    %v1481 = vpack.c.b16 %v989, %v985
    %v1482 = vpack.c.b16 %v990, %v986
    %v1483 = vpack.c.b16 %v995, %v991
    %v1484 = vpack.c.b16 %v996, %v992
    %v1485 = vpack.c.b16 %v997, %v993
    %v1486 = vpack.c.b16 %v998, %v994
    %v1487 = vpack.c.b16 %v1003, %v999
    %v1488 = vpack.c.b16 %v1004, %v1000
    %v1489 = vpack.c.b16 %v1005, %v1001
    %v1490 = vpack.c.b16 %v1006, %v1002
    %v1491 = vpack.c.b16 %v1011, %v1007
    %v1492 = vpack.c.b16 %v1012, %v1008
    %v1493 = vpack.c.b16 %v1013, %v1009
    %v1494 = vpack.c.b16 %v1014, %v1010
    %v1495 = vpack.c.b16 %v1019, %v1015
    %v1496 = vpack.c.b16 %v1020, %v1016
    %v1497 = vpack.c.b16 %v1021, %v1017
    %v1498 = vpack.c.b16 %v1022, %v1018
    %v1499 = vpack.c.b16 %v1027, %v1023
    %v1500 = vpack.c.b16 %v1028, %v1024
    %v1501 = vpack.c.b16 %v1029, %v1025
    %v1502 = vpack.c.b16 %v1030, %v1026
    %v1503 = vpack.c.b16 %v1035, %v1031
    %v1504 = vpack.c.b16 %v1036, %v1032
    %v1505 = vpack.c.b16 %v1037, %v1033
    %v1506 = vpack.c.b16 %v1038, %v1034
    %v1507 = vpack.c.b16 %v1043, %v1039
    %v1508 = vpack.c.b16 %v1044, %v1040
    %v1509 = vpack.c.b16 %v1045, %v1041
    %v1510 = vpack.c.b16 %v1046, %v1042
    %v1511 = vpack.c.b16 %v1051, %v1047
    %v1512 = vpack.c.b16 %v1052, %v1048
    %v1513 = vpack.c.b16 %v1053, %v1049
    %v1514 = vpack.c.b16 %v1054, %v1050
    %v1515 = vpack.c.b16 %v1059, %v1055
    %v1516 = vpack.c.b16 %v1060, %v1056
    %v1517 = vpack.c.b16 %v1061, %v1057
    %v1518 = vpack.c.b16 %v1062, %v1058
    %v1519 = vpack.c.b16 %v1067, %v1063
    %v1520 = vpack.c.b16 %v1068, %v1064
    %v1521 = vpack.c.b16 %v1069, %v1065
    %v1522 = vpack.c.b16 %v1070, %v1066
    %v1523 = vpack.c.b16 %v1075, %v1071
    %v1524 = vpack.c.b16 %v1076, %v1072
    %v1525 = vpack.c.b16 %v1077, %v1073
    %v1526 = vpack.c.b16 %v1078, %v1074
    %v1527 = vpack.c.b16 %v1083, %v1079
    %v1528 = vpack.c.b16 %v1084, %v1080
    %v1529 = vpack.c.b16 %v1085, %v1081
    %v1530 = vpack.c.b16 %v1086, %v1082
    %v1531 = vpack.c.b16 %v1091, %v1087
    %v1532 = vpack.c.b16 %v1092, %v1088
    %v1533 = vpack.c.b16 %v1093, %v1089
    %v1534 = vpack.c.b16 %v1094, %v1090
    %v1535 = vpack.c.b16 %v1099, %v1095
    %v1536 = vpack.c.b16 %v1100, %v1096
    %v1537 = vpack.c.b16 %v1101, %v1097
    %v1538 = vpack.c.b16 %v1102, %v1098
    %v1539 = vpack.c.b16 %v1107, %v1103
    %v1540 = vpack.c.b16 %v1108, %v1104
    %v1541 = vpack.c.b16 %v1109, %v1105
    %v1542 = vpack.c.b16 %v1110, %v1106
    %v1543 = vpack.c.b16 %v1115, %v1111
    %v1544 = vpack.c.b16 %v1116, %v1112
    %v1545 = vpack.c.b16 %v1117, %v1113
    %v1546 = vpack.c.b16 %v1118, %v1114
    %v1547 = vpack.c.b16 %v1123, %v1119
    %v1548 = vpack.c.b16 %v1124, %v1120
    %v1549 = vpack.c.b16 %v1125, %v1121
    %v1550 = vpack.c.b16 %v1126, %v1122
    %v1551 = vpack.c.b16 %v1131, %v1127
    %v1552 = vpack.c.b16 %v1132, %v1128
    %v1553 = vpack.c.b16 %v1133, %v1129
    %v1554 = vpack.c.b16 %v1134, %v1130
    %v1555 = vpack.c.b16 %v1139, %v1135
    %v1556 = vpack.c.b16 %v1140, %v1136
    %v1557 = vpack.c.b16 %v1141, %v1137
    %v1558 = vpack.c.b16 %v1142, %v1138
    %v1559 = vpack.c.b16 %v1147, %v1143
    %v1560 = vpack.c.b16 %v1148, %v1144
    %v1561 = vpack.c.b16 %v1149, %v1145
    %v1562 = vpack.c.b16 %v1150, %v1146
    %v1563 = vpack.c.b16 %v1155, %v1151
    %v1564 = vpack.c.b16 %v1156, %v1152
    %v1565 = vpack.c.b16 %v1157, %v1153
    %v1566 = vpack.c.b16 %v1158, %v1154
    %v1567 = vpack.c.b16 %v1163, %v1159
    %v1568 = vpack.c.b16 %v1164, %v1160
    %v1569 = vpack.c.b16 %v1165, %v1161
    %v1570 = vpack.c.b16 %v1166, %v1162
    %v1571 = vpack.c.b16 %v1171, %v1167
    %v1572 = vpack.c.b16 %v1172, %v1168
    %v1573 = vpack.c.b16 %v1173, %v1169
    %v1574 = vpack.c.b16 %v1174, %v1170
    %v1575 = vpack.c.b16 %v1179, %v1175
    %v1576 = vpack.c.b16 %v1180, %v1176
    %v1577 = vpack.c.b16 %v1181, %v1177
    %v1578 = vpack.c.b16 %v1182, %v1178
    %v1579 = vpack.c.b16 %v1187, %v1183
    %v1580 = vpack.c.b16 %v1188, %v1184
    %v1581 = vpack.c.b16 %v1189, %v1185
    %v1582 = vpack.c.b16 %v1190, %v1186
    %v1583 = vpack.c.b16 %v1195, %v1191
    %v1584 = vpack.c.b16 %v1196, %v1192
    %v1585 = vpack.c.b16 %v1197, %v1193
    %v1586 = vpack.c.b16 %v1198, %v1194
    %v1587 = vpack.c.b16 %v1203, %v1199
    %v1588 = vpack.c.b16 %v1204, %v1200
    %v1589 = vpack.c.b16 %v1205, %v1201
    %v1590 = vpack.c.b16 %v1206, %v1202
    %v1591 = vpack.c.b16 %v1211, %v1207
    %v1592 = vpack.c.b16 %v1212, %v1208
    %v1593 = vpack.c.b16 %v1213, %v1209
    %v1594 = vpack.c.b16 %v1214, %v1210
    %v1595 = vpack.c.b16 %v1219, %v1215
    %v1596 = vpack.c.b16 %v1220, %v1216
    %v1597 = vpack.c.b16 %v1221, %v1217
    %v1598 = vpack.c.b16 %v1222, %v1218
    %v1599 = vpack.c.b16 %v1227, %v1223
    %v1600 = vpack.c.b16 %v1228, %v1224
    %v1601 = vpack.c.b16 %v1229, %v1225
    %v1602 = vpack.c.b16 %v1230, %v1226
    %v1603 = vpack.c.b16 %v1235, %v1231
    %v1604 = vpack.c.b16 %v1236, %v1232
    %v1605 = vpack.c.b16 %v1237, %v1233
    %v1606 = vpack.c.b16 %v1238, %v1234
    %v1607 = vpack.c.b16 %v1243, %v1239
    %v1608 = vpack.c.b16 %v1244, %v1240
    %v1609 = vpack.c.b16 %v1245, %v1241
    %v1610 = vpack.c.b16 %v1246, %v1242
    %v1611 = vpack.c.b16 %v1251, %v1247
    %v1612 = vpack.c.b16 %v1252, %v1248
    %v1613 = vpack.c.b16 %v1253, %v1249
    %v1614 = vpack.c.b16 %v1254, %v1250
    %v1615 = vpack.c.b16 %v1259, %v1255
    %v1616 = vpack.c.b16 %v1260, %v1256
    %v1617 = vpack.c.b16 %v1261, %v1257
    %v1618 = vpack.c.b16 %v1262, %v1258
    %v1619 = vpack.c.b16 %v1267, %v1263
    %v1620 = vpack.c.b16 %v1268, %v1264
    %v1621 = vpack.c.b16 %v1269, %v1265
    %v1622 = vpack.c.b16 %v1270, %v1266
    %v1623 = vpack.c.b16 %v1275, %v1271
    %v1624 = vpack.c.b16 %v1276, %v1272
    %v1625 = vpack.c.b16 %v1277, %v1273
    %v1626 = vpack.c.b16 %v1278, %v1274
    %v1627 = vpack.c.b16 %v1283, %v1279
    %v1628 = vpack.c.b16 %v1284, %v1280
    %v1629 = vpack.c.b16 %v1285, %v1281
    %v1630 = vpack.c.b16 %v1286, %v1282
    %v1631 = vpack.c.b16 %v1291, %v1287
    %v1632 = vpack.c.b16 %v1292, %v1288
    %v1633 = vpack.c.b16 %v1293, %v1289
    %v1634 = vpack.c.b16 %v1294, %v1290
    %v1635 = vpack.c.b16 %v1299, %v1295
    %v1636 = vpack.c.b16 %v1300, %v1296
    %v1637 = vpack.c.b16 %v1301, %v1297
    %v1638 = vpack.c.b16 %v1302, %v1298
    %v1639 = vpack.c.b16 %v1307, %v1303
    %v1640 = vpack.c.b16 %v1308, %v1304
    %v1641 = vpack.c.b16 %v1309, %v1305
    %v1642 = vpack.c.b16 %v1310, %v1306
    %v1643 = vpack.c.b16 %v1315, %v1311
    %v1644 = vpack.c.b16 %v1316, %v1312
    %v1645 = vpack.c.b16 %v1317, %v1313
    %v1646 = vpack.c.b16 %v1318, %v1314
    %v1647 = vpack.c.b16 %v1323, %v1319
    %v1648 = vpack.c.b16 %v1324, %v1320
    %v1649 = vpack.c.b16 %v1325, %v1321
    %v1650 = vpack.c.b16 %v1326, %v1322
    %v1651 = vpack.c.b16 %v1331, %v1327
    %v1652 = vpack.c.b16 %v1332, %v1328
    %v1653 = vpack.c.b16 %v1333, %v1329
    %v1654 = vpack.c.b16 %v1334, %v1330
    %v1655 = vpack.c.b16 %v1339, %v1335
    %v1656 = vpack.c.b16 %v1340, %v1336
    %v1657 = vpack.c.b16 %v1341, %v1337
    %v1658 = vpack.c.b16 %v1342, %v1338
    %v1659 = vpack.c.b16 %v1347, %v1343
    %v1660 = vpack.c.b16 %v1348, %v1344
    %v1661 = vpack.c.b16 %v1349, %v1345
    %v1662 = vpack.c.b16 %v1350, %v1346
    %v1663 = vpack.c.b16 %v1355, %v1351
    %v1664 = vpack.c.b16 %v1356, %v1352
    %v1665 = vpack.c.b16 %v1357, %v1353
    %v1666 = vpack.c.b16 %v1358, %v1354
    %v1667 = vpack.c.b16 %v1363, %v1359
    %v1668 = vpack.c.b16 %v1364, %v1360
    %v1669 = vpack.c.b16 %v1365, %v1361
    %v1670 = vpack.c.b16 %v1366, %v1362
    %v1671 = vpack.c.b16 %v1371, %v1367
    %v1672 = vpack.c.b16 %v1372, %v1368
    %v1673 = vpack.c.b16 %v1373, %v1369
    %v1674 = vpack.c.b16 %v1374, %v1370
    %vm1975 = vcmask 392192
    %v1977 = vsel %vm1975, %v465, 0
    %1979 = vmatprep.subr.bf16.mxu0 %v1376
    %1980 = vmatpush1.bf16.msra.mxu0 %v1375
    %1981 = vmatprep.subr.bf16.mxu0 %v1380
    %1982 = vmatpush1.bf16.msra.mxu0 %v1379
    %1983 = vmatprep.subr.bf16.mxu0 %v1384
    %1984 = vmatpush1.bf16.msra.mxu0 %v1383
    %1985 = vmatprep.subr.bf16.mxu0 %v1388
    %1986 = vmatpush1.bf16.msra.mxu0 %v1387
    %1987 = vmatprep.subr.bf16.mxu0 %v1392
    %1988 = vmatpush1.bf16.msra.mxu0 %v1391
    %1989 = vmatprep.subr.bf16.mxu0 %v1396
    %1990 = vmatpush1.bf16.msra.mxu0 %v1395
    %1991 = vmatprep.subr.bf16.mxu0 %v1400
    %1992 = vmatpush1.bf16.msra.mxu0 %v1399
    %1993 = vmatprep.subr.bf16.mxu0 %v1404
    %1994 = vmatpush1.bf16.msra.mxu0 %v1403
    %1995 = vmatprep.subr.bf16.mxu0 %v1408
    %1996 = vmatpush1.bf16.msra.mxu0 %v1407
    %1997 = vmatprep.subr.bf16.mxu0 %v1412
    %1998 = vmatpush1.bf16.msra.mxu0 %v1411
    %1999 = vmatprep.subr.bf16.mxu0 %v1416
    %2000 = vmatpush1.bf16.msra.mxu0 %v1415
    %2001 = vmatprep.subr.bf16.mxu0 %v1420
    %2002 = vmatpush1.bf16.msra.mxu0 %v1419
    %2003 = vmatprep.subr.bf16.mxu0 %v1424
    %2004 = vmatpush1.bf16.msra.mxu0 %v1423
    %2005 = vmatprep.subr.bf16.mxu0 %v1428
    %2006 = vmatpush1.bf16.msra.mxu0 %v1427
    %2007 = vmatprep.subr.bf16.mxu0 %v1432
    %2008 = vmatpush1.bf16.msra.mxu0 %v1431
    %2009 = vmatprep.subr.bf16.mxu0 %v1436
    %2010 = vmatpush1.bf16.msra.mxu0 %v1435
    %2011 = vmatprep.mubr.bf16.mxu0 %v422
    %2012 = vmatmul.mubr.bf16.gmra.mrb[0].mxu0 %v408
    %v2013 = vpop.f32.mrb[0].mxu0
    %v2014 = vadd.f32 %v341, %v2013
    %v2015 = vpop.f32.mrb[0].mxu0
    %v2016 = vadd.f32 %v345, %v2015
    %v2017 = vpop.f32.mrb[0].mxu0
    %v2018 = vpop.f32.mrb[0].mxu0
    %2019 = vdwg.mxu0
    %2020 = vmatprep.subr.bf16.mxu0 %v1440
    %2021 = vmatpush1.bf16.msra.mxu0 %v1439
    %2022 = vmatprep.subr.bf16.mxu0 %v1444
    %2023 = vmatpush1.bf16.msra.mxu0 %v1443
    %2024 = vmatprep.subr.bf16.mxu0 %v1448
    %2025 = vmatpush1.bf16.msra.mxu0 %v1447
    %2026 = vmatprep.subr.bf16.mxu0 %v1452
    %2027 = vmatpush1.bf16.msra.mxu0 %v1451
    %2028 = vmatprep.subr.bf16.mxu0 %v1456
    %2029 = vmatpush1.bf16.msra.mxu0 %v1455
    %2030 = vmatprep.subr.bf16.mxu0 %v1460
    %2031 = vmatpush1.bf16.msra.mxu0 %v1459
    %2032 = vmatprep.subr.bf16.mxu0 %v1464
    %2033 = vmatpush1.bf16.msra.mxu0 %v1463
    %2034 = vmatprep.subr.bf16.mxu0 %v1468
    %2035 = vmatpush1.bf16.msra.mxu0 %v1467
    %2036 = vmatprep.subr.bf16.mxu0 %v1472
    %2037 = vmatpush1.bf16.msra.mxu0 %v1471
    %2038 = vmatprep.subr.bf16.mxu0 %v1476
    %2039 = vmatpush1.bf16.msra.mxu0 %v1475
    %2040 = vmatprep.subr.bf16.mxu0 %v1480
    %2041 = vmatpush1.bf16.msra.mxu0 %v1479
    %2042 = vmatprep.subr.bf16.mxu0 %v1484
    %2043 = vmatpush1.bf16.msra.mxu0 %v1483
    %2044 = vmatprep.subr.bf16.mxu0 %v1488
    %2045 = vmatpush1.bf16.msra.mxu0 %v1487
    %2046 = vmatprep.subr.bf16.mxu0 %v1492
    %2047 = vmatpush1.bf16.msra.mxu0 %v1491
    %2048 = vmatprep.subr.bf16.mxu0 %v1496
    %2049 = vmatpush1.bf16.msra.mxu0 %v1495
    %2050 = vmatprep.subr.bf16.mxu0 %v1500
    %2051 = vmatpush1.bf16.msra.mxu0 %v1499
    %2052 = vmatprep.mubr.bf16.mxu0 %v432
    %2053 = vmatmul.mubr.bf16.gmra.mrb[0].mxu0 %v430
    %v2054 = vpop.f32.mrb[0].mxu0
    %v2055 = vadd.f32 %v2014, %v2054
    %v2056 = vpop.f32.mrb[0].mxu0
    %v2057 = vadd.f32 %v2016, %v2056
    %v2058 = vpop.f32.mrb[0].mxu0
    %v2059 = vpop.f32.mrb[0].mxu0
    %2060 = vdwg.mxu0
    %2061 = vmatprep.subr.bf16.mxu0 %v1504
    %2062 = vmatpush1.bf16.msra.mxu0 %v1503
    %2063 = vmatprep.subr.bf16.mxu0 %v1508
    %2064 = vmatpush1.bf16.msra.mxu0 %v1507
    %2065 = vmatprep.subr.bf16.mxu0 %v1512
    %2066 = vmatpush1.bf16.msra.mxu0 %v1511
    %2067 = vmatprep.subr.bf16.mxu0 %v1516
    %2068 = vmatpush1.bf16.msra.mxu0 %v1515
    %2069 = vmatprep.subr.bf16.mxu0 %v1520
    %2070 = vmatpush1.bf16.msra.mxu0 %v1519
    %2071 = vmatprep.subr.bf16.mxu0 %v1524
    %2072 = vmatpush1.bf16.msra.mxu0 %v1523
    %2073 = vmatprep.subr.bf16.mxu0 %v1528
    %2074 = vmatpush1.bf16.msra.mxu0 %v1527
    %2075 = vmatprep.subr.bf16.mxu0 %v1532
    %2076 = vmatpush1.bf16.msra.mxu0 %v1531
    %2077 = vmatprep.subr.bf16.mxu0 %v1536
    %2078 = vmatpush1.bf16.msra.mxu0 %v1535
    %2079 = vmatprep.subr.bf16.mxu0 %v1540
    %2080 = vmatpush1.bf16.msra.mxu0 %v1539
    %2081 = vmatprep.subr.bf16.mxu0 %v1544
    %2082 = vmatpush1.bf16.msra.mxu0 %v1543
    %2083 = vmatprep.subr.bf16.mxu0 %v1548
    %2084 = vmatpush1.bf16.msra.mxu0 %v1547
    %2085 = vmatprep.subr.bf16.mxu0 %v1552
    %2086 = vmatpush1.bf16.msra.mxu0 %v1551
    %2087 = vmatprep.subr.bf16.mxu0 %v1556
    %2088 = vmatpush1.bf16.msra.mxu0 %v1555
    %2089 = vmatprep.subr.bf16.mxu0 %v1560
    %2090 = vmatpush1.bf16.msra.mxu0 %v1559
    %2091 = vmatprep.subr.bf16.mxu0 %v1564
    %2092 = vmatpush1.bf16.msra.mxu0 %v1563
    %2093 = vmatprep.mubr.bf16.mxu0 %v429
    %2094 = vmatmul.mubr.bf16.gmra.mrb[0].mxu0 %v415
    %v2095 = vpop.f32.mrb[0].mxu0
    %v2096 = vadd.f32 %v2055, %v2095
    %v2097 = vpop.f32.mrb[0].mxu0
    %v2098 = vadd.f32 %v2057, %v2097
    %v2099 = vpop.f32.mrb[0].mxu0
    %v2100 = vpop.f32.mrb[0].mxu0
    %2101 = vdwg.mxu0
    %2102 = vmatprep.subr.bf16.mxu0 %v1568
    %2103 = vmatpush1.bf16.msra.mxu0 %v1567
    %2104 = vmatprep.subr.bf16.mxu0 %v1572
    %2105 = vmatpush1.bf16.msra.mxu0 %v1571
    %2106 = vmatprep.subr.bf16.mxu0 %v1576
    %2107 = vmatpush1.bf16.msra.mxu0 %v1575
    %2108 = vmatprep.subr.bf16.mxu0 %v1580
    %2109 = vmatpush1.bf16.msra.mxu0 %v1579
    %2110 = vmatprep.subr.bf16.mxu0 %v1584
    %2111 = vmatpush1.bf16.msra.mxu0 %v1583
    %2112 = vmatprep.subr.bf16.mxu0 %v1588
    %2113 = vmatpush1.bf16.msra.mxu0 %v1587
    %2114 = vmatprep.subr.bf16.mxu0 %v1592
    %2115 = vmatpush1.bf16.msra.mxu0 %v1591
    %2116 = vmatprep.subr.bf16.mxu0 %v1596
    %2117 = vmatpush1.bf16.msra.mxu0 %v1595
    %2118 = vmatprep.subr.bf16.mxu0 %v1600
    %2119 = vmatpush1.bf16.msra.mxu0 %v1599
    %2120 = vmatprep.subr.bf16.mxu0 %v1604
    %2121 = vmatpush1.bf16.msra.mxu0 %v1603
    %2122 = vmatprep.subr.bf16.mxu0 %v1608
    %2123 = vmatpush1.bf16.msra.mxu0 %v1607
    %2124 = vmatprep.subr.bf16.mxu0 %v1612
    %2125 = vmatpush1.bf16.msra.mxu0 %v1611
    %2126 = vmatprep.subr.bf16.mxu0 %v1616
    %2127 = vmatpush1.bf16.msra.mxu0 %v1615
    %2128 = vmatprep.subr.bf16.mxu0 %v1620
    %2129 = vmatpush1.bf16.msra.mxu0 %v1619
    %2130 = vmatprep.subr.bf16.mxu0 %v1624
    %2131 = vmatpush1.bf16.msra.mxu0 %v1623
    %2132 = vmatprep.subr.bf16.mxu0 %v1628
    %2133 = vmatpush1.bf16.msra.mxu0 %v1627
    %2134 = vmatprep.mubr.bf16.mxu0 %v433
    %2135 = vmatmul.mubr.bf16.gmra.mrb[0].mxu0 %v431
    %v2136 = vpop.f32.mrb[0].mxu0
    %v2137 = vadd.f32 %v2096, %v2136
    %v2138 = vpop.f32.mrb[0].mxu0
    %v2139 = vadd.f32 %v2098, %v2138
    %v2140 = vpop.f32.mrb[0].mxu0
    %v2141 = vpop.f32.mrb[0].mxu0
    %2142 = vdwg.mxu0
    %2143 = vmatprep.subr.bf16.mxu0 %v1632
    %2144 = vmatpush1.bf16.msra.mxu0 %v1631
    %2145 = vmatprep.subr.bf16.mxu0 %v1636
    %2146 = vmatpush1.bf16.msra.mxu0 %v1635
    %2147 = vmatprep.subr.bf16.mxu0 %v1640
    %2148 = vmatpush1.bf16.msra.mxu0 %v1639
    %2149 = vmatprep.subr.bf16.mxu0 %v1644
    %2150 = vmatpush1.bf16.msra.mxu0 %v1643
    %2151 = vmatprep.subr.bf16.mxu0 %v1648
    %2152 = vmatpush1.bf16.msra.mxu0 %v1647
    %2153 = vmatprep.subr.bf16.mxu0 %v1652
    %2154 = vmatpush1.bf16.msra.mxu0 %v1651
    %2155 = vmatprep.subr.bf16.mxu0 %v1656
    %2156 = vmatpush1.bf16.msra.mxu0 %v1655
    %2157 = vmatprep.subr.bf16.mxu0 %v1660
    %2158 = vmatpush1.bf16.msra.mxu0 %v1659
    %2159 = vmatprep.subr.bf16.mxu0 %v1664
    %2160 = vmatpush1.bf16.msra.mxu0 %v1663
    %2161 = vmatprep.subr.bf16.mxu0 %v1668
    %2162 = vmatpush1.bf16.msra.mxu0 %v1667
    %2163 = vmatprep.subr.bf16.mxu0 %v1672
    %2164 = vmatpush1.bf16.msra.mxu0 %v1671
    %2165 = vmatprep.subr.bf16.mxu0 0
    %2166 = vmatpush1.bf16.msra.mxu0 0
    %2167 = vmatprep.subr.bf16.mxu0 0
    %2168 = vmatpush1.bf16.msra.mxu0 0
    %2169 = vmatprep.subr.bf16.mxu0 0
    %2170 = vmatpush1.bf16.msra.mxu0 0
    %2171 = vmatprep.subr.bf16.mxu0 0
    %2172 = vmatpush1.bf16.msra.mxu0 0
    %2173 = vmatprep.subr.bf16.mxu0 0
    %2174 = vmatpush1.bf16.msra.mxu0 0
    %2175 = vmatprep.mubr.bf16.mxu0 %v1977
    %2176 = vmatmul.mubr.bf16.gmra.mrb[0].mxu0 %v458
    %v2177 = vpop.f32.mrb[0].mxu0
    %v2178 = vadd.f32 %v2137, %v2177
    %v2179 = vpop.f32.mrb[0].mxu0
    %v2180 = vadd.f32 %v2139, %v2179
    %v2181 = vpop.f32.mrb[0].mxu0
    %v2182 = vpop.f32.mrb[0].mxu0
    %2183 = vdwg.mxu0
    %2184 = vmatprep.subr.bf16.mxu0 %v1378
    %2185 = vmatpush1.bf16.msra.mxu0 %v1377
    %2186 = vmatprep.subr.bf16.mxu0 %v1382
    %2187 = vmatpush1.bf16.msra.mxu0 %v1381
    %2188 = vmatprep.subr.bf16.mxu0 %v1386
    %2189 = vmatpush1.bf16.msra.mxu0 %v1385
    %2190 = vmatprep.subr.bf16.mxu0 %v1390
    %2191 = vmatpush1.bf16.msra.mxu0 %v1389
    %2192 = vmatprep.subr.bf16.mxu0 %v1394
    %2193 = vmatpush1.bf16.msra.mxu0 %v1393
    %2194 = vmatprep.subr.bf16.mxu0 %v1398
    %2195 = vmatpush1.bf16.msra.mxu0 %v1397
    %2196 = vmatprep.subr.bf16.mxu0 %v1402
    %2197 = vmatpush1.bf16.msra.mxu0 %v1401
    %2198 = vmatprep.subr.bf16.mxu0 %v1406
    %2199 = vmatpush1.bf16.msra.mxu0 %v1405
    %2200 = vmatprep.subr.bf16.mxu0 %v1410
    %2201 = vmatpush1.bf16.msra.mxu0 %v1409
    %2202 = vmatprep.subr.bf16.mxu0 %v1414
    %2203 = vmatpush1.bf16.msra.mxu0 %v1413
    %2204 = vmatprep.subr.bf16.mxu0 %v1418
    %2205 = vmatpush1.bf16.msra.mxu0 %v1417
    %2206 = vmatprep.subr.bf16.mxu0 %v1422
    %2207 = vmatpush1.bf16.msra.mxu0 %v1421
    %2208 = vmatprep.subr.bf16.mxu0 %v1426
    %2209 = vmatpush1.bf16.msra.mxu0 %v1425
    %2210 = vmatprep.subr.bf16.mxu0 %v1430
    %2211 = vmatpush1.bf16.msra.mxu0 %v1429
    %2212 = vmatprep.subr.bf16.mxu0 %v1434
    %2213 = vmatpush1.bf16.msra.mxu0 %v1433
    %2214 = vmatprep.subr.bf16.mxu0 %v1438
    %2215 = vmatpush1.bf16.msra.mxu0 %v1437
    %2216 = vmatprep.mubr.bf16.mxu0 %v422
    %2217 = vmatmul.mubr.bf16.gmra.mrb[0].mxu0 %v408
    %v2218 = vpop.f32.mrb[0].mxu0
    %v2219 = vadd.f32 %v349, %v2218
    %v2220 = vpop.f32.mrb[0].mxu0
    %v2221 = vadd.f32 %v353, %v2220
    %v2222 = vpop.f32.mrb[0].mxu0
    %v2223 = vpop.f32.mrb[0].mxu0
    %2224 = vdwg.mxu0
    %2225 = vmatprep.subr.bf16.mxu0 %v1442
    %2226 = vmatpush1.bf16.msra.mxu0 %v1441
    %2227 = vmatprep.subr.bf16.mxu0 %v1446
    %2228 = vmatpush1.bf16.msra.mxu0 %v1445
    %2229 = vmatprep.subr.bf16.mxu0 %v1450
    %2230 = vmatpush1.bf16.msra.mxu0 %v1449
    %2231 = vmatprep.subr.bf16.mxu0 %v1454
    %2232 = vmatpush1.bf16.msra.mxu0 %v1453
    %2233 = vmatprep.subr.bf16.mxu0 %v1458
    %2234 = vmatpush1.bf16.msra.mxu0 %v1457
    %2235 = vmatprep.subr.bf16.mxu0 %v1462
    %2236 = vmatpush1.bf16.msra.mxu0 %v1461
    %2237 = vmatprep.subr.bf16.mxu0 %v1466
    %2238 = vmatpush1.bf16.msra.mxu0 %v1465
    %2239 = vmatprep.subr.bf16.mxu0 %v1470
    %2240 = vmatpush1.bf16.msra.mxu0 %v1469
    %2241 = vmatprep.subr.bf16.mxu0 %v1474
    %2242 = vmatpush1.bf16.msra.mxu0 %v1473
    %2243 = vmatprep.subr.bf16.mxu0 %v1478
    %2244 = vmatpush1.bf16.msra.mxu0 %v1477
    %2245 = vmatprep.subr.bf16.mxu0 %v1482
    %2246 = vmatpush1.bf16.msra.mxu0 %v1481
    %2247 = vmatprep.subr.bf16.mxu0 %v1486
    %2248 = vmatpush1.bf16.msra.mxu0 %v1485
    %2249 = vmatprep.subr.bf16.mxu0 %v1490
    %2250 = vmatpush1.bf16.msra.mxu0 %v1489
    %2251 = vmatprep.subr.bf16.mxu0 %v1494
    %2252 = vmatpush1.bf16.msra.mxu0 %v1493
    %2253 = vmatprep.subr.bf16.mxu0 %v1498
    %2254 = vmatpush1.bf16.msra.mxu0 %v1497
    %2255 = vmatprep.subr.bf16.mxu0 %v1502
    %2256 = vmatpush1.bf16.msra.mxu0 %v1501
    %2257 = vmatprep.mubr.bf16.mxu0 %v432
    %2258 = vmatmul.mubr.bf16.gmra.mrb[0].mxu0 %v430
    %v2259 = vpop.f32.mrb[0].mxu0
    %v2260 = vadd.f32 %v2219, %v2259
    %v2261 = vpop.f32.mrb[0].mxu0
    %v2262 = vadd.f32 %v2221, %v2261
    %v2263 = vpop.f32.mrb[0].mxu0
    %v2264 = vpop.f32.mrb[0].mxu0
    %2265 = vdwg.mxu0
    %2266 = vmatprep.subr.bf16.mxu0 %v1506
    %2267 = vmatpush1.bf16.msra.mxu0 %v1505
    %2268 = vmatprep.subr.bf16.mxu0 %v1510
    %2269 = vmatpush1.bf16.msra.mxu0 %v1509
    %2270 = vmatprep.subr.bf16.mxu0 %v1514
    %2271 = vmatpush1.bf16.msra.mxu0 %v1513
    %2272 = vmatprep.subr.bf16.mxu0 %v1518
    %2273 = vmatpush1.bf16.msra.mxu0 %v1517
    %2274 = vmatprep.subr.bf16.mxu0 %v1522
    %2275 = vmatpush1.bf16.msra.mxu0 %v1521
    %2276 = vmatprep.subr.bf16.mxu0 %v1526
    %2277 = vmatpush1.bf16.msra.mxu0 %v1525
    %2278 = vmatprep.subr.bf16.mxu0 %v1530
    %2279 = vmatpush1.bf16.msra.mxu0 %v1529
    %2280 = vmatprep.subr.bf16.mxu0 %v1534
    %2281 = vmatpush1.bf16.msra.mxu0 %v1533
    %2282 = vmatprep.subr.bf16.mxu0 %v1538
    %2283 = vmatpush1.bf16.msra.mxu0 %v1537
    %2284 = vmatprep.subr.bf16.mxu0 %v1542
    %2285 = vmatpush1.bf16.msra.mxu0 %v1541
    %2286 = vmatprep.subr.bf16.mxu0 %v1546
    %2287 = vmatpush1.bf16.msra.mxu0 %v1545
    %2288 = vmatprep.subr.bf16.mxu0 %v1550
    %2289 = vmatpush1.bf16.msra.mxu0 %v1549
    %2290 = vmatprep.subr.bf16.mxu0 %v1554
    %2291 = vmatpush1.bf16.msra.mxu0 %v1553
    %2292 = vmatprep.subr.bf16.mxu0 %v1558
    %2293 = vmatpush1.bf16.msra.mxu0 %v1557
    %2294 = vmatprep.subr.bf16.mxu0 %v1562
    %2295 = vmatpush1.bf16.msra.mxu0 %v1561
    %2296 = vmatprep.subr.bf16.mxu0 %v1566
    %2297 = vmatpush1.bf16.msra.mxu0 %v1565
    %2298 = vmatprep.mubr.bf16.mxu0 %v429
    %2299 = vmatmul.mubr.bf16.gmra.mrb[0].mxu0 %v415
    %v2300 = vpop.f32.mrb[0].mxu0
    %v2301 = vadd.f32 %v2260, %v2300
    %v2302 = vpop.f32.mrb[0].mxu0
    %v2303 = vadd.f32 %v2262, %v2302
    %v2304 = vpop.f32.mrb[0].mxu0
    %v2305 = vpop.f32.mrb[0].mxu0
    %2306 = vdwg.mxu0
    %2307 = vmatprep.subr.bf16.mxu0 %v1570
    %2308 = vmatpush1.bf16.msra.mxu0 %v1569
    %2309 = vmatprep.subr.bf16.mxu0 %v1574
    %2310 = vmatpush1.bf16.msra.mxu0 %v1573
    %2311 = vmatprep.subr.bf16.mxu0 %v1578
    %2312 = vmatpush1.bf16.msra.mxu0 %v1577
    %2313 = vmatprep.subr.bf16.mxu0 %v1582
    %2314 = vmatpush1.bf16.msra.mxu0 %v1581
    %2315 = vmatprep.subr.bf16.mxu0 %v1586
    %2316 = vmatpush1.bf16.msra.mxu0 %v1585
    %2317 = vmatprep.subr.bf16.mxu0 %v1590
    %2318 = vmatpush1.bf16.msra.mxu0 %v1589
    %2319 = vmatprep.subr.bf16.mxu0 %v1594
    %2320 = vmatpush1.bf16.msra.mxu0 %v1593
    %2321 = vmatprep.subr.bf16.mxu0 %v1598
    %2322 = vmatpush1.bf16.msra.mxu0 %v1597
    %2323 = vmatprep.subr.bf16.mxu0 %v1602
    %2324 = vmatpush1.bf16.msra.mxu0 %v1601
    %2325 = vmatprep.subr.bf16.mxu0 %v1606
    %2326 = vmatpush1.bf16.msra.mxu0 %v1605
    %2327 = vmatprep.subr.bf16.mxu0 %v1610
    %2328 = vmatpush1.bf16.msra.mxu0 %v1609
    %2329 = vmatprep.subr.bf16.mxu0 %v1614
    %2330 = vmatpush1.bf16.msra.mxu0 %v1613
    %2331 = vmatprep.subr.bf16.mxu0 %v1618
    %2332 = vmatpush1.bf16.msra.mxu0 %v1617
    %2333 = vmatprep.subr.bf16.mxu0 %v1622
    %2334 = vmatpush1.bf16.msra.mxu0 %v1621
    %2335 = vmatprep.subr.bf16.mxu0 %v1626
    %2336 = vmatpush1.bf16.msra.mxu0 %v1625
    %2337 = vmatprep.subr.bf16.mxu0 %v1630
    %2338 = vmatpush1.bf16.msra.mxu0 %v1629
    %2339 = vmatprep.mubr.bf16.mxu0 %v433
    %2340 = vmatmul.mubr.bf16.gmra.mrb[0].mxu0 %v431
    %v2341 = vpop.f32.mrb[0].mxu0
    %v2342 = vadd.f32 %v2301, %v2341
    %v2343 = vpop.f32.mrb[0].mxu0
    %v2344 = vadd.f32 %v2303, %v2343
    %v2345 = vpop.f32.mrb[0].mxu0
    %v2346 = vpop.f32.mrb[0].mxu0
    %2347 = vdwg.mxu0
    %2348 = vmatprep.subr.bf16.mxu0 %v1634
    %2349 = vmatpush1.bf16.msra.mxu0 %v1633
    %2350 = vmatprep.subr.bf16.mxu0 %v1638
    %2351 = vmatpush1.bf16.msra.mxu0 %v1637
    %2352 = vmatprep.subr.bf16.mxu0 %v1642
    %2353 = vmatpush1.bf16.msra.mxu0 %v1641
    %2354 = vmatprep.subr.bf16.mxu0 %v1646
    %2355 = vmatpush1.bf16.msra.mxu0 %v1645
    %2356 = vmatprep.subr.bf16.mxu0 %v1650
    %2357 = vmatpush1.bf16.msra.mxu0 %v1649
    %2358 = vmatprep.subr.bf16.mxu0 %v1654
    %2359 = vmatpush1.bf16.msra.mxu0 %v1653
    %2360 = vmatprep.subr.bf16.mxu0 %v1658
    %2361 = vmatpush1.bf16.msra.mxu0 %v1657
    %2362 = vmatprep.subr.bf16.mxu0 %v1662
    %2363 = vmatpush1.bf16.msra.mxu0 %v1661
    %2364 = vmatprep.subr.bf16.mxu0 %v1666
    %2365 = vmatpush1.bf16.msra.mxu0 %v1665
    %2366 = vmatprep.subr.bf16.mxu0 %v1670
    %2367 = vmatpush1.bf16.msra.mxu0 %v1669
    %2368 = vmatprep.subr.bf16.mxu0 %v1674
    %2369 = vmatpush1.bf16.msra.mxu0 %v1673
    %2370 = vmatprep.subr.bf16.mxu0 0
    %2371 = vmatpush1.bf16.msra.mxu0 0
    %2372 = vmatprep.subr.bf16.mxu0 0
    %2373 = vmatpush1.bf16.msra.mxu0 0
    %2374 = vmatprep.subr.bf16.mxu0 0
    %2375 = vmatpush1.bf16.msra.mxu0 0
    %2376 = vmatprep.subr.bf16.mxu0 0
    %2377 = vmatpush1.bf16.msra.mxu0 0
    %2378 = vmatprep.subr.bf16.mxu0 0
    %2379 = vmatpush1.bf16.msra.mxu0 0
    %2380 = vmatprep.mubr.bf16.mxu0 %v1977
    %2381 = vmatmul.mubr.bf16.gmra.mrb[0].mxu0 %v458
    %v2382 = vpop.f32.mrb[0].mxu0
    %v2383 = vadd.f32 %v2342, %v2382
    %v2384 = vpop.f32.mrb[0].mxu0
    %v2385 = vadd.f32 %v2344, %v2384
    %v2386 = vpop.f32.mrb[0].mxu0
    %v2387 = vpop.f32.mrb[0].mxu0
    %2388 = vdwg.mxu0
    %v2389 = vmax.f32 %v2178, 0.0
    %v2390 = vmax.f32 %v2180, 0.0
    %v2391 = vmax.f32 %v2383, 0.0
    %v2392 = vmax.f32 %v2385, 0.0
    %v2393 = vpack.c.bf16 %v2389, %v2389
    %v2394 = vpack.c.bf16 %v2390, %v2390
    %v2395 = vpack.c.bf16 %v2391, %v2391
    %v2396 = vpack.c.bf16 %v2392, %v2392
    %v2397 = vld [vmem:[%s3] sm:$0xf]
    %v2398 = vld [vmem:[%s3 + $0x4] sm:$0xf]
    %v2399 = vld [vmem:[%s3 + $0x8] sm:$0xf]
    %v2400 = vld [vmem:[%s3 + $0xc] sm:$0xf]
    %v2401 = vld [vmem:[%s3 + $0x10] sm:$0xf]
    %v2402 = vld [vmem:[%s3 + $0x14] sm:$0xf]
    %v2403 = vld [vmem:[%s3 + $0x18] sm:$0xf]
    %v2404 = vld [vmem:[%s3 + $0x1c] sm:$0xf]
    %v2405 = vld [vmem:[%s3 + $0x20] sm:$0xf]
    %v2406 = vld [vmem:[%s3 + $0x24] sm:$0xf]
    %v2407 = vld [vmem:[%s3 + $0x28] sm:$0xf]
    %v2408 = vld [vmem:[%s3 + $0x2c] sm:$0xf]
    %v2409 = vld [vmem:[%s3 + $0x30] sm:$0xf]
    %v2410 = vld [vmem:[%s3 + $0x34] sm:$0xf]
    %v2411 = vld [vmem:[%s3 + $0x38] sm:$0xf]
    %v2412 = vld [vmem:[%s3 + $0x3c] sm:$0xf]
    %v2413 = vld [vmem:[%s3 + $0x40] sm:$0xf]
    %v2414 = vld [vmem:[%s3 + $0x44] sm:$0xf]
    %v2415 = vld [vmem:[%s3 + $0x48] sm:$0xf]
    %v2416 = vld [vmem:[%s3 + $0x4c] sm:$0xf]
    %v2417 = vld [vmem:[%s3 + $0x50] sm:$0xf]
    %v2418 = vld [vmem:[%s3 + $0x54] sm:$0xf]
    %v2419 = vld [vmem:[%s3 + $0x58] sm:$0xf]
    %v2420 = vld [vmem:[%s3 + $0x5c] sm:$0xf]
    %v2421 = vld [vmem:[%s3 + $0x60] sm:$0xf]
    %v2422 = vld [vmem:[%s3 + $0x64] sm:$0xf]
    %v2423 = vld [vmem:[%s3 + $0x68] sm:$0xf]
    %v2424 = vld [vmem:[%s3 + $0x6c] sm:$0xf]
    %v2425 = vld [vmem:[%s3 + $0x70] sm:$0xf]
    %v2426 = vld [vmem:[%s3 + $0x74] sm:$0xf]
    %v2427 = vld [vmem:[%s3 + $0x78] sm:$0xf]
    %v2428 = vld [vmem:[%s3 + $0x7c] sm:$0xf]
    %v2429 = vld [vmem:[%s3 + $0x80] sm:$0xf]
    %v2430 = vld [vmem:[%s3 + $0x84] sm:$0xf]
    %v2431 = vld [vmem:[%s3 + $0x88] sm:$0xf]
    %v2432 = vld [vmem:[%s3 + $0x8c] sm:$0xf]
    %v2433 = vld [vmem:[%s3 + $0x90] sm:$0xf]
    %v2434 = vld [vmem:[%s3 + $0x94] sm:$0xf]
    %v2435 = vld [vmem:[%s3 + $0x98] sm:$0xf]
    %v2436 = vld [vmem:[%s3 + $0x9c] sm:$0xf]
    %v2437 = vld [vmem:[%s3 + $0xa0] sm:$0xf]
    %v2438 = vld [vmem:[%s3 + $0xa4] sm:$0xf]
    %v2439 = vld [vmem:[%s3 + $0xa8] sm:$0xf]
    %v2440 = vld [vmem:[%s3 + $0xac] sm:$0xf]
    %v2441 = vld [vmem:[%s3 + $0xb0] sm:$0xf]
    %v2442 = vld [vmem:[%s3 + $0xb4] sm:$0xf]
    %v2443 = vld [vmem:[%s3 + $0xb8] sm:$0xf]
    %v2444 = vld [vmem:[%s3 + $0xbc] sm:$0xf]
    %v2445 = vld [vmem:[%s3 + $0xc0] sm:$0xf]
    %v2446 = vld [vmem:[%s3 + $0xc4] sm:$0xf]
    %v2447 = vld [vmem:[%s4] sm:$0x1]
    %v2449 = vlaneseq
    %v2450 = vshrl.u32 %v2449, 7
    %v2451 = vsub.s32 0, %v2450
    %v2452 = vrot.slane %v2447, %v2451
    %v2504 = vunpack.c.l.b16 %v2397
    %v2505 = vunpack.c.l.b16 %v2398
    %v2506 = vunpack.c.l.b16 %v2399
    %v2507 = vunpack.c.l.b16 %v2400
    %v2508 = vunpack.c.l.b16 %v2401
    %v2509 = vunpack.c.l.b16 %v2402
    %v2510 = vunpack.c.l.b16 %v2403
    %v2511 = vunpack.c.l.b16 %v2404
    %v2512 = vunpack.c.l.b16 %v2405
    %v2513 = vunpack.c.l.b16 %v2406
    %v2514 = vunpack.c.l.b16 %v2407
    %v2515 = vunpack.c.l.b16 %v2408
    %v2516 = vunpack.c.l.b16 %v2409
    %v2517 = vunpack.c.l.b16 %v2410
    %v2518 = vunpack.c.l.b16 %v2411
    %v2519 = vunpack.c.l.b16 %v2412
    %v2520 = vunpack.c.l.b16 %v2413
    %v2521 = vunpack.c.l.b16 %v2414
    %v2522 = vunpack.c.l.b16 %v2415
    %v2523 = vunpack.c.l.b16 %v2416
    %v2524 = vunpack.c.l.b16 %v2417
    %v2525 = vunpack.c.l.b16 %v2418
    %v2526 = vunpack.c.l.b16 %v2419
    %v2527 = vunpack.c.l.b16 %v2420
    %v2528 = vunpack.c.l.b16 %v2421
    %v2529 = vunpack.c.l.b16 %v2422
    %v2530 = vunpack.c.l.b16 %v2423
    %v2531 = vunpack.c.l.b16 %v2424
    %v2532 = vunpack.c.l.b16 %v2425
    %v2533 = vunpack.c.l.b16 %v2426
    %v2534 = vunpack.c.l.b16 %v2427
    %v2535 = vunpack.c.l.b16 %v2428
    %v2536 = vunpack.c.l.b16 %v2429
    %v2537 = vunpack.c.l.b16 %v2430
    %v2538 = vunpack.c.l.b16 %v2431
    %v2539 = vunpack.c.l.b16 %v2432
    %v2540 = vunpack.c.l.b16 %v2433
    %v2541 = vunpack.c.l.b16 %v2434
    %v2542 = vunpack.c.l.b16 %v2435
    %v2543 = vunpack.c.l.b16 %v2436
    %v2544 = vunpack.c.l.b16 %v2437
    %v2545 = vunpack.c.l.b16 %v2438
    %v2546 = vunpack.c.l.b16 %v2439
    %v2547 = vunpack.c.l.b16 %v2440
    %v2548 = vunpack.c.l.b16 %v2441
    %v2549 = vunpack.c.l.b16 %v2442
    %v2550 = vunpack.c.l.b16 %v2443
    %v2551 = vunpack.c.l.b16 %v2444
    %v2552 = vunpack.c.l.b16 %v2445
    %v2553 = vunpack.c.l.b16 %v2446
    %v2554 = vpack.c.b16 %v2505, %v2504
    %v2555 = vpack.c.b16 %v2507, %v2506
    %v2556 = vpack.c.b16 %v2509, %v2508
    %v2557 = vpack.c.b16 %v2511, %v2510
    %v2558 = vpack.c.b16 %v2513, %v2512
    %v2559 = vpack.c.b16 %v2515, %v2514
    %v2560 = vpack.c.b16 %v2517, %v2516
    %v2561 = vpack.c.b16 %v2519, %v2518
    %v2562 = vpack.c.b16 %v2521, %v2520
    %v2563 = vpack.c.b16 %v2523, %v2522
    %v2564 = vpack.c.b16 %v2525, %v2524
    %v2565 = vpack.c.b16 %v2527, %v2526
    %v2566 = vpack.c.b16 %v2529, %v2528
    %v2567 = vpack.c.b16 %v2531, %v2530
    %v2568 = vpack.c.b16 %v2533, %v2532
    %v2569 = vpack.c.b16 %v2535, %v2534
    %v2570 = vpack.c.b16 %v2537, %v2536
    %v2571 = vpack.c.b16 %v2539, %v2538
    %v2572 = vpack.c.b16 %v2541, %v2540
    %v2573 = vpack.c.b16 %v2543, %v2542
    %v2574 = vpack.c.b16 %v2545, %v2544
    %v2575 = vpack.c.b16 %v2547, %v2546
    %v2576 = vpack.c.b16 %v2549, %v2548
    %v2577 = vpack.c.b16 %v2551, %v2550
    %v2578 = vpack.c.b16 %v2553, %v2552
    %vm2604 = vcmask 130048
    %v2606 = vsel %vm2604, %v2396, 0
    %2608 = vmatprep.subr.bf16.mxu0 0
    %2609 = vmatpush1.bf16.msra.mxu0 %v2554
    %2610 = vmatprep.subr.bf16.mxu0 0
    %2611 = vmatpush1.bf16.msra.mxu0 %v2555
    %2612 = vmatprep.subr.bf16.mxu0 0
    %2613 = vmatpush1.bf16.msra.mxu0 %v2556
    %2614 = vmatprep.subr.bf16.mxu0 0
    %2615 = vmatpush1.bf16.msra.mxu0 %v2557
    %2616 = vmatprep.subr.bf16.mxu0 0
    %2617 = vmatpush1.bf16.msra.mxu0 %v2558
    %2618 = vmatprep.subr.bf16.mxu0 0
    %2619 = vmatpush1.bf16.msra.mxu0 %v2559
    %2620 = vmatprep.subr.bf16.mxu0 0
    %2621 = vmatpush1.bf16.msra.mxu0 %v2560
    %2622 = vmatprep.subr.bf16.mxu0 0
    %2623 = vmatpush1.bf16.msra.mxu0 %v2561
    %2624 = vmatprep.subr.bf16.mxu0 0
    %2625 = vmatpush1.bf16.msra.mxu0 %v2562
    %2626 = vmatprep.subr.bf16.mxu0 0
    %2627 = vmatpush1.bf16.msra.mxu0 %v2563
    %2628 = vmatprep.subr.bf16.mxu0 0
    %2629 = vmatpush1.bf16.msra.mxu0 %v2564
    %2630 = vmatprep.subr.bf16.mxu0 0
    %2631 = vmatpush1.bf16.msra.mxu0 %v2565
    %2632 = vmatprep.subr.bf16.mxu0 0
    %2633 = vmatpush1.bf16.msra.mxu0 %v2566
    %2634 = vmatprep.subr.bf16.mxu0 0
    %2635 = vmatpush1.bf16.msra.mxu0 %v2567
    %2636 = vmatprep.subr.bf16.mxu0 0
    %2637 = vmatpush1.bf16.msra.mxu0 %v2568
    %2638 = vmatprep.subr.bf16.mxu0 0
    %2639 = vmatpush1.bf16.msra.mxu0 %v2569
    %2640 = vmatprep.mubr.bf16.mxu0 %v2394
    %2641 = vmatmul.mubr.bf16.gmra.mrb[0].mxu0 %v2393
    %v2642 = vpop.f32.mrb[0].mxu0
    %v2643 = vadd.f32 %v2452, %v2642
    %v2644 = vpop.f32.mrb[0].mxu0
    %v2645 = vpop.f32.mrb[0].mxu0
    %v2646 = vpop.f32.mrb[0].mxu0
    %2647 = vdwg.mxu0
    %2648 = vmatprep.subr.bf16.mxu0 0
    %2649 = vmatpush1.bf16.msra.mxu0 %v2570
    %2650 = vmatprep.subr.bf16.mxu0 0
    %2651 = vmatpush1.bf16.msra.mxu0 %v2571
    %2652 = vmatprep.subr.bf16.mxu0 0
    %2653 = vmatpush1.bf16.msra.mxu0 %v2572
    %2654 = vmatprep.subr.bf16.mxu0 0
    %2655 = vmatpush1.bf16.msra.mxu0 %v2573
    %2656 = vmatprep.subr.bf16.mxu0 0
    %2657 = vmatpush1.bf16.msra.mxu0 %v2574
    %2658 = vmatprep.subr.bf16.mxu0 0
    %2659 = vmatpush1.bf16.msra.mxu0 %v2575
    %2660 = vmatprep.subr.bf16.mxu0 0
    %2661 = vmatpush1.bf16.msra.mxu0 %v2576
    %2662 = vmatprep.subr.bf16.mxu0 0
    %2663 = vmatpush1.bf16.msra.mxu0 %v2577
    %2664 = vmatprep.subr.bf16.mxu0 0
    %2665 = vmatpush1.bf16.msra.mxu0 %v2578
    %2666 = vmatprep.subr.bf16.mxu0 0
    %2667 = vmatpush1.bf16.msra.mxu0 0
    %2668 = vmatprep.subr.bf16.mxu0 0
    %2669 = vmatpush1.bf16.msra.mxu0 0
    %2670 = vmatprep.subr.bf16.mxu0 0
    %2671 = vmatpush1.bf16.msra.mxu0 0
    %2672 = vmatprep.subr.bf16.mxu0 0
    %2673 = vmatpush1.bf16.msra.mxu0 0
    %2674 = vmatprep.subr.bf16.mxu0 0
    %2675 = vmatpush1.bf16.msra.mxu0 0
    %2676 = vmatprep.subr.bf16.mxu0 0
    %2677 = vmatpush1.bf16.msra.mxu0 0
    %2678 = vmatprep.subr.bf16.mxu0 0
    %2679 = vmatpush1.bf16.msra.mxu0 0
    %2680 = vmatprep.mubr.bf16.mxu0 %v2606
    %2681 = vmatmul.mubr.bf16.gmra.mrb[0].mxu0 %v2395
    %v2682 = vpop.f32.mrb[0].mxu0
    %v2683 = vadd.f32 %v2643, %v2682
    %v2684 = vpop.f32.mrb[0].mxu0
    %v2685 = vpop.f32.mrb[0].mxu0
    %v2686 = vpop.f32.mrb[0].mxu0
    %2687 = vdwg.mxu0
    %v2688 = vmax.f32 %v2683, 0.0
    %v2689 = vpack.c.bf16 %v2688, %v2688
    %v2690 = vld [vmem:[%s5] sm:$0xf]
    %v2691 = vld [vmem:[%s5 + $0x4] sm:$0xf]
    %v2692 = vld [vmem:[%s5 + $0x8] sm:$0xf]
    %v2693 = vld [vmem:[%s5 + $0xc] sm:$0xf]
    %v2694 = vld [vmem:[%s5 + $0x10] sm:$0xf]
    %v2695 = vld [vmem:[%s5 + $0x14] sm:$0xf]
    %v2696 = vld [vmem:[%s5 + $0x18] sm:$0xf]
    %v2697 = vld [vmem:[%s5 + $0x1c] sm:$0xf]
    %v2698 = vld [vmem:[%s5 + $0x20] sm:$0xf]
    %v2699 = vld [vmem:[%s5 + $0x24] sm:$0xf]
    %v2700 = vld [vmem:[%s5 + $0x28] sm:$0xf]
    %v2701 = vld [vmem:[%s5 + $0x2c] sm:$0xf]
    %v2702 = vld [vmem:[%s5 + $0x30] sm:$0x3]
    %v2703 = vld [vmem:[%s6] sm:$0x1]
    %v2705 = vlaneseq
    %v2706 = vshrl.u32 %v2705, 7
    %v2707 = vsub.s32 0, %v2706
    %v2708 = vrot.slane %v2703, %v2707
    %v2723 = vunpack.c.l.b16 %v2690
    %v2724 = vunpack.c.l.b16 %v2691
    %v2725 = vunpack.c.l.b16 %v2692
    %v2726 = vunpack.c.l.b16 %v2693
    %v2727 = vunpack.c.l.b16 %v2694
    %v2728 = vunpack.c.l.b16 %v2695
    %v2729 = vunpack.c.l.b16 %v2696
    %v2730 = vunpack.c.l.b16 %v2697
    %v2731 = vunpack.c.l.b16 %v2698
    %v2732 = vunpack.c.l.b16 %v2699
    %v2733 = vunpack.c.l.b16 %v2700
    %v2734 = vunpack.c.l.b16 %v2701
    %v2735 = vunpack.c.l.b16 %v2702
    %v2736 = vpack.c.b16 %v2724, %v2723
    %v2737 = vpack.c.b16 %v2726, %v2725
    %v2738 = vpack.c.b16 %v2728, %v2727
    %v2739 = vpack.c.b16 %v2730, %v2729
    %v2740 = vpack.c.b16 %v2732, %v2731
    %v2741 = vpack.c.b16 %v2734, %v2733
    %v2742 = vpack.c.b16 %v2735, %v2735
    %vm2749 = vcmask 818176
    %v2751 = vsel %vm2749, %v2689, 0
    %vm2753 = vcmask 1041408
    %v2755 = vsel %vm2753, %v2742, 0
    %2757 = vmatprep.subr.bf16.mxu0 0
    %2758 = vmatpush1.bf16.msra.mxu0 %v2736
    %2759 = vmatprep.subr.bf16.mxu0 0
    %2760 = vmatpush1.bf16.msra.mxu0 %v2737
    %2761 = vmatprep.subr.bf16.mxu0 0
    %2762 = vmatpush1.bf16.msra.mxu0 %v2738
    %2763 = vmatprep.subr.bf16.mxu0 0
    %2764 = vmatpush1.bf16.msra.mxu0 %v2739
    %2765 = vmatprep.subr.bf16.mxu0 0
    %2766 = vmatpush1.bf16.msra.mxu0 %v2740
    %2767 = vmatprep.subr.bf16.mxu0 0
    %2768 = vmatpush1.bf16.msra.mxu0 %v2741
    %2769 = vmatprep.subr.bf16.mxu0 0
    %2770 = vmatpush1.bf16.msra.mxu0 %v2755
    %2771 = vmatprep.subr.bf16.mxu0 0
    %2772 = vmatpush1.bf16.msra.mxu0 0
    %2773 = vmatprep.subr.bf16.mxu0 0
    %2774 = vmatpush1.bf16.msra.mxu0 0
    %2775 = vmatprep.subr.bf16.mxu0 0
    %2776 = vmatpush1.bf16.msra.mxu0 0
    %2777 = vmatprep.subr.bf16.mxu0 0
    %2778 = vmatpush1.bf16.msra.mxu0 0
    %2779 = vmatprep.subr.bf16.mxu0 0
    %2780 = vmatpush1.bf16.msra.mxu0 0
    %2781 = vmatprep.subr.bf16.mxu0 0
    %2782 = vmatpush1.bf16.msra.mxu0 0
    %2783 = vmatprep.subr.bf16.mxu0 0
    %2784 = vmatpush1.bf16.msra.mxu0 0
    %2785 = vmatprep.subr.bf16.mxu0 0
    %2786 = vmatpush1.bf16.msra.mxu0 0
    %2787 = vmatprep.subr.bf16.mxu0 0
    %2788 = vmatpush1.bf16.msra.mxu0 0
    %2789 = vmatprep.mubr.bf16.mxu0 0
    %2790 = vmatmul.mubr.bf16.gmra.mrb[0].mxu0 %v2751
    %v2791 = vpop.f32.mrb[0].mxu0
    %v2792 = vadd.f32 %v2708, %v2791
    %v2793 = vpop.f32.mrb[0].mxu0
    %v2794 = vpop.f32.mrb[0].mxu0
    %v2795 = vpop.f32.mrb[0].mxu0
    %2796 = vdwg.mxu0
    %vm2797 = vcmask 351232
    %v2798 = vsel %vm2797, %v2792, -inf
    %2799 = vmax.xlane.f32.xlu0 %v2798
    %v2800 = vpop.xlane.xlu0 %2799
    %v2801 = vsub.f32 %v2792, %v2800
    %v2802 = vmul.f32 %v2801, 1.442695
    %v2803 = vpow.pop %v2802
    %v2804 = vsel %vm2797, %v2803, 0.0
    %2805 = vadd.xlane.f32.xlu0 %v2804
    %v2806 = vpop.xlane.xlu0 %2805
    %v2807 = vlog2.pop %v2806
    %v2808 = vmul.f32 %v2807, 0.6931472
    %v2809 = vsub.f32 %v2801, %v2808
    %2810 = vst.msk [vmem:[#allocation2] sm:$0xff] %vm2797, %v2809
    // Predicated region
    $region30: #{net_forward.7} parent=1 // pred_check
      _
    $region31: #{net_forward.7} parent=1 // pred_check_branch
      %2812 = sbr.rel (0) target = $region33
    $region32: #{net_forward.7} parent=1 // pred_region
      %s2814 = ssub.s32 128, 32
      %2815 = vsyncadd [#allocation3], %s2814
      %s2816 = sshll.u32 [#allocation2], 4
      %s2817 = int_to_ptr.vmem [resolvable:$true] %s2816
      %2822 = dma.vmem_to_hbm [thread:$0]  %s2817, 32, %s7, [#allocation3], 32, 32, 2
    $region33: #{net_forward.7} parent=1 // pred_fallthru
      _
    // Predicated region
    $region34: #{net_forward.7} parent=1 // pred_check
      _
    $region35: #{net_forward.7} parent=1 // pred_check_branch
      %2824 = sbr.rel (0) target = $region37
    $region36: #{net_forward.7} parent=1 // pred_region
      %2825 = dma.done [#allocation3], 128
    $region37: #{net_forward.7} parent=1 // pred_fallthru
      _
    %2826 = vsyncpa [#allocation3], 1

</llo_original>
